<compile_context>
chip_gen: v7x
topology: tpu7x:2x2x1
jax: 0.10.0
libtpu: 0.0.40
codegen_flags: <defaults>
</compile_context>

<pallas_src>
import jax
import jax.numpy as jnp
from jax import lax
from jax.experimental import pallas as pl
from jax.experimental.pallas import tpu as pltpu

_EPS = 1e-5  # torch.nn.InstanceNorm2d default (affine=False, no running stats)


def _residual_block_kernel(x_ref, w1_ref, b1_ref, w2_ref, b2_ref, o_ref, pad_ref):
    _, H, W, C = x_ref.shape
    HW = H * W

    def reflect_pad(a3):
        """Stage conv input a3 (H, W, C) into pad_ref with 1-px reflect borders."""
        pad_ref[1:H + 1, 1:W + 1, :] = a3
        pad_ref[0:1, 1:W + 1, :] = a3[1:2, :, :]                   # top row  <- row 1
        pad_ref[H + 1:H + 2, 1:W + 1, :] = a3[H - 2:H - 1, :, :]   # bot row  <- row H-2
        pad_ref[:, 0:1, :] = pad_ref[:, 2:3, :]                    # left col  (+corners)
        pad_ref[:, W + 1:W + 2, :] = pad_ref[:, W - 1:W, :]        # right col (+corners)

    def conv3x3_instnorm(a3, w_ref, b_ref, relu):
        """Reflect-padded 3x3 conv + InstanceNorm2d (+ optional ReLU) -> (H*W, C)."""
        reflect_pad(a3)
        # Bias kept for fidelity to nn.Conv2d (it cancels exactly under IN).
        acc = jnp.zeros((HW, C), jnp.float32) + b_ref[...]
        for k in range(9):                          # 9 taps, k = ky*3 + kx
            ky, kx = divmod(k, 3)
            tap = pad_ref[ky:ky + H, kx:kx + W, :].reshape(HW, C)
            acc = acc + jnp.dot(tap, w_ref[k], preferred_element_type=jnp.float32)
        # InstanceNorm2d: per-(sample, channel) mean / biased variance over H*W.
        m = jnp.mean(acc, axis=0, keepdims=True)        # (1, C)
        d = acc - m
        var = jnp.mean(d * d, axis=0, keepdims=True)    # (1, C)
        y = d * lax.rsqrt(var + _EPS)
        if relu:
            y = jnp.maximum(y, 0.0)
        return y

    x3 = x_ref[0]                                            # (H, W, C)
    h1 = conv3x3_instnorm(x3, w1_ref, b1_ref, relu=True)     # ConvBlock #1
    h2 = conv3x3_instnorm(h1.reshape(H, W, C), w2_ref, b2_ref, relu=False)
    o_ref[0] = (x3 + h2.reshape(H, W, C)).astype(o_ref.dtype)   # residual add


def residual_block(x, w1, b1, w2, b2):
    """x: (N, C, H, W) f32; w*: (C, C, 3, 3); b*: (C,). Returns (N, C, H, W)."""
    N, C, H, W = x.shape
    x_nhwc = jnp.transpose(x, (0, 2, 3, 1))       # channels -> lane (minor) axis

    def taps(w):  # (OC, IC, 3, 3) -> (k = ky*3 + kx, IC, OC) matmul tiles
        return jnp.transpose(w, (2, 3, 1, 0)).reshape(9, C, C)

    out_nhwc = pl.pallas_call(
        _residual_block_kernel,
        out_shape=jax.ShapeDtypeStruct((N, H, W, C), x.dtype),
        grid=(N,),
        in_specs=[
            pl.BlockSpec((1, H, W, C), lambda n: (n, 0, 0, 0)),   # x (one sample)
            pl.BlockSpec((9, C, C), lambda n: (0, 0, 0)),          # w1 taps (VMEM)
            pl.BlockSpec((1, C), lambda n: (0, 0)),                # b1
            pl.BlockSpec((9, C, C), lambda n: (0, 0, 0)),          # w2 taps (VMEM)
            pl.BlockSpec((1, C), lambda n: (0, 0)),                # b2
        ],
        out_specs=pl.BlockSpec((1, H, W, C), lambda n: (n, 0, 0, 0)),
        scratch_shapes=[pltpu.VMEM((H + 2, W + 2, C), jnp.float32)],
        compiler_params=pltpu.CompilerParams(
            dimension_semantics=("parallel",),
            vmem_limit_bytes=64 * 1024 * 1024),
    )(x_nhwc, taps(w1), b1.reshape(1, C), taps(w2), b2.reshape(1, C))
    return jnp.transpose(out_nhwc, (0, 3, 1, 2))


def _ref_forward(x, w1, b1, w2, b2):
    """Pure-JAX reference of ResidualBlock.forward (for verification)."""
    def conv(h, w, b):
        hp = jnp.pad(h, ((0, 0), (0, 0), (1, 1), (1, 1)), mode="reflect")
        y = lax.conv_general_dilated(
            hp, w, window_strides=(1, 1), padding="VALID",
            dimension_numbers=("NCHW", "OIHW", "NCHW"),
            precision=lax.Precision.HIGHEST)
        return y + b[None, :, None, None]

    def inorm(y):
        m = y.mean(axis=(2, 3), keepdims=True)
        v = ((y - m) ** 2).mean(axis=(2, 3), keepdims=True)
        return (y - m) / jnp.sqrt(v + _EPS)

    h = jnp.maximum(inorm(conv(x, w1, b1)), 0.0)
    h = inorm(conv(h, w2, b2))
    return x + h


if __name__ == "__main__":
    N, C, H, W = 2, 4, 16, 16
    key = jax.random.PRNGKey(0)
    kx, kw1, kb1, kw2, kb2 = jax.random.split(key, 5)

    x = jax.random.normal(kx, (N, C, H, W), jnp.float32)
    fan_in = C * 3 * 3
    bound = 1.0 / (fan_in ** 0.5)  # deterministic, PyTorch-like uniform init
    w1 = jax.random.uniform(kw1, (C, C, 3, 3), jnp.float32, -bound, bound)
    b1 = jax.random.uniform(kb1, (C,), jnp.float32, -bound, bound)
    w2 = jax.random.uniform(kw2, (C, C, 3, 3), jnp.float32, -bound, bound)
    b2 = jax.random.uniform(kb2, (C,), jnp.float32, -bound, bound)

    out = residual_block(x, w1, b1, w2, b2)
    out = jax.block_until_ready(out)

    ref = _ref_forward(x, w1, b1, w2, b2)
    max_err = float(jnp.max(jnp.abs(out - ref)))
    assert out.shape == (N, C, H, W) and out.dtype == jnp.float32
    assert jnp.allclose(out, ref, atol=1e-3, rtol=1e-3), max_err

    print("KERNEL_OK")
</pallas_src>

<mosaic_0001>
module attributes {stable_mosaic.version = 11 : i64} {
  func.func @_residual_block_kernel(%arg0: i32, %arg1: memref<1x16x16x4xf32, #tpu.memory_space<vmem>>, %arg2: memref<9x4x4xf32, #tpu.memory_space<vmem>>, %arg3: memref<1x4xf32, #tpu.memory_space<vmem>>, %arg4: memref<9x4x4xf32, #tpu.memory_space<vmem>>, %arg5: memref<1x4xf32, #tpu.memory_space<vmem>>, %arg6: memref<1x16x16x4xf32, #tpu.memory_space<vmem>>, %arg7: memref<18x18x4xf32, #tpu.memory_space<vmem>>) attributes {dimension_semantics = [#tpu.dimension_semantics<parallel>], iteration_bounds = array<i64: 2>, scalar_prefetch = 0 : i64, scratch_operands = 1 : i64, tpu.core_type = #tpu.core_type<tc>, window_params = [{transform_indices = @transform_0, window_bounds = array<i64: 1, 16, 16, 4>}, {pipeline_mode = #tpu.pipeline_mode<synchronous>, transform_indices = @transform_1, window_bounds = array<i64: 9, 4, 4>}, {pipeline_mode = #tpu.pipeline_mode<synchronous>, transform_indices = @transform_2, window_bounds = array<i64: 1, 4>}, {pipeline_mode = #tpu.pipeline_mode<synchronous>, transform_indices = @transform_3, window_bounds = array<i64: 9, 4, 4>}, {pipeline_mode = #tpu.pipeline_mode<synchronous>, transform_indices = @transform_4, window_bounds = array<i64: 1, 4>}, {transform_indices = @transform_5, window_bounds = array<i64: 1, 16, 16, 4>}]} {
    %c0 = arith.constant 0 : index
    %c0_0 = arith.constant 0 : index
    %c0_1 = arith.constant 0 : index
    %c0_2 = arith.constant 0 : index
    %0 = vector.load %arg1[%c0, %c0_0, %c0_1, %c0_2] : memref<1x16x16x4xf32, #tpu.memory_space<vmem>>, vector<1x16x16x4xf32>
    %1 = vector.shape_cast %0 : vector<1x16x16x4xf32> to vector<16x16x4xf32>
    %c1 = arith.constant 1 : index
    %c1_3 = arith.constant 1 : index
    %c0_4 = arith.constant 0 : index
    %2 = vector.load %arg7[%c1, %c1_3, %c0_4] : memref<18x18x4xf32, #tpu.memory_space<vmem>>, vector<16x16x4xf32>
    tpu.vector_store %arg7[%c1, %c1_3, %c0_4], %1 {strides = array<i32>} : memref<18x18x4xf32, #tpu.memory_space<vmem>>, vector<16x16x4xf32>,
    %3 = vector.extract_strided_slice %1 {offsets = [1, 0, 0], sizes = [1, 16, 4], strides = [1, 1, 1]} : vector<16x16x4xf32> to vector<1x16x4xf32>
    %c0_5 = arith.constant 0 : index
    %c1_6 = arith.constant 1 : index
    %c0_7 = arith.constant 0 : index
    %4 = vector.load %arg7[%c0_5, %c1_6, %c0_7] : memref<18x18x4xf32, #tpu.memory_space<vmem>>, vector<1x16x4xf32>
    tpu.vector_store %arg7[%c0_5, %c1_6, %c0_7], %3 {strides = array<i32>} : memref<18x18x4xf32, #tpu.memory_space<vmem>>, vector<1x16x4xf32>,
    %5 = vector.extract_strided_slice %1 {offsets = [14, 0, 0], sizes = [1, 16, 4], strides = [1, 1, 1]} : vector<16x16x4xf32> to vector<1x16x4xf32>
    %c17 = arith.constant 17 : index
    %c1_8 = arith.constant 1 : index
    %c0_9 = arith.constant 0 : index
    %6 = vector.load %arg7[%c17, %c1_8, %c0_9] : memref<18x18x4xf32, #tpu.memory_space<vmem>>, vector<1x16x4xf32>
    tpu.vector_store %arg7[%c17, %c1_8, %c0_9], %5 {strides = array<i32>} : memref<18x18x4xf32, #tpu.memory_space<vmem>>, vector<1x16x4xf32>,
    %c0_10 = arith.constant 0 : index
    %c2 = arith.constant 2 : index
    %c0_11 = arith.constant 0 : index
    %7 = vector.load %arg7[%c0_10, %c2, %c0_11] : memref<18x18x4xf32, #tpu.memory_space<vmem>>, vector<18x1x4xf32>
    %c0_12 = arith.constant 0 : index
    %c0_13 = arith.constant 0 : index
    %c0_14 = arith.constant 0 : index
    %8 = vector.load %arg7[%c0_12, %c0_13, %c0_14] : memref<18x18x4xf32, #tpu.memory_space<vmem>>, vector<18x1x4xf32>
    tpu.vector_store %arg7[%c0_12, %c0_13, %c0_14], %7 {strides = array<i32>} : memref<18x18x4xf32, #tpu.memory_space<vmem>>, vector<18x1x4xf32>,
    %c0_15 = arith.constant 0 : index
    %c15 = arith.constant 15 : index
    %c0_16 = arith.constant 0 : index
    %9 = vector.load %arg7[%c0_15, %c15, %c0_16] : memref<18x18x4xf32, #tpu.memory_space<vmem>>, vector<18x1x4xf32>
    %c0_17 = arith.constant 0 : index
    %c17_18 = arith.constant 17 : index
    %c0_19 = arith.constant 0 : index
    %10 = vector.load %arg7[%c0_17, %c17_18, %c0_19] : memref<18x18x4xf32, #tpu.memory_space<vmem>>, vector<18x1x4xf32>
    tpu.vector_store %arg7[%c0_17, %c17_18, %c0_19], %9 {strides = array<i32>} : memref<18x18x4xf32, #tpu.memory_space<vmem>>, vector<18x1x4xf32>,
    %cst = arith.constant 0.000000e+00 : f32
    %11 = vector.broadcast %cst : f32 to vector<256x4xf32>
    %c0_20 = arith.constant 0 : index
    %c0_21 = arith.constant 0 : index
    %12 = vector.load %arg3[%c0_20, %c0_21] : memref<1x4xf32, #tpu.memory_space<vmem>>, vector<1x4xf32>
    %13 = vector.broadcast %12 : vector<1x4xf32> to vector<256x4xf32>
    %14 = arith.addf %11, %13 : vector<256x4xf32>
    %c0_22 = arith.constant 0 : index
    %c0_23 = arith.constant 0 : index
    %c0_24 = arith.constant 0 : index
    %15 = vector.load %arg7[%c0_22, %c0_23, %c0_24] : memref<18x18x4xf32, #tpu.memory_space<vmem>>, vector<16x16x4xf32>
    %16 = vector.shape_cast %15 : vector<16x16x4xf32> to vector<256x4xf32>
    %c0_25 = arith.constant 0 : index
    %c0_26 = arith.constant 0 : index
    %c0_27 = arith.constant 0 : index
    %17 = vector.load %arg2[%c0_25, %c0_26, %c0_27] : memref<9x4x4xf32, #tpu.memory_space<vmem>>, vector<1x4x4xf32>
    %18 = vector.shape_cast %17 : vector<1x4x4xf32> to vector<4x4xf32>
    %cst_28 = arith.constant dense<0.000000e+00> : vector<256x4xf32>
    %19 = tpu.matmul %16, %18, %cst_28 {dimension_numbers = #tpu.dot_dimension_numbers<[1], [0], [0], [1], [0, 0, 1, 1], [], []>} : vector<256x4xf32>, vector<4x4xf32>, vector<256x4xf32> -> vector<256x4xf32>
    %20 = arith.addf %14, %19 : vector<256x4xf32>
    %c0_29 = arith.constant 0 : index
    %c1_30 = arith.constant 1 : index
    %c0_31 = arith.constant 0 : index
    %21 = vector.load %arg7[%c0_29, %c1_30, %c0_31] : memref<18x18x4xf32, #tpu.memory_space<vmem>>, vector<16x16x4xf32>
    %22 = vector.shape_cast %21 : vector<16x16x4xf32> to vector<256x4xf32>
    %c1_32 = arith.constant 1 : index
    %c0_33 = arith.constant 0 : index
    %c0_34 = arith.constant 0 : index
    %23 = vector.load %arg2[%c1_32, %c0_33, %c0_34] : memref<9x4x4xf32, #tpu.memory_space<vmem>>, vector<1x4x4xf32>
    %24 = vector.shape_cast %23 : vector<1x4x4xf32> to vector<4x4xf32>
    %cst_35 = arith.constant dense<0.000000e+00> : vector<256x4xf32>
    %25 = tpu.matmul %22, %24, %cst_35 {dimension_numbers = #tpu.dot_dimension_numbers<[1], [0], [0], [1], [0, 0, 1, 1], [], []>} : vector<256x4xf32>, vector<4x4xf32>, vector<256x4xf32> -> vector<256x4xf32>
    %26 = arith.addf %20, %25 : vector<256x4xf32>
    %c0_36 = arith.constant 0 : index
    %c2_37 = arith.constant 2 : index
    %c0_38 = arith.constant 0 : index
    %27 = vector.load %arg7[%c0_36, %c2_37, %c0_38] : memref<18x18x4xf32, #tpu.memory_space<vmem>>, vector<16x16x4xf32>
    %28 = vector.shape_cast %27 : vector<16x16x4xf32> to vector<256x4xf32>
    %c2_39 = arith.constant 2 : index
    %c0_40 = arith.constant 0 : index
    %c0_41 = arith.constant 0 : index
    %29 = vector.load %arg2[%c2_39, %c0_40, %c0_41] : memref<9x4x4xf32, #tpu.memory_space<vmem>>, vector<1x4x4xf32>
    %30 = vector.shape_cast %29 : vector<1x4x4xf32> to vector<4x4xf32>
    %cst_42 = arith.constant dense<0.000000e+00> : vector<256x4xf32>
    %31 = tpu.matmul %28, %30, %cst_42 {dimension_numbers = #tpu.dot_dimension_numbers<[1], [0], [0], [1], [0, 0, 1, 1], [], []>} : vector<256x4xf32>, vector<4x4xf32>, vector<256x4xf32> -> vector<256x4xf32>
    %32 = arith.addf %26, %31 : vector<256x4xf32>
    %c1_43 = arith.constant 1 : index
    %c0_44 = arith.constant 0 : index
    %c0_45 = arith.constant 0 : index
    %33 = vector.load %arg7[%c1_43, %c0_44, %c0_45] : memref<18x18x4xf32, #tpu.memory_space<vmem>>, vector<16x16x4xf32>
    %34 = vector.shape_cast %33 : vector<16x16x4xf32> to vector<256x4xf32>
    %c3 = arith.constant 3 : index
    %c0_46 = arith.constant 0 : index
    %c0_47 = arith.constant 0 : index
    %35 = vector.load %arg2[%c3, %c0_46, %c0_47] : memref<9x4x4xf32, #tpu.memory_space<vmem>>, vector<1x4x4xf32>
    %36 = vector.shape_cast %35 : vector<1x4x4xf32> to vector<4x4xf32>
    %cst_48 = arith.constant dense<0.000000e+00> : vector<256x4xf32>
    %37 = tpu.matmul %34, %36, %cst_48 {dimension_numbers = #tpu.dot_dimension_numbers<[1], [0], [0], [1], [0, 0, 1, 1], [], []>} : vector<256x4xf32>, vector<4x4xf32>, vector<256x4xf32> -> vector<256x4xf32>
    %38 = arith.addf %32, %37 : vector<256x4xf32>
    %c1_49 = arith.constant 1 : index
    %c1_50 = arith.constant 1 : index
    %c0_51 = arith.constant 0 : index
    %39 = vector.load %arg7[%c1_49, %c1_50, %c0_51] : memref<18x18x4xf32, #tpu.memory_space<vmem>>, vector<16x16x4xf32>
    %40 = vector.shape_cast %39 : vector<16x16x4xf32> to vector<256x4xf32>
    %c4 = arith.constant 4 : index
    %c0_52 = arith.constant 0 : index
    %c0_53 = arith.constant 0 : index
    %41 = vector.load %arg2[%c4, %c0_52, %c0_53] : memref<9x4x4xf32, #tpu.memory_space<vmem>>, vector<1x4x4xf32>
    %42 = vector.shape_cast %41 : vector<1x4x4xf32> to vector<4x4xf32>
    %cst_54 = arith.constant dense<0.000000e+00> : vector<256x4xf32>
    %43 = tpu.matmul %40, %42, %cst_54 {dimension_numbers = #tpu.dot_dimension_numbers<[1], [0], [0], [1], [0, 0, 1, 1], [], []>} : vector<256x4xf32>, vector<4x4xf32>, vector<256x4xf32> -> vector<256x4xf32>
    %44 = arith.addf %38, %43 : vector<256x4xf32>
    %c1_55 = arith.constant 1 : index
    %c2_56 = arith.constant 2 : index
    %c0_57 = arith.constant 0 : index
    %45 = vector.load %arg7[%c1_55, %c2_56, %c0_57] : memref<18x18x4xf32, #tpu.memory_space<vmem>>, vector<16x16x4xf32>
    %46 = vector.shape_cast %45 : vector<16x16x4xf32> to vector<256x4xf32>
    %c5 = arith.constant 5 : index
    %c0_58 = arith.constant 0 : index
    %c0_59 = arith.constant 0 : index
    %47 = vector.load %arg2[%c5, %c0_58, %c0_59] : memref<9x4x4xf32, #tpu.memory_space<vmem>>, vector<1x4x4xf32>
    %48 = vector.shape_cast %47 : vector<1x4x4xf32> to vector<4x4xf32>
    %cst_60 = arith.constant dense<0.000000e+00> : vector<256x4xf32>
    %49 = tpu.matmul %46, %48, %cst_60 {dimension_numbers = #tpu.dot_dimension_numbers<[1], [0], [0], [1], [0, 0, 1, 1], [], []>} : vector<256x4xf32>, vector<4x4xf32>, vector<256x4xf32> -> vector<256x4xf32>
    %50 = arith.addf %44, %49 : vector<256x4xf32>
    %c2_61 = arith.constant 2 : index
    %c0_62 = arith.constant 0 : index
    %c0_63 = arith.constant 0 : index
    %51 = vector.load %arg7[%c2_61, %c0_62, %c0_63] : memref<18x18x4xf32, #tpu.memory_space<vmem>>, vector<16x16x4xf32>
    %52 = vector.shape_cast %51 : vector<16x16x4xf32> to vector<256x4xf32>
    %c6 = arith.constant 6 : index
    %c0_64 = arith.constant 0 : index
    %c0_65 = arith.constant 0 : index
    %53 = vector.load %arg2[%c6, %c0_64, %c0_65] : memref<9x4x4xf32, #tpu.memory_space<vmem>>, vector<1x4x4xf32>
    %54 = vector.shape_cast %53 : vector<1x4x4xf32> to vector<4x4xf32>
    %cst_66 = arith.constant dense<0.000000e+00> : vector<256x4xf32>
    %55 = tpu.matmul %52, %54, %cst_66 {dimension_numbers = #tpu.dot_dimension_numbers<[1], [0], [0], [1], [0, 0, 1, 1], [], []>} : vector<256x4xf32>, vector<4x4xf32>, vector<256x4xf32> -> vector<256x4xf32>
    %56 = arith.addf %50, %55 : vector<256x4xf32>
    %c2_67 = arith.constant 2 : index
    %c1_68 = arith.constant 1 : index
    %c0_69 = arith.constant 0 : index
    %57 = vector.load %arg7[%c2_67, %c1_68, %c0_69] : memref<18x18x4xf32, #tpu.memory_space<vmem>>, vector<16x16x4xf32>
    %58 = vector.shape_cast %57 : vector<16x16x4xf32> to vector<256x4xf32>
    %c7 = arith.constant 7 : index
    %c0_70 = arith.constant 0 : index
    %c0_71 = arith.constant 0 : index
    %59 = vector.load %arg2[%c7, %c0_70, %c0_71] : memref<9x4x4xf32, #tpu.memory_space<vmem>>, vector<1x4x4xf32>
    %60 = vector.shape_cast %59 : vector<1x4x4xf32> to vector<4x4xf32>
    %cst_72 = arith.constant dense<0.000000e+00> : vector<256x4xf32>
    %61 = tpu.matmul %58, %60, %cst_72 {dimension_numbers = #tpu.dot_dimension_numbers<[1], [0], [0], [1], [0, 0, 1, 1], [], []>} : vector<256x4xf32>, vector<4x4xf32>, vector<256x4xf32> -> vector<256x4xf32>
    %62 = arith.addf %56, %61 : vector<256x4xf32>
    %c2_73 = arith.constant 2 : index
    %c2_74 = arith.constant 2 : index
    %c0_75 = arith.constant 0 : index
    %63 = vector.load %arg7[%c2_73, %c2_74, %c0_75] : memref<18x18x4xf32, #tpu.memory_space<vmem>>, vector<16x16x4xf32>
    %64 = vector.shape_cast %63 : vector<16x16x4xf32> to vector<256x4xf32>
    %c8 = arith.constant 8 : index
    %c0_76 = arith.constant 0 : index
    %c0_77 = arith.constant 0 : index
    %65 = vector.load %arg2[%c8, %c0_76, %c0_77] : memref<9x4x4xf32, #tpu.memory_space<vmem>>, vector<1x4x4xf32>
    %66 = vector.shape_cast %65 : vector<1x4x4xf32> to vector<4x4xf32>
    %cst_78 = arith.constant dense<0.000000e+00> : vector<256x4xf32>
    %67 = tpu.matmul %64, %66, %cst_78 {dimension_numbers = #tpu.dot_dimension_numbers<[1], [0], [0], [1], [0, 0, 1, 1], [], []>} : vector<256x4xf32>, vector<4x4xf32>, vector<256x4xf32> -> vector<256x4xf32>
    %68 = arith.addf %62, %67 : vector<256x4xf32>
    %cst_79 = arith.constant dense<0.000000e+00> : vector<4xf32>
    %69 = vector.multi_reduction <add>, %68, %cst_79 [0] : vector<256x4xf32> to vector<4xf32>
    %70 = vector.shape_cast %69 : vector<4xf32> to vector<1x4xf32>
    %cst_80 = arith.constant 2.560000e+02 : f32
    %71 = vector.broadcast %cst_80 : f32 to vector<1x4xf32>
    %72 = arith.divf %70, %71 : vector<1x4xf32>
    %73 = vector.broadcast %72 : vector<1x4xf32> to vector<256x4xf32>
    %74 = arith.subf %68, %73 : vector<256x4xf32>
    %75 = arith.mulf %74, %74 : vector<256x4xf32>
    %cst_81 = arith.constant dense<0.000000e+00> : vector<4xf32>
    %76 = vector.multi_reduction <add>, %75, %cst_81 [0] : vector<256x4xf32> to vector<4xf32>
    %77 = vector.shape_cast %76 : vector<4xf32> to vector<1x4xf32>
    %cst_82 = arith.constant 2.560000e+02 : f32
    %78 = vector.broadcast %cst_82 : f32 to vector<1x4xf32>
    %79 = arith.divf %77, %78 : vector<1x4xf32>
    %cst_83 = arith.constant 9.99999974E-6 : f32
    %80 = vector.broadcast %cst_83 : f32 to vector<1x4xf32>
    %81 = arith.addf %79, %80 : vector<1x4xf32>
    %82 = math.rsqrt %81 : vector<1x4xf32>
    %83 = vector.broadcast %82 : vector<1x4xf32> to vector<256x4xf32>
    %84 = arith.mulf %74, %83 : vector<256x4xf32>
    %cst_84 = arith.constant 0.000000e+00 : f32
    %85 = vector.broadcast %cst_84 : f32 to vector<256x4xf32>
    %86 = arith.maximumf %84, %85 : vector<256x4xf32>
    %87 = vector.shape_cast %86 : vector<256x4xf32> to vector<16x16x4xf32>
    %c1_85 = arith.constant 1 : index
    %c1_86 = arith.constant 1 : index
    %c0_87 = arith.constant 0 : index
    %88 = vector.load %arg7[%c1_85, %c1_86, %c0_87] : memref<18x18x4xf32, #tpu.memory_space<vmem>>, vector<16x16x4xf32>
    tpu.vector_store %arg7[%c1_85, %c1_86, %c0_87], %87 {strides = array<i32>} : memref<18x18x4xf32, #tpu.memory_space<vmem>>, vector<16x16x4xf32>,
    %89 = vector.extract_strided_slice %87 {offsets = [1, 0, 0], sizes = [1, 16, 4], strides = [1, 1, 1]} : vector<16x16x4xf32> to vector<1x16x4xf32>
    %c0_88 = arith.constant 0 : index
    %c1_89 = arith.constant 1 : index
    %c0_90 = arith.constant 0 : index
    %90 = vector.load %arg7[%c0_88, %c1_89, %c0_90] : memref<18x18x4xf32, #tpu.memory_space<vmem>>, vector<1x16x4xf32>
    tpu.vector_store %arg7[%c0_88, %c1_89, %c0_90], %89 {strides = array<i32>} : memref<18x18x4xf32, #tpu.memory_space<vmem>>, vector<1x16x4xf32>,
    %91 = vector.extract_strided_slice %87 {offsets = [14, 0, 0], sizes = [1, 16, 4], strides = [1, 1, 1]} : vector<16x16x4xf32> to vector<1x16x4xf32>
    %c17_91 = arith.constant 17 : index
    %c1_92 = arith.constant 1 : index
    %c0_93 = arith.constant 0 : index
    %92 = vector.load %arg7[%c17_91, %c1_92, %c0_93] : memref<18x18x4xf32, #tpu.memory_space<vmem>>, vector<1x16x4xf32>
    tpu.vector_store %arg7[%c17_91, %c1_92, %c0_93], %91 {strides = array<i32>} : memref<18x18x4xf32, #tpu.memory_space<vmem>>, vector<1x16x4xf32>,
    %c0_94 = arith.constant 0 : index
    %c2_95 = arith.constant 2 : index
    %c0_96 = arith.constant 0 : index
    %93 = vector.load %arg7[%c0_94, %c2_95, %c0_96] : memref<18x18x4xf32, #tpu.memory_space<vmem>>, vector<18x1x4xf32>
    %c0_97 = arith.constant 0 : index
    %c0_98 = arith.constant 0 : index
    %c0_99 = arith.constant 0 : index
    %94 = vector.load %arg7[%c0_97, %c0_98, %c0_99] : memref<18x18x4xf32, #tpu.memory_space<vmem>>, vector<18x1x4xf32>
    tpu.vector_store %arg7[%c0_97, %c0_98, %c0_99], %93 {strides = array<i32>} : memref<18x18x4xf32, #tpu.memory_space<vmem>>, vector<18x1x4xf32>,
    %c0_100 = arith.constant 0 : index
    %c15_101 = arith.constant 15 : index
    %c0_102 = arith.constant 0 : index
    %95 = vector.load %arg7[%c0_100, %c15_101, %c0_102] : memref<18x18x4xf32, #tpu.memory_space<vmem>>, vector<18x1x4xf32>
    %c0_103 = arith.constant 0 : index
    %c17_104 = arith.constant 17 : index
    %c0_105 = arith.constant 0 : index
    %96 = vector.load %arg7[%c0_103, %c17_104, %c0_105] : memref<18x18x4xf32, #tpu.memory_space<vmem>>, vector<18x1x4xf32>
    tpu.vector_store %arg7[%c0_103, %c17_104, %c0_105], %95 {strides = array<i32>} : memref<18x18x4xf32, #tpu.memory_space<vmem>>, vector<18x1x4xf32>,
    %cst_106 = arith.constant 0.000000e+00 : f32
    %97 = vector.broadcast %cst_106 : f32 to vector<256x4xf32>
    %c0_107 = arith.constant 0 : index
    %c0_108 = arith.constant 0 : index
    %98 = vector.load %arg5[%c0_107, %c0_108] : memref<1x4xf32, #tpu.memory_space<vmem>>, vector<1x4xf32>
    %99 = vector.broadcast %98 : vector<1x4xf32> to vector<256x4xf32>
    %100 = arith.addf %97, %99 : vector<256x4xf32>
    %c0_109 = arith.constant 0 : index
    %c0_110 = arith.constant 0 : index
    %c0_111 = arith.constant 0 : index
    %101 = vector.load %arg7[%c0_109, %c0_110, %c0_111] : memref<18x18x4xf32, #tpu.memory_space<vmem>>, vector<16x16x4xf32>
    %102 = vector.shape_cast %101 : vector<16x16x4xf32> to vector<256x4xf32>
    %c0_112 = arith.constant 0 : index
    %c0_113 = arith.constant 0 : index
    %c0_114 = arith.constant 0 : index
    %103 = vector.load %arg4[%c0_112, %c0_113, %c0_114] : memref<9x4x4xf32, #tpu.memory_space<vmem>>, vector<1x4x4xf32>
    %104 = vector.shape_cast %103 : vector<1x4x4xf32> to vector<4x4xf32>
    %cst_115 = arith.constant dense<0.000000e+00> : vector<256x4xf32>
    %105 = tpu.matmul %102, %104, %cst_115 {dimension_numbers = #tpu.dot_dimension_numbers<[1], [0], [0], [1], [0, 0, 1, 1], [], []>} : vector<256x4xf32>, vector<4x4xf32>, vector<256x4xf32> -> vector<256x4xf32>
    %106 = arith.addf %100, %105 : vector<256x4xf32>
    %c0_116 = arith.constant 0 : index
    %c1_117 = arith.constant 1 : index
    %c0_118 = arith.constant 0 : index
    %107 = vector.load %arg7[%c0_116, %c1_117, %c0_118] : memref<18x18x4xf32, #tpu.memory_space<vmem>>, vector<16x16x4xf32>
    %108 = vector.shape_cast %107 : vector<16x16x4xf32> to vector<256x4xf32>
    %c1_119 = arith.constant 1 : index
    %c0_120 = arith.constant 0 : index
    %c0_121 = arith.constant 0 : index
    %109 = vector.load %arg4[%c1_119, %c0_120, %c0_121] : memref<9x4x4xf32, #tpu.memory_space<vmem>>, vector<1x4x4xf32>
    %110 = vector.shape_cast %109 : vector<1x4x4xf32> to vector<4x4xf32>
    %cst_122 = arith.constant dense<0.000000e+00> : vector<256x4xf32>
    %111 = tpu.matmul %108, %110, %cst_122 {dimension_numbers = #tpu.dot_dimension_numbers<[1], [0], [0], [1], [0, 0, 1, 1], [], []>} : vector<256x4xf32>, vector<4x4xf32>, vector<256x4xf32> -> vector<256x4xf32>
    %112 = arith.addf %106, %111 : vector<256x4xf32>
    %c0_123 = arith.constant 0 : index
    %c2_124 = arith.constant 2 : index
    %c0_125 = arith.constant 0 : index
    %113 = vector.load %arg7[%c0_123, %c2_124, %c0_125] : memref<18x18x4xf32, #tpu.memory_space<vmem>>, vector<16x16x4xf32>
    %114 = vector.shape_cast %113 : vector<16x16x4xf32> to vector<256x4xf32>
    %c2_126 = arith.constant 2 : index
    %c0_127 = arith.constant 0 : index
    %c0_128 = arith.constant 0 : index
    %115 = vector.load %arg4[%c2_126, %c0_127, %c0_128] : memref<9x4x4xf32, #tpu.memory_space<vmem>>, vector<1x4x4xf32>
    %116 = vector.shape_cast %115 : vector<1x4x4xf32> to vector<4x4xf32>
    %cst_129 = arith.constant dense<0.000000e+00> : vector<256x4xf32>
    %117 = tpu.matmul %114, %116, %cst_129 {dimension_numbers = #tpu.dot_dimension_numbers<[1], [0], [0], [1], [0, 0, 1, 1], [], []>} : vector<256x4xf32>, vector<4x4xf32>, vector<256x4xf32> -> vector<256x4xf32>
    %118 = arith.addf %112, %117 : vector<256x4xf32>
    %c1_130 = arith.constant 1 : index
    %c0_131 = arith.constant 0 : index
    %c0_132 = arith.constant 0 : index
    %119 = vector.load %arg7[%c1_130, %c0_131, %c0_132] : memref<18x18x4xf32, #tpu.memory_space<vmem>>, vector<16x16x4xf32>
    %120 = vector.shape_cast %119 : vector<16x16x4xf32> to vector<256x4xf32>
    %c3_133 = arith.constant 3 : index
    %c0_134 = arith.constant 0 : index
    %c0_135 = arith.constant 0 : index
    %121 = vector.load %arg4[%c3_133, %c0_134, %c0_135] : memref<9x4x4xf32, #tpu.memory_space<vmem>>, vector<1x4x4xf32>
    %122 = vector.shape_cast %121 : vector<1x4x4xf32> to vector<4x4xf32>
    %cst_136 = arith.constant dense<0.000000e+00> : vector<256x4xf32>
    %123 = tpu.matmul %120, %122, %cst_136 {dimension_numbers = #tpu.dot_dimension_numbers<[1], [0], [0], [1], [0, 0, 1, 1], [], []>} : vector<256x4xf32>, vector<4x4xf32>, vector<256x4xf32> -> vector<256x4xf32>
    %124 = arith.addf %118, %123 : vector<256x4xf32>
    %c1_137 = arith.constant 1 : index
    %c1_138 = arith.constant 1 : index
    %c0_139 = arith.constant 0 : index
    %125 = vector.load %arg7[%c1_137, %c1_138, %c0_139] : memref<18x18x4xf32, #tpu.memory_space<vmem>>, vector<16x16x4xf32>
    %126 = vector.shape_cast %125 : vector<16x16x4xf32> to vector<256x4xf32>
    %c4_140 = arith.constant 4 : index
    %c0_141 = arith.constant 0 : index
    %c0_142 = arith.constant 0 : index
    %127 = vector.load %arg4[%c4_140, %c0_141, %c0_142] : memref<9x4x4xf32, #tpu.memory_space<vmem>>, vector<1x4x4xf32>
    %128 = vector.shape_cast %127 : vector<1x4x4xf32> to vector<4x4xf32>
    %cst_143 = arith.constant dense<0.000000e+00> : vector<256x4xf32>
    %129 = tpu.matmul %126, %128, %cst_143 {dimension_numbers = #tpu.dot_dimension_numbers<[1], [0], [0], [1], [0, 0, 1, 1], [], []>} : vector<256x4xf32>, vector<4x4xf32>, vector<256x4xf32> -> vector<256x4xf32>
    %130 = arith.addf %124, %129 : vector<256x4xf32>
    %c1_144 = arith.constant 1 : index
    %c2_145 = arith.constant 2 : index
    %c0_146 = arith.constant 0 : index
    %131 = vector.load %arg7[%c1_144, %c2_145, %c0_146] : memref<18x18x4xf32, #tpu.memory_space<vmem>>, vector<16x16x4xf32>
    %132 = vector.shape_cast %131 : vector<16x16x4xf32> to vector<256x4xf32>
    %c5_147 = arith.constant 5 : index
    %c0_148 = arith.constant 0 : index
    %c0_149 = arith.constant 0 : index
    %133 = vector.load %arg4[%c5_147, %c0_148, %c0_149] : memref<9x4x4xf32, #tpu.memory_space<vmem>>, vector<1x4x4xf32>
    %134 = vector.shape_cast %133 : vector<1x4x4xf32> to vector<4x4xf32>
    %cst_150 = arith.constant dense<0.000000e+00> : vector<256x4xf32>
    %135 = tpu.matmul %132, %134, %cst_150 {dimension_numbers = #tpu.dot_dimension_numbers<[1], [0], [0], [1], [0, 0, 1, 1], [], []>} : vector<256x4xf32>, vector<4x4xf32>, vector<256x4xf32> -> vector<256x4xf32>
    %136 = arith.addf %130, %135 : vector<256x4xf32>
    %c2_151 = arith.constant 2 : index
    %c0_152 = arith.constant 0 : index
    %c0_153 = arith.constant 0 : index
    %137 = vector.load %arg7[%c2_151, %c0_152, %c0_153] : memref<18x18x4xf32, #tpu.memory_space<vmem>>, vector<16x16x4xf32>
    %138 = vector.shape_cast %137 : vector<16x16x4xf32> to vector<256x4xf32>
    %c6_154 = arith.constant 6 : index
    %c0_155 = arith.constant 0 : index
    %c0_156 = arith.constant 0 : index
    %139 = vector.load %arg4[%c6_154, %c0_155, %c0_156] : memref<9x4x4xf32, #tpu.memory_space<vmem>>, vector<1x4x4xf32>
    %140 = vector.shape_cast %139 : vector<1x4x4xf32> to vector<4x4xf32>
    %cst_157 = arith.constant dense<0.000000e+00> : vector<256x4xf32>
    %141 = tpu.matmul %138, %140, %cst_157 {dimension_numbers = #tpu.dot_dimension_numbers<[1], [0], [0], [1], [0, 0, 1, 1], [], []>} : vector<256x4xf32>, vector<4x4xf32>, vector<256x4xf32> -> vector<256x4xf32>
    %142 = arith.addf %136, %141 : vector<256x4xf32>
    %c2_158 = arith.constant 2 : index
    %c1_159 = arith.constant 1 : index
    %c0_160 = arith.constant 0 : index
    %143 = vector.load %arg7[%c2_158, %c1_159, %c0_160] : memref<18x18x4xf32, #tpu.memory_space<vmem>>, vector<16x16x4xf32>
    %144 = vector.shape_cast %143 : vector<16x16x4xf32> to vector<256x4xf32>
    %c7_161 = arith.constant 7 : index
    %c0_162 = arith.constant 0 : index
    %c0_163 = arith.constant 0 : index
    %145 = vector.load %arg4[%c7_161, %c0_162, %c0_163] : memref<9x4x4xf32, #tpu.memory_space<vmem>>, vector<1x4x4xf32>
    %146 = vector.shape_cast %145 : vector<1x4x4xf32> to vector<4x4xf32>
    %cst_164 = arith.constant dense<0.000000e+00> : vector<256x4xf32>
    %147 = tpu.matmul %144, %146, %cst_164 {dimension_numbers = #tpu.dot_dimension_numbers<[1], [0], [0], [1], [0, 0, 1, 1], [], []>} : vector<256x4xf32>, vector<4x4xf32>, vector<256x4xf32> -> vector<256x4xf32>
    %148 = arith.addf %142, %147 : vector<256x4xf32>
    %c2_165 = arith.constant 2 : index
    %c2_166 = arith.constant 2 : index
    %c0_167 = arith.constant 0 : index
    %149 = vector.load %arg7[%c2_165, %c2_166, %c0_167] : memref<18x18x4xf32, #tpu.memory_space<vmem>>, vector<16x16x4xf32>
    %150 = vector.shape_cast %149 : vector<16x16x4xf32> to vector<256x4xf32>
    %c8_168 = arith.constant 8 : index
    %c0_169 = arith.constant 0 : index
    %c0_170 = arith.constant 0 : index
    %151 = vector.load %arg4[%c8_168, %c0_169, %c0_170] : memref<9x4x4xf32, #tpu.memory_space<vmem>>, vector<1x4x4xf32>
    %152 = vector.shape_cast %151 : vector<1x4x4xf32> to vector<4x4xf32>
    %cst_171 = arith.constant dense<0.000000e+00> : vector<256x4xf32>
    %153 = tpu.matmul %150, %152, %cst_171 {dimension_numbers = #tpu.dot_dimension_numbers<[1], [0], [0], [1], [0, 0, 1, 1], [], []>} : vector<256x4xf32>, vector<4x4xf32>, vector<256x4xf32> -> vector<256x4xf32>
    %154 = arith.addf %148, %153 : vector<256x4xf32>
    %cst_172 = arith.constant dense<0.000000e+00> : vector<4xf32>
    %155 = vector.multi_reduction <add>, %154, %cst_172 [0] : vector<256x4xf32> to vector<4xf32>
    %156 = vector.shape_cast %155 : vector<4xf32> to vector<1x4xf32>
    %cst_173 = arith.constant 2.560000e+02 : f32
    %157 = vector.broadcast %cst_173 : f32 to vector<1x4xf32>
    %158 = arith.divf %156, %157 : vector<1x4xf32>
    %159 = vector.broadcast %158 : vector<1x4xf32> to vector<256x4xf32>
    %160 = arith.subf %154, %159 : vector<256x4xf32>
    %161 = arith.mulf %160, %160 : vector<256x4xf32>
    %cst_174 = arith.constant dense<0.000000e+00> : vector<4xf32>
    %162 = vector.multi_reduction <add>, %161, %cst_174 [0] : vector<256x4xf32> to vector<4xf32>
    %163 = vector.shape_cast %162 : vector<4xf32> to vector<1x4xf32>
    %cst_175 = arith.constant 2.560000e+02 : f32
    %164 = vector.broadcast %cst_175 : f32 to vector<1x4xf32>
    %165 = arith.divf %163, %164 : vector<1x4xf32>
    %cst_176 = arith.constant 9.99999974E-6 : f32
    %166 = vector.broadcast %cst_176 : f32 to vector<1x4xf32>
    %167 = arith.addf %165, %166 : vector<1x4xf32>
    %168 = math.rsqrt %167 : vector<1x4xf32>
    %169 = vector.broadcast %168 : vector<1x4xf32> to vector<256x4xf32>
    %170 = arith.mulf %160, %169 : vector<256x4xf32>
    %171 = vector.shape_cast %170 : vector<256x4xf32> to vector<16x16x4xf32>
    %172 = arith.addf %1, %171 : vector<16x16x4xf32>
    %c0_177 = arith.constant 0 : index
    %c0_178 = arith.constant 0 : index
    %c0_179 = arith.constant 0 : index
    %c0_180 = arith.constant 0 : index
    %173 = vector.load %arg6[%c0_177, %c0_178, %c0_179, %c0_180] : memref<1x16x16x4xf32, #tpu.memory_space<vmem>>, vector<1x16x16x4xf32>
    %174 = vector.shape_cast %173 : vector<1x16x16x4xf32> to vector<16x16x4xf32>
    %175 = vector.shape_cast %172 : vector<16x16x4xf32> to vector<1x16x16x4xf32>
    tpu.vector_store %arg6[%c0_177, %c0_178, %c0_179, %c0_180], %175 {strides = array<i32>} : memref<1x16x16x4xf32, #tpu.memory_space<vmem>>, vector<1x16x16x4xf32>,
    return
  }
  func.func @transform_0(%arg0: i32) -> (i32, i32, i32, i32) {
    %c0_i32 = arith.constant 0 : i32
    %c0_i32_0 = arith.constant 0 : i32
    %c0_i32_1 = arith.constant 0 : i32
    %c0_i32_2 = arith.constant 0 : i32
    return %arg0, %c0_i32, %c0_i32_0, %c0_i32_1 : i32, i32, i32, i32
  }
  func.func @transform_1(%arg0: i32) -> (i32, i32, i32) {
    %c0_i32 = arith.constant 0 : i32
    %c0_i32_0 = arith.constant 0 : i32
    %c0_i32_1 = arith.constant 0 : i32
    %c0_i32_2 = arith.constant 0 : i32
    return %c0_i32, %c0_i32_0, %c0_i32_1 : i32, i32, i32
  }
  func.func @transform_2(%arg0: i32) -> (i32, i32) {
    %c0_i32 = arith.constant 0 : i32
    %c0_i32_0 = arith.constant 0 : i32
    %c0_i32_1 = arith.constant 0 : i32
    return %c0_i32, %c0_i32_0 : i32, i32
  }
  func.func @transform_3(%arg0: i32) -> (i32, i32, i32) {
    %c0_i32 = arith.constant 0 : i32
    %c0_i32_0 = arith.constant 0 : i32
    %c0_i32_1 = arith.constant 0 : i32
    %c0_i32_2 = arith.constant 0 : i32
    return %c0_i32, %c0_i32_0, %c0_i32_1 : i32, i32, i32
  }
  func.func @transform_4(%arg0: i32) -> (i32, i32) {
    %c0_i32 = arith.constant 0 : i32
    %c0_i32_0 = arith.constant 0 : i32
    %c0_i32_1 = arith.constant 0 : i32
    return %c0_i32, %c0_i32_0 : i32, i32
  }
  func.func @transform_5(%arg0: i32) -> (i32, i32, i32, i32) {
    %c0_i32 = arith.constant 0 : i32
    %c0_i32_0 = arith.constant 0 : i32
    %c0_i32_1 = arith.constant 0 : i32
    %c0_i32_2 = arith.constant 0 : i32
    return %arg0, %c0_i32, %c0_i32_0, %c0_i32_1 : i32, i32, i32, i32
  }
}

</mosaic_0001>

<llo_original>
// kernel: tpu_custom_call.1
$region0: #{tpu_custom_call.1}
  #allocation0 [shape = 'u32[]', space=smem, size = 0x4, offset = 0x4, fixed_abs, tag = 'smem constant byte address 0x4 - core index']
  #allocation1 [shape = 'u32[144,128]{1,0:T(1,128)}', space=vmem, size = 0x12000, scoped, tag = 'internal scratch']
  #allocation2 [shape = 'f32[18,18,4]{2,1,0:T(8,128)}', space=vmem, size = 0x36000, scoped, tag = 'scratch operand']
  %s0 = inlined_call_operand.hbm [shape: f32[2,16,16,4], index: 0, kind: input, shape index: {}]
  %s1 = inlined_call_operand.hbm [shape: f32[9,4,4], index: 1, kind: input, shape index: {}]
  %s2 = inlined_call_operand.hbm [shape: f32[1,4], index: 2, kind: input, shape index: {}]
  %s3 = inlined_call_operand.hbm [shape: f32[9,4,4], index: 3, kind: input, shape index: {}]
  %s4 = inlined_call_operand.hbm [shape: f32[1,4], index: 4, kind: input, shape index: {}]
  %s5 = inlined_call_operand.hbm [shape: f32[2,16,16,4], index: 5, kind: output, shape index: {}]
  %s6 = sld [smem:[#allocation0]]
  $region73: #{tpu_custom_call.1} parent=0
    _
  %s8 = ssub.s32 1, %s6
  %s9 = scalar_select 0, %s8, %s6
  $region1: #{tpu_custom_call.1} parent=0
    #allocation3 [shape = 'u8[262144]{0}', space=vmem, size = 0x40000, scoped, tag = 'input window, operand 0']
    #allocation4 [shape = 's32[2]{0}', space=sflag, size = 0x8, scoped, tag = 'scoped memory for tpu_custom_call.1']
    #allocation5 [shape = 's32[2]{0}', space=sflag, size = 0x8, scoped, tag = 'scoped memory for tpu_custom_call.1']
    #allocation6 [shape = 'u8[18432]{0}', space=vmem, size = 0x4800, scoped, tag = 'input window, operand 1, single buffered']
    #allocation7 [shape = 's32[1]{0}', space=sflag, size = 0x4, scoped, tag = 'scoped memory for tpu_custom_call.1']
    #allocation8 [shape = 'u8[512]{0}', space=vmem, size = 0x400, scoped, tag = 'input window, operand 2, single buffered']
    #allocation9 [shape = 'u8[18432]{0}', space=vmem, size = 0x4800, scoped, tag = 'input window, operand 3, single buffered']
    #allocation10 [shape = 's32[1]{0}', space=sflag, size = 0x4, scoped, tag = 'scoped memory for tpu_custom_call.1']
    #allocation11 [shape = 'u8[512]{0}', space=vmem, size = 0x400, scoped, tag = 'input window, operand 4, single buffered']
    #allocation12 [shape = 'u8[262144]{0}', space=vmem, size = 0x40000, scoped, tag = 'output window, operand 0']
    %10 = vsyncpa [#allocation4], 0
    %s11 = scalar_lea.sflag [#allocation4], 1
    %12 = vsyncpa %s11, 0
    %13 = vsyncpa [#allocation7], 0
    %14 = vsyncpa [#allocation10], 0
    %15 = vsyncpa [#allocation5], 0
    %s16 = scalar_lea.sflag [#allocation5], 1
    %17 = vsyncpa %s16, 0
    loop: start=0, step=1, limit=4
    $region2: #{tpu_custom_call.1} parent=1 // loop_pre_header
      _
    $region3: #{tpu_custom_call.1} parent=1 // loop_header
      %s19 = sphi 0, %s23
      %p20 = scmp.ge.s32.totalorder %s19, 4
      %s29 = sphi 0, %s31
      %s32 = sphi 0, %s29
      %s33 = sphi 0, %s32
      %s49 = sphi 0, %s33
      %s53 = sphi 0, %s53
      %s55 = sphi 0, %s53
      %s56 = sphi 0, %s55
      %s70 = sphi 0, %s56
      %s74 = sphi 0, %s74
      %s76 = sphi 0, %s74
      %s77 = sphi 0, %s76
      %s91 = sphi 0, %s77
      %s95 = sphi 0, %s95
      %s97 = sphi 0, %s95
      %s98 = sphi 0, %s97
      %s112 = sphi 0, %s98
      %s116 = sphi 0, %s116
      %s118 = sphi 0, %s116
      %s119 = sphi 0, %s118
      %s133 = sphi 0, %s119
      %s139 = sphi 0, %s141
      %s142 = sphi 0, %s139
      %s143 = sphi 0, %s142
      %s159 = sphi 0, %s143
    $region4: #{tpu_custom_call.1} parent=1 // loop_header_branch
      %22 = sbr.rel (%p20) target = $region8
    $region5: #{tpu_custom_call.1} parent=1 // loop_body
      %s24 = ssub.s32 %s19, 1
      %s25 = ssub.s32 %s19, 2
      %s26 = sadd.s32 %s19, 1
      %s27 = ssub.s32 %s19, %s26
      %p28 = scmp.eq.s32.totalorder %s27, 0
      %s30 = sadd.s32 %s29, 1
      %s31 = scalar_select %p28, %s29, %s30
      %p34 = pneg %p28
      %p35 = scmp.eq.s32.totalorder %s19, 1
      %p36 = por %p34, %p35
      %p37 = scmp.ne.s32.totalorder %s29, %s32
      %p38 = scmp.eq.s32.totalorder %s19, 0
      %p39 = por %p37, %p38
      %p40 = scmp.ne.s32.totalorder %s29, %s32
      %p41 = scmp.eq.s32.totalorder %s24, 1
      %p42 = por %p40, %p41
      %p43 = scmp.ne.s32.totalorder %s32, %s33
      %p44 = scmp.eq.s32.totalorder %s24, 0
      %p45 = por %p43, %p44
      %p46 = scmp.ne.s32.totalorder %s32, %s33
      %p47 = scmp.eq.s32.totalorder %s25, 1
      %p48 = por %p46, %p47
      %p50 = scmp.ne.s32.totalorder %s33, %s49
      %p51 = scmp.eq.s32.totalorder %s25, 0
      %p52 = por %p50, %p51
      %s54 = sadd.s32 %s53, 1
      %p57 = scmp.eq.s32.totalorder %s19, 1
      %p58 = scmp.ne.s32.totalorder %s53, %s55
      %p59 = scmp.eq.s32.totalorder %s19, 0
      %p60 = por %p58, %p59
      %p61 = scmp.ne.s32.totalorder %s53, %s55
      %p62 = scmp.eq.s32.totalorder %s24, 1
      %p63 = por %p61, %p62
      %p64 = scmp.ne.s32.totalorder %s55, %s56
      %p65 = scmp.eq.s32.totalorder %s24, 0
      %p66 = por %p64, %p65
      %p67 = scmp.ne.s32.totalorder %s55, %s56
      %p68 = scmp.eq.s32.totalorder %s25, 1
      %p69 = por %p67, %p68
      %p71 = scmp.ne.s32.totalorder %s56, %s70
      %p72 = scmp.eq.s32.totalorder %s25, 0
      %p73 = por %p71, %p72
      %s75 = sadd.s32 %s74, 1
      %p78 = scmp.eq.s32.totalorder %s19, 1
      %p79 = scmp.ne.s32.totalorder %s74, %s76
      %p80 = scmp.eq.s32.totalorder %s19, 0
      %p81 = por %p79, %p80
      %p82 = scmp.ne.s32.totalorder %s74, %s76
      %p83 = scmp.eq.s32.totalorder %s24, 1
      %p84 = por %p82, %p83
      %p85 = scmp.ne.s32.totalorder %s76, %s77
      %p86 = scmp.eq.s32.totalorder %s24, 0
      %p87 = por %p85, %p86
      %p88 = scmp.ne.s32.totalorder %s76, %s77
      %p89 = scmp.eq.s32.totalorder %s25, 1
      %p90 = por %p88, %p89
      %p92 = scmp.ne.s32.totalorder %s77, %s91
      %p93 = scmp.eq.s32.totalorder %s25, 0
      %p94 = por %p92, %p93
      %s96 = sadd.s32 %s95, 1
      %p99 = scmp.eq.s32.totalorder %s19, 1
      %p100 = scmp.ne.s32.totalorder %s95, %s97
      %p101 = scmp.eq.s32.totalorder %s19, 0
      %p102 = por %p100, %p101
      %p103 = scmp.ne.s32.totalorder %s95, %s97
      %p104 = scmp.eq.s32.totalorder %s24, 1
      %p105 = por %p103, %p104
      %p106 = scmp.ne.s32.totalorder %s97, %s98
      %p107 = scmp.eq.s32.totalorder %s24, 0
      %p108 = por %p106, %p107
      %p109 = scmp.ne.s32.totalorder %s97, %s98
      %p110 = scmp.eq.s32.totalorder %s25, 1
      %p111 = por %p109, %p110
      %p113 = scmp.ne.s32.totalorder %s98, %s112
      %p114 = scmp.eq.s32.totalorder %s25, 0
      %p115 = por %p113, %p114
      %s117 = sadd.s32 %s116, 1
      %p120 = scmp.eq.s32.totalorder %s19, 1
      %p121 = scmp.ne.s32.totalorder %s116, %s118
      %p122 = scmp.eq.s32.totalorder %s19, 0
      %p123 = por %p121, %p122
      %p124 = scmp.ne.s32.totalorder %s116, %s118
      %p125 = scmp.eq.s32.totalorder %s24, 1
      %p126 = por %p124, %p125
      %p127 = scmp.ne.s32.totalorder %s118, %s119
      %p128 = scmp.eq.s32.totalorder %s24, 0
      %p129 = por %p127, %p128
      %p130 = scmp.ne.s32.totalorder %s118, %s119
      %p131 = scmp.eq.s32.totalorder %s25, 1
      %p132 = por %p130, %p131
      %p134 = scmp.ne.s32.totalorder %s119, %s133
      %p135 = scmp.eq.s32.totalorder %s25, 0
      %p136 = por %p134, %p135
      %s137 = ssub.s32 %s19, %s26
      %p138 = scmp.eq.s32.totalorder %s137, 0
      %s140 = sadd.s32 %s139, 1
      %s141 = scalar_select %p138, %s139, %s140
      %p144 = pneg %p138
      %p145 = scmp.eq.s32.totalorder %s19, 1
      %p146 = por %p144, %p145
      %p147 = scmp.ne.s32.totalorder %s139, %s142
      %p148 = scmp.eq.s32.totalorder %s19, 0
      %p149 = por %p147, %p148
      %p150 = scmp.ne.s32.totalorder %s139, %s142
      %p151 = scmp.eq.s32.totalorder %s24, 1
      %p152 = por %p150, %p151
      %p153 = scmp.ne.s32.totalorder %s142, %s143
      %p154 = scmp.eq.s32.totalorder %s24, 0
      %p155 = por %p153, %p154
      %p156 = scmp.ne.s32.totalorder %s142, %s143
      %p157 = scmp.eq.s32.totalorder %s25, 1
      %p158 = por %p156, %p157
      %p160 = scmp.ne.s32.totalorder %s143, %s159
      %p161 = scmp.eq.s32.totalorder %s25, 0
      %p162 = por %p160, %p161
      %p163 = scmp.le.s32.totalorder 1, %s19
      %p164 = scmp.lt.s32.totalorder %s19, 3
      %p165 = pnand %p163, %p164
      %p166 = pneg %p165
      // Predicated region
      $region9: #{tpu_custom_call.1} parent=5 // pred_check
        _
      $region10: #{tpu_custom_call.1} parent=5 // pred_check_branch
        %168 = sbr.rel (%p165) target = $region12
      $region11: #{tpu_custom_call.1} parent=5 // pred_region
        %s169 = ssub.s32 %s19, 1
        // Predicated region
        $region13: #{tpu_custom_call.1} parent=11 // pred_check
          %p170 = pneg %p66
        $region14: #{tpu_custom_call.1} parent=11 // pred_check_branch
          %172 = sbr.rel (%p170) target = $region16
        $region15: #{tpu_custom_call.1} parent=11 // pred_region
          %s174 = ssub.s32 576, 576
          %175 = vsyncadd [#allocation7], %s174
          %s176 = sshll.u32 [#allocation6], 4
          %s177 = int_to_ptr.vmem [resolvable:$true] %s176
          %182 = dma.hbm_to_vmem [thread:$0]  %s1, 576, %s177, [#allocation7], 64, 64, 4
        $region16: #{tpu_custom_call.1} parent=11 // pred_fallthru
          _
        // Predicated region
        $region17: #{tpu_custom_call.1} parent=11 // pred_check
          %p183 = pneg %p87
        $region18: #{tpu_custom_call.1} parent=11 // pred_check_branch
          %185 = sbr.rel (%p183) target = $region20
        $region19: #{tpu_custom_call.1} parent=11 // pred_region
          %s187 = ssub.s32 16, 16
          %188 = vsyncadd [#allocation7], %s187
          %s190 = sshll.u32 [#allocation8], 4
          %s191 = int_to_ptr.vmem [resolvable:$true] %s190
          %193 = dma.hbm_to_vmem [thread:$0]  %s2, 16, %s191, [#allocation7]
        $region20: #{tpu_custom_call.1} parent=11 // pred_fallthru
          _
        // Predicated region
        $region21: #{tpu_custom_call.1} parent=11 // pred_check
          %p194 = pneg %p108
        $region22: #{tpu_custom_call.1} parent=11 // pred_check_branch
          %196 = sbr.rel (%p194) target = $region24
        $region23: #{tpu_custom_call.1} parent=11 // pred_region
          %s198 = ssub.s32 576, 576
          %199 = vsyncadd [#allocation10], %s198
          %s200 = sshll.u32 [#allocation9], 4
          %s201 = int_to_ptr.vmem [resolvable:$true] %s200
          %206 = dma.hbm_to_vmem [thread:$0]  %s3, 576, %s201, [#allocation10], 64, 64, 4
        $region24: #{tpu_custom_call.1} parent=11 // pred_fallthru
          _
        // Predicated region
        $region25: #{tpu_custom_call.1} parent=11 // pred_check
          %p207 = pneg %p129
        $region26: #{tpu_custom_call.1} parent=11 // pred_check_branch
          %209 = sbr.rel (%p207) target = $region28
        $region27: #{tpu_custom_call.1} parent=11 // pred_region
          %s211 = ssub.s32 16, 16
          %212 = vsyncadd [#allocation10], %s211
          %s214 = sshll.u32 [#allocation11], 4
          %s215 = int_to_ptr.vmem [resolvable:$true] %s214
          %217 = dma.hbm_to_vmem [thread:$0]  %s4, 16, %s215, [#allocation10]
        $region28: #{tpu_custom_call.1} parent=11 // pred_fallthru
          _
      $region12: #{tpu_custom_call.1} parent=5 // pred_fallthru
        _
      %p218 = scmp.lt.s32.totalorder %s19, 2
      // Predicated region
      $region29: #{tpu_custom_call.1} parent=5 // pred_check
        %p219 = pneg %p218
      $region30: #{tpu_custom_call.1} parent=5 // pred_check_branch
        %221 = sbr.rel (%p219) target = $region32
      $region31: #{tpu_custom_call.1} parent=5 // pred_region
        // Predicated region
        $region33: #{tpu_custom_call.1} parent=31 // pred_check
          %p222 = pneg %p39
        $region34: #{tpu_custom_call.1} parent=31 // pred_check_branch
          %224 = sbr.rel (%p222) target = $region36
        $region35: #{tpu_custom_call.1} parent=31 // pred_region
          %s225 = sand.u32 %s29, 1
          %s226 = scalar_lea.sflag [#allocation4], %s225
          %s227 = sand.u32 %s29, 1
          %s228 = smul.addr %s227, 256
          %s229 = scalar_lea.vmem [#allocation3], %s228
          %s231 = ssub.s32 4096, 4096
          %232 = vsyncadd %s226, %s231
          %s233 = smul.addr %s19, 32
          %s234 = smul.addr %s233, 128
          %s235 = scalar_lea.hbm %s0, %s234
          %s236 = sshll.u32 %s229, 4
          %s237 = int_to_ptr.vmem [resolvable:$true] %s236
          %242 = dma.hbm_to_vmem [thread:$0]  %s235, 4096, %s237, %s226, 128, 128, 8
        $region36: #{tpu_custom_call.1} parent=31 // pred_fallthru
          _
      $region32: #{tpu_custom_call.1} parent=5 // pred_fallthru
        _
      %p243 = scmp.le.s32.totalorder 1, %s19
      %p244 = scmp.lt.s32.totalorder %s19, 3
      %p245 = pnand %p243, %p244
      %p246 = pneg %p245
      // Predicated region
      $region37: #{tpu_custom_call.1} parent=5 // pred_check
        _
      $region38: #{tpu_custom_call.1} parent=5 // pred_check_branch
        %248 = sbr.rel (%p245) target = $region40
      $region39: #{tpu_custom_call.1} parent=5 // pred_region
        %s249 = ssub.s32 %s19, 1
        %s250 = sand.u32 %s32, 1
        %s251 = scalar_lea.sflag [#allocation4], %s250
        %s252 = sand.u32 %s32, 1
        %s253 = smul.addr %s252, 256
        %s254 = scalar_lea.vmem [#allocation3], %s253
        // Predicated region
        $region41: #{tpu_custom_call.1} parent=39 // pred_check
          %p255 = pneg %p45
        $region42: #{tpu_custom_call.1} parent=39 // pred_check_branch
          %257 = sbr.rel (%p255) target = $region44
        $region43: #{tpu_custom_call.1} parent=39 // pred_region
          %258 = dma.done %s251, 4096
        $region44: #{tpu_custom_call.1} parent=39 // pred_fallthru
          _
        // Predicated region
        $region45: #{tpu_custom_call.1} parent=39 // pred_check
          %p259 = pneg %p66
        $region46: #{tpu_custom_call.1} parent=39 // pred_check_branch
          %261 = sbr.rel (%p259) target = $region48
        $region47: #{tpu_custom_call.1} parent=39 // pred_region
          %262 = dma.done [#allocation7], 576
        $region48: #{tpu_custom_call.1} parent=39 // pred_fallthru
          _
        // Predicated region
        $region49: #{tpu_custom_call.1} parent=39 // pred_check
          %p263 = pneg %p87
        $region50: #{tpu_custom_call.1} parent=39 // pred_check_branch
          %265 = sbr.rel (%p263) target = $region52
        $region51: #{tpu_custom_call.1} parent=39 // pred_region
          %266 = dma.done [#allocation7], 16
        $region52: #{tpu_custom_call.1} parent=39 // pred_fallthru
          _
        // Predicated region
        $region53: #{tpu_custom_call.1} parent=39 // pred_check
          %p267 = pneg %p108
        $region54: #{tpu_custom_call.1} parent=39 // pred_check_branch
          %269 = sbr.rel (%p267) target = $region56
        $region55: #{tpu_custom_call.1} parent=39 // pred_region
          %270 = dma.done [#allocation10], 576
        $region56: #{tpu_custom_call.1} parent=39 // pred_fallthru
          _
        // Predicated region
        $region57: #{tpu_custom_call.1} parent=39 // pred_check
          %p271 = pneg %p129
        $region58: #{tpu_custom_call.1} parent=39 // pred_check_branch
          %273 = sbr.rel (%p271) target = $region60
        $region59: #{tpu_custom_call.1} parent=39 // pred_region
          %274 = dma.done [#allocation10], 16
        $region60: #{tpu_custom_call.1} parent=39 // pred_fallthru
          _
        %s275 = sand.u32 %s32, 1
        %s276 = scalar_lea.sflag [#allocation4], %s275
        %s277 = sand.u32 %s32, 1
        %s278 = smul.addr %s277, 256
        %s279 = scalar_lea.vmem [#allocation3], %s278
        %p280 = pneg %p45
        %p281 = pneg %p42
        %p282 = pneg %p66
        %p283 = pneg %p63
        %p284 = pneg %p87
        %p285 = pneg %p84
        %p286 = pneg %p108
        %p287 = pneg %p105
        %p288 = pneg %p129
        %p289 = pneg %p126
        %p290 = pneg %p155
        %p291 = pneg %p152
        %s292 = sand.u32 %s142, 1
        %s293 = scalar_lea.sflag [#allocation5], %s292
        %s294 = sand.u32 %s142, 1
        %s295 = smul.addr %s294, 256
        %s296 = scalar_lea.vmem [#allocation12], %s295
        %v297 = vld [vmem:[%s254] sm:$0xff]
        %v298 = vld [vmem:[%s254 + $0x8] sm:$0xff]
        %v299 = vld [vmem:[%s254 + $0x10] sm:$0xff]
        %v300 = vld [vmem:[%s254 + $0x18] sm:$0xff]
        %v301 = vld [vmem:[%s254 + $0x20] sm:$0xff]
        %v302 = vld [vmem:[%s254 + $0x28] sm:$0xff]
        %v303 = vld [vmem:[%s254 + $0x30] sm:$0xff]
        %v304 = vld [vmem:[%s254 + $0x38] sm:$0xff]
        %v305 = vld [vmem:[%s254 + $0x40] sm:$0xff]
        %v306 = vld [vmem:[%s254 + $0x48] sm:$0xff]
        %v307 = vld [vmem:[%s254 + $0x50] sm:$0xff]
        %v308 = vld [vmem:[%s254 + $0x58] sm:$0xff]
        %v309 = vld [vmem:[%s254 + $0x60] sm:$0xff]
        %v310 = vld [vmem:[%s254 + $0x68] sm:$0xff]
        %v311 = vld [vmem:[%s254 + $0x70] sm:$0xff]
        %v312 = vld [vmem:[%s254 + $0x78] sm:$0xff]
        %v313 = vld [vmem:[%s254 + $0x80] sm:$0xff]
        %v314 = vld [vmem:[%s254 + $0x88] sm:$0xff]
        %v315 = vld [vmem:[%s254 + $0x90] sm:$0xff]
        %v316 = vld [vmem:[%s254 + $0x98] sm:$0xff]
        %v317 = vld [vmem:[%s254 + $0xa0] sm:$0xff]
        %v318 = vld [vmem:[%s254 + $0xa8] sm:$0xff]
        %v319 = vld [vmem:[%s254 + $0xb0] sm:$0xff]
        %v320 = vld [vmem:[%s254 + $0xb8] sm:$0xff]
        %v321 = vld [vmem:[%s254 + $0xc0] sm:$0xff]
        %v322 = vld [vmem:[%s254 + $0xc8] sm:$0xff]
        %v323 = vld [vmem:[%s254 + $0xd0] sm:$0xff]
        %v324 = vld [vmem:[%s254 + $0xd8] sm:$0xff]
        %v325 = vld [vmem:[%s254 + $0xe0] sm:$0xff]
        %v326 = vld [vmem:[%s254 + $0xe8] sm:$0xff]
        %v327 = vld [vmem:[%s254 + $0xf0] sm:$0xff]
        %v328 = vld [vmem:[%s254 + $0xf8] sm:$0xff]
        %s329 = scalar_lea.vmem [#allocation2], 24
        %vm330 = vcmask 31744
        %331 = vst.msk [vmem:[%s329 + $0x1] sm:$0xff] %vm330, %v297
        %332 = vst.msk [vmem:[%s329 + $0x9] sm:$0xff] %vm330, %v298
        %333 = vst.msk [vmem:[%s329 + $0x19] sm:$0xff] %vm330, %v299
        %334 = vst.msk [vmem:[%s329 + $0x21] sm:$0xff] %vm330, %v300
        %335 = vst.msk [vmem:[%s329 + $0x31] sm:$0xff] %vm330, %v301
        %336 = vst.msk [vmem:[%s329 + $0x39] sm:$0xff] %vm330, %v302
        %337 = vst.msk [vmem:[%s329 + $0x49] sm:$0xff] %vm330, %v303
        %338 = vst.msk [vmem:[%s329 + $0x51] sm:$0xff] %vm330, %v304
        %339 = vst.msk [vmem:[%s329 + $0x61] sm:$0xff] %vm330, %v305
        %340 = vst.msk [vmem:[%s329 + $0x69] sm:$0xff] %vm330, %v306
        %341 = vst.msk [vmem:[%s329 + $0x79] sm:$0xff] %vm330, %v307
        %342 = vst.msk [vmem:[%s329 + $0x81] sm:$0xff] %vm330, %v308
        %343 = vst.msk [vmem:[%s329 + $0x91] sm:$0xff] %vm330, %v309
        %344 = vst.msk [vmem:[%s329 + $0x99] sm:$0xff] %vm330, %v310
        %345 = vst.msk [vmem:[%s329 + $0xa9] sm:$0xff] %vm330, %v311
        %346 = vst.msk [vmem:[%s329 + $0xb1] sm:$0xff] %vm330, %v312
        %347 = vst.msk [vmem:[%s329 + $0xc1] sm:$0xff] %vm330, %v313
        %348 = vst.msk [vmem:[%s329 + $0xc9] sm:$0xff] %vm330, %v314
        %349 = vst.msk [vmem:[%s329 + $0xd9] sm:$0xff] %vm330, %v315
        %350 = vst.msk [vmem:[%s329 + $0xe1] sm:$0xff] %vm330, %v316
        %351 = vst.msk [vmem:[%s329 + $0xf1] sm:$0xff] %vm330, %v317
        %352 = vst.msk [vmem:[%s329 + $0xf9] sm:$0xff] %vm330, %v318
        %353 = vst.msk [vmem:[%s329 + $0x109] sm:$0xff] %vm330, %v319
        %354 = vst.msk [vmem:[%s329 + $0x111] sm:$0xff] %vm330, %v320
        %355 = vst.msk [vmem:[%s329 + $0x121] sm:$0xff] %vm330, %v321
        %356 = vst.msk [vmem:[%s329 + $0x129] sm:$0xff] %vm330, %v322
        %357 = vst.msk [vmem:[%s329 + $0x139] sm:$0xff] %vm330, %v323
        %358 = vst.msk [vmem:[%s329 + $0x141] sm:$0xff] %vm330, %v324
        %359 = vst.msk [vmem:[%s329 + $0x151] sm:$0xff] %vm330, %v325
        %360 = vst.msk [vmem:[%s329 + $0x159] sm:$0xff] %vm330, %v326
        %361 = vst.msk [vmem:[%s329 + $0x169] sm:$0xff] %vm330, %v327
        %362 = vst.msk [vmem:[%s329 + $0x171] sm:$0xff] %vm330, %v328
        %363 = vst.msk [vmem:[#allocation2 + $0x1] sm:$0xff] %vm330, %v299
        %364 = vst.msk [vmem:[#allocation2 + $0x9] sm:$0xff] %vm330, %v300
        %s365 = scalar_lea.vmem [#allocation2], 408
        %366 = vst.msk [vmem:[%s365 + $0x1] sm:$0xff] %vm330, %v325
        %367 = vst.msk [vmem:[%s365 + $0x9] sm:$0xff] %vm330, %v326
        %v368 = vld [vmem:[#allocation2 + $0x2] sm:$0x1]
        %v369 = vld [vmem:[#allocation2 + $0x1a] sm:$0x1]
        %v370 = vld [vmem:[#allocation2 + $0x32] sm:$0x1]
        %v371 = vld [vmem:[#allocation2 + $0x4a] sm:$0x1]
        %v372 = vld [vmem:[#allocation2 + $0x62] sm:$0x1]
        %v373 = vld [vmem:[#allocation2 + $0x7a] sm:$0x1]
        %v374 = vld [vmem:[#allocation2 + $0x92] sm:$0x1]
        %v375 = vld [vmem:[#allocation2 + $0xaa] sm:$0x1]
        %v376 = vld [vmem:[#allocation2 + $0xc2] sm:$0x1]
        %v377 = vld [vmem:[#allocation2 + $0xda] sm:$0x1]
        %v378 = vld [vmem:[#allocation2 + $0xf2] sm:$0x1]
        %v379 = vld [vmem:[#allocation2 + $0x10a] sm:$0x1]
        %v380 = vld [vmem:[#allocation2 + $0x122] sm:$0x1]
        %v381 = vld [vmem:[#allocation2 + $0x13a] sm:$0x1]
        %v382 = vld [vmem:[#allocation2 + $0x152] sm:$0x1]
        %v383 = vld [vmem:[#allocation2 + $0x16a] sm:$0x1]
        %v384 = vld [vmem:[#allocation2 + $0x182] sm:$0x1]
        %v385 = vld [vmem:[#allocation2 + $0x19a] sm:$0x1]
        %vm386 = vcmask 24576
        %387 = vst.msk [vmem:[#allocation2] sm:$0x1] %vm386, %v368
        %388 = vst.msk [vmem:[#allocation2 + $0x18] sm:$0x1] %vm386, %v369
        %389 = vst.msk [vmem:[#allocation2 + $0x30] sm:$0x1] %vm386, %v370
        %390 = vst.msk [vmem:[#allocation2 + $0x48] sm:$0x1] %vm386, %v371
        %391 = vst.msk [vmem:[#allocation2 + $0x60] sm:$0x1] %vm386, %v372
        %392 = vst.msk [vmem:[#allocation2 + $0x78] sm:$0x1] %vm386, %v373
        %393 = vst.msk [vmem:[#allocation2 + $0x90] sm:$0x1] %vm386, %v374
        %394 = vst.msk [vmem:[#allocation2 + $0xa8] sm:$0x1] %vm386, %v375
        %395 = vst.msk [vmem:[#allocation2 + $0xc0] sm:$0x1] %vm386, %v376
        %396 = vst.msk [vmem:[#allocation2 + $0xd8] sm:$0x1] %vm386, %v377
        %397 = vst.msk [vmem:[#allocation2 + $0xf0] sm:$0x1] %vm386, %v378
        %398 = vst.msk [vmem:[#allocation2 + $0x108] sm:$0x1] %vm386, %v379
        %399 = vst.msk [vmem:[#allocation2 + $0x120] sm:$0x1] %vm386, %v380
        %400 = vst.msk [vmem:[#allocation2 + $0x138] sm:$0x1] %vm386, %v381
        %401 = vst.msk [vmem:[#allocation2 + $0x150] sm:$0x1] %vm386, %v382
        %402 = vst.msk [vmem:[#allocation2 + $0x168] sm:$0x1] %vm386, %v383
        %403 = vst.msk [vmem:[#allocation2 + $0x180] sm:$0x1] %vm386, %v384
        %404 = vst.msk [vmem:[#allocation2 + $0x198] sm:$0x1] %vm386, %v385
        %v405 = vld [vmem:[#allocation2 + $0xf] sm:$0x1]
        %v406 = vld [vmem:[#allocation2 + $0x27] sm:$0x1]
        %v407 = vld [vmem:[#allocation2 + $0x3f] sm:$0x1]
        %v408 = vld [vmem:[#allocation2 + $0x57] sm:$0x1]
        %v409 = vld [vmem:[#allocation2 + $0x6f] sm:$0x1]
        %v410 = vld [vmem:[#allocation2 + $0x87] sm:$0x1]
        %v411 = vld [vmem:[#allocation2 + $0x9f] sm:$0x1]
        %v412 = vld [vmem:[#allocation2 + $0xb7] sm:$0x1]
        %v413 = vld [vmem:[#allocation2 + $0xcf] sm:$0x1]
        %v414 = vld [vmem:[#allocation2 + $0xe7] sm:$0x1]
        %v415 = vld [vmem:[#allocation2 + $0xff] sm:$0x1]
        %v416 = vld [vmem:[#allocation2 + $0x117] sm:$0x1]
        %v417 = vld [vmem:[#allocation2 + $0x12f] sm:$0x1]
        %v418 = vld [vmem:[#allocation2 + $0x147] sm:$0x1]
        %v419 = vld [vmem:[#allocation2 + $0x15f] sm:$0x1]
        %v420 = vld [vmem:[#allocation2 + $0x177] sm:$0x1]
        %v421 = vld [vmem:[#allocation2 + $0x18f] sm:$0x1]
        %v422 = vld [vmem:[#allocation2 + $0x1a7] sm:$0x1]
        %423 = vst.msk [vmem:[#allocation2 + $0x11] sm:$0x1] %vm386, %v405
        %424 = vst.msk [vmem:[#allocation2 + $0x29] sm:$0x1] %vm386, %v406
        %425 = vst.msk [vmem:[#allocation2 + $0x41] sm:$0x1] %vm386, %v407
        %426 = vst.msk [vmem:[#allocation2 + $0x59] sm:$0x1] %vm386, %v408
        %427 = vst.msk [vmem:[#allocation2 + $0x71] sm:$0x1] %vm386, %v409
        %428 = vst.msk [vmem:[#allocation2 + $0x89] sm:$0x1] %vm386, %v410
        %429 = vst.msk [vmem:[#allocation2 + $0xa1] sm:$0x1] %vm386, %v411
        %430 = vst.msk [vmem:[#allocation2 + $0xb9] sm:$0x1] %vm386, %v412
        %431 = vst.msk [vmem:[#allocation2 + $0xd1] sm:$0x1] %vm386, %v413
        %432 = vst.msk [vmem:[#allocation2 + $0xe9] sm:$0x1] %vm386, %v414
        %433 = vst.msk [vmem:[#allocation2 + $0x101] sm:$0x1] %vm386, %v415
        %434 = vst.msk [vmem:[#allocation2 + $0x119] sm:$0x1] %vm386, %v416
        %435 = vst.msk [vmem:[#allocation2 + $0x131] sm:$0x1] %vm386, %v417
        %436 = vst.msk [vmem:[#allocation2 + $0x149] sm:$0x1] %vm386, %v418
        %437 = vst.msk [vmem:[#allocation2 + $0x161] sm:$0x1] %vm386, %v419
        %438 = vst.msk [vmem:[#allocation2 + $0x179] sm:$0x1] %vm386, %v420
        %439 = vst.msk [vmem:[#allocation2 + $0x191] sm:$0x1] %vm386, %v421
        %440 = vst.msk [vmem:[#allocation2 + $0x1a9] sm:$0x1] %vm386, %v422
        %v441 = vld [vmem:[#allocation8] sm:$0x1]
        %v443 = vlaneseq
        %v444 = vshrl.u32 %v443, 7
        %v445 = vsub.s32 0, %v444
        %v446 = vrot.slane %v441, %v445
        %v448 = vadd.f32 %v446, 0.0
        %v449 = vld [vmem:[#allocation2] sm:$0xff]
        %v450 = vld [vmem:[#allocation2 + $0x8] sm:$0xff]
        %v451 = vld [vmem:[#allocation2 + $0x18] sm:$0xff]
        %v452 = vld [vmem:[#allocation2 + $0x20] sm:$0xff]
        %v453 = vld [vmem:[#allocation2 + $0x30] sm:$0xff]
        %v454 = vld [vmem:[#allocation2 + $0x38] sm:$0xff]
        %v455 = vld [vmem:[#allocation2 + $0x48] sm:$0xff]
        %v456 = vld [vmem:[#allocation2 + $0x50] sm:$0xff]
        %v457 = vld [vmem:[#allocation2 + $0x60] sm:$0xff]
        %v458 = vld [vmem:[#allocation2 + $0x68] sm:$0xff]
        %v459 = vld [vmem:[#allocation2 + $0x78] sm:$0xff]
        %v460 = vld [vmem:[#allocation2 + $0x80] sm:$0xff]
        %v461 = vld [vmem:[#allocation2 + $0x90] sm:$0xff]
        %v462 = vld [vmem:[#allocation2 + $0x98] sm:$0xff]
        %v463 = vld [vmem:[#allocation2 + $0xa8] sm:$0xff]
        %v464 = vld [vmem:[#allocation2 + $0xb0] sm:$0xff]
        %v465 = vld [vmem:[#allocation2 + $0xc0] sm:$0xff]
        %v466 = vld [vmem:[#allocation2 + $0xc8] sm:$0xff]
        %v467 = vld [vmem:[#allocation2 + $0xd8] sm:$0xff]
        %v468 = vld [vmem:[#allocation2 + $0xe0] sm:$0xff]
        %v469 = vld [vmem:[#allocation2 + $0xf0] sm:$0xff]
        %v470 = vld [vmem:[#allocation2 + $0xf8] sm:$0xff]
        %v471 = vld [vmem:[#allocation2 + $0x108] sm:$0xff]
        %v472 = vld [vmem:[#allocation2 + $0x110] sm:$0xff]
        %v473 = vld [vmem:[#allocation2 + $0x120] sm:$0xff]
        %v474 = vld [vmem:[#allocation2 + $0x128] sm:$0xff]
        %v475 = vld [vmem:[#allocation2 + $0x138] sm:$0xff]
        %v476 = vld [vmem:[#allocation2 + $0x140] sm:$0xff]
        %v477 = vld [vmem:[#allocation2 + $0x150] sm:$0xff]
        %v478 = vld [vmem:[#allocation2 + $0x158] sm:$0xff]
        %v479 = vld [vmem:[#allocation2 + $0x168] sm:$0xff]
        %v480 = vld [vmem:[#allocation2 + $0x170] sm:$0xff]
        %v481 = vld [vmem:[#allocation6] sm:$0xf]
        %v483 = vsel %vm330, %v449, 0
        %v486 = vsel %vm330, %v450, 0
        %v489 = vsel %vm330, %v451, 0
        %v492 = vsel %vm330, %v452, 0
        %v495 = vsel %vm330, %v453, 0
        %v498 = vsel %vm330, %v454, 0
        %v501 = vsel %vm330, %v455, 0
        %v504 = vsel %vm330, %v456, 0
        %v507 = vsel %vm330, %v457, 0
        %v510 = vsel %vm330, %v458, 0
        %v513 = vsel %vm330, %v459, 0
        %v516 = vsel %vm330, %v460, 0
        %v519 = vsel %vm330, %v461, 0
        %v522 = vsel %vm330, %v462, 0
        %v525 = vsel %vm330, %v463, 0
        %v528 = vsel %vm330, %v464, 0
        %v531 = vsel %vm330, %v465, 0
        %v534 = vsel %vm330, %v466, 0
        %v537 = vsel %vm330, %v467, 0
        %v540 = vsel %vm330, %v468, 0
        %v543 = vsel %vm330, %v469, 0
        %v546 = vsel %vm330, %v470, 0
        %v549 = vsel %vm330, %v471, 0
        %v552 = vsel %vm330, %v472, 0
        %v555 = vsel %vm330, %v473, 0
        %v558 = vsel %vm330, %v474, 0
        %v561 = vsel %vm330, %v475, 0
        %v564 = vsel %vm330, %v476, 0
        %v567 = vsel %vm330, %v477, 0
        %v570 = vsel %vm330, %v478, 0
        %v573 = vsel %vm330, %v479, 0
        %v576 = vsel %vm330, %v480, 0
        %vm578 = vcmask 1043456
        %v580 = vsel %vm578, %v481, 0
        %582 = vmatprep.subr.mxu0 0.0
        %583 = vmatpush1.msra.mxu0 %v580
        %584 = vmatprep.subr.mxu0 0.0
        %585 = vmatpush1.msra.mxu0 0.0
        %586 = vmatprep.subr.mxu0 0.0
        %587 = vmatpush1.msra.mxu0 0.0
        %588 = vmatprep.subr.mxu0 0.0
        %589 = vmatpush1.msra.mxu0 0.0
        %590 = vmatprep.subr.mxu0 0.0
        %591 = vmatpush1.msra.mxu0 0.0
        %592 = vmatprep.subr.mxu0 0.0
        %593 = vmatpush1.msra.mxu0 0.0
        %594 = vmatprep.subr.mxu0 0.0
        %595 = vmatpush1.msra.mxu0 0.0
        %596 = vmatprep.subr.mxu0 0.0
        %597 = vmatpush1.msra.mxu0 0.0
        %598 = vmatprep.subr.mxu0 0.0
        %599 = vmatpush1.msra.mxu0 0.0
        %600 = vmatprep.subr.mxu0 0.0
        %601 = vmatpush1.msra.mxu0 0.0
        %602 = vmatprep.subr.mxu0 0.0
        %603 = vmatpush1.msra.mxu0 0.0
        %604 = vmatprep.subr.mxu0 0.0
        %605 = vmatpush1.msra.mxu0 0.0
        %606 = vmatprep.subr.mxu0 0.0
        %607 = vmatpush1.msra.mxu0 0.0
        %608 = vmatprep.subr.mxu0 0.0
        %609 = vmatpush1.msra.mxu0 0.0
        %610 = vmatprep.subr.mxu0 0.0
        %611 = vmatpush1.msra.mxu0 0.0
        %612 = vmatprep.subr.mxu0 0.0
        %613 = vmatpush1.msra.mxu0 0.0
        %614 = vmatprep.subr.mxu0 0.0
        %615 = vmatpush1.msra.mxu0 0.0
        %616 = vmatprep.subr.mxu0 0.0
        %617 = vmatpush1.msra.mxu0 0.0
        %618 = vmatprep.subr.mxu0 0.0
        %619 = vmatpush1.msra.mxu0 0.0
        %620 = vmatprep.subr.mxu0 0.0
        %621 = vmatpush1.msra.mxu0 0.0
        %622 = vmatprep.subr.mxu0 0.0
        %623 = vmatpush1.msra.mxu0 0.0
        %624 = vmatprep.subr.mxu0 0.0
        %625 = vmatpush1.msra.mxu0 0.0
        %626 = vmatprep.subr.mxu0 0.0
        %627 = vmatpush1.msra.mxu0 0.0
        %628 = vmatprep.subr.mxu0 0.0
        %629 = vmatpush1.msra.mxu0 0.0
        %630 = vmatprep.subr.mxu0 0.0
        %631 = vmatpush1.msra.mxu0 0.0
        %632 = vmatprep.subr.mxu0 0.0
        %633 = vmatpush1.msra.mxu0 0.0
        %634 = vmatprep.subr.mxu0 0.0
        %635 = vmatpush1.msra.mxu0 0.0
        %636 = vmatprep.subr.mxu0 0.0
        %637 = vmatpush1.msra.mxu0 0.0
        %638 = vmatprep.subr.mxu0 0.0
        %639 = vmatpush1.msra.mxu0 0.0
        %640 = vmatprep.subr.mxu0 0.0
        %641 = vmatpush1.msra.mxu0 0.0
        %642 = vmatprep.subr.mxu0 0.0
        %643 = vmatpush1.msra.mxu0 0.0
        %644 = vmatprep.subr.mxu0 0.0
        %645 = vmatpush1.msra.mxu0 0.0
        %646 = vmatprep.mubr.f32.mxu0 0.0
        %647 = vmatmul.mubr.f32.gmra.mrb[0].mxu0 %v483
        %v648 = vpop.f32.mrb[0].mxu0
        %v649 = vadd.f32 0.0, %v648
        %v650 = vpop.f32.mrb[0].mxu0
        %651 = vmatprep.mubr.f32.mxu0 0.0
        %652 = vmatmul.mubr.f32.gmra.mrb[0].mxu0 %v486
        %v653 = vpop.f32.mrb[0].mxu0
        %v654 = vadd.f32 0.0, %v653
        %v655 = vpop.f32.mrb[0].mxu0
        %656 = vmatprep.mubr.f32.mxu0 0.0
        %657 = vmatmul.mubr.f32.gmra.mrb[0].mxu0 %v489
        %v658 = vpop.f32.mrb[0].mxu0
        %v659 = vadd.f32 0.0, %v658
        %v660 = vpop.f32.mrb[0].mxu0
        %661 = vmatprep.mubr.f32.mxu0 0.0
        %662 = vmatmul.mubr.f32.gmra.mrb[0].mxu0 %v492
        %v663 = vpop.f32.mrb[0].mxu0
        %v664 = vadd.f32 0.0, %v663
        %v665 = vpop.f32.mrb[0].mxu0
        %666 = vmatprep.mubr.f32.mxu0 0.0
        %667 = vmatmul.mubr.f32.gmra.mrb[0].mxu0 %v495
        %v668 = vpop.f32.mrb[0].mxu0
        %v669 = vadd.f32 0.0, %v668
        %v670 = vpop.f32.mrb[0].mxu0
        %671 = vmatprep.mubr.f32.mxu0 0.0
        %672 = vmatmul.mubr.f32.gmra.mrb[0].mxu0 %v498
        %v673 = vpop.f32.mrb[0].mxu0
        %v674 = vadd.f32 0.0, %v673
        %v675 = vpop.f32.mrb[0].mxu0
        %676 = vmatprep.mubr.f32.mxu0 0.0
        %677 = vmatmul.mubr.f32.gmra.mrb[0].mxu0 %v501
        %v678 = vpop.f32.mrb[0].mxu0
        %v679 = vadd.f32 0.0, %v678
        %v680 = vpop.f32.mrb[0].mxu0
        %681 = vmatprep.mubr.f32.mxu0 0.0
        %682 = vmatmul.mubr.f32.gmra.mrb[0].mxu0 %v504
        %v683 = vpop.f32.mrb[0].mxu0
        %v684 = vadd.f32 0.0, %v683
        %v685 = vpop.f32.mrb[0].mxu0
        %686 = vmatprep.mubr.f32.mxu0 0.0
        %687 = vmatmul.mubr.f32.gmra.mrb[0].mxu0 %v507
        %v688 = vpop.f32.mrb[0].mxu0
        %v689 = vadd.f32 0.0, %v688
        %v690 = vpop.f32.mrb[0].mxu0
        %691 = vmatprep.mubr.f32.mxu0 0.0
        %692 = vmatmul.mubr.f32.gmra.mrb[0].mxu0 %v510
        %v693 = vpop.f32.mrb[0].mxu0
        %v694 = vadd.f32 0.0, %v693
        %v695 = vpop.f32.mrb[0].mxu0
        %696 = vmatprep.mubr.f32.mxu0 0.0
        %697 = vmatmul.mubr.f32.gmra.mrb[0].mxu0 %v513
        %v698 = vpop.f32.mrb[0].mxu0
        %v699 = vadd.f32 0.0, %v698
        %v700 = vpop.f32.mrb[0].mxu0
        %701 = vmatprep.mubr.f32.mxu0 0.0
        %702 = vmatmul.mubr.f32.gmra.mrb[0].mxu0 %v516
        %v703 = vpop.f32.mrb[0].mxu0
        %v704 = vadd.f32 0.0, %v703
        %v705 = vpop.f32.mrb[0].mxu0
        %706 = vmatprep.mubr.f32.mxu0 0.0
        %707 = vmatmul.mubr.f32.gmra.mrb[0].mxu0 %v519
        %v708 = vpop.f32.mrb[0].mxu0
        %v709 = vadd.f32 0.0, %v708
        %v710 = vpop.f32.mrb[0].mxu0
        %711 = vmatprep.mubr.f32.mxu0 0.0
        %712 = vmatmul.mubr.f32.gmra.mrb[0].mxu0 %v522
        %v713 = vpop.f32.mrb[0].mxu0
        %v714 = vadd.f32 0.0, %v713
        %v715 = vpop.f32.mrb[0].mxu0
        %716 = vmatprep.mubr.f32.mxu0 0.0
        %717 = vmatmul.mubr.f32.gmra.mrb[0].mxu0 %v525
        %v718 = vpop.f32.mrb[0].mxu0
        %v719 = vadd.f32 0.0, %v718
        %v720 = vpop.f32.mrb[0].mxu0
        %721 = vmatprep.mubr.f32.mxu0 0.0
        %722 = vmatmul.mubr.f32.gmra.mrb[0].mxu0 %v528
        %v723 = vpop.f32.mrb[0].mxu0
        %v724 = vadd.f32 0.0, %v723
        %v725 = vpop.f32.mrb[0].mxu0
        %726 = vmatprep.mubr.f32.mxu0 0.0
        %727 = vmatmul.mubr.f32.gmra.mrb[0].mxu0 %v531
        %v728 = vpop.f32.mrb[0].mxu0
        %v729 = vadd.f32 0.0, %v728
        %v730 = vpop.f32.mrb[0].mxu0
        %731 = vmatprep.mubr.f32.mxu0 0.0
        %732 = vmatmul.mubr.f32.gmra.mrb[0].mxu0 %v534
        %v733 = vpop.f32.mrb[0].mxu0
        %v734 = vadd.f32 0.0, %v733
        %v735 = vpop.f32.mrb[0].mxu0
        %736 = vmatprep.mubr.f32.mxu0 0.0
        %737 = vmatmul.mubr.f32.gmra.mrb[0].mxu0 %v537
        %v738 = vpop.f32.mrb[0].mxu0
        %v739 = vadd.f32 0.0, %v738
        %v740 = vpop.f32.mrb[0].mxu0
        %741 = vmatprep.mubr.f32.mxu0 0.0
        %742 = vmatmul.mubr.f32.gmra.mrb[0].mxu0 %v540
        %v743 = vpop.f32.mrb[0].mxu0
        %v744 = vadd.f32 0.0, %v743
        %v745 = vpop.f32.mrb[0].mxu0
        %746 = vmatprep.mubr.f32.mxu0 0.0
        %747 = vmatmul.mubr.f32.gmra.mrb[0].mxu0 %v543
        %v748 = vpop.f32.mrb[0].mxu0
        %v749 = vadd.f32 0.0, %v748
        %v750 = vpop.f32.mrb[0].mxu0
        %751 = vmatprep.mubr.f32.mxu0 0.0
        %752 = vmatmul.mubr.f32.gmra.mrb[0].mxu0 %v546
        %v753 = vpop.f32.mrb[0].mxu0
        %v754 = vadd.f32 0.0, %v753
        %v755 = vpop.f32.mrb[0].mxu0
        %756 = vmatprep.mubr.f32.mxu0 0.0
        %757 = vmatmul.mubr.f32.gmra.mrb[0].mxu0 %v549
        %v758 = vpop.f32.mrb[0].mxu0
        %v759 = vadd.f32 0.0, %v758
        %v760 = vpop.f32.mrb[0].mxu0
        %761 = vmatprep.mubr.f32.mxu0 0.0
        %762 = vmatmul.mubr.f32.gmra.mrb[0].mxu0 %v552
        %v763 = vpop.f32.mrb[0].mxu0
        %v764 = vadd.f32 0.0, %v763
        %v765 = vpop.f32.mrb[0].mxu0
        %766 = vmatprep.mubr.f32.mxu0 0.0
        %767 = vmatmul.mubr.f32.gmra.mrb[0].mxu0 %v555
        %v768 = vpop.f32.mrb[0].mxu0
        %v769 = vadd.f32 0.0, %v768
        %v770 = vpop.f32.mrb[0].mxu0
        %771 = vmatprep.mubr.f32.mxu0 0.0
        %772 = vmatmul.mubr.f32.gmra.mrb[0].mxu0 %v558
        %v773 = vpop.f32.mrb[0].mxu0
        %v774 = vadd.f32 0.0, %v773
        %v775 = vpop.f32.mrb[0].mxu0
        %776 = vmatprep.mubr.f32.mxu0 0.0
        %777 = vmatmul.mubr.f32.gmra.mrb[0].mxu0 %v561
        %v778 = vpop.f32.mrb[0].mxu0
        %v779 = vadd.f32 0.0, %v778
        %v780 = vpop.f32.mrb[0].mxu0
        %781 = vmatprep.mubr.f32.mxu0 0.0
        %782 = vmatmul.mubr.f32.gmra.mrb[0].mxu0 %v564
        %v783 = vpop.f32.mrb[0].mxu0
        %v784 = vadd.f32 0.0, %v783
        %v785 = vpop.f32.mrb[0].mxu0
        %786 = vmatprep.mubr.f32.mxu0 0.0
        %787 = vmatmul.mubr.f32.gmra.mrb[0].mxu0 %v567
        %v788 = vpop.f32.mrb[0].mxu0
        %v789 = vadd.f32 0.0, %v788
        %v790 = vpop.f32.mrb[0].mxu0
        %791 = vmatprep.mubr.f32.mxu0 0.0
        %792 = vmatmul.mubr.f32.gmra.mrb[0].mxu0 %v570
        %v793 = vpop.f32.mrb[0].mxu0
        %v794 = vadd.f32 0.0, %v793
        %v795 = vpop.f32.mrb[0].mxu0
        %796 = vmatprep.mubr.f32.mxu0 0.0
        %797 = vmatmul.mubr.f32.gmra.mrb[0].mxu0 %v573
        %v798 = vpop.f32.mrb[0].mxu0
        %v799 = vadd.f32 0.0, %v798
        %v800 = vpop.f32.mrb[0].mxu0
        %801 = vmatprep.mubr.f32.mxu0 0.0
        %802 = vmatmul.mubr.f32.gmra.mrb[0].mxu0 %v576
        %v803 = vpop.f32.mrb[0].mxu0
        %v804 = vadd.f32 0.0, %v803
        %v805 = vpop.f32.mrb[0].mxu0
        %806 = vdwg.mxu0
        %v807 = vadd.f32 %v448, %v649
        %v808 = vadd.f32 %v448, %v654
        %v809 = vadd.f32 %v448, %v659
        %v810 = vadd.f32 %v448, %v664
        %v811 = vadd.f32 %v448, %v669
        %v812 = vadd.f32 %v448, %v674
        %v813 = vadd.f32 %v448, %v679
        %v814 = vadd.f32 %v448, %v684
        %v815 = vadd.f32 %v448, %v689
        %v816 = vadd.f32 %v448, %v694
        %v817 = vadd.f32 %v448, %v699
        %v818 = vadd.f32 %v448, %v704
        %v819 = vadd.f32 %v448, %v709
        %v820 = vadd.f32 %v448, %v714
        %v821 = vadd.f32 %v448, %v719
        %v822 = vadd.f32 %v448, %v724
        %v823 = vadd.f32 %v448, %v729
        %v824 = vadd.f32 %v448, %v734
        %v825 = vadd.f32 %v448, %v739
        %v826 = vadd.f32 %v448, %v744
        %v827 = vadd.f32 %v448, %v749
        %v828 = vadd.f32 %v448, %v754
        %v829 = vadd.f32 %v448, %v759
        %v830 = vadd.f32 %v448, %v764
        %v831 = vadd.f32 %v448, %v769
        %v832 = vadd.f32 %v448, %v774
        %v833 = vadd.f32 %v448, %v779
        %v834 = vadd.f32 %v448, %v784
        %v835 = vadd.f32 %v448, %v789
        %v836 = vadd.f32 %v448, %v794
        %v837 = vadd.f32 %v448, %v799
        %v838 = vadd.f32 %v448, %v804
        %v839 = vld [vmem:[#allocation2 + $0x1] sm:$0xff]
        %v840 = vld [vmem:[#allocation2 + $0x9] sm:$0xff]
        %v841 = vld [vmem:[#allocation2 + $0x19] sm:$0xff]
        %v842 = vld [vmem:[#allocation2 + $0x21] sm:$0xff]
        %v843 = vld [vmem:[#allocation2 + $0x31] sm:$0xff]
        %v844 = vld [vmem:[#allocation2 + $0x39] sm:$0xff]
        %v845 = vld [vmem:[#allocation2 + $0x49] sm:$0xff]
        %v846 = vld [vmem:[#allocation2 + $0x51] sm:$0xff]
        %v847 = vld [vmem:[#allocation2 + $0x61] sm:$0xff]
        %v848 = vld [vmem:[#allocation2 + $0x69] sm:$0xff]
        %v849 = vld [vmem:[#allocation2 + $0x79] sm:$0xff]
        %v850 = vld [vmem:[#allocation2 + $0x81] sm:$0xff]
        %v851 = vld [vmem:[#allocation2 + $0x91] sm:$0xff]
        %v852 = vld [vmem:[#allocation2 + $0x99] sm:$0xff]
        %v853 = vld [vmem:[#allocation2 + $0xa9] sm:$0xff]
        %v854 = vld [vmem:[#allocation2 + $0xb1] sm:$0xff]
        %v855 = vld [vmem:[#allocation2 + $0xc1] sm:$0xff]
        %v856 = vld [vmem:[#allocation2 + $0xc9] sm:$0xff]
        %v857 = vld [vmem:[#allocation2 + $0xd9] sm:$0xff]
        %v858 = vld [vmem:[#allocation2 + $0xe1] sm:$0xff]
        %v859 = vld [vmem:[#allocation2 + $0xf1] sm:$0xff]
        %v860 = vld [vmem:[#allocation2 + $0xf9] sm:$0xff]
        %v861 = vld [vmem:[#allocation2 + $0x109] sm:$0xff]
        %v862 = vld [vmem:[#allocation2 + $0x111] sm:$0xff]
        %v863 = vld [vmem:[#allocation2 + $0x121] sm:$0xff]
        %v864 = vld [vmem:[#allocation2 + $0x129] sm:$0xff]
        %v865 = vld [vmem:[#allocation2 + $0x139] sm:$0xff]
        %v866 = vld [vmem:[#allocation2 + $0x141] sm:$0xff]
        %v867 = vld [vmem:[#allocation2 + $0x151] sm:$0xff]
        %v868 = vld [vmem:[#allocation2 + $0x159] sm:$0xff]
        %v869 = vld [vmem:[#allocation2 + $0x169] sm:$0xff]
        %v870 = vld [vmem:[#allocation2 + $0x171] sm:$0xff]
        %s871 = scalar_lea.vmem [#allocation6], 4
        %v872 = vld [vmem:[%s871] sm:$0xf]
        %v874 = vsel %vm330, %v839, 0
        %v877 = vsel %vm330, %v840, 0
        %v880 = vsel %vm330, %v841, 0
        %v883 = vsel %vm330, %v842, 0
        %v886 = vsel %vm330, %v843, 0
        %v889 = vsel %vm330, %v844, 0
        %v892 = vsel %vm330, %v845, 0
        %v895 = vsel %vm330, %v846, 0
        %v898 = vsel %vm330, %v847, 0
        %v901 = vsel %vm330, %v848, 0
        %v904 = vsel %vm330, %v849, 0
        %v907 = vsel %vm330, %v850, 0
        %v910 = vsel %vm330, %v851, 0
        %v913 = vsel %vm330, %v852, 0
        %v916 = vsel %vm330, %v853, 0
        %v919 = vsel %vm330, %v854, 0
        %v922 = vsel %vm330, %v855, 0
        %v925 = vsel %vm330, %v856, 0
        %v928 = vsel %vm330, %v857, 0
        %v931 = vsel %vm330, %v858, 0
        %v934 = vsel %vm330, %v859, 0
        %v937 = vsel %vm330, %v860, 0
        %v940 = vsel %vm330, %v861, 0
        %v943 = vsel %vm330, %v862, 0
        %v946 = vsel %vm330, %v863, 0
        %v949 = vsel %vm330, %v864, 0
        %v952 = vsel %vm330, %v865, 0
        %v955 = vsel %vm330, %v866, 0
        %v958 = vsel %vm330, %v867, 0
        %v961 = vsel %vm330, %v868, 0
        %v964 = vsel %vm330, %v869, 0
        %v967 = vsel %vm330, %v870, 0
        %v970 = vsel %vm578, %v872, 0
        %972 = vmatprep.subr.mxu0 0.0
        %973 = vmatpush1.msra.mxu0 %v970
        %974 = vmatprep.subr.mxu0 0.0
        %975 = vmatpush1.msra.mxu0 0.0
        %976 = vmatprep.subr.mxu0 0.0
        %977 = vmatpush1.msra.mxu0 0.0
        %978 = vmatprep.subr.mxu0 0.0
        %979 = vmatpush1.msra.mxu0 0.0
        %980 = vmatprep.subr.mxu0 0.0
        %981 = vmatpush1.msra.mxu0 0.0
        %982 = vmatprep.subr.mxu0 0.0
        %983 = vmatpush1.msra.mxu0 0.0
        %984 = vmatprep.subr.mxu0 0.0
        %985 = vmatpush1.msra.mxu0 0.0
        %986 = vmatprep.subr.mxu0 0.0
        %987 = vmatpush1.msra.mxu0 0.0
        %988 = vmatprep.subr.mxu0 0.0
        %989 = vmatpush1.msra.mxu0 0.0
        %990 = vmatprep.subr.mxu0 0.0
        %991 = vmatpush1.msra.mxu0 0.0
        %992 = vmatprep.subr.mxu0 0.0
        %993 = vmatpush1.msra.mxu0 0.0
        %994 = vmatprep.subr.mxu0 0.0
        %995 = vmatpush1.msra.mxu0 0.0
        %996 = vmatprep.subr.mxu0 0.0
        %997 = vmatpush1.msra.mxu0 0.0
        %998 = vmatprep.subr.mxu0 0.0
        %999 = vmatpush1.msra.mxu0 0.0
        %1000 = vmatprep.subr.mxu0 0.0
        %1001 = vmatpush1.msra.mxu0 0.0
        %1002 = vmatprep.subr.mxu0 0.0
        %1003 = vmatpush1.msra.mxu0 0.0
        %1004 = vmatprep.subr.mxu0 0.0
        %1005 = vmatpush1.msra.mxu0 0.0
        %1006 = vmatprep.subr.mxu0 0.0
        %1007 = vmatpush1.msra.mxu0 0.0
        %1008 = vmatprep.subr.mxu0 0.0
        %1009 = vmatpush1.msra.mxu0 0.0
        %1010 = vmatprep.subr.mxu0 0.0
        %1011 = vmatpush1.msra.mxu0 0.0
        %1012 = vmatprep.subr.mxu0 0.0
        %1013 = vmatpush1.msra.mxu0 0.0
        %1014 = vmatprep.subr.mxu0 0.0
        %1015 = vmatpush1.msra.mxu0 0.0
        %1016 = vmatprep.subr.mxu0 0.0
        %1017 = vmatpush1.msra.mxu0 0.0
        %1018 = vmatprep.subr.mxu0 0.0
        %1019 = vmatpush1.msra.mxu0 0.0
        %1020 = vmatprep.subr.mxu0 0.0
        %1021 = vmatpush1.msra.mxu0 0.0
        %1022 = vmatprep.subr.mxu0 0.0
        %1023 = vmatpush1.msra.mxu0 0.0
        %1024 = vmatprep.subr.mxu0 0.0
        %1025 = vmatpush1.msra.mxu0 0.0
        %1026 = vmatprep.subr.mxu0 0.0
        %1027 = vmatpush1.msra.mxu0 0.0
        %1028 = vmatprep.subr.mxu0 0.0
        %1029 = vmatpush1.msra.mxu0 0.0
        %1030 = vmatprep.subr.mxu0 0.0
        %1031 = vmatpush1.msra.mxu0 0.0
        %1032 = vmatprep.subr.mxu0 0.0
        %1033 = vmatpush1.msra.mxu0 0.0
        %1034 = vmatprep.subr.mxu0 0.0
        %1035 = vmatpush1.msra.mxu0 0.0
        %1036 = vmatprep.mubr.f32.mxu0 0.0
        %1037 = vmatmul.mubr.f32.gmra.mrb[0].mxu0 %v874
        %v1038 = vpop.f32.mrb[0].mxu0
        %v1039 = vadd.f32 0.0, %v1038
        %v1040 = vpop.f32.mrb[0].mxu0
        %1041 = vmatprep.mubr.f32.mxu0 0.0
        %1042 = vmatmul.mubr.f32.gmra.mrb[0].mxu0 %v877
        %v1043 = vpop.f32.mrb[0].mxu0
        %v1044 = vadd.f32 0.0, %v1043
        %v1045 = vpop.f32.mrb[0].mxu0
        %1046 = vmatprep.mubr.f32.mxu0 0.0
        %1047 = vmatmul.mubr.f32.gmra.mrb[0].mxu0 %v880
        %v1048 = vpop.f32.mrb[0].mxu0
        %v1049 = vadd.f32 0.0, %v1048
        %v1050 = vpop.f32.mrb[0].mxu0
        %1051 = vmatprep.mubr.f32.mxu0 0.0
        %1052 = vmatmul.mubr.f32.gmra.mrb[0].mxu0 %v883
        %v1053 = vpop.f32.mrb[0].mxu0
        %v1054 = vadd.f32 0.0, %v1053
        %v1055 = vpop.f32.mrb[0].mxu0
        %1056 = vmatprep.mubr.f32.mxu0 0.0
        %1057 = vmatmul.mubr.f32.gmra.mrb[0].mxu0 %v886
        %v1058 = vpop.f32.mrb[0].mxu0
        %v1059 = vadd.f32 0.0, %v1058
        %v1060 = vpop.f32.mrb[0].mxu0
        %1061 = vmatprep.mubr.f32.mxu0 0.0
        %1062 = vmatmul.mubr.f32.gmra.mrb[0].mxu0 %v889
        %v1063 = vpop.f32.mrb[0].mxu0
        %v1064 = vadd.f32 0.0, %v1063
        %v1065 = vpop.f32.mrb[0].mxu0
        %1066 = vmatprep.mubr.f32.mxu0 0.0
        %1067 = vmatmul.mubr.f32.gmra.mrb[0].mxu0 %v892
        %v1068 = vpop.f32.mrb[0].mxu0
        %v1069 = vadd.f32 0.0, %v1068
        %v1070 = vpop.f32.mrb[0].mxu0
        %1071 = vmatprep.mubr.f32.mxu0 0.0
        %1072 = vmatmul.mubr.f32.gmra.mrb[0].mxu0 %v895
        %v1073 = vpop.f32.mrb[0].mxu0
        %v1074 = vadd.f32 0.0, %v1073
        %v1075 = vpop.f32.mrb[0].mxu0
        %1076 = vmatprep.mubr.f32.mxu0 0.0
        %1077 = vmatmul.mubr.f32.gmra.mrb[0].mxu0 %v898
        %v1078 = vpop.f32.mrb[0].mxu0
        %v1079 = vadd.f32 0.0, %v1078
        %v1080 = vpop.f32.mrb[0].mxu0
        %1081 = vmatprep.mubr.f32.mxu0 0.0
        %1082 = vmatmul.mubr.f32.gmra.mrb[0].mxu0 %v901
        %v1083 = vpop.f32.mrb[0].mxu0
        %v1084 = vadd.f32 0.0, %v1083
        %v1085 = vpop.f32.mrb[0].mxu0
        %1086 = vmatprep.mubr.f32.mxu0 0.0
        %1087 = vmatmul.mubr.f32.gmra.mrb[0].mxu0 %v904
        %v1088 = vpop.f32.mrb[0].mxu0
        %v1089 = vadd.f32 0.0, %v1088
        %v1090 = vpop.f32.mrb[0].mxu0
        %1091 = vmatprep.mubr.f32.mxu0 0.0
        %1092 = vmatmul.mubr.f32.gmra.mrb[0].mxu0 %v907
        %v1093 = vpop.f32.mrb[0].mxu0
        %v1094 = vadd.f32 0.0, %v1093
        %v1095 = vpop.f32.mrb[0].mxu0
        %1096 = vmatprep.mubr.f32.mxu0 0.0
        %1097 = vmatmul.mubr.f32.gmra.mrb[0].mxu0 %v910
        %v1098 = vpop.f32.mrb[0].mxu0
        %v1099 = vadd.f32 0.0, %v1098
        %v1100 = vpop.f32.mrb[0].mxu0
        %1101 = vmatprep.mubr.f32.mxu0 0.0
        %1102 = vmatmul.mubr.f32.gmra.mrb[0].mxu0 %v913
        %v1103 = vpop.f32.mrb[0].mxu0
        %v1104 = vadd.f32 0.0, %v1103
        %v1105 = vpop.f32.mrb[0].mxu0
        %1106 = vmatprep.mubr.f32.mxu0 0.0
        %1107 = vmatmul.mubr.f32.gmra.mrb[0].mxu0 %v916
        %v1108 = vpop.f32.mrb[0].mxu0
        %v1109 = vadd.f32 0.0, %v1108
        %v1110 = vpop.f32.mrb[0].mxu0
        %1111 = vmatprep.mubr.f32.mxu0 0.0
        %1112 = vmatmul.mubr.f32.gmra.mrb[0].mxu0 %v919
        %v1113 = vpop.f32.mrb[0].mxu0
        %v1114 = vadd.f32 0.0, %v1113
        %v1115 = vpop.f32.mrb[0].mxu0
        %1116 = vmatprep.mubr.f32.mxu0 0.0
        %1117 = vmatmul.mubr.f32.gmra.mrb[0].mxu0 %v922
        %v1118 = vpop.f32.mrb[0].mxu0
        %v1119 = vadd.f32 0.0, %v1118
        %v1120 = vpop.f32.mrb[0].mxu0
        %1121 = vmatprep.mubr.f32.mxu0 0.0
        %1122 = vmatmul.mubr.f32.gmra.mrb[0].mxu0 %v925
        %v1123 = vpop.f32.mrb[0].mxu0
        %v1124 = vadd.f32 0.0, %v1123
        %v1125 = vpop.f32.mrb[0].mxu0
        %1126 = vmatprep.mubr.f32.mxu0 0.0
        %1127 = vmatmul.mubr.f32.gmra.mrb[0].mxu0 %v928
        %v1128 = vpop.f32.mrb[0].mxu0
        %v1129 = vadd.f32 0.0, %v1128
        %v1130 = vpop.f32.mrb[0].mxu0
        %1131 = vmatprep.mubr.f32.mxu0 0.0
        %1132 = vmatmul.mubr.f32.gmra.mrb[0].mxu0 %v931
        %v1133 = vpop.f32.mrb[0].mxu0
        %v1134 = vadd.f32 0.0, %v1133
        %v1135 = vpop.f32.mrb[0].mxu0
        %1136 = vmatprep.mubr.f32.mxu0 0.0
        %1137 = vmatmul.mubr.f32.gmra.mrb[0].mxu0 %v934
        %v1138 = vpop.f32.mrb[0].mxu0
        %v1139 = vadd.f32 0.0, %v1138
        %v1140 = vpop.f32.mrb[0].mxu0
        %1141 = vmatprep.mubr.f32.mxu0 0.0
        %1142 = vmatmul.mubr.f32.gmra.mrb[0].mxu0 %v937
        %v1143 = vpop.f32.mrb[0].mxu0
        %v1144 = vadd.f32 0.0, %v1143
        %v1145 = vpop.f32.mrb[0].mxu0
        %1146 = vmatprep.mubr.f32.mxu0 0.0
        %1147 = vmatmul.mubr.f32.gmra.mrb[0].mxu0 %v940
        %v1148 = vpop.f32.mrb[0].mxu0
        %v1149 = vadd.f32 0.0, %v1148
        %v1150 = vpop.f32.mrb[0].mxu0
        %1151 = vmatprep.mubr.f32.mxu0 0.0
        %1152 = vmatmul.mubr.f32.gmra.mrb[0].mxu0 %v943
        %v1153 = vpop.f32.mrb[0].mxu0
        %v1154 = vadd.f32 0.0, %v1153
        %v1155 = vpop.f32.mrb[0].mxu0
        %1156 = vmatprep.mubr.f32.mxu0 0.0
        %1157 = vmatmul.mubr.f32.gmra.mrb[0].mxu0 %v946
        %v1158 = vpop.f32.mrb[0].mxu0
        %v1159 = vadd.f32 0.0, %v1158
        %v1160 = vpop.f32.mrb[0].mxu0
        %1161 = vmatprep.mubr.f32.mxu0 0.0
        %1162 = vmatmul.mubr.f32.gmra.mrb[0].mxu0 %v949
        %v1163 = vpop.f32.mrb[0].mxu0
        %v1164 = vadd.f32 0.0, %v1163
        %v1165 = vpop.f32.mrb[0].mxu0
        %1166 = vmatprep.mubr.f32.mxu0 0.0
        %1167 = vmatmul.mubr.f32.gmra.mrb[0].mxu0 %v952
        %v1168 = vpop.f32.mrb[0].mxu0
        %v1169 = vadd.f32 0.0, %v1168
        %v1170 = vpop.f32.mrb[0].mxu0
        %1171 = vmatprep.mubr.f32.mxu0 0.0
        %1172 = vmatmul.mubr.f32.gmra.mrb[0].mxu0 %v955
        %v1173 = vpop.f32.mrb[0].mxu0
        %v1174 = vadd.f32 0.0, %v1173
        %v1175 = vpop.f32.mrb[0].mxu0
        %1176 = vmatprep.mubr.f32.mxu0 0.0
        %1177 = vmatmul.mubr.f32.gmra.mrb[0].mxu0 %v958
        %v1178 = vpop.f32.mrb[0].mxu0
        %v1179 = vadd.f32 0.0, %v1178
        %v1180 = vpop.f32.mrb[0].mxu0
        %1181 = vmatprep.mubr.f32.mxu0 0.0
        %1182 = vmatmul.mubr.f32.gmra.mrb[0].mxu0 %v961
        %v1183 = vpop.f32.mrb[0].mxu0
        %v1184 = vadd.f32 0.0, %v1183
        %v1185 = vpop.f32.mrb[0].mxu0
        %1186 = vmatprep.mubr.f32.mxu0 0.0
        %1187 = vmatmul.mubr.f32.gmra.mrb[0].mxu0 %v964
        %v1188 = vpop.f32.mrb[0].mxu0
        %v1189 = vadd.f32 0.0, %v1188
        %v1190 = vpop.f32.mrb[0].mxu0
        %1191 = vmatprep.mubr.f32.mxu0 0.0
        %1192 = vmatmul.mubr.f32.gmra.mrb[0].mxu0 %v967
        %v1193 = vpop.f32.mrb[0].mxu0
        %v1194 = vadd.f32 0.0, %v1193
        %v1195 = vpop.f32.mrb[0].mxu0
        %1196 = vdwg.mxu0
        %v1197 = vadd.f32 %v807, %v1039
        %v1198 = vadd.f32 %v808, %v1044
        %v1199 = vadd.f32 %v809, %v1049
        %v1200 = vadd.f32 %v810, %v1054
        %v1201 = vadd.f32 %v811, %v1059
        %v1202 = vadd.f32 %v812, %v1064
        %v1203 = vadd.f32 %v813, %v1069
        %v1204 = vadd.f32 %v814, %v1074
        %v1205 = vadd.f32 %v815, %v1079
        %v1206 = vadd.f32 %v816, %v1084
        %v1207 = vadd.f32 %v817, %v1089
        %v1208 = vadd.f32 %v818, %v1094
        %v1209 = vadd.f32 %v819, %v1099
        %v1210 = vadd.f32 %v820, %v1104
        %v1211 = vadd.f32 %v821, %v1109
        %v1212 = vadd.f32 %v822, %v1114
        %v1213 = vadd.f32 %v823, %v1119
        %v1214 = vadd.f32 %v824, %v1124
        %v1215 = vadd.f32 %v825, %v1129
        %v1216 = vadd.f32 %v826, %v1134
        %v1217 = vadd.f32 %v827, %v1139
        %v1218 = vadd.f32 %v828, %v1144
        %v1219 = vadd.f32 %v829, %v1149
        %v1220 = vadd.f32 %v830, %v1154
        %v1221 = vadd.f32 %v831, %v1159
        %v1222 = vadd.f32 %v832, %v1164
        %v1223 = vadd.f32 %v833, %v1169
        %v1224 = vadd.f32 %v834, %v1174
        %v1225 = vadd.f32 %v835, %v1179
        %v1226 = vadd.f32 %v836, %v1184
        %v1227 = vadd.f32 %v837, %v1189
        %v1228 = vadd.f32 %v838, %v1194
        %v1229 = vld [vmem:[#allocation2 + $0x2] sm:$0xff]
        %v1230 = vld [vmem:[#allocation2 + $0xa] sm:$0xff]
        %v1231 = vld [vmem:[#allocation2 + $0x1a] sm:$0xff]
        %v1232 = vld [vmem:[#allocation2 + $0x22] sm:$0xff]
        %v1233 = vld [vmem:[#allocation2 + $0x32] sm:$0xff]
        %v1234 = vld [vmem:[#allocation2 + $0x3a] sm:$0xff]
        %v1235 = vld [vmem:[#allocation2 + $0x4a] sm:$0xff]
        %v1236 = vld [vmem:[#allocation2 + $0x52] sm:$0xff]
        %v1237 = vld [vmem:[#allocation2 + $0x62] sm:$0xff]
        %v1238 = vld [vmem:[#allocation2 + $0x6a] sm:$0xff]
        %v1239 = vld [vmem:[#allocation2 + $0x7a] sm:$0xff]
        %v1240 = vld [vmem:[#allocation2 + $0x82] sm:$0xff]
        %v1241 = vld [vmem:[#allocation2 + $0x92] sm:$0xff]
        %v1242 = vld [vmem:[#allocation2 + $0x9a] sm:$0xff]
        %v1243 = vld [vmem:[#allocation2 + $0xaa] sm:$0xff]
        %v1244 = vld [vmem:[#allocation2 + $0xb2] sm:$0xff]
        %v1245 = vld [vmem:[#allocation2 + $0xc2] sm:$0xff]
        %v1246 = vld [vmem:[#allocation2 + $0xca] sm:$0xff]
        %v1247 = vld [vmem:[#allocation2 + $0xda] sm:$0xff]
        %v1248 = vld [vmem:[#allocation2 + $0xe2] sm:$0xff]
        %v1249 = vld [vmem:[#allocation2 + $0xf2] sm:$0xff]
        %v1250 = vld [vmem:[#allocation2 + $0xfa] sm:$0xff]
        %v1251 = vld [vmem:[#allocation2 + $0x10a] sm:$0xff]
        %v1252 = vld [vmem:[#allocation2 + $0x112] sm:$0xff]
        %v1253 = vld [vmem:[#allocation2 + $0x122] sm:$0xff]
        %v1254 = vld [vmem:[#allocation2 + $0x12a] sm:$0xff]
        %v1255 = vld [vmem:[#allocation2 + $0x13a] sm:$0xff]
        %v1256 = vld [vmem:[#allocation2 + $0x142] sm:$0xff]
        %v1257 = vld [vmem:[#allocation2 + $0x152] sm:$0xff]
        %v1258 = vld [vmem:[#allocation2 + $0x15a] sm:$0xff]
        %v1259 = vld [vmem:[#allocation2 + $0x16a] sm:$0xff]
        %v1260 = vld [vmem:[#allocation2 + $0x172] sm:$0xff]
        %s1261 = scalar_lea.vmem [#allocation6], 8
        %v1262 = vld [vmem:[%s1261] sm:$0xf]
        %v1264 = vsel %vm330, %v1229, 0
        %v1267 = vsel %vm330, %v1230, 0
        %v1270 = vsel %vm330, %v1231, 0
        %v1273 = vsel %vm330, %v1232, 0
        %v1276 = vsel %vm330, %v1233, 0
        %v1279 = vsel %vm330, %v1234, 0
        %v1282 = vsel %vm330, %v1235, 0
        %v1285 = vsel %vm330, %v1236, 0
        %v1288 = vsel %vm330, %v1237, 0
        %v1291 = vsel %vm330, %v1238, 0
        %v1294 = vsel %vm330, %v1239, 0
        %v1297 = vsel %vm330, %v1240, 0
        %v1300 = vsel %vm330, %v1241, 0
        %v1303 = vsel %vm330, %v1242, 0
        %v1306 = vsel %vm330, %v1243, 0
        %v1309 = vsel %vm330, %v1244, 0
        %v1312 = vsel %vm330, %v1245, 0
        %v1315 = vsel %vm330, %v1246, 0
        %v1318 = vsel %vm330, %v1247, 0
        %v1321 = vsel %vm330, %v1248, 0
        %v1324 = vsel %vm330, %v1249, 0
        %v1327 = vsel %vm330, %v1250, 0
        %v1330 = vsel %vm330, %v1251, 0
        %v1333 = vsel %vm330, %v1252, 0
        %v1336 = vsel %vm330, %v1253, 0
        %v1339 = vsel %vm330, %v1254, 0
        %v1342 = vsel %vm330, %v1255, 0
        %v1345 = vsel %vm330, %v1256, 0
        %v1348 = vsel %vm330, %v1257, 0
        %v1351 = vsel %vm330, %v1258, 0
        %v1354 = vsel %vm330, %v1259, 0
        %v1357 = vsel %vm330, %v1260, 0
        %v1360 = vsel %vm578, %v1262, 0
        %1362 = vmatprep.subr.mxu0 0.0
        %1363 = vmatpush1.msra.mxu0 %v1360
        %1364 = vmatprep.subr.mxu0 0.0
        %1365 = vmatpush1.msra.mxu0 0.0
        %1366 = vmatprep.subr.mxu0 0.0
        %1367 = vmatpush1.msra.mxu0 0.0
        %1368 = vmatprep.subr.mxu0 0.0
        %1369 = vmatpush1.msra.mxu0 0.0
        %1370 = vmatprep.subr.mxu0 0.0
        %1371 = vmatpush1.msra.mxu0 0.0
        %1372 = vmatprep.subr.mxu0 0.0
        %1373 = vmatpush1.msra.mxu0 0.0
        %1374 = vmatprep.subr.mxu0 0.0
        %1375 = vmatpush1.msra.mxu0 0.0
        %1376 = vmatprep.subr.mxu0 0.0
        %1377 = vmatpush1.msra.mxu0 0.0
        %1378 = vmatprep.subr.mxu0 0.0
        %1379 = vmatpush1.msra.mxu0 0.0
        %1380 = vmatprep.subr.mxu0 0.0
        %1381 = vmatpush1.msra.mxu0 0.0
        %1382 = vmatprep.subr.mxu0 0.0
        %1383 = vmatpush1.msra.mxu0 0.0
        %1384 = vmatprep.subr.mxu0 0.0
        %1385 = vmatpush1.msra.mxu0 0.0
        %1386 = vmatprep.subr.mxu0 0.0
        %1387 = vmatpush1.msra.mxu0 0.0
        %1388 = vmatprep.subr.mxu0 0.0
        %1389 = vmatpush1.msra.mxu0 0.0
        %1390 = vmatprep.subr.mxu0 0.0
        %1391 = vmatpush1.msra.mxu0 0.0
        %1392 = vmatprep.subr.mxu0 0.0
        %1393 = vmatpush1.msra.mxu0 0.0
        %1394 = vmatprep.subr.mxu0 0.0
        %1395 = vmatpush1.msra.mxu0 0.0
        %1396 = vmatprep.subr.mxu0 0.0
        %1397 = vmatpush1.msra.mxu0 0.0
        %1398 = vmatprep.subr.mxu0 0.0
        %1399 = vmatpush1.msra.mxu0 0.0
        %1400 = vmatprep.subr.mxu0 0.0
        %1401 = vmatpush1.msra.mxu0 0.0
        %1402 = vmatprep.subr.mxu0 0.0
        %1403 = vmatpush1.msra.mxu0 0.0
        %1404 = vmatprep.subr.mxu0 0.0
        %1405 = vmatpush1.msra.mxu0 0.0
        %1406 = vmatprep.subr.mxu0 0.0
        %1407 = vmatpush1.msra.mxu0 0.0
        %1408 = vmatprep.subr.mxu0 0.0
        %1409 = vmatpush1.msra.mxu0 0.0
        %1410 = vmatprep.subr.mxu0 0.0
        %1411 = vmatpush1.msra.mxu0 0.0
        %1412 = vmatprep.subr.mxu0 0.0
        %1413 = vmatpush1.msra.mxu0 0.0
        %1414 = vmatprep.subr.mxu0 0.0
        %1415 = vmatpush1.msra.mxu0 0.0
        %1416 = vmatprep.subr.mxu0 0.0
        %1417 = vmatpush1.msra.mxu0 0.0
        %1418 = vmatprep.subr.mxu0 0.0
        %1419 = vmatpush1.msra.mxu0 0.0
        %1420 = vmatprep.subr.mxu0 0.0
        %1421 = vmatpush1.msra.mxu0 0.0
        %1422 = vmatprep.subr.mxu0 0.0
        %1423 = vmatpush1.msra.mxu0 0.0
        %1424 = vmatprep.subr.mxu0 0.0
        %1425 = vmatpush1.msra.mxu0 0.0
        %1426 = vmatprep.mubr.f32.mxu0 0.0
        %1427 = vmatmul.mubr.f32.gmra.mrb[0].mxu0 %v1264
        %v1428 = vpop.f32.mrb[0].mxu0
        %v1429 = vadd.f32 0.0, %v1428
        %v1430 = vpop.f32.mrb[0].mxu0
        %1431 = vmatprep.mubr.f32.mxu0 0.0
        %1432 = vmatmul.mubr.f32.gmra.mrb[0].mxu0 %v1267
        %v1433 = vpop.f32.mrb[0].mxu0
        %v1434 = vadd.f32 0.0, %v1433
        %v1435 = vpop.f32.mrb[0].mxu0
        %1436 = vmatprep.mubr.f32.mxu0 0.0
        %1437 = vmatmul.mubr.f32.gmra.mrb[0].mxu0 %v1270
        %v1438 = vpop.f32.mrb[0].mxu0
        %v1439 = vadd.f32 0.0, %v1438
        %v1440 = vpop.f32.mrb[0].mxu0
        %1441 = vmatprep.mubr.f32.mxu0 0.0
        %1442 = vmatmul.mubr.f32.gmra.mrb[0].mxu0 %v1273
        %v1443 = vpop.f32.mrb[0].mxu0
        %v1444 = vadd.f32 0.0, %v1443
        %v1445 = vpop.f32.mrb[0].mxu0
        %1446 = vmatprep.mubr.f32.mxu0 0.0
        %1447 = vmatmul.mubr.f32.gmra.mrb[0].mxu0 %v1276
        %v1448 = vpop.f32.mrb[0].mxu0
        %v1449 = vadd.f32 0.0, %v1448
        %v1450 = vpop.f32.mrb[0].mxu0
        %1451 = vmatprep.mubr.f32.mxu0 0.0
        %1452 = vmatmul.mubr.f32.gmra.mrb[0].mxu0 %v1279
        %v1453 = vpop.f32.mrb[0].mxu0
        %v1454 = vadd.f32 0.0, %v1453
        %v1455 = vpop.f32.mrb[0].mxu0
        %1456 = vmatprep.mubr.f32.mxu0 0.0
        %1457 = vmatmul.mubr.f32.gmra.mrb[0].mxu0 %v1282
        %v1458 = vpop.f32.mrb[0].mxu0
        %v1459 = vadd.f32 0.0, %v1458
        %v1460 = vpop.f32.mrb[0].mxu0
        %1461 = vmatprep.mubr.f32.mxu0 0.0
        %1462 = vmatmul.mubr.f32.gmra.mrb[0].mxu0 %v1285
        %v1463 = vpop.f32.mrb[0].mxu0
        %v1464 = vadd.f32 0.0, %v1463
        %v1465 = vpop.f32.mrb[0].mxu0
        %1466 = vmatprep.mubr.f32.mxu0 0.0
        %1467 = vmatmul.mubr.f32.gmra.mrb[0].mxu0 %v1288
        %v1468 = vpop.f32.mrb[0].mxu0
        %v1469 = vadd.f32 0.0, %v1468
        %v1470 = vpop.f32.mrb[0].mxu0
        %1471 = vmatprep.mubr.f32.mxu0 0.0
        %1472 = vmatmul.mubr.f32.gmra.mrb[0].mxu0 %v1291
        %v1473 = vpop.f32.mrb[0].mxu0
        %v1474 = vadd.f32 0.0, %v1473
        %v1475 = vpop.f32.mrb[0].mxu0
        %1476 = vmatprep.mubr.f32.mxu0 0.0
        %1477 = vmatmul.mubr.f32.gmra.mrb[0].mxu0 %v1294
        %v1478 = vpop.f32.mrb[0].mxu0
        %v1479 = vadd.f32 0.0, %v1478
        %v1480 = vpop.f32.mrb[0].mxu0
        %1481 = vmatprep.mubr.f32.mxu0 0.0
        %1482 = vmatmul.mubr.f32.gmra.mrb[0].mxu0 %v1297
        %v1483 = vpop.f32.mrb[0].mxu0
        %v1484 = vadd.f32 0.0, %v1483
        %v1485 = vpop.f32.mrb[0].mxu0
        %1486 = vmatprep.mubr.f32.mxu0 0.0
        %1487 = vmatmul.mubr.f32.gmra.mrb[0].mxu0 %v1300
        %v1488 = vpop.f32.mrb[0].mxu0
        %v1489 = vadd.f32 0.0, %v1488
        %v1490 = vpop.f32.mrb[0].mxu0
        %1491 = vmatprep.mubr.f32.mxu0 0.0
        %1492 = vmatmul.mubr.f32.gmra.mrb[0].mxu0 %v1303
        %v1493 = vpop.f32.mrb[0].mxu0
        %v1494 = vadd.f32 0.0, %v1493
        %v1495 = vpop.f32.mrb[0].mxu0
        %1496 = vmatprep.mubr.f32.mxu0 0.0
        %1497 = vmatmul.mubr.f32.gmra.mrb[0].mxu0 %v1306
        %v1498 = vpop.f32.mrb[0].mxu0
        %v1499 = vadd.f32 0.0, %v1498
        %v1500 = vpop.f32.mrb[0].mxu0
        %1501 = vmatprep.mubr.f32.mxu0 0.0
        %1502 = vmatmul.mubr.f32.gmra.mrb[0].mxu0 %v1309
        %v1503 = vpop.f32.mrb[0].mxu0
        %v1504 = vadd.f32 0.0, %v1503
        %v1505 = vpop.f32.mrb[0].mxu0
        %1506 = vmatprep.mubr.f32.mxu0 0.0
        %1507 = vmatmul.mubr.f32.gmra.mrb[0].mxu0 %v1312
        %v1508 = vpop.f32.mrb[0].mxu0
        %v1509 = vadd.f32 0.0, %v1508
        %v1510 = vpop.f32.mrb[0].mxu0
        %1511 = vmatprep.mubr.f32.mxu0 0.0
        %1512 = vmatmul.mubr.f32.gmra.mrb[0].mxu0 %v1315
        %v1513 = vpop.f32.mrb[0].mxu0
        %v1514 = vadd.f32 0.0, %v1513
        %v1515 = vpop.f32.mrb[0].mxu0
        %1516 = vmatprep.mubr.f32.mxu0 0.0
        %1517 = vmatmul.mubr.f32.gmra.mrb[0].mxu0 %v1318
        %v1518 = vpop.f32.mrb[0].mxu0
        %v1519 = vadd.f32 0.0, %v1518
        %v1520 = vpop.f32.mrb[0].mxu0
        %1521 = vmatprep.mubr.f32.mxu0 0.0
        %1522 = vmatmul.mubr.f32.gmra.mrb[0].mxu0 %v1321
        %v1523 = vpop.f32.mrb[0].mxu0
        %v1524 = vadd.f32 0.0, %v1523
        %v1525 = vpop.f32.mrb[0].mxu0
        %1526 = vmatprep.mubr.f32.mxu0 0.0
        %1527 = vmatmul.mubr.f32.gmra.mrb[0].mxu0 %v1324
        %v1528 = vpop.f32.mrb[0].mxu0
        %v1529 = vadd.f32 0.0, %v1528
        %v1530 = vpop.f32.mrb[0].mxu0
        %1531 = vmatprep.mubr.f32.mxu0 0.0
        %1532 = vmatmul.mubr.f32.gmra.mrb[0].mxu0 %v1327
        %v1533 = vpop.f32.mrb[0].mxu0
        %v1534 = vadd.f32 0.0, %v1533
        %v1535 = vpop.f32.mrb[0].mxu0
        %1536 = vmatprep.mubr.f32.mxu0 0.0
        %1537 = vmatmul.mubr.f32.gmra.mrb[0].mxu0 %v1330
        %v1538 = vpop.f32.mrb[0].mxu0
        %v1539 = vadd.f32 0.0, %v1538
        %v1540 = vpop.f32.mrb[0].mxu0
        %1541 = vmatprep.mubr.f32.mxu0 0.0
        %1542 = vmatmul.mubr.f32.gmra.mrb[0].mxu0 %v1333
        %v1543 = vpop.f32.mrb[0].mxu0
        %v1544 = vadd.f32 0.0, %v1543
        %v1545 = vpop.f32.mrb[0].mxu0
        %1546 = vmatprep.mubr.f32.mxu0 0.0
        %1547 = vmatmul.mubr.f32.gmra.mrb[0].mxu0 %v1336
        %v1548 = vpop.f32.mrb[0].mxu0
        %v1549 = vadd.f32 0.0, %v1548
        %v1550 = vpop.f32.mrb[0].mxu0
        %1551 = vmatprep.mubr.f32.mxu0 0.0
        %1552 = vmatmul.mubr.f32.gmra.mrb[0].mxu0 %v1339
        %v1553 = vpop.f32.mrb[0].mxu0
        %v1554 = vadd.f32 0.0, %v1553
        %v1555 = vpop.f32.mrb[0].mxu0
        %1556 = vmatprep.mubr.f32.mxu0 0.0
        %1557 = vmatmul.mubr.f32.gmra.mrb[0].mxu0 %v1342
        %v1558 = vpop.f32.mrb[0].mxu0
        %v1559 = vadd.f32 0.0, %v1558
        %v1560 = vpop.f32.mrb[0].mxu0
        %1561 = vmatprep.mubr.f32.mxu0 0.0
        %1562 = vmatmul.mubr.f32.gmra.mrb[0].mxu0 %v1345
        %v1563 = vpop.f32.mrb[0].mxu0
        %v1564 = vadd.f32 0.0, %v1563
        %v1565 = vpop.f32.mrb[0].mxu0
        %1566 = vmatprep.mubr.f32.mxu0 0.0
        %1567 = vmatmul.mubr.f32.gmra.mrb[0].mxu0 %v1348
        %v1568 = vpop.f32.mrb[0].mxu0
        %v1569 = vadd.f32 0.0, %v1568
        %v1570 = vpop.f32.mrb[0].mxu0
        %1571 = vmatprep.mubr.f32.mxu0 0.0
        %1572 = vmatmul.mubr.f32.gmra.mrb[0].mxu0 %v1351
        %v1573 = vpop.f32.mrb[0].mxu0
        %v1574 = vadd.f32 0.0, %v1573
        %v1575 = vpop.f32.mrb[0].mxu0
        %1576 = vmatprep.mubr.f32.mxu0 0.0
        %1577 = vmatmul.mubr.f32.gmra.mrb[0].mxu0 %v1354
        %v1578 = vpop.f32.mrb[0].mxu0
        %v1579 = vadd.f32 0.0, %v1578
        %v1580 = vpop.f32.mrb[0].mxu0
        %1581 = vmatprep.mubr.f32.mxu0 0.0
        %1582 = vmatmul.mubr.f32.gmra.mrb[0].mxu0 %v1357
        %v1583 = vpop.f32.mrb[0].mxu0
        %v1584 = vadd.f32 0.0, %v1583
        %v1585 = vpop.f32.mrb[0].mxu0
        %1586 = vdwg.mxu0
        %v1587 = vadd.f32 %v1197, %v1429
        %v1588 = vadd.f32 %v1198, %v1434
        %v1589 = vadd.f32 %v1199, %v1439
        %v1590 = vadd.f32 %v1200, %v1444
        %v1591 = vadd.f32 %v1201, %v1449
        %v1592 = vadd.f32 %v1202, %v1454
        %v1593 = vadd.f32 %v1203, %v1459
        %v1594 = vadd.f32 %v1204, %v1464
        %v1595 = vadd.f32 %v1205, %v1469
        %v1596 = vadd.f32 %v1206, %v1474
        %v1597 = vadd.f32 %v1207, %v1479
        %v1598 = vadd.f32 %v1208, %v1484
        %v1599 = vadd.f32 %v1209, %v1489
        %v1600 = vadd.f32 %v1210, %v1494
        %v1601 = vadd.f32 %v1211, %v1499
        %v1602 = vadd.f32 %v1212, %v1504
        %v1603 = vadd.f32 %v1213, %v1509
        %v1604 = vadd.f32 %v1214, %v1514
        %v1605 = vadd.f32 %v1215, %v1519
        %v1606 = vadd.f32 %v1216, %v1524
        %v1607 = vadd.f32 %v1217, %v1529
        %v1608 = vadd.f32 %v1218, %v1534
        %v1609 = vadd.f32 %v1219, %v1539
        %v1610 = vadd.f32 %v1220, %v1544
        %v1611 = vadd.f32 %v1221, %v1549
        %v1612 = vadd.f32 %v1222, %v1554
        %v1613 = vadd.f32 %v1223, %v1559
        %v1614 = vadd.f32 %v1224, %v1564
        %v1615 = vadd.f32 %v1225, %v1569
        %v1616 = vadd.f32 %v1226, %v1574
        %v1617 = vadd.f32 %v1227, %v1579
        %v1618 = vadd.f32 %v1228, %v1584
        %v1619 = vld [vmem:[%s329] sm:$0xff]
        %v1620 = vld [vmem:[%s329 + $0x8] sm:$0xff]
        %v1621 = vld [vmem:[%s329 + $0x18] sm:$0xff]
        %v1622 = vld [vmem:[%s329 + $0x20] sm:$0xff]
        %v1623 = vld [vmem:[%s329 + $0x30] sm:$0xff]
        %v1624 = vld [vmem:[%s329 + $0x38] sm:$0xff]
        %v1625 = vld [vmem:[%s329 + $0x48] sm:$0xff]
        %v1626 = vld [vmem:[%s329 + $0x50] sm:$0xff]
        %v1627 = vld [vmem:[%s329 + $0x60] sm:$0xff]
        %v1628 = vld [vmem:[%s329 + $0x68] sm:$0xff]
        %v1629 = vld [vmem:[%s329 + $0x78] sm:$0xff]
        %v1630 = vld [vmem:[%s329 + $0x80] sm:$0xff]
        %v1631 = vld [vmem:[%s329 + $0x90] sm:$0xff]
        %v1632 = vld [vmem:[%s329 + $0x98] sm:$0xff]
        %v1633 = vld [vmem:[%s329 + $0xa8] sm:$0xff]
        %v1634 = vld [vmem:[%s329 + $0xb0] sm:$0xff]
        %v1635 = vld [vmem:[%s329 + $0xc0] sm:$0xff]
        %v1636 = vld [vmem:[%s329 + $0xc8] sm:$0xff]
        %v1637 = vld [vmem:[%s329 + $0xd8] sm:$0xff]
        %v1638 = vld [vmem:[%s329 + $0xe0] sm:$0xff]
        %v1639 = vld [vmem:[%s329 + $0xf0] sm:$0xff]
        %v1640 = vld [vmem:[%s329 + $0xf8] sm:$0xff]
        %v1641 = vld [vmem:[%s329 + $0x108] sm:$0xff]
        %v1642 = vld [vmem:[%s329 + $0x110] sm:$0xff]
        %v1643 = vld [vmem:[%s329 + $0x120] sm:$0xff]
        %v1644 = vld [vmem:[%s329 + $0x128] sm:$0xff]
        %v1645 = vld [vmem:[%s329 + $0x138] sm:$0xff]
        %v1646 = vld [vmem:[%s329 + $0x140] sm:$0xff]
        %v1647 = vld [vmem:[%s329 + $0x150] sm:$0xff]
        %v1648 = vld [vmem:[%s329 + $0x158] sm:$0xff]
        %v1649 = vld [vmem:[%s329 + $0x168] sm:$0xff]
        %v1650 = vld [vmem:[%s329 + $0x170] sm:$0xff]
        %s1651 = scalar_lea.vmem [#allocation6], 12
        %v1652 = vld [vmem:[%s1651] sm:$0xf]
        %v1654 = vsel %vm330, %v1619, 0
        %v1657 = vsel %vm330, %v1620, 0
        %v1660 = vsel %vm330, %v1621, 0
        %v1663 = vsel %vm330, %v1622, 0
        %v1666 = vsel %vm330, %v1623, 0
        %v1669 = vsel %vm330, %v1624, 0
        %v1672 = vsel %vm330, %v1625, 0
        %v1675 = vsel %vm330, %v1626, 0
        %v1678 = vsel %vm330, %v1627, 0
        %v1681 = vsel %vm330, %v1628, 0
        %v1684 = vsel %vm330, %v1629, 0
        %v1687 = vsel %vm330, %v1630, 0
        %v1690 = vsel %vm330, %v1631, 0
        %v1693 = vsel %vm330, %v1632, 0
        %v1696 = vsel %vm330, %v1633, 0
        %v1699 = vsel %vm330, %v1634, 0
        %v1702 = vsel %vm330, %v1635, 0
        %v1705 = vsel %vm330, %v1636, 0
        %v1708 = vsel %vm330, %v1637, 0
        %v1711 = vsel %vm330, %v1638, 0
        %v1714 = vsel %vm330, %v1639, 0
        %v1717 = vsel %vm330, %v1640, 0
        %v1720 = vsel %vm330, %v1641, 0
        %v1723 = vsel %vm330, %v1642, 0
        %v1726 = vsel %vm330, %v1643, 0
        %v1729 = vsel %vm330, %v1644, 0
        %v1732 = vsel %vm330, %v1645, 0
        %v1735 = vsel %vm330, %v1646, 0
        %v1738 = vsel %vm330, %v1647, 0
        %v1741 = vsel %vm330, %v1648, 0
        %v1744 = vsel %vm330, %v1649, 0
        %v1747 = vsel %vm330, %v1650, 0
        %v1750 = vsel %vm578, %v1652, 0
        %1752 = vmatprep.subr.mxu0 0.0
        %1753 = vmatpush1.msra.mxu0 %v1750
        %1754 = vmatprep.subr.mxu0 0.0
        %1755 = vmatpush1.msra.mxu0 0.0
        %1756 = vmatprep.subr.mxu0 0.0
        %1757 = vmatpush1.msra.mxu0 0.0
        %1758 = vmatprep.subr.mxu0 0.0
        %1759 = vmatpush1.msra.mxu0 0.0
        %1760 = vmatprep.subr.mxu0 0.0
        %1761 = vmatpush1.msra.mxu0 0.0
        %1762 = vmatprep.subr.mxu0 0.0
        %1763 = vmatpush1.msra.mxu0 0.0
        %1764 = vmatprep.subr.mxu0 0.0
        %1765 = vmatpush1.msra.mxu0 0.0
        %1766 = vmatprep.subr.mxu0 0.0
        %1767 = vmatpush1.msra.mxu0 0.0
        %1768 = vmatprep.subr.mxu0 0.0
        %1769 = vmatpush1.msra.mxu0 0.0
        %1770 = vmatprep.subr.mxu0 0.0
        %1771 = vmatpush1.msra.mxu0 0.0
        %1772 = vmatprep.subr.mxu0 0.0
        %1773 = vmatpush1.msra.mxu0 0.0
        %1774 = vmatprep.subr.mxu0 0.0
        %1775 = vmatpush1.msra.mxu0 0.0
        %1776 = vmatprep.subr.mxu0 0.0
        %1777 = vmatpush1.msra.mxu0 0.0
        %1778 = vmatprep.subr.mxu0 0.0
        %1779 = vmatpush1.msra.mxu0 0.0
        %1780 = vmatprep.subr.mxu0 0.0
        %1781 = vmatpush1.msra.mxu0 0.0
        %1782 = vmatprep.subr.mxu0 0.0
        %1783 = vmatpush1.msra.mxu0 0.0
        %1784 = vmatprep.subr.mxu0 0.0
        %1785 = vmatpush1.msra.mxu0 0.0
        %1786 = vmatprep.subr.mxu0 0.0
        %1787 = vmatpush1.msra.mxu0 0.0
        %1788 = vmatprep.subr.mxu0 0.0
        %1789 = vmatpush1.msra.mxu0 0.0
        %1790 = vmatprep.subr.mxu0 0.0
        %1791 = vmatpush1.msra.mxu0 0.0
        %1792 = vmatprep.subr.mxu0 0.0
        %1793 = vmatpush1.msra.mxu0 0.0
        %1794 = vmatprep.subr.mxu0 0.0
        %1795 = vmatpush1.msra.mxu0 0.0
        %1796 = vmatprep.subr.mxu0 0.0
        %1797 = vmatpush1.msra.mxu0 0.0
        %1798 = vmatprep.subr.mxu0 0.0
        %1799 = vmatpush1.msra.mxu0 0.0
        %1800 = vmatprep.subr.mxu0 0.0
        %1801 = vmatpush1.msra.mxu0 0.0
        %1802 = vmatprep.subr.mxu0 0.0
        %1803 = vmatpush1.msra.mxu0 0.0
        %1804 = vmatprep.subr.mxu0 0.0
        %1805 = vmatpush1.msra.mxu0 0.0
        %1806 = vmatprep.subr.mxu0 0.0
        %1807 = vmatpush1.msra.mxu0 0.0
        %1808 = vmatprep.subr.mxu0 0.0
        %1809 = vmatpush1.msra.mxu0 0.0
        %1810 = vmatprep.subr.mxu0 0.0
        %1811 = vmatpush1.msra.mxu0 0.0
        %1812 = vmatprep.subr.mxu0 0.0
        %1813 = vmatpush1.msra.mxu0 0.0
        %1814 = vmatprep.subr.mxu0 0.0
        %1815 = vmatpush1.msra.mxu0 0.0
        %1816 = vmatprep.mubr.f32.mxu0 0.0
        %1817 = vmatmul.mubr.f32.gmra.mrb[0].mxu0 %v1654
        %v1818 = vpop.f32.mrb[0].mxu0
        %v1819 = vadd.f32 0.0, %v1818
        %v1820 = vpop.f32.mrb[0].mxu0
        %1821 = vmatprep.mubr.f32.mxu0 0.0
        %1822 = vmatmul.mubr.f32.gmra.mrb[0].mxu0 %v1657
        %v1823 = vpop.f32.mrb[0].mxu0
        %v1824 = vadd.f32 0.0, %v1823
        %v1825 = vpop.f32.mrb[0].mxu0
        %1826 = vmatprep.mubr.f32.mxu0 0.0
        %1827 = vmatmul.mubr.f32.gmra.mrb[0].mxu0 %v1660
        %v1828 = vpop.f32.mrb[0].mxu0
        %v1829 = vadd.f32 0.0, %v1828
        %v1830 = vpop.f32.mrb[0].mxu0
        %1831 = vmatprep.mubr.f32.mxu0 0.0
        %1832 = vmatmul.mubr.f32.gmra.mrb[0].mxu0 %v1663
        %v1833 = vpop.f32.mrb[0].mxu0
        %v1834 = vadd.f32 0.0, %v1833
        %v1835 = vpop.f32.mrb[0].mxu0
        %1836 = vmatprep.mubr.f32.mxu0 0.0
        %1837 = vmatmul.mubr.f32.gmra.mrb[0].mxu0 %v1666
        %v1838 = vpop.f32.mrb[0].mxu0
        %v1839 = vadd.f32 0.0, %v1838
        %v1840 = vpop.f32.mrb[0].mxu0
        %1841 = vmatprep.mubr.f32.mxu0 0.0
        %1842 = vmatmul.mubr.f32.gmra.mrb[0].mxu0 %v1669
        %v1843 = vpop.f32.mrb[0].mxu0
        %v1844 = vadd.f32 0.0, %v1843
        %v1845 = vpop.f32.mrb[0].mxu0
        %1846 = vmatprep.mubr.f32.mxu0 0.0
        %1847 = vmatmul.mubr.f32.gmra.mrb[0].mxu0 %v1672
        %v1848 = vpop.f32.mrb[0].mxu0
        %v1849 = vadd.f32 0.0, %v1848
        %v1850 = vpop.f32.mrb[0].mxu0
        %1851 = vmatprep.mubr.f32.mxu0 0.0
        %1852 = vmatmul.mubr.f32.gmra.mrb[0].mxu0 %v1675
        %v1853 = vpop.f32.mrb[0].mxu0
        %v1854 = vadd.f32 0.0, %v1853
        %v1855 = vpop.f32.mrb[0].mxu0
        %1856 = vmatprep.mubr.f32.mxu0 0.0
        %1857 = vmatmul.mubr.f32.gmra.mrb[0].mxu0 %v1678
        %v1858 = vpop.f32.mrb[0].mxu0
        %v1859 = vadd.f32 0.0, %v1858
        %v1860 = vpop.f32.mrb[0].mxu0
        %1861 = vmatprep.mubr.f32.mxu0 0.0
        %1862 = vmatmul.mubr.f32.gmra.mrb[0].mxu0 %v1681
        %v1863 = vpop.f32.mrb[0].mxu0
        %v1864 = vadd.f32 0.0, %v1863
        %v1865 = vpop.f32.mrb[0].mxu0
        %1866 = vmatprep.mubr.f32.mxu0 0.0
        %1867 = vmatmul.mubr.f32.gmra.mrb[0].mxu0 %v1684
        %v1868 = vpop.f32.mrb[0].mxu0
        %v1869 = vadd.f32 0.0, %v1868
        %v1870 = vpop.f32.mrb[0].mxu0
        %1871 = vmatprep.mubr.f32.mxu0 0.0
        %1872 = vmatmul.mubr.f32.gmra.mrb[0].mxu0 %v1687
        %v1873 = vpop.f32.mrb[0].mxu0
        %v1874 = vadd.f32 0.0, %v1873
        %v1875 = vpop.f32.mrb[0].mxu0
        %1876 = vmatprep.mubr.f32.mxu0 0.0
        %1877 = vmatmul.mubr.f32.gmra.mrb[0].mxu0 %v1690
        %v1878 = vpop.f32.mrb[0].mxu0
        %v1879 = vadd.f32 0.0, %v1878
        %v1880 = vpop.f32.mrb[0].mxu0
        %1881 = vmatprep.mubr.f32.mxu0 0.0
        %1882 = vmatmul.mubr.f32.gmra.mrb[0].mxu0 %v1693
        %v1883 = vpop.f32.mrb[0].mxu0
        %v1884 = vadd.f32 0.0, %v1883
        %v1885 = vpop.f32.mrb[0].mxu0
        %1886 = vmatprep.mubr.f32.mxu0 0.0
        %1887 = vmatmul.mubr.f32.gmra.mrb[0].mxu0 %v1696
        %v1888 = vpop.f32.mrb[0].mxu0
        %v1889 = vadd.f32 0.0, %v1888
        %v1890 = vpop.f32.mrb[0].mxu0
        %1891 = vmatprep.mubr.f32.mxu0 0.0
        %1892 = vmatmul.mubr.f32.gmra.mrb[0].mxu0 %v1699
        %v1893 = vpop.f32.mrb[0].mxu0
        %v1894 = vadd.f32 0.0, %v1893
        %v1895 = vpop.f32.mrb[0].mxu0
        %1896 = vmatprep.mubr.f32.mxu0 0.0
        %1897 = vmatmul.mubr.f32.gmra.mrb[0].mxu0 %v1702
        %v1898 = vpop.f32.mrb[0].mxu0
        %v1899 = vadd.f32 0.0, %v1898
        %v1900 = vpop.f32.mrb[0].mxu0
        %1901 = vmatprep.mubr.f32.mxu0 0.0
        %1902 = vmatmul.mubr.f32.gmra.mrb[0].mxu0 %v1705
        %v1903 = vpop.f32.mrb[0].mxu0
        %v1904 = vadd.f32 0.0, %v1903
        %v1905 = vpop.f32.mrb[0].mxu0
        %1906 = vmatprep.mubr.f32.mxu0 0.0
        %1907 = vmatmul.mubr.f32.gmra.mrb[0].mxu0 %v1708
        %v1908 = vpop.f32.mrb[0].mxu0
        %v1909 = vadd.f32 0.0, %v1908
        %v1910 = vpop.f32.mrb[0].mxu0
        %1911 = vmatprep.mubr.f32.mxu0 0.0
        %1912 = vmatmul.mubr.f32.gmra.mrb[0].mxu0 %v1711
        %v1913 = vpop.f32.mrb[0].mxu0
        %v1914 = vadd.f32 0.0, %v1913
        %v1915 = vpop.f32.mrb[0].mxu0
        %1916 = vmatprep.mubr.f32.mxu0 0.0
        %1917 = vmatmul.mubr.f32.gmra.mrb[0].mxu0 %v1714
        %v1918 = vpop.f32.mrb[0].mxu0
        %v1919 = vadd.f32 0.0, %v1918
        %v1920 = vpop.f32.mrb[0].mxu0
        %1921 = vmatprep.mubr.f32.mxu0 0.0
        %1922 = vmatmul.mubr.f32.gmra.mrb[0].mxu0 %v1717
        %v1923 = vpop.f32.mrb[0].mxu0
        %v1924 = vadd.f32 0.0, %v1923
        %v1925 = vpop.f32.mrb[0].mxu0
        %1926 = vmatprep.mubr.f32.mxu0 0.0
        %1927 = vmatmul.mubr.f32.gmra.mrb[0].mxu0 %v1720
        %v1928 = vpop.f32.mrb[0].mxu0
        %v1929 = vadd.f32 0.0, %v1928
        %v1930 = vpop.f32.mrb[0].mxu0
        %1931 = vmatprep.mubr.f32.mxu0 0.0
        %1932 = vmatmul.mubr.f32.gmra.mrb[0].mxu0 %v1723
        %v1933 = vpop.f32.mrb[0].mxu0
        %v1934 = vadd.f32 0.0, %v1933
        %v1935 = vpop.f32.mrb[0].mxu0
        %1936 = vmatprep.mubr.f32.mxu0 0.0
        %1937 = vmatmul.mubr.f32.gmra.mrb[0].mxu0 %v1726
        %v1938 = vpop.f32.mrb[0].mxu0
        %v1939 = vadd.f32 0.0, %v1938
        %v1940 = vpop.f32.mrb[0].mxu0
        %1941 = vmatprep.mubr.f32.mxu0 0.0
        %1942 = vmatmul.mubr.f32.gmra.mrb[0].mxu0 %v1729
        %v1943 = vpop.f32.mrb[0].mxu0
        %v1944 = vadd.f32 0.0, %v1943
        %v1945 = vpop.f32.mrb[0].mxu0
        %1946 = vmatprep.mubr.f32.mxu0 0.0
        %1947 = vmatmul.mubr.f32.gmra.mrb[0].mxu0 %v1732
        %v1948 = vpop.f32.mrb[0].mxu0
        %v1949 = vadd.f32 0.0, %v1948
        %v1950 = vpop.f32.mrb[0].mxu0
        %1951 = vmatprep.mubr.f32.mxu0 0.0
        %1952 = vmatmul.mubr.f32.gmra.mrb[0].mxu0 %v1735
        %v1953 = vpop.f32.mrb[0].mxu0
        %v1954 = vadd.f32 0.0, %v1953
        %v1955 = vpop.f32.mrb[0].mxu0
        %1956 = vmatprep.mubr.f32.mxu0 0.0
        %1957 = vmatmul.mubr.f32.gmra.mrb[0].mxu0 %v1738
        %v1958 = vpop.f32.mrb[0].mxu0
        %v1959 = vadd.f32 0.0, %v1958
        %v1960 = vpop.f32.mrb[0].mxu0
        %1961 = vmatprep.mubr.f32.mxu0 0.0
        %1962 = vmatmul.mubr.f32.gmra.mrb[0].mxu0 %v1741
        %v1963 = vpop.f32.mrb[0].mxu0
        %v1964 = vadd.f32 0.0, %v1963
        %v1965 = vpop.f32.mrb[0].mxu0
        %1966 = vmatprep.mubr.f32.mxu0 0.0
        %1967 = vmatmul.mubr.f32.gmra.mrb[0].mxu0 %v1744
        %v1968 = vpop.f32.mrb[0].mxu0
        %v1969 = vadd.f32 0.0, %v1968
        %v1970 = vpop.f32.mrb[0].mxu0
        %1971 = vmatprep.mubr.f32.mxu0 0.0
        %1972 = vmatmul.mubr.f32.gmra.mrb[0].mxu0 %v1747
        %v1973 = vpop.f32.mrb[0].mxu0
        %v1974 = vadd.f32 0.0, %v1973
        %v1975 = vpop.f32.mrb[0].mxu0
        %1976 = vdwg.mxu0
        %v1977 = vadd.f32 %v1587, %v1819
        %v1978 = vadd.f32 %v1588, %v1824
        %v1979 = vadd.f32 %v1589, %v1829
        %v1980 = vadd.f32 %v1590, %v1834
        %v1981 = vadd.f32 %v1591, %v1839
        %v1982 = vadd.f32 %v1592, %v1844
        %v1983 = vadd.f32 %v1593, %v1849
        %v1984 = vadd.f32 %v1594, %v1854
        %v1985 = vadd.f32 %v1595, %v1859
        %v1986 = vadd.f32 %v1596, %v1864
        %v1987 = vadd.f32 %v1597, %v1869
        %v1988 = vadd.f32 %v1598, %v1874
        %v1989 = vadd.f32 %v1599, %v1879
        %v1990 = vadd.f32 %v1600, %v1884
        %v1991 = vadd.f32 %v1601, %v1889
        %v1992 = vadd.f32 %v1602, %v1894
        %v1993 = vadd.f32 %v1603, %v1899
        %v1994 = vadd.f32 %v1604, %v1904
        %v1995 = vadd.f32 %v1605, %v1909
        %v1996 = vadd.f32 %v1606, %v1914
        %v1997 = vadd.f32 %v1607, %v1919
        %v1998 = vadd.f32 %v1608, %v1924
        %v1999 = vadd.f32 %v1609, %v1929
        %v2000 = vadd.f32 %v1610, %v1934
        %v2001 = vadd.f32 %v1611, %v1939
        %v2002 = vadd.f32 %v1612, %v1944
        %v2003 = vadd.f32 %v1613, %v1949
        %v2004 = vadd.f32 %v1614, %v1954
        %v2005 = vadd.f32 %v1615, %v1959
        %v2006 = vadd.f32 %v1616, %v1964
        %v2007 = vadd.f32 %v1617, %v1969
        %v2008 = vadd.f32 %v1618, %v1974
        %v2009 = vld [vmem:[%s329 + $0x1] sm:$0xff]
        %v2010 = vld [vmem:[%s329 + $0x9] sm:$0xff]
        %v2011 = vld [vmem:[%s329 + $0x19] sm:$0xff]
        %v2012 = vld [vmem:[%s329 + $0x21] sm:$0xff]
        %v2013 = vld [vmem:[%s329 + $0x31] sm:$0xff]
        %v2014 = vld [vmem:[%s329 + $0x39] sm:$0xff]
        %v2015 = vld [vmem:[%s329 + $0x49] sm:$0xff]
        %v2016 = vld [vmem:[%s329 + $0x51] sm:$0xff]
        %v2017 = vld [vmem:[%s329 + $0x61] sm:$0xff]
        %v2018 = vld [vmem:[%s329 + $0x69] sm:$0xff]
        %v2019 = vld [vmem:[%s329 + $0x79] sm:$0xff]
        %v2020 = vld [vmem:[%s329 + $0x81] sm:$0xff]
        %v2021 = vld [vmem:[%s329 + $0x91] sm:$0xff]
        %v2022 = vld [vmem:[%s329 + $0x99] sm:$0xff]
        %v2023 = vld [vmem:[%s329 + $0xa9] sm:$0xff]
        %v2024 = vld [vmem:[%s329 + $0xb1] sm:$0xff]
        %v2025 = vld [vmem:[%s329 + $0xc1] sm:$0xff]
        %v2026 = vld [vmem:[%s329 + $0xc9] sm:$0xff]
        %v2027 = vld [vmem:[%s329 + $0xd9] sm:$0xff]
        %v2028 = vld [vmem:[%s329 + $0xe1] sm:$0xff]
        %v2029 = vld [vmem:[%s329 + $0xf1] sm:$0xff]
        %v2030 = vld [vmem:[%s329 + $0xf9] sm:$0xff]
        %v2031 = vld [vmem:[%s329 + $0x109] sm:$0xff]
        %v2032 = vld [vmem:[%s329 + $0x111] sm:$0xff]
        %v2033 = vld [vmem:[%s329 + $0x121] sm:$0xff]
        %v2034 = vld [vmem:[%s329 + $0x129] sm:$0xff]
        %v2035 = vld [vmem:[%s329 + $0x139] sm:$0xff]
        %v2036 = vld [vmem:[%s329 + $0x141] sm:$0xff]
        %v2037 = vld [vmem:[%s329 + $0x151] sm:$0xff]
        %v2038 = vld [vmem:[%s329 + $0x159] sm:$0xff]
        %v2039 = vld [vmem:[%s329 + $0x169] sm:$0xff]
        %v2040 = vld [vmem:[%s329 + $0x171] sm:$0xff]
        %s2041 = scalar_lea.vmem [#allocation6], 16
        %v2042 = vld [vmem:[%s2041] sm:$0xf]
        %v2044 = vsel %vm330, %v2009, 0
        %v2047 = vsel %vm330, %v2010, 0
        %v2050 = vsel %vm330, %v2011, 0
        %v2053 = vsel %vm330, %v2012, 0
        %v2056 = vsel %vm330, %v2013, 0
        %v2059 = vsel %vm330, %v2014, 0
        %v2062 = vsel %vm330, %v2015, 0
        %v2065 = vsel %vm330, %v2016, 0
        %v2068 = vsel %vm330, %v2017, 0
        %v2071 = vsel %vm330, %v2018, 0
        %v2074 = vsel %vm330, %v2019, 0
        %v2077 = vsel %vm330, %v2020, 0
        %v2080 = vsel %vm330, %v2021, 0
        %v2083 = vsel %vm330, %v2022, 0
        %v2086 = vsel %vm330, %v2023, 0
        %v2089 = vsel %vm330, %v2024, 0
        %v2092 = vsel %vm330, %v2025, 0
        %v2095 = vsel %vm330, %v2026, 0
        %v2098 = vsel %vm330, %v2027, 0
        %v2101 = vsel %vm330, %v2028, 0
        %v2104 = vsel %vm330, %v2029, 0
        %v2107 = vsel %vm330, %v2030, 0
        %v2110 = vsel %vm330, %v2031, 0
        %v2113 = vsel %vm330, %v2032, 0
        %v2116 = vsel %vm330, %v2033, 0
        %v2119 = vsel %vm330, %v2034, 0
        %v2122 = vsel %vm330, %v2035, 0
        %v2125 = vsel %vm330, %v2036, 0
        %v2128 = vsel %vm330, %v2037, 0
        %v2131 = vsel %vm330, %v2038, 0
        %v2134 = vsel %vm330, %v2039, 0
        %v2137 = vsel %vm330, %v2040, 0
        %v2140 = vsel %vm578, %v2042, 0
        %2142 = vmatprep.subr.mxu0 0.0
        %2143 = vmatpush1.msra.mxu0 %v2140
        %2144 = vmatprep.subr.mxu0 0.0
        %2145 = vmatpush1.msra.mxu0 0.0
        %2146 = vmatprep.subr.mxu0 0.0
        %2147 = vmatpush1.msra.mxu0 0.0
        %2148 = vmatprep.subr.mxu0 0.0
        %2149 = vmatpush1.msra.mxu0 0.0
        %2150 = vmatprep.subr.mxu0 0.0
        %2151 = vmatpush1.msra.mxu0 0.0
        %2152 = vmatprep.subr.mxu0 0.0
        %2153 = vmatpush1.msra.mxu0 0.0
        %2154 = vmatprep.subr.mxu0 0.0
        %2155 = vmatpush1.msra.mxu0 0.0
        %2156 = vmatprep.subr.mxu0 0.0
        %2157 = vmatpush1.msra.mxu0 0.0
        %2158 = vmatprep.subr.mxu0 0.0
        %2159 = vmatpush1.msra.mxu0 0.0
        %2160 = vmatprep.subr.mxu0 0.0
        %2161 = vmatpush1.msra.mxu0 0.0
        %2162 = vmatprep.subr.mxu0 0.0
        %2163 = vmatpush1.msra.mxu0 0.0
        %2164 = vmatprep.subr.mxu0 0.0
        %2165 = vmatpush1.msra.mxu0 0.0
        %2166 = vmatprep.subr.mxu0 0.0
        %2167 = vmatpush1.msra.mxu0 0.0
        %2168 = vmatprep.subr.mxu0 0.0
        %2169 = vmatpush1.msra.mxu0 0.0
        %2170 = vmatprep.subr.mxu0 0.0
        %2171 = vmatpush1.msra.mxu0 0.0
        %2172 = vmatprep.subr.mxu0 0.0
        %2173 = vmatpush1.msra.mxu0 0.0
        %2174 = vmatprep.subr.mxu0 0.0
        %2175 = vmatpush1.msra.mxu0 0.0
        %2176 = vmatprep.subr.mxu0 0.0
        %2177 = vmatpush1.msra.mxu0 0.0
        %2178 = vmatprep.subr.mxu0 0.0
        %2179 = vmatpush1.msra.mxu0 0.0
        %2180 = vmatprep.subr.mxu0 0.0
        %2181 = vmatpush1.msra.mxu0 0.0
        %2182 = vmatprep.subr.mxu0 0.0
        %2183 = vmatpush1.msra.mxu0 0.0
        %2184 = vmatprep.subr.mxu0 0.0
        %2185 = vmatpush1.msra.mxu0 0.0
        %2186 = vmatprep.subr.mxu0 0.0
        %2187 = vmatpush1.msra.mxu0 0.0
        %2188 = vmatprep.subr.mxu0 0.0
        %2189 = vmatpush1.msra.mxu0 0.0
        %2190 = vmatprep.subr.mxu0 0.0
        %2191 = vmatpush1.msra.mxu0 0.0
        %2192 = vmatprep.subr.mxu0 0.0
        %2193 = vmatpush1.msra.mxu0 0.0
        %2194 = vmatprep.subr.mxu0 0.0
        %2195 = vmatpush1.msra.mxu0 0.0
        %2196 = vmatprep.subr.mxu0 0.0
        %2197 = vmatpush1.msra.mxu0 0.0
        %2198 = vmatprep.subr.mxu0 0.0
        %2199 = vmatpush1.msra.mxu0 0.0
        %2200 = vmatprep.subr.mxu0 0.0
        %2201 = vmatpush1.msra.mxu0 0.0
        %2202 = vmatprep.subr.mxu0 0.0
        %2203 = vmatpush1.msra.mxu0 0.0
        %2204 = vmatprep.subr.mxu0 0.0
        %2205 = vmatpush1.msra.mxu0 0.0
        %2206 = vmatprep.mubr.f32.mxu0 0.0
        %2207 = vmatmul.mubr.f32.gmra.mrb[0].mxu0 %v2044
        %v2208 = vpop.f32.mrb[0].mxu0
        %v2209 = vadd.f32 0.0, %v2208
        %v2210 = vpop.f32.mrb[0].mxu0
        %2211 = vmatprep.mubr.f32.mxu0 0.0
        %2212 = vmatmul.mubr.f32.gmra.mrb[0].mxu0 %v2047
        %v2213 = vpop.f32.mrb[0].mxu0
        %v2214 = vadd.f32 0.0, %v2213
        %v2215 = vpop.f32.mrb[0].mxu0
        %2216 = vmatprep.mubr.f32.mxu0 0.0
        %2217 = vmatmul.mubr.f32.gmra.mrb[0].mxu0 %v2050
        %v2218 = vpop.f32.mrb[0].mxu0
        %v2219 = vadd.f32 0.0, %v2218
        %v2220 = vpop.f32.mrb[0].mxu0
        %2221 = vmatprep.mubr.f32.mxu0 0.0
        %2222 = vmatmul.mubr.f32.gmra.mrb[0].mxu0 %v2053
        %v2223 = vpop.f32.mrb[0].mxu0
        %v2224 = vadd.f32 0.0, %v2223
        %v2225 = vpop.f32.mrb[0].mxu0
        %2226 = vmatprep.mubr.f32.mxu0 0.0
        %2227 = vmatmul.mubr.f32.gmra.mrb[0].mxu0 %v2056
        %v2228 = vpop.f32.mrb[0].mxu0
        %v2229 = vadd.f32 0.0, %v2228
        %v2230 = vpop.f32.mrb[0].mxu0
        %2231 = vmatprep.mubr.f32.mxu0 0.0
        %2232 = vmatmul.mubr.f32.gmra.mrb[0].mxu0 %v2059
        %v2233 = vpop.f32.mrb[0].mxu0
        %v2234 = vadd.f32 0.0, %v2233
        %v2235 = vpop.f32.mrb[0].mxu0
        %2236 = vmatprep.mubr.f32.mxu0 0.0
        %2237 = vmatmul.mubr.f32.gmra.mrb[0].mxu0 %v2062
        %v2238 = vpop.f32.mrb[0].mxu0
        %v2239 = vadd.f32 0.0, %v2238
        %v2240 = vpop.f32.mrb[0].mxu0
        %2241 = vmatprep.mubr.f32.mxu0 0.0
        %2242 = vmatmul.mubr.f32.gmra.mrb[0].mxu0 %v2065
        %v2243 = vpop.f32.mrb[0].mxu0
        %v2244 = vadd.f32 0.0, %v2243
        %v2245 = vpop.f32.mrb[0].mxu0
        %2246 = vmatprep.mubr.f32.mxu0 0.0
        %2247 = vmatmul.mubr.f32.gmra.mrb[0].mxu0 %v2068
        %v2248 = vpop.f32.mrb[0].mxu0
        %v2249 = vadd.f32 0.0, %v2248
        %v2250 = vpop.f32.mrb[0].mxu0
        %2251 = vmatprep.mubr.f32.mxu0 0.0
        %2252 = vmatmul.mubr.f32.gmra.mrb[0].mxu0 %v2071
        %v2253 = vpop.f32.mrb[0].mxu0
        %v2254 = vadd.f32 0.0, %v2253
        %v2255 = vpop.f32.mrb[0].mxu0
        %2256 = vmatprep.mubr.f32.mxu0 0.0
        %2257 = vmatmul.mubr.f32.gmra.mrb[0].mxu0 %v2074
        %v2258 = vpop.f32.mrb[0].mxu0
        %v2259 = vadd.f32 0.0, %v2258
        %v2260 = vpop.f32.mrb[0].mxu0
        %2261 = vmatprep.mubr.f32.mxu0 0.0
        %2262 = vmatmul.mubr.f32.gmra.mrb[0].mxu0 %v2077
        %v2263 = vpop.f32.mrb[0].mxu0
        %v2264 = vadd.f32 0.0, %v2263
        %v2265 = vpop.f32.mrb[0].mxu0
        %2266 = vmatprep.mubr.f32.mxu0 0.0
        %2267 = vmatmul.mubr.f32.gmra.mrb[0].mxu0 %v2080
        %v2268 = vpop.f32.mrb[0].mxu0
        %v2269 = vadd.f32 0.0, %v2268
        %v2270 = vpop.f32.mrb[0].mxu0
        %2271 = vmatprep.mubr.f32.mxu0 0.0
        %2272 = vmatmul.mubr.f32.gmra.mrb[0].mxu0 %v2083
        %v2273 = vpop.f32.mrb[0].mxu0
        %v2274 = vadd.f32 0.0, %v2273
        %v2275 = vpop.f32.mrb[0].mxu0
        %2276 = vmatprep.mubr.f32.mxu0 0.0
        %2277 = vmatmul.mubr.f32.gmra.mrb[0].mxu0 %v2086
        %v2278 = vpop.f32.mrb[0].mxu0
        %v2279 = vadd.f32 0.0, %v2278
        %v2280 = vpop.f32.mrb[0].mxu0
        %2281 = vmatprep.mubr.f32.mxu0 0.0
        %2282 = vmatmul.mubr.f32.gmra.mrb[0].mxu0 %v2089
        %v2283 = vpop.f32.mrb[0].mxu0
        %v2284 = vadd.f32 0.0, %v2283
        %v2285 = vpop.f32.mrb[0].mxu0
        %2286 = vmatprep.mubr.f32.mxu0 0.0
        %2287 = vmatmul.mubr.f32.gmra.mrb[0].mxu0 %v2092
        %v2288 = vpop.f32.mrb[0].mxu0
        %v2289 = vadd.f32 0.0, %v2288
        %v2290 = vpop.f32.mrb[0].mxu0
        %2291 = vmatprep.mubr.f32.mxu0 0.0
        %2292 = vmatmul.mubr.f32.gmra.mrb[0].mxu0 %v2095
        %v2293 = vpop.f32.mrb[0].mxu0
        %v2294 = vadd.f32 0.0, %v2293
        %v2295 = vpop.f32.mrb[0].mxu0
        %2296 = vmatprep.mubr.f32.mxu0 0.0
        %2297 = vmatmul.mubr.f32.gmra.mrb[0].mxu0 %v2098
        %v2298 = vpop.f32.mrb[0].mxu0
        %v2299 = vadd.f32 0.0, %v2298
        %v2300 = vpop.f32.mrb[0].mxu0
        %2301 = vmatprep.mubr.f32.mxu0 0.0
        %2302 = vmatmul.mubr.f32.gmra.mrb[0].mxu0 %v2101
        %v2303 = vpop.f32.mrb[0].mxu0
        %v2304 = vadd.f32 0.0, %v2303
        %v2305 = vpop.f32.mrb[0].mxu0
        %2306 = vmatprep.mubr.f32.mxu0 0.0
        %2307 = vmatmul.mubr.f32.gmra.mrb[0].mxu0 %v2104
        %v2308 = vpop.f32.mrb[0].mxu0
        %v2309 = vadd.f32 0.0, %v2308
        %v2310 = vpop.f32.mrb[0].mxu0
        %2311 = vmatprep.mubr.f32.mxu0 0.0
        %2312 = vmatmul.mubr.f32.gmra.mrb[0].mxu0 %v2107
        %v2313 = vpop.f32.mrb[0].mxu0
        %v2314 = vadd.f32 0.0, %v2313
        %v2315 = vpop.f32.mrb[0].mxu0
        %2316 = vmatprep.mubr.f32.mxu0 0.0
        %2317 = vmatmul.mubr.f32.gmra.mrb[0].mxu0 %v2110
        %v2318 = vpop.f32.mrb[0].mxu0
        %v2319 = vadd.f32 0.0, %v2318
        %v2320 = vpop.f32.mrb[0].mxu0
        %2321 = vmatprep.mubr.f32.mxu0 0.0
        %2322 = vmatmul.mubr.f32.gmra.mrb[0].mxu0 %v2113
        %v2323 = vpop.f32.mrb[0].mxu0
        %v2324 = vadd.f32 0.0, %v2323
        %v2325 = vpop.f32.mrb[0].mxu0
        %2326 = vmatprep.mubr.f32.mxu0 0.0
        %2327 = vmatmul.mubr.f32.gmra.mrb[0].mxu0 %v2116
        %v2328 = vpop.f32.mrb[0].mxu0
        %v2329 = vadd.f32 0.0, %v2328
        %v2330 = vpop.f32.mrb[0].mxu0
        %2331 = vmatprep.mubr.f32.mxu0 0.0
        %2332 = vmatmul.mubr.f32.gmra.mrb[0].mxu0 %v2119
        %v2333 = vpop.f32.mrb[0].mxu0
        %v2334 = vadd.f32 0.0, %v2333
        %v2335 = vpop.f32.mrb[0].mxu0
        %2336 = vmatprep.mubr.f32.mxu0 0.0
        %2337 = vmatmul.mubr.f32.gmra.mrb[0].mxu0 %v2122
        %v2338 = vpop.f32.mrb[0].mxu0
        %v2339 = vadd.f32 0.0, %v2338
        %v2340 = vpop.f32.mrb[0].mxu0
        %2341 = vmatprep.mubr.f32.mxu0 0.0
        %2342 = vmatmul.mubr.f32.gmra.mrb[0].mxu0 %v2125
        %v2343 = vpop.f32.mrb[0].mxu0
        %v2344 = vadd.f32 0.0, %v2343
        %v2345 = vpop.f32.mrb[0].mxu0
        %2346 = vmatprep.mubr.f32.mxu0 0.0
        %2347 = vmatmul.mubr.f32.gmra.mrb[0].mxu0 %v2128
        %v2348 = vpop.f32.mrb[0].mxu0
        %v2349 = vadd.f32 0.0, %v2348
        %v2350 = vpop.f32.mrb[0].mxu0
        %2351 = vmatprep.mubr.f32.mxu0 0.0
        %2352 = vmatmul.mubr.f32.gmra.mrb[0].mxu0 %v2131
        %v2353 = vpop.f32.mrb[0].mxu0
        %v2354 = vadd.f32 0.0, %v2353
        %v2355 = vpop.f32.mrb[0].mxu0
        %2356 = vmatprep.mubr.f32.mxu0 0.0
        %2357 = vmatmul.mubr.f32.gmra.mrb[0].mxu0 %v2134
        %v2358 = vpop.f32.mrb[0].mxu0
        %v2359 = vadd.f32 0.0, %v2358
        %v2360 = vpop.f32.mrb[0].mxu0
        %2361 = vmatprep.mubr.f32.mxu0 0.0
        %2362 = vmatmul.mubr.f32.gmra.mrb[0].mxu0 %v2137
        %v2363 = vpop.f32.mrb[0].mxu0
        %v2364 = vadd.f32 0.0, %v2363
        %v2365 = vpop.f32.mrb[0].mxu0
        %2366 = vdwg.mxu0
        %v2367 = vadd.f32 %v1977, %v2209
        %v2368 = vadd.f32 %v1978, %v2214
        %v2369 = vadd.f32 %v1979, %v2219
        %v2370 = vadd.f32 %v1980, %v2224
        %v2371 = vadd.f32 %v1981, %v2229
        %v2372 = vadd.f32 %v1982, %v2234
        %v2373 = vadd.f32 %v1983, %v2239
        %v2374 = vadd.f32 %v1984, %v2244
        %v2375 = vadd.f32 %v1985, %v2249
        %v2376 = vadd.f32 %v1986, %v2254
        %v2377 = vadd.f32 %v1987, %v2259
        %v2378 = vadd.f32 %v1988, %v2264
        %v2379 = vadd.f32 %v1989, %v2269
        %v2380 = vadd.f32 %v1990, %v2274
        %v2381 = vadd.f32 %v1991, %v2279
        %v2382 = vadd.f32 %v1992, %v2284
        %v2383 = vadd.f32 %v1993, %v2289
        %v2384 = vadd.f32 %v1994, %v2294
        %v2385 = vadd.f32 %v1995, %v2299
        %v2386 = vadd.f32 %v1996, %v2304
        %v2387 = vadd.f32 %v1997, %v2309
        %v2388 = vadd.f32 %v1998, %v2314
        %v2389 = vadd.f32 %v1999, %v2319
        %v2390 = vadd.f32 %v2000, %v2324
        %v2391 = vadd.f32 %v2001, %v2329
        %v2392 = vadd.f32 %v2002, %v2334
        %v2393 = vadd.f32 %v2003, %v2339
        %v2394 = vadd.f32 %v2004, %v2344
        %v2395 = vadd.f32 %v2005, %v2349
        %v2396 = vadd.f32 %v2006, %v2354
        %v2397 = vadd.f32 %v2007, %v2359
        %v2398 = vadd.f32 %v2008, %v2364
        %v2399 = vld [vmem:[%s329 + $0x2] sm:$0xff]
        %v2400 = vld [vmem:[%s329 + $0xa] sm:$0xff]
        %v2401 = vld [vmem:[%s329 + $0x1a] sm:$0xff]
        %v2402 = vld [vmem:[%s329 + $0x22] sm:$0xff]
        %v2403 = vld [vmem:[%s329 + $0x32] sm:$0xff]
        %v2404 = vld [vmem:[%s329 + $0x3a] sm:$0xff]
        %v2405 = vld [vmem:[%s329 + $0x4a] sm:$0xff]
        %v2406 = vld [vmem:[%s329 + $0x52] sm:$0xff]
        %v2407 = vld [vmem:[%s329 + $0x62] sm:$0xff]
        %v2408 = vld [vmem:[%s329 + $0x6a] sm:$0xff]
        %v2409 = vld [vmem:[%s329 + $0x7a] sm:$0xff]
        %v2410 = vld [vmem:[%s329 + $0x82] sm:$0xff]
        %v2411 = vld [vmem:[%s329 + $0x92] sm:$0xff]
        %v2412 = vld [vmem:[%s329 + $0x9a] sm:$0xff]
        %v2413 = vld [vmem:[%s329 + $0xaa] sm:$0xff]
        %v2414 = vld [vmem:[%s329 + $0xb2] sm:$0xff]
        %v2415 = vld [vmem:[%s329 + $0xc2] sm:$0xff]
        %v2416 = vld [vmem:[%s329 + $0xca] sm:$0xff]
        %v2417 = vld [vmem:[%s329 + $0xda] sm:$0xff]
        %v2418 = vld [vmem:[%s329 + $0xe2] sm:$0xff]
        %v2419 = vld [vmem:[%s329 + $0xf2] sm:$0xff]
        %v2420 = vld [vmem:[%s329 + $0xfa] sm:$0xff]
        %v2421 = vld [vmem:[%s329 + $0x10a] sm:$0xff]
        %v2422 = vld [vmem:[%s329 + $0x112] sm:$0xff]
        %v2423 = vld [vmem:[%s329 + $0x122] sm:$0xff]
        %v2424 = vld [vmem:[%s329 + $0x12a] sm:$0xff]
        %v2425 = vld [vmem:[%s329 + $0x13a] sm:$0xff]
        %v2426 = vld [vmem:[%s329 + $0x142] sm:$0xff]
        %v2427 = vld [vmem:[%s329 + $0x152] sm:$0xff]
        %v2428 = vld [vmem:[%s329 + $0x15a] sm:$0xff]
        %v2429 = vld [vmem:[%s329 + $0x16a] sm:$0xff]
        %v2430 = vld [vmem:[%s329 + $0x172] sm:$0xff]
        %s2431 = scalar_lea.vmem [#allocation6], 20
        %v2432 = vld [vmem:[%s2431] sm:$0xf]
        %v2434 = vsel %vm330, %v2399, 0
        %v2437 = vsel %vm330, %v2400, 0
        %v2440 = vsel %vm330, %v2401, 0
        %v2443 = vsel %vm330, %v2402, 0
        %v2446 = vsel %vm330, %v2403, 0
        %v2449 = vsel %vm330, %v2404, 0
        %v2452 = vsel %vm330, %v2405, 0
        %v2455 = vsel %vm330, %v2406, 0
        %v2458 = vsel %vm330, %v2407, 0
        %v2461 = vsel %vm330, %v2408, 0
        %v2464 = vsel %vm330, %v2409, 0
        %v2467 = vsel %vm330, %v2410, 0
        %v2470 = vsel %vm330, %v2411, 0
        %v2473 = vsel %vm330, %v2412, 0
        %v2476 = vsel %vm330, %v2413, 0
        %v2479 = vsel %vm330, %v2414, 0
        %v2482 = vsel %vm330, %v2415, 0
        %v2485 = vsel %vm330, %v2416, 0
        %v2488 = vsel %vm330, %v2417, 0
        %v2491 = vsel %vm330, %v2418, 0
        %v2494 = vsel %vm330, %v2419, 0
        %v2497 = vsel %vm330, %v2420, 0
        %v2500 = vsel %vm330, %v2421, 0
        %v2503 = vsel %vm330, %v2422, 0
        %v2506 = vsel %vm330, %v2423, 0
        %v2509 = vsel %vm330, %v2424, 0
        %v2512 = vsel %vm330, %v2425, 0
        %v2515 = vsel %vm330, %v2426, 0
        %v2518 = vsel %vm330, %v2427, 0
        %v2521 = vsel %vm330, %v2428, 0
        %v2524 = vsel %vm330, %v2429, 0
        %v2527 = vsel %vm330, %v2430, 0
        %v2530 = vsel %vm578, %v2432, 0
        %2532 = vmatprep.subr.mxu0 0.0
        %2533 = vmatpush1.msra.mxu0 %v2530
        %2534 = vmatprep.subr.mxu0 0.0
        %2535 = vmatpush1.msra.mxu0 0.0
        %2536 = vmatprep.subr.mxu0 0.0
        %2537 = vmatpush1.msra.mxu0 0.0
        %2538 = vmatprep.subr.mxu0 0.0
        %2539 = vmatpush1.msra.mxu0 0.0
        %2540 = vmatprep.subr.mxu0 0.0
        %2541 = vmatpush1.msra.mxu0 0.0
        %2542 = vmatprep.subr.mxu0 0.0
        %2543 = vmatpush1.msra.mxu0 0.0
        %2544 = vmatprep.subr.mxu0 0.0
        %2545 = vmatpush1.msra.mxu0 0.0
        %2546 = vmatprep.subr.mxu0 0.0
        %2547 = vmatpush1.msra.mxu0 0.0
        %2548 = vmatprep.subr.mxu0 0.0
        %2549 = vmatpush1.msra.mxu0 0.0
        %2550 = vmatprep.subr.mxu0 0.0
        %2551 = vmatpush1.msra.mxu0 0.0
        %2552 = vmatprep.subr.mxu0 0.0
        %2553 = vmatpush1.msra.mxu0 0.0
        %2554 = vmatprep.subr.mxu0 0.0
        %2555 = vmatpush1.msra.mxu0 0.0
        %2556 = vmatprep.subr.mxu0 0.0
        %2557 = vmatpush1.msra.mxu0 0.0
        %2558 = vmatprep.subr.mxu0 0.0
        %2559 = vmatpush1.msra.mxu0 0.0
        %2560 = vmatprep.subr.mxu0 0.0
        %2561 = vmatpush1.msra.mxu0 0.0
        %2562 = vmatprep.subr.mxu0 0.0
        %2563 = vmatpush1.msra.mxu0 0.0
        %2564 = vmatprep.subr.mxu0 0.0
        %2565 = vmatpush1.msra.mxu0 0.0
        %2566 = vmatprep.subr.mxu0 0.0
        %2567 = vmatpush1.msra.mxu0 0.0
        %2568 = vmatprep.subr.mxu0 0.0
        %2569 = vmatpush1.msra.mxu0 0.0
        %2570 = vmatprep.subr.mxu0 0.0
        %2571 = vmatpush1.msra.mxu0 0.0
        %2572 = vmatprep.subr.mxu0 0.0
        %2573 = vmatpush1.msra.mxu0 0.0
        %2574 = vmatprep.subr.mxu0 0.0
        %2575 = vmatpush1.msra.mxu0 0.0
        %2576 = vmatprep.subr.mxu0 0.0
        %2577 = vmatpush1.msra.mxu0 0.0
        %2578 = vmatprep.subr.mxu0 0.0
        %2579 = vmatpush1.msra.mxu0 0.0
        %2580 = vmatprep.subr.mxu0 0.0
        %2581 = vmatpush1.msra.mxu0 0.0
        %2582 = vmatprep.subr.mxu0 0.0
        %2583 = vmatpush1.msra.mxu0 0.0
        %2584 = vmatprep.subr.mxu0 0.0
        %2585 = vmatpush1.msra.mxu0 0.0
        %2586 = vmatprep.subr.mxu0 0.0
        %2587 = vmatpush1.msra.mxu0 0.0
        %2588 = vmatprep.subr.mxu0 0.0
        %2589 = vmatpush1.msra.mxu0 0.0
        %2590 = vmatprep.subr.mxu0 0.0
        %2591 = vmatpush1.msra.mxu0 0.0
        %2592 = vmatprep.subr.mxu0 0.0
        %2593 = vmatpush1.msra.mxu0 0.0
        %2594 = vmatprep.subr.mxu0 0.0
        %2595 = vmatpush1.msra.mxu0 0.0
        %2596 = vmatprep.mubr.f32.mxu0 0.0
        %2597 = vmatmul.mubr.f32.gmra.mrb[0].mxu0 %v2434
        %v2598 = vpop.f32.mrb[0].mxu0
        %v2599 = vadd.f32 0.0, %v2598
        %v2600 = vpop.f32.mrb[0].mxu0
        %2601 = vmatprep.mubr.f32.mxu0 0.0
        %2602 = vmatmul.mubr.f32.gmra.mrb[0].mxu0 %v2437
        %v2603 = vpop.f32.mrb[0].mxu0
        %v2604 = vadd.f32 0.0, %v2603
        %v2605 = vpop.f32.mrb[0].mxu0
        %2606 = vmatprep.mubr.f32.mxu0 0.0
        %2607 = vmatmul.mubr.f32.gmra.mrb[0].mxu0 %v2440
        %v2608 = vpop.f32.mrb[0].mxu0
        %v2609 = vadd.f32 0.0, %v2608
        %v2610 = vpop.f32.mrb[0].mxu0
        %2611 = vmatprep.mubr.f32.mxu0 0.0
        %2612 = vmatmul.mubr.f32.gmra.mrb[0].mxu0 %v2443
        %v2613 = vpop.f32.mrb[0].mxu0
        %v2614 = vadd.f32 0.0, %v2613
        %v2615 = vpop.f32.mrb[0].mxu0
        %2616 = vmatprep.mubr.f32.mxu0 0.0
        %2617 = vmatmul.mubr.f32.gmra.mrb[0].mxu0 %v2446
        %v2618 = vpop.f32.mrb[0].mxu0
        %v2619 = vadd.f32 0.0, %v2618
        %v2620 = vpop.f32.mrb[0].mxu0
        %2621 = vmatprep.mubr.f32.mxu0 0.0
        %2622 = vmatmul.mubr.f32.gmra.mrb[0].mxu0 %v2449
        %v2623 = vpop.f32.mrb[0].mxu0
        %v2624 = vadd.f32 0.0, %v2623
        %v2625 = vpop.f32.mrb[0].mxu0
        %2626 = vmatprep.mubr.f32.mxu0 0.0
        %2627 = vmatmul.mubr.f32.gmra.mrb[0].mxu0 %v2452
        %v2628 = vpop.f32.mrb[0].mxu0
        %v2629 = vadd.f32 0.0, %v2628
        %v2630 = vpop.f32.mrb[0].mxu0
        %2631 = vmatprep.mubr.f32.mxu0 0.0
        %2632 = vmatmul.mubr.f32.gmra.mrb[0].mxu0 %v2455
        %v2633 = vpop.f32.mrb[0].mxu0
        %v2634 = vadd.f32 0.0, %v2633
        %v2635 = vpop.f32.mrb[0].mxu0
        %2636 = vmatprep.mubr.f32.mxu0 0.0
        %2637 = vmatmul.mubr.f32.gmra.mrb[0].mxu0 %v2458
        %v2638 = vpop.f32.mrb[0].mxu0
        %v2639 = vadd.f32 0.0, %v2638
        %v2640 = vpop.f32.mrb[0].mxu0
        %2641 = vmatprep.mubr.f32.mxu0 0.0
        %2642 = vmatmul.mubr.f32.gmra.mrb[0].mxu0 %v2461
        %v2643 = vpop.f32.mrb[0].mxu0
        %v2644 = vadd.f32 0.0, %v2643
        %v2645 = vpop.f32.mrb[0].mxu0
        %2646 = vmatprep.mubr.f32.mxu0 0.0
        %2647 = vmatmul.mubr.f32.gmra.mrb[0].mxu0 %v2464
        %v2648 = vpop.f32.mrb[0].mxu0
        %v2649 = vadd.f32 0.0, %v2648
        %v2650 = vpop.f32.mrb[0].mxu0
        %2651 = vmatprep.mubr.f32.mxu0 0.0
        %2652 = vmatmul.mubr.f32.gmra.mrb[0].mxu0 %v2467
        %v2653 = vpop.f32.mrb[0].mxu0
        %v2654 = vadd.f32 0.0, %v2653
        %v2655 = vpop.f32.mrb[0].mxu0
        %2656 = vmatprep.mubr.f32.mxu0 0.0
        %2657 = vmatmul.mubr.f32.gmra.mrb[0].mxu0 %v2470
        %v2658 = vpop.f32.mrb[0].mxu0
        %v2659 = vadd.f32 0.0, %v2658
        %v2660 = vpop.f32.mrb[0].mxu0
        %2661 = vmatprep.mubr.f32.mxu0 0.0
        %2662 = vmatmul.mubr.f32.gmra.mrb[0].mxu0 %v2473
        %v2663 = vpop.f32.mrb[0].mxu0
        %v2664 = vadd.f32 0.0, %v2663
        %v2665 = vpop.f32.mrb[0].mxu0
        %2666 = vmatprep.mubr.f32.mxu0 0.0
        %2667 = vmatmul.mubr.f32.gmra.mrb[0].mxu0 %v2476
        %v2668 = vpop.f32.mrb[0].mxu0
        %v2669 = vadd.f32 0.0, %v2668
        %v2670 = vpop.f32.mrb[0].mxu0
        %2671 = vmatprep.mubr.f32.mxu0 0.0
        %2672 = vmatmul.mubr.f32.gmra.mrb[0].mxu0 %v2479
        %v2673 = vpop.f32.mrb[0].mxu0
        %v2674 = vadd.f32 0.0, %v2673
        %v2675 = vpop.f32.mrb[0].mxu0
        %2676 = vmatprep.mubr.f32.mxu0 0.0
        %2677 = vmatmul.mubr.f32.gmra.mrb[0].mxu0 %v2482
        %v2678 = vpop.f32.mrb[0].mxu0
        %v2679 = vadd.f32 0.0, %v2678
        %v2680 = vpop.f32.mrb[0].mxu0
        %2681 = vmatprep.mubr.f32.mxu0 0.0
        %2682 = vmatmul.mubr.f32.gmra.mrb[0].mxu0 %v2485
        %v2683 = vpop.f32.mrb[0].mxu0
        %v2684 = vadd.f32 0.0, %v2683
        %v2685 = vpop.f32.mrb[0].mxu0
        %2686 = vmatprep.mubr.f32.mxu0 0.0
        %2687 = vmatmul.mubr.f32.gmra.mrb[0].mxu0 %v2488
        %v2688 = vpop.f32.mrb[0].mxu0
        %v2689 = vadd.f32 0.0, %v2688
        %v2690 = vpop.f32.mrb[0].mxu0
        %2691 = vmatprep.mubr.f32.mxu0 0.0
        %2692 = vmatmul.mubr.f32.gmra.mrb[0].mxu0 %v2491
        %v2693 = vpop.f32.mrb[0].mxu0
        %v2694 = vadd.f32 0.0, %v2693
        %v2695 = vpop.f32.mrb[0].mxu0
        %2696 = vmatprep.mubr.f32.mxu0 0.0
        %2697 = vmatmul.mubr.f32.gmra.mrb[0].mxu0 %v2494
        %v2698 = vpop.f32.mrb[0].mxu0
        %v2699 = vadd.f32 0.0, %v2698
        %v2700 = vpop.f32.mrb[0].mxu0
        %2701 = vmatprep.mubr.f32.mxu0 0.0
        %2702 = vmatmul.mubr.f32.gmra.mrb[0].mxu0 %v2497
        %v2703 = vpop.f32.mrb[0].mxu0
        %v2704 = vadd.f32 0.0, %v2703
        %v2705 = vpop.f32.mrb[0].mxu0
        %2706 = vmatprep.mubr.f32.mxu0 0.0
        %2707 = vmatmul.mubr.f32.gmra.mrb[0].mxu0 %v2500
        %v2708 = vpop.f32.mrb[0].mxu0
        %v2709 = vadd.f32 0.0, %v2708
        %v2710 = vpop.f32.mrb[0].mxu0
        %2711 = vmatprep.mubr.f32.mxu0 0.0
        %2712 = vmatmul.mubr.f32.gmra.mrb[0].mxu0 %v2503
        %v2713 = vpop.f32.mrb[0].mxu0
        %v2714 = vadd.f32 0.0, %v2713
        %v2715 = vpop.f32.mrb[0].mxu0
        %2716 = vmatprep.mubr.f32.mxu0 0.0
        %2717 = vmatmul.mubr.f32.gmra.mrb[0].mxu0 %v2506
        %v2718 = vpop.f32.mrb[0].mxu0
        %v2719 = vadd.f32 0.0, %v2718
        %v2720 = vpop.f32.mrb[0].mxu0
        %2721 = vmatprep.mubr.f32.mxu0 0.0
        %2722 = vmatmul.mubr.f32.gmra.mrb[0].mxu0 %v2509
        %v2723 = vpop.f32.mrb[0].mxu0
        %v2724 = vadd.f32 0.0, %v2723
        %v2725 = vpop.f32.mrb[0].mxu0
        %2726 = vmatprep.mubr.f32.mxu0 0.0
        %2727 = vmatmul.mubr.f32.gmra.mrb[0].mxu0 %v2512
        %v2728 = vpop.f32.mrb[0].mxu0
        %v2729 = vadd.f32 0.0, %v2728
        %v2730 = vpop.f32.mrb[0].mxu0
        %2731 = vmatprep.mubr.f32.mxu0 0.0
        %2732 = vmatmul.mubr.f32.gmra.mrb[0].mxu0 %v2515
        %v2733 = vpop.f32.mrb[0].mxu0
        %v2734 = vadd.f32 0.0, %v2733
        %v2735 = vpop.f32.mrb[0].mxu0
        %2736 = vmatprep.mubr.f32.mxu0 0.0
        %2737 = vmatmul.mubr.f32.gmra.mrb[0].mxu0 %v2518
        %v2738 = vpop.f32.mrb[0].mxu0
        %v2739 = vadd.f32 0.0, %v2738
        %v2740 = vpop.f32.mrb[0].mxu0
        %2741 = vmatprep.mubr.f32.mxu0 0.0
        %2742 = vmatmul.mubr.f32.gmra.mrb[0].mxu0 %v2521
        %v2743 = vpop.f32.mrb[0].mxu0
        %v2744 = vadd.f32 0.0, %v2743
        %v2745 = vpop.f32.mrb[0].mxu0
        %2746 = vmatprep.mubr.f32.mxu0 0.0
        %2747 = vmatmul.mubr.f32.gmra.mrb[0].mxu0 %v2524
        %v2748 = vpop.f32.mrb[0].mxu0
        %v2749 = vadd.f32 0.0, %v2748
        %v2750 = vpop.f32.mrb[0].mxu0
        %2751 = vmatprep.mubr.f32.mxu0 0.0
        %2752 = vmatmul.mubr.f32.gmra.mrb[0].mxu0 %v2527
        %v2753 = vpop.f32.mrb[0].mxu0
        %v2754 = vadd.f32 0.0, %v2753
        %v2755 = vpop.f32.mrb[0].mxu0
        %2756 = vdwg.mxu0
        %v2757 = vadd.f32 %v2367, %v2599
        %v2758 = vadd.f32 %v2368, %v2604
        %v2759 = vadd.f32 %v2369, %v2609
        %v2760 = vadd.f32 %v2370, %v2614
        %v2761 = vadd.f32 %v2371, %v2619
        %v2762 = vadd.f32 %v2372, %v2624
        %v2763 = vadd.f32 %v2373, %v2629
        %v2764 = vadd.f32 %v2374, %v2634
        %v2765 = vadd.f32 %v2375, %v2639
        %v2766 = vadd.f32 %v2376, %v2644
        %v2767 = vadd.f32 %v2377, %v2649
        %v2768 = vadd.f32 %v2378, %v2654
        %v2769 = vadd.f32 %v2379, %v2659
        %v2770 = vadd.f32 %v2380, %v2664
        %v2771 = vadd.f32 %v2381, %v2669
        %v2772 = vadd.f32 %v2382, %v2674
        %v2773 = vadd.f32 %v2383, %v2679
        %v2774 = vadd.f32 %v2384, %v2684
        %v2775 = vadd.f32 %v2385, %v2689
        %v2776 = vadd.f32 %v2386, %v2694
        %v2777 = vadd.f32 %v2387, %v2699
        %v2778 = vadd.f32 %v2388, %v2704
        %v2779 = vadd.f32 %v2389, %v2709
        %v2780 = vadd.f32 %v2390, %v2714
        %v2781 = vadd.f32 %v2391, %v2719
        %v2782 = vadd.f32 %v2392, %v2724
        %v2783 = vadd.f32 %v2393, %v2729
        %v2784 = vadd.f32 %v2394, %v2734
        %v2785 = vadd.f32 %v2395, %v2739
        %v2786 = vadd.f32 %v2396, %v2744
        %v2787 = vadd.f32 %v2397, %v2749
        %v2788 = vadd.f32 %v2398, %v2754
        %s2789 = scalar_lea.vmem [#allocation2], 48
        %v2790 = vld [vmem:[%s2789] sm:$0xff]
        %v2791 = vld [vmem:[%s2789 + $0x8] sm:$0xff]
        %v2792 = vld [vmem:[%s2789 + $0x18] sm:$0xff]
        %v2793 = vld [vmem:[%s2789 + $0x20] sm:$0xff]
        %v2794 = vld [vmem:[%s2789 + $0x30] sm:$0xff]
        %v2795 = vld [vmem:[%s2789 + $0x38] sm:$0xff]
        %v2796 = vld [vmem:[%s2789 + $0x48] sm:$0xff]
        %v2797 = vld [vmem:[%s2789 + $0x50] sm:$0xff]
        %v2798 = vld [vmem:[%s2789 + $0x60] sm:$0xff]
        %v2799 = vld [vmem:[%s2789 + $0x68] sm:$0xff]
        %v2800 = vld [vmem:[%s2789 + $0x78] sm:$0xff]
        %v2801 = vld [vmem:[%s2789 + $0x80] sm:$0xff]
        %v2802 = vld [vmem:[%s2789 + $0x90] sm:$0xff]
        %v2803 = vld [vmem:[%s2789 + $0x98] sm:$0xff]
        %v2804 = vld [vmem:[%s2789 + $0xa8] sm:$0xff]
        %v2805 = vld [vmem:[%s2789 + $0xb0] sm:$0xff]
        %v2806 = vld [vmem:[%s2789 + $0xc0] sm:$0xff]
        %v2807 = vld [vmem:[%s2789 + $0xc8] sm:$0xff]
        %v2808 = vld [vmem:[%s2789 + $0xd8] sm:$0xff]
        %v2809 = vld [vmem:[%s2789 + $0xe0] sm:$0xff]
        %v2810 = vld [vmem:[%s2789 + $0xf0] sm:$0xff]
        %v2811 = vld [vmem:[%s2789 + $0xf8] sm:$0xff]
        %v2812 = vld [vmem:[%s2789 + $0x108] sm:$0xff]
        %v2813 = vld [vmem:[%s2789 + $0x110] sm:$0xff]
        %v2814 = vld [vmem:[%s2789 + $0x120] sm:$0xff]
        %v2815 = vld [vmem:[%s2789 + $0x128] sm:$0xff]
        %v2816 = vld [vmem:[%s2789 + $0x138] sm:$0xff]
        %v2817 = vld [vmem:[%s2789 + $0x140] sm:$0xff]
        %v2818 = vld [vmem:[%s2789 + $0x150] sm:$0xff]
        %v2819 = vld [vmem:[%s2789 + $0x158] sm:$0xff]
        %v2820 = vld [vmem:[%s2789 + $0x168] sm:$0xff]
        %v2821 = vld [vmem:[%s2789 + $0x170] sm:$0xff]
        %s2822 = scalar_lea.vmem [#allocation6], 24
        %v2823 = vld [vmem:[%s2822] sm:$0xf]
        %v2825 = vsel %vm330, %v2790, 0
        %v2828 = vsel %vm330, %v2791, 0
        %v2831 = vsel %vm330, %v2792, 0
        %v2834 = vsel %vm330, %v2793, 0
        %v2837 = vsel %vm330, %v2794, 0
        %v2840 = vsel %vm330, %v2795, 0
        %v2843 = vsel %vm330, %v2796, 0
        %v2846 = vsel %vm330, %v2797, 0
        %v2849 = vsel %vm330, %v2798, 0
        %v2852 = vsel %vm330, %v2799, 0
        %v2855 = vsel %vm330, %v2800, 0
        %v2858 = vsel %vm330, %v2801, 0
        %v2861 = vsel %vm330, %v2802, 0
        %v2864 = vsel %vm330, %v2803, 0
        %v2867 = vsel %vm330, %v2804, 0
        %v2870 = vsel %vm330, %v2805, 0
        %v2873 = vsel %vm330, %v2806, 0
        %v2876 = vsel %vm330, %v2807, 0
        %v2879 = vsel %vm330, %v2808, 0
        %v2882 = vsel %vm330, %v2809, 0
        %v2885 = vsel %vm330, %v2810, 0
        %v2888 = vsel %vm330, %v2811, 0
        %v2891 = vsel %vm330, %v2812, 0
        %v2894 = vsel %vm330, %v2813, 0
        %v2897 = vsel %vm330, %v2814, 0
        %v2900 = vsel %vm330, %v2815, 0
        %v2903 = vsel %vm330, %v2816, 0
        %v2906 = vsel %vm330, %v2817, 0
        %v2909 = vsel %vm330, %v2818, 0
        %v2912 = vsel %vm330, %v2819, 0
        %v2915 = vsel %vm330, %v2820, 0
        %v2918 = vsel %vm330, %v2821, 0
        %v2921 = vsel %vm578, %v2823, 0
        %2923 = vmatprep.subr.mxu0 0.0
        %2924 = vmatpush1.msra.mxu0 %v2921
        %2925 = vmatprep.subr.mxu0 0.0
        %2926 = vmatpush1.msra.mxu0 0.0
        %2927 = vmatprep.subr.mxu0 0.0
        %2928 = vmatpush1.msra.mxu0 0.0
        %2929 = vmatprep.subr.mxu0 0.0
        %2930 = vmatpush1.msra.mxu0 0.0
        %2931 = vmatprep.subr.mxu0 0.0
        %2932 = vmatpush1.msra.mxu0 0.0
        %2933 = vmatprep.subr.mxu0 0.0
        %2934 = vmatpush1.msra.mxu0 0.0
        %2935 = vmatprep.subr.mxu0 0.0
        %2936 = vmatpush1.msra.mxu0 0.0
        %2937 = vmatprep.subr.mxu0 0.0
        %2938 = vmatpush1.msra.mxu0 0.0
        %2939 = vmatprep.subr.mxu0 0.0
        %2940 = vmatpush1.msra.mxu0 0.0
        %2941 = vmatprep.subr.mxu0 0.0
        %2942 = vmatpush1.msra.mxu0 0.0
        %2943 = vmatprep.subr.mxu0 0.0
        %2944 = vmatpush1.msra.mxu0 0.0
        %2945 = vmatprep.subr.mxu0 0.0
        %2946 = vmatpush1.msra.mxu0 0.0
        %2947 = vmatprep.subr.mxu0 0.0
        %2948 = vmatpush1.msra.mxu0 0.0
        %2949 = vmatprep.subr.mxu0 0.0
        %2950 = vmatpush1.msra.mxu0 0.0
        %2951 = vmatprep.subr.mxu0 0.0
        %2952 = vmatpush1.msra.mxu0 0.0
        %2953 = vmatprep.subr.mxu0 0.0
        %2954 = vmatpush1.msra.mxu0 0.0
        %2955 = vmatprep.subr.mxu0 0.0
        %2956 = vmatpush1.msra.mxu0 0.0
        %2957 = vmatprep.subr.mxu0 0.0
        %2958 = vmatpush1.msra.mxu0 0.0
        %2959 = vmatprep.subr.mxu0 0.0
        %2960 = vmatpush1.msra.mxu0 0.0
        %2961 = vmatprep.subr.mxu0 0.0
        %2962 = vmatpush1.msra.mxu0 0.0
        %2963 = vmatprep.subr.mxu0 0.0
        %2964 = vmatpush1.msra.mxu0 0.0
        %2965 = vmatprep.subr.mxu0 0.0
        %2966 = vmatpush1.msra.mxu0 0.0
        %2967 = vmatprep.subr.mxu0 0.0
        %2968 = vmatpush1.msra.mxu0 0.0
        %2969 = vmatprep.subr.mxu0 0.0
        %2970 = vmatpush1.msra.mxu0 0.0
        %2971 = vmatprep.subr.mxu0 0.0
        %2972 = vmatpush1.msra.mxu0 0.0
        %2973 = vmatprep.subr.mxu0 0.0
        %2974 = vmatpush1.msra.mxu0 0.0
        %2975 = vmatprep.subr.mxu0 0.0
        %2976 = vmatpush1.msra.mxu0 0.0
        %2977 = vmatprep.subr.mxu0 0.0
        %2978 = vmatpush1.msra.mxu0 0.0
        %2979 = vmatprep.subr.mxu0 0.0
        %2980 = vmatpush1.msra.mxu0 0.0
        %2981 = vmatprep.subr.mxu0 0.0
        %2982 = vmatpush1.msra.mxu0 0.0
        %2983 = vmatprep.subr.mxu0 0.0
        %2984 = vmatpush1.msra.mxu0 0.0
        %2985 = vmatprep.subr.mxu0 0.0
        %2986 = vmatpush1.msra.mxu0 0.0
        %2987 = vmatprep.mubr.f32.mxu0 0.0
        %2988 = vmatmul.mubr.f32.gmra.mrb[0].mxu0 %v2825
        %v2989 = vpop.f32.mrb[0].mxu0
        %v2990 = vadd.f32 0.0, %v2989
        %v2991 = vpop.f32.mrb[0].mxu0
        %2992 = vmatprep.mubr.f32.mxu0 0.0
        %2993 = vmatmul.mubr.f32.gmra.mrb[0].mxu0 %v2828
        %v2994 = vpop.f32.mrb[0].mxu0
        %v2995 = vadd.f32 0.0, %v2994
        %v2996 = vpop.f32.mrb[0].mxu0
        %2997 = vmatprep.mubr.f32.mxu0 0.0
        %2998 = vmatmul.mubr.f32.gmra.mrb[0].mxu0 %v2831
        %v2999 = vpop.f32.mrb[0].mxu0
        %v3000 = vadd.f32 0.0, %v2999
        %v3001 = vpop.f32.mrb[0].mxu0
        %3002 = vmatprep.mubr.f32.mxu0 0.0
        %3003 = vmatmul.mubr.f32.gmra.mrb[0].mxu0 %v2834
        %v3004 = vpop.f32.mrb[0].mxu0
        %v3005 = vadd.f32 0.0, %v3004
        %v3006 = vpop.f32.mrb[0].mxu0
        %3007 = vmatprep.mubr.f32.mxu0 0.0
        %3008 = vmatmul.mubr.f32.gmra.mrb[0].mxu0 %v2837
        %v3009 = vpop.f32.mrb[0].mxu0
        %v3010 = vadd.f32 0.0, %v3009
        %v3011 = vpop.f32.mrb[0].mxu0
        %3012 = vmatprep.mubr.f32.mxu0 0.0
        %3013 = vmatmul.mubr.f32.gmra.mrb[0].mxu0 %v2840
        %v3014 = vpop.f32.mrb[0].mxu0
        %v3015 = vadd.f32 0.0, %v3014
        %v3016 = vpop.f32.mrb[0].mxu0
        %3017 = vmatprep.mubr.f32.mxu0 0.0
        %3018 = vmatmul.mubr.f32.gmra.mrb[0].mxu0 %v2843
        %v3019 = vpop.f32.mrb[0].mxu0
        %v3020 = vadd.f32 0.0, %v3019
        %v3021 = vpop.f32.mrb[0].mxu0
        %3022 = vmatprep.mubr.f32.mxu0 0.0
        %3023 = vmatmul.mubr.f32.gmra.mrb[0].mxu0 %v2846
        %v3024 = vpop.f32.mrb[0].mxu0
        %v3025 = vadd.f32 0.0, %v3024
        %v3026 = vpop.f32.mrb[0].mxu0
        %3027 = vmatprep.mubr.f32.mxu0 0.0
        %3028 = vmatmul.mubr.f32.gmra.mrb[0].mxu0 %v2849
        %v3029 = vpop.f32.mrb[0].mxu0
        %v3030 = vadd.f32 0.0, %v3029
        %v3031 = vpop.f32.mrb[0].mxu0
        %3032 = vmatprep.mubr.f32.mxu0 0.0
        %3033 = vmatmul.mubr.f32.gmra.mrb[0].mxu0 %v2852
        %v3034 = vpop.f32.mrb[0].mxu0
        %v3035 = vadd.f32 0.0, %v3034
        %v3036 = vpop.f32.mrb[0].mxu0
        %3037 = vmatprep.mubr.f32.mxu0 0.0
        %3038 = vmatmul.mubr.f32.gmra.mrb[0].mxu0 %v2855
        %v3039 = vpop.f32.mrb[0].mxu0
        %v3040 = vadd.f32 0.0, %v3039
        %v3041 = vpop.f32.mrb[0].mxu0
        %3042 = vmatprep.mubr.f32.mxu0 0.0
        %3043 = vmatmul.mubr.f32.gmra.mrb[0].mxu0 %v2858
        %v3044 = vpop.f32.mrb[0].mxu0
        %v3045 = vadd.f32 0.0, %v3044
        %v3046 = vpop.f32.mrb[0].mxu0
        %3047 = vmatprep.mubr.f32.mxu0 0.0
        %3048 = vmatmul.mubr.f32.gmra.mrb[0].mxu0 %v2861
        %v3049 = vpop.f32.mrb[0].mxu0
        %v3050 = vadd.f32 0.0, %v3049
        %v3051 = vpop.f32.mrb[0].mxu0
        %3052 = vmatprep.mubr.f32.mxu0 0.0
        %3053 = vmatmul.mubr.f32.gmra.mrb[0].mxu0 %v2864
        %v3054 = vpop.f32.mrb[0].mxu0
        %v3055 = vadd.f32 0.0, %v3054
        %v3056 = vpop.f32.mrb[0].mxu0
        %3057 = vmatprep.mubr.f32.mxu0 0.0
        %3058 = vmatmul.mubr.f32.gmra.mrb[0].mxu0 %v2867
        %v3059 = vpop.f32.mrb[0].mxu0
        %v3060 = vadd.f32 0.0, %v3059
        %v3061 = vpop.f32.mrb[0].mxu0
        %3062 = vmatprep.mubr.f32.mxu0 0.0
        %3063 = vmatmul.mubr.f32.gmra.mrb[0].mxu0 %v2870
        %v3064 = vpop.f32.mrb[0].mxu0
        %v3065 = vadd.f32 0.0, %v3064
        %v3066 = vpop.f32.mrb[0].mxu0
        %3067 = vmatprep.mubr.f32.mxu0 0.0
        %3068 = vmatmul.mubr.f32.gmra.mrb[0].mxu0 %v2873
        %v3069 = vpop.f32.mrb[0].mxu0
        %v3070 = vadd.f32 0.0, %v3069
        %v3071 = vpop.f32.mrb[0].mxu0
        %3072 = vmatprep.mubr.f32.mxu0 0.0
        %3073 = vmatmul.mubr.f32.gmra.mrb[0].mxu0 %v2876
        %v3074 = vpop.f32.mrb[0].mxu0
        %v3075 = vadd.f32 0.0, %v3074
        %v3076 = vpop.f32.mrb[0].mxu0
        %3077 = vmatprep.mubr.f32.mxu0 0.0
        %3078 = vmatmul.mubr.f32.gmra.mrb[0].mxu0 %v2879
        %v3079 = vpop.f32.mrb[0].mxu0
        %v3080 = vadd.f32 0.0, %v3079
        %v3081 = vpop.f32.mrb[0].mxu0
        %3082 = vmatprep.mubr.f32.mxu0 0.0
        %3083 = vmatmul.mubr.f32.gmra.mrb[0].mxu0 %v2882
        %v3084 = vpop.f32.mrb[0].mxu0
        %v3085 = vadd.f32 0.0, %v3084
        %v3086 = vpop.f32.mrb[0].mxu0
        %3087 = vmatprep.mubr.f32.mxu0 0.0
        %3088 = vmatmul.mubr.f32.gmra.mrb[0].mxu0 %v2885
        %v3089 = vpop.f32.mrb[0].mxu0
        %v3090 = vadd.f32 0.0, %v3089
        %v3091 = vpop.f32.mrb[0].mxu0
        %3092 = vmatprep.mubr.f32.mxu0 0.0
        %3093 = vmatmul.mubr.f32.gmra.mrb[0].mxu0 %v2888
        %v3094 = vpop.f32.mrb[0].mxu0
        %v3095 = vadd.f32 0.0, %v3094
        %v3096 = vpop.f32.mrb[0].mxu0
        %3097 = vmatprep.mubr.f32.mxu0 0.0
        %3098 = vmatmul.mubr.f32.gmra.mrb[0].mxu0 %v2891
        %v3099 = vpop.f32.mrb[0].mxu0
        %v3100 = vadd.f32 0.0, %v3099
        %v3101 = vpop.f32.mrb[0].mxu0
        %3102 = vmatprep.mubr.f32.mxu0 0.0
        %3103 = vmatmul.mubr.f32.gmra.mrb[0].mxu0 %v2894
        %v3104 = vpop.f32.mrb[0].mxu0
        %v3105 = vadd.f32 0.0, %v3104
        %v3106 = vpop.f32.mrb[0].mxu0
        %3107 = vmatprep.mubr.f32.mxu0 0.0
        %3108 = vmatmul.mubr.f32.gmra.mrb[0].mxu0 %v2897
        %v3109 = vpop.f32.mrb[0].mxu0
        %v3110 = vadd.f32 0.0, %v3109
        %v3111 = vpop.f32.mrb[0].mxu0
        %3112 = vmatprep.mubr.f32.mxu0 0.0
        %3113 = vmatmul.mubr.f32.gmra.mrb[0].mxu0 %v2900
        %v3114 = vpop.f32.mrb[0].mxu0
        %v3115 = vadd.f32 0.0, %v3114
        %v3116 = vpop.f32.mrb[0].mxu0
        %3117 = vmatprep.mubr.f32.mxu0 0.0
        %3118 = vmatmul.mubr.f32.gmra.mrb[0].mxu0 %v2903
        %v3119 = vpop.f32.mrb[0].mxu0
        %v3120 = vadd.f32 0.0, %v3119
        %v3121 = vpop.f32.mrb[0].mxu0
        %3122 = vmatprep.mubr.f32.mxu0 0.0
        %3123 = vmatmul.mubr.f32.gmra.mrb[0].mxu0 %v2906
        %v3124 = vpop.f32.mrb[0].mxu0
        %v3125 = vadd.f32 0.0, %v3124
        %v3126 = vpop.f32.mrb[0].mxu0
        %3127 = vmatprep.mubr.f32.mxu0 0.0
        %3128 = vmatmul.mubr.f32.gmra.mrb[0].mxu0 %v2909
        %v3129 = vpop.f32.mrb[0].mxu0
        %v3130 = vadd.f32 0.0, %v3129
        %v3131 = vpop.f32.mrb[0].mxu0
        %3132 = vmatprep.mubr.f32.mxu0 0.0
        %3133 = vmatmul.mubr.f32.gmra.mrb[0].mxu0 %v2912
        %v3134 = vpop.f32.mrb[0].mxu0
        %v3135 = vadd.f32 0.0, %v3134
        %v3136 = vpop.f32.mrb[0].mxu0
        %3137 = vmatprep.mubr.f32.mxu0 0.0
        %3138 = vmatmul.mubr.f32.gmra.mrb[0].mxu0 %v2915
        %v3139 = vpop.f32.mrb[0].mxu0
        %v3140 = vadd.f32 0.0, %v3139
        %v3141 = vpop.f32.mrb[0].mxu0
        %3142 = vmatprep.mubr.f32.mxu0 0.0
        %3143 = vmatmul.mubr.f32.gmra.mrb[0].mxu0 %v2918
        %v3144 = vpop.f32.mrb[0].mxu0
        %v3145 = vadd.f32 0.0, %v3144
        %v3146 = vpop.f32.mrb[0].mxu0
        %3147 = vdwg.mxu0
        %v3148 = vadd.f32 %v2757, %v2990
        %v3149 = vadd.f32 %v2758, %v2995
        %v3150 = vadd.f32 %v2759, %v3000
        %v3151 = vadd.f32 %v2760, %v3005
        %v3152 = vadd.f32 %v2761, %v3010
        %v3153 = vadd.f32 %v2762, %v3015
        %v3154 = vadd.f32 %v2763, %v3020
        %v3155 = vadd.f32 %v2764, %v3025
        %v3156 = vadd.f32 %v2765, %v3030
        %v3157 = vadd.f32 %v2766, %v3035
        %v3158 = vadd.f32 %v2767, %v3040
        %v3159 = vadd.f32 %v2768, %v3045
        %v3160 = vadd.f32 %v2769, %v3050
        %v3161 = vadd.f32 %v2770, %v3055
        %v3162 = vadd.f32 %v2771, %v3060
        %v3163 = vadd.f32 %v2772, %v3065
        %v3164 = vadd.f32 %v2773, %v3070
        %v3165 = vadd.f32 %v2774, %v3075
        %v3166 = vadd.f32 %v2775, %v3080
        %v3167 = vadd.f32 %v2776, %v3085
        %v3168 = vadd.f32 %v2777, %v3090
        %v3169 = vadd.f32 %v2778, %v3095
        %v3170 = vadd.f32 %v2779, %v3100
        %v3171 = vadd.f32 %v2780, %v3105
        %v3172 = vadd.f32 %v2781, %v3110
        %v3173 = vadd.f32 %v2782, %v3115
        %v3174 = vadd.f32 %v2783, %v3120
        %v3175 = vadd.f32 %v2784, %v3125
        %v3176 = vadd.f32 %v2785, %v3130
        %v3177 = vadd.f32 %v2786, %v3135
        %v3178 = vadd.f32 %v2787, %v3140
        %v3179 = vadd.f32 %v2788, %v3145
        %v3180 = vld [vmem:[%s2789 + $0x1] sm:$0xff]
        %v3181 = vld [vmem:[%s2789 + $0x9] sm:$0xff]
        %v3182 = vld [vmem:[%s2789 + $0x19] sm:$0xff]
        %v3183 = vld [vmem:[%s2789 + $0x21] sm:$0xff]
        %v3184 = vld [vmem:[%s2789 + $0x31] sm:$0xff]
        %v3185 = vld [vmem:[%s2789 + $0x39] sm:$0xff]
        %v3186 = vld [vmem:[%s2789 + $0x49] sm:$0xff]
        %v3187 = vld [vmem:[%s2789 + $0x51] sm:$0xff]
        %v3188 = vld [vmem:[%s2789 + $0x61] sm:$0xff]
        %v3189 = vld [vmem:[%s2789 + $0x69] sm:$0xff]
        %v3190 = vld [vmem:[%s2789 + $0x79] sm:$0xff]
        %v3191 = vld [vmem:[%s2789 + $0x81] sm:$0xff]
        %v3192 = vld [vmem:[%s2789 + $0x91] sm:$0xff]
        %v3193 = vld [vmem:[%s2789 + $0x99] sm:$0xff]
        %v3194 = vld [vmem:[%s2789 + $0xa9] sm:$0xff]
        %v3195 = vld [vmem:[%s2789 + $0xb1] sm:$0xff]
        %v3196 = vld [vmem:[%s2789 + $0xc1] sm:$0xff]
        %v3197 = vld [vmem:[%s2789 + $0xc9] sm:$0xff]
        %v3198 = vld [vmem:[%s2789 + $0xd9] sm:$0xff]
        %v3199 = vld [vmem:[%s2789 + $0xe1] sm:$0xff]
        %v3200 = vld [vmem:[%s2789 + $0xf1] sm:$0xff]
        %v3201 = vld [vmem:[%s2789 + $0xf9] sm:$0xff]
        %v3202 = vld [vmem:[%s2789 + $0x109] sm:$0xff]
        %v3203 = vld [vmem:[%s2789 + $0x111] sm:$0xff]
        %v3204 = vld [vmem:[%s2789 + $0x121] sm:$0xff]
        %v3205 = vld [vmem:[%s2789 + $0x129] sm:$0xff]
        %v3206 = vld [vmem:[%s2789 + $0x139] sm:$0xff]
        %v3207 = vld [vmem:[%s2789 + $0x141] sm:$0xff]
        %v3208 = vld [vmem:[%s2789 + $0x151] sm:$0xff]
        %v3209 = vld [vmem:[%s2789 + $0x159] sm:$0xff]
        %v3210 = vld [vmem:[%s2789 + $0x169] sm:$0xff]
        %v3211 = vld [vmem:[%s2789 + $0x171] sm:$0xff]
        %s3212 = scalar_lea.vmem [#allocation6], 28
        %v3213 = vld [vmem:[%s3212] sm:$0xf]
        %v3215 = vsel %vm330, %v3180, 0
        %v3218 = vsel %vm330, %v3181, 0
        %v3221 = vsel %vm330, %v3182, 0
        %v3224 = vsel %vm330, %v3183, 0
        %v3227 = vsel %vm330, %v3184, 0
        %v3230 = vsel %vm330, %v3185, 0
        %v3233 = vsel %vm330, %v3186, 0
        %v3236 = vsel %vm330, %v3187, 0
        %v3239 = vsel %vm330, %v3188, 0
        %v3242 = vsel %vm330, %v3189, 0
        %v3245 = vsel %vm330, %v3190, 0
        %v3248 = vsel %vm330, %v3191, 0
        %v3251 = vsel %vm330, %v3192, 0
        %v3254 = vsel %vm330, %v3193, 0
        %v3257 = vsel %vm330, %v3194, 0
        %v3260 = vsel %vm330, %v3195, 0
        %v3263 = vsel %vm330, %v3196, 0
        %v3266 = vsel %vm330, %v3197, 0
        %v3269 = vsel %vm330, %v3198, 0
        %v3272 = vsel %vm330, %v3199, 0
        %v3275 = vsel %vm330, %v3200, 0
        %v3278 = vsel %vm330, %v3201, 0
        %v3281 = vsel %vm330, %v3202, 0
        %v3284 = vsel %vm330, %v3203, 0
        %v3287 = vsel %vm330, %v3204, 0
        %v3290 = vsel %vm330, %v3205, 0
        %v3293 = vsel %vm330, %v3206, 0
        %v3296 = vsel %vm330, %v3207, 0
        %v3299 = vsel %vm330, %v3208, 0
        %v3302 = vsel %vm330, %v3209, 0
        %v3305 = vsel %vm330, %v3210, 0
        %v3308 = vsel %vm330, %v3211, 0
        %v3311 = vsel %vm578, %v3213, 0
        %3313 = vmatprep.subr.mxu0 0.0
        %3314 = vmatpush1.msra.mxu0 %v3311
        %3315 = vmatprep.subr.mxu0 0.0
        %3316 = vmatpush1.msra.mxu0 0.0
        %3317 = vmatprep.subr.mxu0 0.0
        %3318 = vmatpush1.msra.mxu0 0.0
        %3319 = vmatprep.subr.mxu0 0.0
        %3320 = vmatpush1.msra.mxu0 0.0
        %3321 = vmatprep.subr.mxu0 0.0
        %3322 = vmatpush1.msra.mxu0 0.0
        %3323 = vmatprep.subr.mxu0 0.0
        %3324 = vmatpush1.msra.mxu0 0.0
        %3325 = vmatprep.subr.mxu0 0.0
        %3326 = vmatpush1.msra.mxu0 0.0
        %3327 = vmatprep.subr.mxu0 0.0
        %3328 = vmatpush1.msra.mxu0 0.0
        %3329 = vmatprep.subr.mxu0 0.0
        %3330 = vmatpush1.msra.mxu0 0.0
        %3331 = vmatprep.subr.mxu0 0.0
        %3332 = vmatpush1.msra.mxu0 0.0
        %3333 = vmatprep.subr.mxu0 0.0
        %3334 = vmatpush1.msra.mxu0 0.0
        %3335 = vmatprep.subr.mxu0 0.0
        %3336 = vmatpush1.msra.mxu0 0.0
        %3337 = vmatprep.subr.mxu0 0.0
        %3338 = vmatpush1.msra.mxu0 0.0
        %3339 = vmatprep.subr.mxu0 0.0
        %3340 = vmatpush1.msra.mxu0 0.0
        %3341 = vmatprep.subr.mxu0 0.0
        %3342 = vmatpush1.msra.mxu0 0.0
        %3343 = vmatprep.subr.mxu0 0.0
        %3344 = vmatpush1.msra.mxu0 0.0
        %3345 = vmatprep.subr.mxu0 0.0
        %3346 = vmatpush1.msra.mxu0 0.0
        %3347 = vmatprep.subr.mxu0 0.0
        %3348 = vmatpush1.msra.mxu0 0.0
        %3349 = vmatprep.subr.mxu0 0.0
        %3350 = vmatpush1.msra.mxu0 0.0
        %3351 = vmatprep.subr.mxu0 0.0
        %3352 = vmatpush1.msra.mxu0 0.0
        %3353 = vmatprep.subr.mxu0 0.0
        %3354 = vmatpush1.msra.mxu0 0.0
        %3355 = vmatprep.subr.mxu0 0.0
        %3356 = vmatpush1.msra.mxu0 0.0
        %3357 = vmatprep.subr.mxu0 0.0
        %3358 = vmatpush1.msra.mxu0 0.0
        %3359 = vmatprep.subr.mxu0 0.0
        %3360 = vmatpush1.msra.mxu0 0.0
        %3361 = vmatprep.subr.mxu0 0.0
        %3362 = vmatpush1.msra.mxu0 0.0
        %3363 = vmatprep.subr.mxu0 0.0
        %3364 = vmatpush1.msra.mxu0 0.0
        %3365 = vmatprep.subr.mxu0 0.0
        %3366 = vmatpush1.msra.mxu0 0.0
        %3367 = vmatprep.subr.mxu0 0.0
        %3368 = vmatpush1.msra.mxu0 0.0
        %3369 = vmatprep.subr.mxu0 0.0
        %3370 = vmatpush1.msra.mxu0 0.0
        %3371 = vmatprep.subr.mxu0 0.0
        %3372 = vmatpush1.msra.mxu0 0.0
        %3373 = vmatprep.subr.mxu0 0.0
        %3374 = vmatpush1.msra.mxu0 0.0
        %3375 = vmatprep.subr.mxu0 0.0
        %3376 = vmatpush1.msra.mxu0 0.0
        %3377 = vmatprep.mubr.f32.mxu0 0.0
        %3378 = vmatmul.mubr.f32.gmra.mrb[0].mxu0 %v3215
        %v3379 = vpop.f32.mrb[0].mxu0
        %v3380 = vadd.f32 0.0, %v3379
        %v3381 = vpop.f32.mrb[0].mxu0
        %3382 = vmatprep.mubr.f32.mxu0 0.0
        %3383 = vmatmul.mubr.f32.gmra.mrb[0].mxu0 %v3218
        %v3384 = vpop.f32.mrb[0].mxu0
        %v3385 = vadd.f32 0.0, %v3384
        %v3386 = vpop.f32.mrb[0].mxu0
        %3387 = vmatprep.mubr.f32.mxu0 0.0
        %3388 = vmatmul.mubr.f32.gmra.mrb[0].mxu0 %v3221
        %v3389 = vpop.f32.mrb[0].mxu0
        %v3390 = vadd.f32 0.0, %v3389
        %v3391 = vpop.f32.mrb[0].mxu0
        %3392 = vmatprep.mubr.f32.mxu0 0.0
        %3393 = vmatmul.mubr.f32.gmra.mrb[0].mxu0 %v3224
        %v3394 = vpop.f32.mrb[0].mxu0
        %v3395 = vadd.f32 0.0, %v3394
        %v3396 = vpop.f32.mrb[0].mxu0
        %3397 = vmatprep.mubr.f32.mxu0 0.0
        %3398 = vmatmul.mubr.f32.gmra.mrb[0].mxu0 %v3227
        %v3399 = vpop.f32.mrb[0].mxu0
        %v3400 = vadd.f32 0.0, %v3399
        %v3401 = vpop.f32.mrb[0].mxu0
        %3402 = vmatprep.mubr.f32.mxu0 0.0
        %3403 = vmatmul.mubr.f32.gmra.mrb[0].mxu0 %v3230
        %v3404 = vpop.f32.mrb[0].mxu0
        %v3405 = vadd.f32 0.0, %v3404
        %v3406 = vpop.f32.mrb[0].mxu0
        %3407 = vmatprep.mubr.f32.mxu0 0.0
        %3408 = vmatmul.mubr.f32.gmra.mrb[0].mxu0 %v3233
        %v3409 = vpop.f32.mrb[0].mxu0
        %v3410 = vadd.f32 0.0, %v3409
        %v3411 = vpop.f32.mrb[0].mxu0
        %3412 = vmatprep.mubr.f32.mxu0 0.0
        %3413 = vmatmul.mubr.f32.gmra.mrb[0].mxu0 %v3236
        %v3414 = vpop.f32.mrb[0].mxu0
        %v3415 = vadd.f32 0.0, %v3414
        %v3416 = vpop.f32.mrb[0].mxu0
        %3417 = vmatprep.mubr.f32.mxu0 0.0
        %3418 = vmatmul.mubr.f32.gmra.mrb[0].mxu0 %v3239
        %v3419 = vpop.f32.mrb[0].mxu0
        %v3420 = vadd.f32 0.0, %v3419
        %v3421 = vpop.f32.mrb[0].mxu0
        %3422 = vmatprep.mubr.f32.mxu0 0.0
        %3423 = vmatmul.mubr.f32.gmra.mrb[0].mxu0 %v3242
        %v3424 = vpop.f32.mrb[0].mxu0
        %v3425 = vadd.f32 0.0, %v3424
        %v3426 = vpop.f32.mrb[0].mxu0
        %3427 = vmatprep.mubr.f32.mxu0 0.0
        %3428 = vmatmul.mubr.f32.gmra.mrb[0].mxu0 %v3245
        %v3429 = vpop.f32.mrb[0].mxu0
        %v3430 = vadd.f32 0.0, %v3429
        %v3431 = vpop.f32.mrb[0].mxu0
        %3432 = vmatprep.mubr.f32.mxu0 0.0
        %3433 = vmatmul.mubr.f32.gmra.mrb[0].mxu0 %v3248
        %v3434 = vpop.f32.mrb[0].mxu0
        %v3435 = vadd.f32 0.0, %v3434
        %v3436 = vpop.f32.mrb[0].mxu0
        %3437 = vmatprep.mubr.f32.mxu0 0.0
        %3438 = vmatmul.mubr.f32.gmra.mrb[0].mxu0 %v3251
        %v3439 = vpop.f32.mrb[0].mxu0
        %v3440 = vadd.f32 0.0, %v3439
        %v3441 = vpop.f32.mrb[0].mxu0
        %3442 = vmatprep.mubr.f32.mxu0 0.0
        %3443 = vmatmul.mubr.f32.gmra.mrb[0].mxu0 %v3254
        %v3444 = vpop.f32.mrb[0].mxu0
        %v3445 = vadd.f32 0.0, %v3444
        %v3446 = vpop.f32.mrb[0].mxu0
        %3447 = vmatprep.mubr.f32.mxu0 0.0
        %3448 = vmatmul.mubr.f32.gmra.mrb[0].mxu0 %v3257
        %v3449 = vpop.f32.mrb[0].mxu0
        %v3450 = vadd.f32 0.0, %v3449
        %v3451 = vpop.f32.mrb[0].mxu0
        %3452 = vmatprep.mubr.f32.mxu0 0.0
        %3453 = vmatmul.mubr.f32.gmra.mrb[0].mxu0 %v3260
        %v3454 = vpop.f32.mrb[0].mxu0
        %v3455 = vadd.f32 0.0, %v3454
        %v3456 = vpop.f32.mrb[0].mxu0
        %3457 = vmatprep.mubr.f32.mxu0 0.0
        %3458 = vmatmul.mubr.f32.gmra.mrb[0].mxu0 %v3263
        %v3459 = vpop.f32.mrb[0].mxu0
        %v3460 = vadd.f32 0.0, %v3459
        %v3461 = vpop.f32.mrb[0].mxu0
        %3462 = vmatprep.mubr.f32.mxu0 0.0
        %3463 = vmatmul.mubr.f32.gmra.mrb[0].mxu0 %v3266
        %v3464 = vpop.f32.mrb[0].mxu0
        %v3465 = vadd.f32 0.0, %v3464
        %v3466 = vpop.f32.mrb[0].mxu0
        %3467 = vmatprep.mubr.f32.mxu0 0.0
        %3468 = vmatmul.mubr.f32.gmra.mrb[0].mxu0 %v3269
        %v3469 = vpop.f32.mrb[0].mxu0
        %v3470 = vadd.f32 0.0, %v3469
        %v3471 = vpop.f32.mrb[0].mxu0
        %3472 = vmatprep.mubr.f32.mxu0 0.0
        %3473 = vmatmul.mubr.f32.gmra.mrb[0].mxu0 %v3272
        %v3474 = vpop.f32.mrb[0].mxu0
        %v3475 = vadd.f32 0.0, %v3474
        %v3476 = vpop.f32.mrb[0].mxu0
        %3477 = vmatprep.mubr.f32.mxu0 0.0
        %3478 = vmatmul.mubr.f32.gmra.mrb[0].mxu0 %v3275
        %v3479 = vpop.f32.mrb[0].mxu0
        %v3480 = vadd.f32 0.0, %v3479
        %v3481 = vpop.f32.mrb[0].mxu0
        %3482 = vmatprep.mubr.f32.mxu0 0.0
        %3483 = vmatmul.mubr.f32.gmra.mrb[0].mxu0 %v3278
        %v3484 = vpop.f32.mrb[0].mxu0
        %v3485 = vadd.f32 0.0, %v3484
        %v3486 = vpop.f32.mrb[0].mxu0
        %3487 = vmatprep.mubr.f32.mxu0 0.0
        %3488 = vmatmul.mubr.f32.gmra.mrb[0].mxu0 %v3281
        %v3489 = vpop.f32.mrb[0].mxu0
        %v3490 = vadd.f32 0.0, %v3489
        %v3491 = vpop.f32.mrb[0].mxu0
        %3492 = vmatprep.mubr.f32.mxu0 0.0
        %3493 = vmatmul.mubr.f32.gmra.mrb[0].mxu0 %v3284
        %v3494 = vpop.f32.mrb[0].mxu0
        %v3495 = vadd.f32 0.0, %v3494
        %v3496 = vpop.f32.mrb[0].mxu0
        %3497 = vmatprep.mubr.f32.mxu0 0.0
        %3498 = vmatmul.mubr.f32.gmra.mrb[0].mxu0 %v3287
        %v3499 = vpop.f32.mrb[0].mxu0
        %v3500 = vadd.f32 0.0, %v3499
        %v3501 = vpop.f32.mrb[0].mxu0
        %3502 = vmatprep.mubr.f32.mxu0 0.0
        %3503 = vmatmul.mubr.f32.gmra.mrb[0].mxu0 %v3290
        %v3504 = vpop.f32.mrb[0].mxu0
        %v3505 = vadd.f32 0.0, %v3504
        %v3506 = vpop.f32.mrb[0].mxu0
        %3507 = vmatprep.mubr.f32.mxu0 0.0
        %3508 = vmatmul.mubr.f32.gmra.mrb[0].mxu0 %v3293
        %v3509 = vpop.f32.mrb[0].mxu0
        %v3510 = vadd.f32 0.0, %v3509
        %v3511 = vpop.f32.mrb[0].mxu0
        %3512 = vmatprep.mubr.f32.mxu0 0.0
        %3513 = vmatmul.mubr.f32.gmra.mrb[0].mxu0 %v3296
        %v3514 = vpop.f32.mrb[0].mxu0
        %v3515 = vadd.f32 0.0, %v3514
        %v3516 = vpop.f32.mrb[0].mxu0
        %3517 = vmatprep.mubr.f32.mxu0 0.0
        %3518 = vmatmul.mubr.f32.gmra.mrb[0].mxu0 %v3299
        %v3519 = vpop.f32.mrb[0].mxu0
        %v3520 = vadd.f32 0.0, %v3519
        %v3521 = vpop.f32.mrb[0].mxu0
        %3522 = vmatprep.mubr.f32.mxu0 0.0
        %3523 = vmatmul.mubr.f32.gmra.mrb[0].mxu0 %v3302
        %v3524 = vpop.f32.mrb[0].mxu0
        %v3525 = vadd.f32 0.0, %v3524
        %v3526 = vpop.f32.mrb[0].mxu0
        %3527 = vmatprep.mubr.f32.mxu0 0.0
        %3528 = vmatmul.mubr.f32.gmra.mrb[0].mxu0 %v3305
        %v3529 = vpop.f32.mrb[0].mxu0
        %v3530 = vadd.f32 0.0, %v3529
        %v3531 = vpop.f32.mrb[0].mxu0
        %3532 = vmatprep.mubr.f32.mxu0 0.0
        %3533 = vmatmul.mubr.f32.gmra.mrb[0].mxu0 %v3308
        %v3534 = vpop.f32.mrb[0].mxu0
        %v3535 = vadd.f32 0.0, %v3534
        %v3536 = vpop.f32.mrb[0].mxu0
        %3537 = vdwg.mxu0
        %v3538 = vadd.f32 %v3148, %v3380
        %v3539 = vadd.f32 %v3149, %v3385
        %v3540 = vadd.f32 %v3150, %v3390
        %v3541 = vadd.f32 %v3151, %v3395
        %v3542 = vadd.f32 %v3152, %v3400
        %v3543 = vadd.f32 %v3153, %v3405
        %v3544 = vadd.f32 %v3154, %v3410
        %v3545 = vadd.f32 %v3155, %v3415
        %v3546 = vadd.f32 %v3156, %v3420
        %v3547 = vadd.f32 %v3157, %v3425
        %v3548 = vadd.f32 %v3158, %v3430
        %v3549 = vadd.f32 %v3159, %v3435
        %v3550 = vadd.f32 %v3160, %v3440
        %v3551 = vadd.f32 %v3161, %v3445
        %v3552 = vadd.f32 %v3162, %v3450
        %v3553 = vadd.f32 %v3163, %v3455
        %v3554 = vadd.f32 %v3164, %v3460
        %v3555 = vadd.f32 %v3165, %v3465
        %v3556 = vadd.f32 %v3166, %v3470
        %v3557 = vadd.f32 %v3167, %v3475
        %v3558 = vadd.f32 %v3168, %v3480
        %v3559 = vadd.f32 %v3169, %v3485
        %v3560 = vadd.f32 %v3170, %v3490
        %v3561 = vadd.f32 %v3171, %v3495
        %v3562 = vadd.f32 %v3172, %v3500
        %v3563 = vadd.f32 %v3173, %v3505
        %v3564 = vadd.f32 %v3174, %v3510
        %v3565 = vadd.f32 %v3175, %v3515
        %v3566 = vadd.f32 %v3176, %v3520
        %v3567 = vadd.f32 %v3177, %v3525
        %v3568 = vadd.f32 %v3178, %v3530
        %v3569 = vadd.f32 %v3179, %v3535
        %v3570 = vld [vmem:[%s2789 + $0x2] sm:$0xff]
        %v3571 = vld [vmem:[%s2789 + $0xa] sm:$0xff]
        %v3572 = vld [vmem:[%s2789 + $0x1a] sm:$0xff]
        %v3573 = vld [vmem:[%s2789 + $0x22] sm:$0xff]
        %v3574 = vld [vmem:[%s2789 + $0x32] sm:$0xff]
        %v3575 = vld [vmem:[%s2789 + $0x3a] sm:$0xff]
        %v3576 = vld [vmem:[%s2789 + $0x4a] sm:$0xff]
        %v3577 = vld [vmem:[%s2789 + $0x52] sm:$0xff]
        %v3578 = vld [vmem:[%s2789 + $0x62] sm:$0xff]
        %v3579 = vld [vmem:[%s2789 + $0x6a] sm:$0xff]
        %v3580 = vld [vmem:[%s2789 + $0x7a] sm:$0xff]
        %v3581 = vld [vmem:[%s2789 + $0x82] sm:$0xff]
        %v3582 = vld [vmem:[%s2789 + $0x92] sm:$0xff]
        %v3583 = vld [vmem:[%s2789 + $0x9a] sm:$0xff]
        %v3584 = vld [vmem:[%s2789 + $0xaa] sm:$0xff]
        %v3585 = vld [vmem:[%s2789 + $0xb2] sm:$0xff]
        %v3586 = vld [vmem:[%s2789 + $0xc2] sm:$0xff]
        %v3587 = vld [vmem:[%s2789 + $0xca] sm:$0xff]
        %v3588 = vld [vmem:[%s2789 + $0xda] sm:$0xff]
        %v3589 = vld [vmem:[%s2789 + $0xe2] sm:$0xff]
        %v3590 = vld [vmem:[%s2789 + $0xf2] sm:$0xff]
        %v3591 = vld [vmem:[%s2789 + $0xfa] sm:$0xff]
        %v3592 = vld [vmem:[%s2789 + $0x10a] sm:$0xff]
        %v3593 = vld [vmem:[%s2789 + $0x112] sm:$0xff]
        %v3594 = vld [vmem:[%s2789 + $0x122] sm:$0xff]
        %v3595 = vld [vmem:[%s2789 + $0x12a] sm:$0xff]
        %v3596 = vld [vmem:[%s2789 + $0x13a] sm:$0xff]
        %v3597 = vld [vmem:[%s2789 + $0x142] sm:$0xff]
        %v3598 = vld [vmem:[%s2789 + $0x152] sm:$0xff]
        %v3599 = vld [vmem:[%s2789 + $0x15a] sm:$0xff]
        %v3600 = vld [vmem:[%s2789 + $0x16a] sm:$0xff]
        %v3601 = vld [vmem:[%s2789 + $0x172] sm:$0xff]
        %s3602 = scalar_lea.vmem [#allocation6], 32
        %v3603 = vld [vmem:[%s3602] sm:$0xf]
        %v3605 = vsel %vm330, %v3570, 0
        %v3608 = vsel %vm330, %v3571, 0
        %v3611 = vsel %vm330, %v3572, 0
        %v3614 = vsel %vm330, %v3573, 0
        %v3617 = vsel %vm330, %v3574, 0
        %v3620 = vsel %vm330, %v3575, 0
        %v3623 = vsel %vm330, %v3576, 0
        %v3626 = vsel %vm330, %v3577, 0
        %v3629 = vsel %vm330, %v3578, 0
        %v3632 = vsel %vm330, %v3579, 0
        %v3635 = vsel %vm330, %v3580, 0
        %v3638 = vsel %vm330, %v3581, 0
        %v3641 = vsel %vm330, %v3582, 0
        %v3644 = vsel %vm330, %v3583, 0
        %v3647 = vsel %vm330, %v3584, 0
        %v3650 = vsel %vm330, %v3585, 0
        %v3653 = vsel %vm330, %v3586, 0
        %v3656 = vsel %vm330, %v3587, 0
        %v3659 = vsel %vm330, %v3588, 0
        %v3662 = vsel %vm330, %v3589, 0
        %v3665 = vsel %vm330, %v3590, 0
        %v3668 = vsel %vm330, %v3591, 0
        %v3671 = vsel %vm330, %v3592, 0
        %v3674 = vsel %vm330, %v3593, 0
        %v3677 = vsel %vm330, %v3594, 0
        %v3680 = vsel %vm330, %v3595, 0
        %v3683 = vsel %vm330, %v3596, 0
        %v3686 = vsel %vm330, %v3597, 0
        %v3689 = vsel %vm330, %v3598, 0
        %v3692 = vsel %vm330, %v3599, 0
        %v3695 = vsel %vm330, %v3600, 0
        %v3698 = vsel %vm330, %v3601, 0
        %v3701 = vsel %vm578, %v3603, 0
        %3703 = vmatprep.subr.mxu0 0.0
        %3704 = vmatpush1.msra.mxu0 %v3701
        %3705 = vmatprep.subr.mxu0 0.0
        %3706 = vmatpush1.msra.mxu0 0.0
        %3707 = vmatprep.subr.mxu0 0.0
        %3708 = vmatpush1.msra.mxu0 0.0
        %3709 = vmatprep.subr.mxu0 0.0
        %3710 = vmatpush1.msra.mxu0 0.0
        %3711 = vmatprep.subr.mxu0 0.0
        %3712 = vmatpush1.msra.mxu0 0.0
        %3713 = vmatprep.subr.mxu0 0.0
        %3714 = vmatpush1.msra.mxu0 0.0
        %3715 = vmatprep.subr.mxu0 0.0
        %3716 = vmatpush1.msra.mxu0 0.0
        %3717 = vmatprep.subr.mxu0 0.0
        %3718 = vmatpush1.msra.mxu0 0.0
        %3719 = vmatprep.subr.mxu0 0.0
        %3720 = vmatpush1.msra.mxu0 0.0
        %3721 = vmatprep.subr.mxu0 0.0
        %3722 = vmatpush1.msra.mxu0 0.0
        %3723 = vmatprep.subr.mxu0 0.0
        %3724 = vmatpush1.msra.mxu0 0.0
        %3725 = vmatprep.subr.mxu0 0.0
        %3726 = vmatpush1.msra.mxu0 0.0
        %3727 = vmatprep.subr.mxu0 0.0
        %3728 = vmatpush1.msra.mxu0 0.0
        %3729 = vmatprep.subr.mxu0 0.0
        %3730 = vmatpush1.msra.mxu0 0.0
        %3731 = vmatprep.subr.mxu0 0.0
        %3732 = vmatpush1.msra.mxu0 0.0
        %3733 = vmatprep.subr.mxu0 0.0
        %3734 = vmatpush1.msra.mxu0 0.0
        %3735 = vmatprep.subr.mxu0 0.0
        %3736 = vmatpush1.msra.mxu0 0.0
        %3737 = vmatprep.subr.mxu0 0.0
        %3738 = vmatpush1.msra.mxu0 0.0
        %3739 = vmatprep.subr.mxu0 0.0
        %3740 = vmatpush1.msra.mxu0 0.0
        %3741 = vmatprep.subr.mxu0 0.0
        %3742 = vmatpush1.msra.mxu0 0.0
        %3743 = vmatprep.subr.mxu0 0.0
        %3744 = vmatpush1.msra.mxu0 0.0
        %3745 = vmatprep.subr.mxu0 0.0
        %3746 = vmatpush1.msra.mxu0 0.0
        %3747 = vmatprep.subr.mxu0 0.0
        %3748 = vmatpush1.msra.mxu0 0.0
        %3749 = vmatprep.subr.mxu0 0.0
        %3750 = vmatpush1.msra.mxu0 0.0
        %3751 = vmatprep.subr.mxu0 0.0
        %3752 = vmatpush1.msra.mxu0 0.0
        %3753 = vmatprep.subr.mxu0 0.0
        %3754 = vmatpush1.msra.mxu0 0.0
        %3755 = vmatprep.subr.mxu0 0.0
        %3756 = vmatpush1.msra.mxu0 0.0
        %3757 = vmatprep.subr.mxu0 0.0
        %3758 = vmatpush1.msra.mxu0 0.0
        %3759 = vmatprep.subr.mxu0 0.0
        %3760 = vmatpush1.msra.mxu0 0.0
        %3761 = vmatprep.subr.mxu0 0.0
        %3762 = vmatpush1.msra.mxu0 0.0
        %3763 = vmatprep.subr.mxu0 0.0
        %3764 = vmatpush1.msra.mxu0 0.0
        %3765 = vmatprep.subr.mxu0 0.0
        %3766 = vmatpush1.msra.mxu0 0.0
        %3767 = vmatprep.mubr.f32.mxu0 0.0
        %3768 = vmatmul.mubr.f32.gmra.mrb[0].mxu0 %v3605
        %v3769 = vpop.f32.mrb[0].mxu0
        %v3770 = vadd.f32 0.0, %v3769
        %v3771 = vpop.f32.mrb[0].mxu0
        %3772 = vmatprep.mubr.f32.mxu0 0.0
        %3773 = vmatmul.mubr.f32.gmra.mrb[0].mxu0 %v3608
        %v3774 = vpop.f32.mrb[0].mxu0
        %v3775 = vadd.f32 0.0, %v3774
        %v3776 = vpop.f32.mrb[0].mxu0
        %3777 = vmatprep.mubr.f32.mxu0 0.0
        %3778 = vmatmul.mubr.f32.gmra.mrb[0].mxu0 %v3611
        %v3779 = vpop.f32.mrb[0].mxu0
        %v3780 = vadd.f32 0.0, %v3779
        %v3781 = vpop.f32.mrb[0].mxu0
        %3782 = vmatprep.mubr.f32.mxu0 0.0
        %3783 = vmatmul.mubr.f32.gmra.mrb[0].mxu0 %v3614
        %v3784 = vpop.f32.mrb[0].mxu0
        %v3785 = vadd.f32 0.0, %v3784
        %v3786 = vpop.f32.mrb[0].mxu0
        %3787 = vmatprep.mubr.f32.mxu0 0.0
        %3788 = vmatmul.mubr.f32.gmra.mrb[0].mxu0 %v3617
        %v3789 = vpop.f32.mrb[0].mxu0
        %v3790 = vadd.f32 0.0, %v3789
        %v3791 = vpop.f32.mrb[0].mxu0
        %3792 = vmatprep.mubr.f32.mxu0 0.0
        %3793 = vmatmul.mubr.f32.gmra.mrb[0].mxu0 %v3620
        %v3794 = vpop.f32.mrb[0].mxu0
        %v3795 = vadd.f32 0.0, %v3794
        %v3796 = vpop.f32.mrb[0].mxu0
        %3797 = vmatprep.mubr.f32.mxu0 0.0
        %3798 = vmatmul.mubr.f32.gmra.mrb[0].mxu0 %v3623
        %v3799 = vpop.f32.mrb[0].mxu0
        %v3800 = vadd.f32 0.0, %v3799
        %v3801 = vpop.f32.mrb[0].mxu0
        %3802 = vmatprep.mubr.f32.mxu0 0.0
        %3803 = vmatmul.mubr.f32.gmra.mrb[0].mxu0 %v3626
        %v3804 = vpop.f32.mrb[0].mxu0
        %v3805 = vadd.f32 0.0, %v3804
        %v3806 = vpop.f32.mrb[0].mxu0
        %3807 = vmatprep.mubr.f32.mxu0 0.0
        %3808 = vmatmul.mubr.f32.gmra.mrb[0].mxu0 %v3629
        %v3809 = vpop.f32.mrb[0].mxu0
        %v3810 = vadd.f32 0.0, %v3809
        %v3811 = vpop.f32.mrb[0].mxu0
        %3812 = vmatprep.mubr.f32.mxu0 0.0
        %3813 = vmatmul.mubr.f32.gmra.mrb[0].mxu0 %v3632
        %v3814 = vpop.f32.mrb[0].mxu0
        %v3815 = vadd.f32 0.0, %v3814
        %v3816 = vpop.f32.mrb[0].mxu0
        %3817 = vmatprep.mubr.f32.mxu0 0.0
        %3818 = vmatmul.mubr.f32.gmra.mrb[0].mxu0 %v3635
        %v3819 = vpop.f32.mrb[0].mxu0
        %v3820 = vadd.f32 0.0, %v3819
        %v3821 = vpop.f32.mrb[0].mxu0
        %3822 = vmatprep.mubr.f32.mxu0 0.0
        %3823 = vmatmul.mubr.f32.gmra.mrb[0].mxu0 %v3638
        %v3824 = vpop.f32.mrb[0].mxu0
        %v3825 = vadd.f32 0.0, %v3824
        %v3826 = vpop.f32.mrb[0].mxu0
        %3827 = vmatprep.mubr.f32.mxu0 0.0
        %3828 = vmatmul.mubr.f32.gmra.mrb[0].mxu0 %v3641
        %v3829 = vpop.f32.mrb[0].mxu0
        %v3830 = vadd.f32 0.0, %v3829
        %v3831 = vpop.f32.mrb[0].mxu0
        %3832 = vmatprep.mubr.f32.mxu0 0.0
        %3833 = vmatmul.mubr.f32.gmra.mrb[0].mxu0 %v3644
        %v3834 = vpop.f32.mrb[0].mxu0
        %v3835 = vadd.f32 0.0, %v3834
        %v3836 = vpop.f32.mrb[0].mxu0
        %3837 = vmatprep.mubr.f32.mxu0 0.0
        %3838 = vmatmul.mubr.f32.gmra.mrb[0].mxu0 %v3647
        %v3839 = vpop.f32.mrb[0].mxu0
        %v3840 = vadd.f32 0.0, %v3839
        %v3841 = vpop.f32.mrb[0].mxu0
        %3842 = vmatprep.mubr.f32.mxu0 0.0
        %3843 = vmatmul.mubr.f32.gmra.mrb[0].mxu0 %v3650
        %v3844 = vpop.f32.mrb[0].mxu0
        %v3845 = vadd.f32 0.0, %v3844
        %v3846 = vpop.f32.mrb[0].mxu0
        %3847 = vmatprep.mubr.f32.mxu0 0.0
        %3848 = vmatmul.mubr.f32.gmra.mrb[0].mxu0 %v3653
        %v3849 = vpop.f32.mrb[0].mxu0
        %v3850 = vadd.f32 0.0, %v3849
        %v3851 = vpop.f32.mrb[0].mxu0
        %3852 = vmatprep.mubr.f32.mxu0 0.0
        %3853 = vmatmul.mubr.f32.gmra.mrb[0].mxu0 %v3656
        %v3854 = vpop.f32.mrb[0].mxu0
        %v3855 = vadd.f32 0.0, %v3854
        %v3856 = vpop.f32.mrb[0].mxu0
        %3857 = vmatprep.mubr.f32.mxu0 0.0
        %3858 = vmatmul.mubr.f32.gmra.mrb[0].mxu0 %v3659
        %v3859 = vpop.f32.mrb[0].mxu0
        %v3860 = vadd.f32 0.0, %v3859
        %v3861 = vpop.f32.mrb[0].mxu0
        %3862 = vmatprep.mubr.f32.mxu0 0.0
        %3863 = vmatmul.mubr.f32.gmra.mrb[0].mxu0 %v3662
        %v3864 = vpop.f32.mrb[0].mxu0
        %v3865 = vadd.f32 0.0, %v3864
        %v3866 = vpop.f32.mrb[0].mxu0
        %3867 = vmatprep.mubr.f32.mxu0 0.0
        %3868 = vmatmul.mubr.f32.gmra.mrb[0].mxu0 %v3665
        %v3869 = vpop.f32.mrb[0].mxu0
        %v3870 = vadd.f32 0.0, %v3869
        %v3871 = vpop.f32.mrb[0].mxu0
        %3872 = vmatprep.mubr.f32.mxu0 0.0
        %3873 = vmatmul.mubr.f32.gmra.mrb[0].mxu0 %v3668
        %v3874 = vpop.f32.mrb[0].mxu0
        %v3875 = vadd.f32 0.0, %v3874
        %v3876 = vpop.f32.mrb[0].mxu0
        %3877 = vmatprep.mubr.f32.mxu0 0.0
        %3878 = vmatmul.mubr.f32.gmra.mrb[0].mxu0 %v3671
        %v3879 = vpop.f32.mrb[0].mxu0
        %v3880 = vadd.f32 0.0, %v3879
        %v3881 = vpop.f32.mrb[0].mxu0
        %3882 = vmatprep.mubr.f32.mxu0 0.0
        %3883 = vmatmul.mubr.f32.gmra.mrb[0].mxu0 %v3674
        %v3884 = vpop.f32.mrb[0].mxu0
        %v3885 = vadd.f32 0.0, %v3884
        %v3886 = vpop.f32.mrb[0].mxu0
        %3887 = vmatprep.mubr.f32.mxu0 0.0
        %3888 = vmatmul.mubr.f32.gmra.mrb[0].mxu0 %v3677
        %v3889 = vpop.f32.mrb[0].mxu0
        %v3890 = vadd.f32 0.0, %v3889
        %v3891 = vpop.f32.mrb[0].mxu0
        %3892 = vmatprep.mubr.f32.mxu0 0.0
        %3893 = vmatmul.mubr.f32.gmra.mrb[0].mxu0 %v3680
        %v3894 = vpop.f32.mrb[0].mxu0
        %v3895 = vadd.f32 0.0, %v3894
        %v3896 = vpop.f32.mrb[0].mxu0
        %3897 = vmatprep.mubr.f32.mxu0 0.0
        %3898 = vmatmul.mubr.f32.gmra.mrb[0].mxu0 %v3683
        %v3899 = vpop.f32.mrb[0].mxu0
        %v3900 = vadd.f32 0.0, %v3899
        %v3901 = vpop.f32.mrb[0].mxu0
        %3902 = vmatprep.mubr.f32.mxu0 0.0
        %3903 = vmatmul.mubr.f32.gmra.mrb[0].mxu0 %v3686
        %v3904 = vpop.f32.mrb[0].mxu0
        %v3905 = vadd.f32 0.0, %v3904
        %v3906 = vpop.f32.mrb[0].mxu0
        %3907 = vmatprep.mubr.f32.mxu0 0.0
        %3908 = vmatmul.mubr.f32.gmra.mrb[0].mxu0 %v3689
        %v3909 = vpop.f32.mrb[0].mxu0
        %v3910 = vadd.f32 0.0, %v3909
        %v3911 = vpop.f32.mrb[0].mxu0
        %3912 = vmatprep.mubr.f32.mxu0 0.0
        %3913 = vmatmul.mubr.f32.gmra.mrb[0].mxu0 %v3692
        %v3914 = vpop.f32.mrb[0].mxu0
        %v3915 = vadd.f32 0.0, %v3914
        %v3916 = vpop.f32.mrb[0].mxu0
        %3917 = vmatprep.mubr.f32.mxu0 0.0
        %3918 = vmatmul.mubr.f32.gmra.mrb[0].mxu0 %v3695
        %v3919 = vpop.f32.mrb[0].mxu0
        %v3920 = vadd.f32 0.0, %v3919
        %v3921 = vpop.f32.mrb[0].mxu0
        %3922 = vmatprep.mubr.f32.mxu0 0.0
        %3923 = vmatmul.mubr.f32.gmra.mrb[0].mxu0 %v3698
        %v3924 = vpop.f32.mrb[0].mxu0
        %v3925 = vadd.f32 0.0, %v3924
        %v3926 = vpop.f32.mrb[0].mxu0
        %3927 = vdwg.mxu0
        %v3928 = vadd.f32 %v3538, %v3770
        %v3929 = vadd.f32 %v3539, %v3775
        %v3930 = vadd.f32 %v3540, %v3780
        %v3931 = vadd.f32 %v3541, %v3785
        %v3932 = vadd.f32 %v3542, %v3790
        %v3933 = vadd.f32 %v3543, %v3795
        %v3934 = vadd.f32 %v3544, %v3800
        %v3935 = vadd.f32 %v3545, %v3805
        %v3936 = vadd.f32 %v3546, %v3810
        %v3937 = vadd.f32 %v3547, %v3815
        %v3938 = vadd.f32 %v3548, %v3820
        %v3939 = vadd.f32 %v3549, %v3825
        %v3940 = vadd.f32 %v3550, %v3830
        %v3941 = vadd.f32 %v3551, %v3835
        %v3942 = vadd.f32 %v3552, %v3840
        %v3943 = vadd.f32 %v3553, %v3845
        %v3944 = vadd.f32 %v3554, %v3850
        %v3945 = vadd.f32 %v3555, %v3855
        %v3946 = vadd.f32 %v3556, %v3860
        %v3947 = vadd.f32 %v3557, %v3865
        %v3948 = vadd.f32 %v3558, %v3870
        %v3949 = vadd.f32 %v3559, %v3875
        %v3950 = vadd.f32 %v3560, %v3880
        %v3951 = vadd.f32 %v3561, %v3885
        %v3952 = vadd.f32 %v3562, %v3890
        %v3953 = vadd.f32 %v3563, %v3895
        %v3954 = vadd.f32 %v3564, %v3900
        %v3955 = vadd.f32 %v3565, %v3905
        %v3956 = vadd.f32 %v3566, %v3910
        %v3957 = vadd.f32 %v3567, %v3915
        %v3958 = vadd.f32 %v3568, %v3920
        %v3959 = vadd.f32 %v3569, %v3925
        %v3960 = vsel %vm330, %v3928, 0.0
        %v3961 = vsel %vm330, %v3929, 0.0
        %v3962 = vadd.f32 %v3960, %v3961
        %v3963 = vsel %vm330, %v3930, 0.0
        %v3964 = vadd.f32 %v3962, %v3963
        %v3965 = vsel %vm330, %v3931, 0.0
        %v3966 = vadd.f32 %v3964, %v3965
        %v3967 = vsel %vm330, %v3932, 0.0
        %v3968 = vadd.f32 %v3966, %v3967
        %v3969 = vsel %vm330, %v3933, 0.0
        %v3970 = vadd.f32 %v3968, %v3969
        %v3971 = vsel %vm330, %v3934, 0.0
        %v3972 = vadd.f32 %v3970, %v3971
        %v3973 = vsel %vm330, %v3935, 0.0
        %v3974 = vadd.f32 %v3972, %v3973
        %v3975 = vsel %vm330, %v3936, 0.0
        %v3976 = vadd.f32 %v3974, %v3975
        %v3977 = vsel %vm330, %v3937, 0.0
        %v3978 = vadd.f32 %v3976, %v3977
        %v3979 = vsel %vm330, %v3938, 0.0
        %v3980 = vadd.f32 %v3978, %v3979
        %v3981 = vsel %vm330, %v3939, 0.0
        %v3982 = vadd.f32 %v3980, %v3981
        %v3983 = vsel %vm330, %v3940, 0.0
        %v3984 = vadd.f32 %v3982, %v3983
        %v3985 = vsel %vm330, %v3941, 0.0
        %v3986 = vadd.f32 %v3984, %v3985
        %v3987 = vsel %vm330, %v3942, 0.0
        %v3988 = vadd.f32 %v3986, %v3987
        %v3989 = vsel %vm330, %v3943, 0.0
        %v3990 = vadd.f32 %v3988, %v3989
        %v3991 = vsel %vm330, %v3944, 0.0
        %v3992 = vadd.f32 %v3990, %v3991
        %v3993 = vsel %vm330, %v3945, 0.0
        %v3994 = vadd.f32 %v3992, %v3993
        %v3995 = vsel %vm330, %v3946, 0.0
        %v3996 = vadd.f32 %v3994, %v3995
        %v3997 = vsel %vm330, %v3947, 0.0
        %v3998 = vadd.f32 %v3996, %v3997
        %v3999 = vsel %vm330, %v3948, 0.0
        %v4000 = vadd.f32 %v3998, %v3999
        %v4001 = vsel %vm330, %v3949, 0.0
        %v4002 = vadd.f32 %v4000, %v4001
        %v4003 = vsel %vm330, %v3950, 0.0
        %v4004 = vadd.f32 %v4002, %v4003
        %v4005 = vsel %vm330, %v3951, 0.0
        %v4006 = vadd.f32 %v4004, %v4005
        %v4007 = vsel %vm330, %v3952, 0.0
        %v4008 = vadd.f32 %v4006, %v4007
        %v4009 = vsel %vm330, %v3953, 0.0
        %v4010 = vadd.f32 %v4008, %v4009
        %v4011 = vsel %vm330, %v3954, 0.0
        %v4012 = vadd.f32 %v4010, %v4011
        %v4013 = vsel %vm330, %v3955, 0.0
        %v4014 = vadd.f32 %v4012, %v4013
        %v4015 = vsel %vm330, %v3956, 0.0
        %v4016 = vadd.f32 %v4014, %v4015
        %v4017 = vsel %vm330, %v3957, 0.0
        %v4018 = vadd.f32 %v4016, %v4017
        %v4019 = vsel %vm330, %v3958, 0.0
        %v4020 = vadd.f32 %v4018, %v4019
        %v4021 = vsel %vm330, %v3959, 0.0
        %v4022 = vadd.f32 %v4020, %v4021
        %v4023 = vrot.slane %v4022, 4
        %v4024 = vadd.f32 %v4022, %v4023
        %v4025 = vrot.slane %v4024, 2
        %v4026 = vadd.f32 %v4024, %v4025
        %v4027 = vrot.slane %v4026, 1
        %v4028 = vadd.f32 %v4026, %v4027
        %v4029 = vrcp.pop 256.0
        %v4030 = vmul.f32 %v4028, %v4029
        %v4031 = vsub.f32 %v3928, %v4030
        %v4032 = vsub.f32 %v3929, %v4030
        %v4033 = vsub.f32 %v3930, %v4030
        %v4034 = vsub.f32 %v3931, %v4030
        %v4035 = vsub.f32 %v3932, %v4030
        %v4036 = vsub.f32 %v3933, %v4030
        %v4037 = vsub.f32 %v3934, %v4030
        %v4038 = vsub.f32 %v3935, %v4030
        %v4039 = vsub.f32 %v3936, %v4030
        %v4040 = vsub.f32 %v3937, %v4030
        %v4041 = vsub.f32 %v3938, %v4030
        %v4042 = vsub.f32 %v3939, %v4030
        %v4043 = vsub.f32 %v3940, %v4030
        %v4044 = vsub.f32 %v3941, %v4030
        %v4045 = vsub.f32 %v3942, %v4030
        %v4046 = vsub.f32 %v3943, %v4030
        %v4047 = vsub.f32 %v3944, %v4030
        %v4048 = vsub.f32 %v3945, %v4030
        %v4049 = vsub.f32 %v3946, %v4030
        %v4050 = vsub.f32 %v3947, %v4030
        %v4051 = vsub.f32 %v3948, %v4030
        %v4052 = vsub.f32 %v3949, %v4030
        %v4053 = vsub.f32 %v3950, %v4030
        %v4054 = vsub.f32 %v3951, %v4030
        %v4055 = vsub.f32 %v3952, %v4030
        %v4056 = vsub.f32 %v3953, %v4030
        %v4057 = vsub.f32 %v3954, %v4030
        %v4058 = vsub.f32 %v3955, %v4030
        %v4059 = vsub.f32 %v3956, %v4030
        %v4060 = vsub.f32 %v3957, %v4030
        %v4061 = vsub.f32 %v3958, %v4030
        %v4062 = vsub.f32 %v3959, %v4030
        %v4063 = vmul.f32 %v4031, %v4031
        %v4064 = vmul.f32 %v4032, %v4032
        %v4065 = vmul.f32 %v4033, %v4033
        %v4066 = vmul.f32 %v4034, %v4034
        %v4067 = vmul.f32 %v4035, %v4035
        %v4068 = vmul.f32 %v4036, %v4036
        %v4069 = vmul.f32 %v4037, %v4037
        %v4070 = vmul.f32 %v4038, %v4038
        %v4071 = vmul.f32 %v4039, %v4039
        %v4072 = vmul.f32 %v4040, %v4040
        %v4073 = vmul.f32 %v4041, %v4041
        %v4074 = vmul.f32 %v4042, %v4042
        %v4075 = vmul.f32 %v4043, %v4043
        %v4076 = vmul.f32 %v4044, %v4044
        %v4077 = vmul.f32 %v4045, %v4045
        %v4078 = vmul.f32 %v4046, %v4046
        %v4079 = vmul.f32 %v4047, %v4047
        %v4080 = vmul.f32 %v4048, %v4048
        %v4081 = vmul.f32 %v4049, %v4049
        %v4082 = vmul.f32 %v4050, %v4050
        %v4083 = vmul.f32 %v4051, %v4051
        %v4084 = vmul.f32 %v4052, %v4052
        %v4085 = vmul.f32 %v4053, %v4053
        %v4086 = vmul.f32 %v4054, %v4054
        %v4087 = vmul.f32 %v4055, %v4055
        %v4088 = vmul.f32 %v4056, %v4056
        %v4089 = vmul.f32 %v4057, %v4057
        %v4090 = vmul.f32 %v4058, %v4058
        %v4091 = vmul.f32 %v4059, %v4059
        %v4092 = vmul.f32 %v4060, %v4060
        %v4093 = vmul.f32 %v4061, %v4061
        %v4094 = vmul.f32 %v4062, %v4062
        %v4095 = vsel %vm330, %v4063, 0.0
        %v4096 = vsel %vm330, %v4064, 0.0
        %v4097 = vadd.f32 %v4095, %v4096
        %v4098 = vsel %vm330, %v4065, 0.0
        %v4099 = vadd.f32 %v4097, %v4098
        %v4100 = vsel %vm330, %v4066, 0.0
        %v4101 = vadd.f32 %v4099, %v4100
        %v4102 = vsel %vm330, %v4067, 0.0
        %v4103 = vadd.f32 %v4101, %v4102
        %v4104 = vsel %vm330, %v4068, 0.0
        %v4105 = vadd.f32 %v4103, %v4104
        %v4106 = vsel %vm330, %v4069, 0.0
        %v4107 = vadd.f32 %v4105, %v4106
        %v4108 = vsel %vm330, %v4070, 0.0
        %v4109 = vadd.f32 %v4107, %v4108
        %v4110 = vsel %vm330, %v4071, 0.0
        %v4111 = vadd.f32 %v4109, %v4110
        %v4112 = vsel %vm330, %v4072, 0.0
        %v4113 = vadd.f32 %v4111, %v4112
        %v4114 = vsel %vm330, %v4073, 0.0
        %v4115 = vadd.f32 %v4113, %v4114
        %v4116 = vsel %vm330, %v4074, 0.0
        %v4117 = vadd.f32 %v4115, %v4116
        %v4118 = vsel %vm330, %v4075, 0.0
        %v4119 = vadd.f32 %v4117, %v4118
        %v4120 = vsel %vm330, %v4076, 0.0
        %v4121 = vadd.f32 %v4119, %v4120
        %v4122 = vsel %vm330, %v4077, 0.0
        %v4123 = vadd.f32 %v4121, %v4122
        %v4124 = vsel %vm330, %v4078, 0.0
        %v4125 = vadd.f32 %v4123, %v4124
        %v4126 = vsel %vm330, %v4079, 0.0
        %v4127 = vadd.f32 %v4125, %v4126
        %v4128 = vsel %vm330, %v4080, 0.0
        %v4129 = vadd.f32 %v4127, %v4128
        %v4130 = vsel %vm330, %v4081, 0.0
        %v4131 = vadd.f32 %v4129, %v4130
        %v4132 = vsel %vm330, %v4082, 0.0
        %v4133 = vadd.f32 %v4131, %v4132
        %v4134 = vsel %vm330, %v4083, 0.0
        %v4135 = vadd.f32 %v4133, %v4134
        %v4136 = vsel %vm330, %v4084, 0.0
        %v4137 = vadd.f32 %v4135, %v4136
        %v4138 = vsel %vm330, %v4085, 0.0
        %v4139 = vadd.f32 %v4137, %v4138
        %v4140 = vsel %vm330, %v4086, 0.0
        %v4141 = vadd.f32 %v4139, %v4140
        %v4142 = vsel %vm330, %v4087, 0.0
        %v4143 = vadd.f32 %v4141, %v4142
        %v4144 = vsel %vm330, %v4088, 0.0
        %v4145 = vadd.f32 %v4143, %v4144
        %v4146 = vsel %vm330, %v4089, 0.0
        %v4147 = vadd.f32 %v4145, %v4146
        %v4148 = vsel %vm330, %v4090, 0.0
        %v4149 = vadd.f32 %v4147, %v4148
        %v4150 = vsel %vm330, %v4091, 0.0
        %v4151 = vadd.f32 %v4149, %v4150
        %v4152 = vsel %vm330, %v4092, 0.0
        %v4153 = vadd.f32 %v4151, %v4152
        %v4154 = vsel %vm330, %v4093, 0.0
        %v4155 = vadd.f32 %v4153, %v4154
        %v4156 = vsel %vm330, %v4094, 0.0
        %v4157 = vadd.f32 %v4155, %v4156
        %v4158 = vrot.slane %v4157, 4
        %v4159 = vadd.f32 %v4157, %v4158
        %v4160 = vrot.slane %v4159, 2
        %v4161 = vadd.f32 %v4159, %v4160
        %v4162 = vrot.slane %v4161, 1
        %v4163 = vadd.f32 %v4161, %v4162
        %v4164 = vmul.f32 %v4163, %v4029
        %v4165 = vadd.f32 %v4164, 1e-05
        %v4166 = vrsqrt.pop %v4165
        %v4167 = vmul.f32 %v4031, %v4166
        %v4168 = vmul.f32 %v4032, %v4166
        %v4169 = vmul.f32 %v4033, %v4166
        %v4170 = vmul.f32 %v4034, %v4166
        %v4171 = vmul.f32 %v4035, %v4166
        %v4172 = vmul.f32 %v4036, %v4166
        %v4173 = vmul.f32 %v4037, %v4166
        %v4174 = vmul.f32 %v4038, %v4166
        %v4175 = vmul.f32 %v4039, %v4166
        %v4176 = vmul.f32 %v4040, %v4166
        %v4177 = vmul.f32 %v4041, %v4166
        %v4178 = vmul.f32 %v4042, %v4166
        %v4179 = vmul.f32 %v4043, %v4166
        %v4180 = vmul.f32 %v4044, %v4166
        %v4181 = vmul.f32 %v4045, %v4166
        %v4182 = vmul.f32 %v4046, %v4166
        %v4183 = vmul.f32 %v4047, %v4166
        %v4184 = vmul.f32 %v4048, %v4166
        %v4185 = vmul.f32 %v4049, %v4166
        %v4186 = vmul.f32 %v4050, %v4166
        %v4187 = vmul.f32 %v4051, %v4166
        %v4188 = vmul.f32 %v4052, %v4166
        %v4189 = vmul.f32 %v4053, %v4166
        %v4190 = vmul.f32 %v4054, %v4166
        %v4191 = vmul.f32 %v4055, %v4166
        %v4192 = vmul.f32 %v4056, %v4166
        %v4193 = vmul.f32 %v4057, %v4166
        %v4194 = vmul.f32 %v4058, %v4166
        %v4195 = vmul.f32 %v4059, %v4166
        %v4196 = vmul.f32 %v4060, %v4166
        %v4197 = vmul.f32 %v4061, %v4166
        %v4198 = vmul.f32 %v4062, %v4166
        %v4199 = vmax.f32 %v4167, 0.0
        %v4200 = vmax.f32 %v4168, 0.0
        %v4201 = vmax.f32 %v4169, 0.0
        %v4202 = vmax.f32 %v4170, 0.0
        %v4203 = vmax.f32 %v4171, 0.0
        %v4204 = vmax.f32 %v4172, 0.0
        %v4205 = vmax.f32 %v4173, 0.0
        %v4206 = vmax.f32 %v4174, 0.0
        %v4207 = vmax.f32 %v4175, 0.0
        %v4208 = vmax.f32 %v4176, 0.0
        %v4209 = vmax.f32 %v4177, 0.0
        %v4210 = vmax.f32 %v4178, 0.0
        %v4211 = vmax.f32 %v4179, 0.0
        %v4212 = vmax.f32 %v4180, 0.0
        %v4213 = vmax.f32 %v4181, 0.0
        %v4214 = vmax.f32 %v4182, 0.0
        %v4215 = vmax.f32 %v4183, 0.0
        %v4216 = vmax.f32 %v4184, 0.0
        %v4217 = vmax.f32 %v4185, 0.0
        %v4218 = vmax.f32 %v4186, 0.0
        %v4219 = vmax.f32 %v4187, 0.0
        %v4220 = vmax.f32 %v4188, 0.0
        %v4221 = vmax.f32 %v4189, 0.0
        %v4222 = vmax.f32 %v4190, 0.0
        %v4223 = vmax.f32 %v4191, 0.0
        %v4224 = vmax.f32 %v4192, 0.0
        %v4225 = vmax.f32 %v4193, 0.0
        %v4226 = vmax.f32 %v4194, 0.0
        %v4227 = vmax.f32 %v4195, 0.0
        %v4228 = vmax.f32 %v4196, 0.0
        %v4229 = vmax.f32 %v4197, 0.0
        %v4230 = vmax.f32 %v4198, 0.0
        %4231 = vst.msk [vmem:[%s329 + $0x1] sm:$0xff] %vm330, %v4199
        %4232 = vst.msk [vmem:[%s329 + $0x9] sm:$0xff] %vm330, %v4200
        %4233 = vst.msk [vmem:[%s329 + $0x19] sm:$0xff] %vm330, %v4201
        %4234 = vst.msk [vmem:[%s329 + $0x21] sm:$0xff] %vm330, %v4202
        %4235 = vst.msk [vmem:[%s329 + $0x31] sm:$0xff] %vm330, %v4203
        %4236 = vst.msk [vmem:[%s329 + $0x39] sm:$0xff] %vm330, %v4204
        %4237 = vst.msk [vmem:[%s329 + $0x49] sm:$0xff] %vm330, %v4205
        %4238 = vst.msk [vmem:[%s329 + $0x51] sm:$0xff] %vm330, %v4206
        %4239 = vst.msk [vmem:[%s329 + $0x61] sm:$0xff] %vm330, %v4207
        %4240 = vst.msk [vmem:[%s329 + $0x69] sm:$0xff] %vm330, %v4208
        %4241 = vst.msk [vmem:[%s329 + $0x79] sm:$0xff] %vm330, %v4209
        %4242 = vst.msk [vmem:[%s329 + $0x81] sm:$0xff] %vm330, %v4210
        %4243 = vst.msk [vmem:[%s329 + $0x91] sm:$0xff] %vm330, %v4211
        %4244 = vst.msk [vmem:[%s329 + $0x99] sm:$0xff] %vm330, %v4212
        %4245 = vst.msk [vmem:[%s329 + $0xa9] sm:$0xff] %vm330, %v4213
        %4246 = vst.msk [vmem:[%s329 + $0xb1] sm:$0xff] %vm330, %v4214
        %4247 = vst.msk [vmem:[%s329 + $0xc1] sm:$0xff] %vm330, %v4215
        %4248 = vst.msk [vmem:[%s329 + $0xc9] sm:$0xff] %vm330, %v4216
        %4249 = vst.msk [vmem:[%s329 + $0xd9] sm:$0xff] %vm330, %v4217
        %4250 = vst.msk [vmem:[%s329 + $0xe1] sm:$0xff] %vm330, %v4218
        %4251 = vst.msk [vmem:[%s329 + $0xf1] sm:$0xff] %vm330, %v4219
        %4252 = vst.msk [vmem:[%s329 + $0xf9] sm:$0xff] %vm330, %v4220
        %4253 = vst.msk [vmem:[%s329 + $0x109] sm:$0xff] %vm330, %v4221
        %4254 = vst.msk [vmem:[%s329 + $0x111] sm:$0xff] %vm330, %v4222
        %4255 = vst.msk [vmem:[%s329 + $0x121] sm:$0xff] %vm330, %v4223
        %4256 = vst.msk [vmem:[%s329 + $0x129] sm:$0xff] %vm330, %v4224
        %4257 = vst.msk [vmem:[%s329 + $0x139] sm:$0xff] %vm330, %v4225
        %4258 = vst.msk [vmem:[%s329 + $0x141] sm:$0xff] %vm330, %v4226
        %4259 = vst.msk [vmem:[%s329 + $0x151] sm:$0xff] %vm330, %v4227
        %4260 = vst.msk [vmem:[%s329 + $0x159] sm:$0xff] %vm330, %v4228
        %4261 = vst.msk [vmem:[%s329 + $0x169] sm:$0xff] %vm330, %v4229
        %4262 = vst.msk [vmem:[%s329 + $0x171] sm:$0xff] %vm330, %v4230
        %4263 = vst.msk [vmem:[#allocation2 + $0x1] sm:$0xff] %vm330, %v4201
        %4264 = vst.msk [vmem:[#allocation2 + $0x9] sm:$0xff] %vm330, %v4202
        %4265 = vst.msk [vmem:[%s365 + $0x1] sm:$0xff] %vm330, %v4227
        %4266 = vst.msk [vmem:[%s365 + $0x9] sm:$0xff] %vm330, %v4228
        %v4267 = vld [vmem:[#allocation2 + $0x2] sm:$0x1]
        %v4268 = vld [vmem:[#allocation2 + $0x1a] sm:$0x1]
        %v4269 = vld [vmem:[#allocation2 + $0x32] sm:$0x1]
        %v4270 = vld [vmem:[#allocation2 + $0x4a] sm:$0x1]
        %v4271 = vld [vmem:[#allocation2 + $0x62] sm:$0x1]
        %v4272 = vld [vmem:[#allocation2 + $0x7a] sm:$0x1]
        %v4273 = vld [vmem:[#allocation2 + $0x92] sm:$0x1]
        %v4274 = vld [vmem:[#allocation2 + $0xaa] sm:$0x1]
        %v4275 = vld [vmem:[#allocation2 + $0xc2] sm:$0x1]
        %v4276 = vld [vmem:[#allocation2 + $0xda] sm:$0x1]
        %v4277 = vld [vmem:[#allocation2 + $0xf2] sm:$0x1]
        %v4278 = vld [vmem:[#allocation2 + $0x10a] sm:$0x1]
        %v4279 = vld [vmem:[#allocation2 + $0x122] sm:$0x1]
        %v4280 = vld [vmem:[#allocation2 + $0x13a] sm:$0x1]
        %v4281 = vld [vmem:[#allocation2 + $0x152] sm:$0x1]
        %v4282 = vld [vmem:[#allocation2 + $0x16a] sm:$0x1]
        %v4283 = vld [vmem:[#allocation2 + $0x182] sm:$0x1]
        %v4284 = vld [vmem:[#allocation2 + $0x19a] sm:$0x1]
        %4285 = vst.msk [vmem:[#allocation2] sm:$0x1] %vm386, %v4267
        %4286 = vst.msk [vmem:[#allocation2 + $0x18] sm:$0x1] %vm386, %v4268
        %4287 = vst.msk [vmem:[#allocation2 + $0x30] sm:$0x1] %vm386, %v4269
        %4288 = vst.msk [vmem:[#allocation2 + $0x48] sm:$0x1] %vm386, %v4270
        %4289 = vst.msk [vmem:[#allocation2 + $0x60] sm:$0x1] %vm386, %v4271
        %4290 = vst.msk [vmem:[#allocation2 + $0x78] sm:$0x1] %vm386, %v4272
        %4291 = vst.msk [vmem:[#allocation2 + $0x90] sm:$0x1] %vm386, %v4273
        %4292 = vst.msk [vmem:[#allocation2 + $0xa8] sm:$0x1] %vm386, %v4274
        %4293 = vst.msk [vmem:[#allocation2 + $0xc0] sm:$0x1] %vm386, %v4275
        %4294 = vst.msk [vmem:[#allocation2 + $0xd8] sm:$0x1] %vm386, %v4276
        %4295 = vst.msk [vmem:[#allocation2 + $0xf0] sm:$0x1] %vm386, %v4277
        %4296 = vst.msk [vmem:[#allocation2 + $0x108] sm:$0x1] %vm386, %v4278
        %4297 = vst.msk [vmem:[#allocation2 + $0x120] sm:$0x1] %vm386, %v4279
        %4298 = vst.msk [vmem:[#allocation2 + $0x138] sm:$0x1] %vm386, %v4280
        %4299 = vst.msk [vmem:[#allocation2 + $0x150] sm:$0x1] %vm386, %v4281
        %4300 = vst.msk [vmem:[#allocation2 + $0x168] sm:$0x1] %vm386, %v4282
        %4301 = vst.msk [vmem:[#allocation2 + $0x180] sm:$0x1] %vm386, %v4283
        %4302 = vst.msk [vmem:[#allocation2 + $0x198] sm:$0x1] %vm386, %v4284
        %v4303 = vld [vmem:[#allocation2 + $0xf] sm:$0x1]
        %v4304 = vld [vmem:[#allocation2 + $0x27] sm:$0x1]
        %v4305 = vld [vmem:[#allocation2 + $0x3f] sm:$0x1]
        %v4306 = vld [vmem:[#allocation2 + $0x57] sm:$0x1]
        %v4307 = vld [vmem:[#allocation2 + $0x6f] sm:$0x1]
        %v4308 = vld [vmem:[#allocation2 + $0x87] sm:$0x1]
        %v4309 = vld [vmem:[#allocation2 + $0x9f] sm:$0x1]
        %v4310 = vld [vmem:[#allocation2 + $0xb7] sm:$0x1]
        %v4311 = vld [vmem:[#allocation2 + $0xcf] sm:$0x1]
        %v4312 = vld [vmem:[#allocation2 + $0xe7] sm:$0x1]
        %v4313 = vld [vmem:[#allocation2 + $0xff] sm:$0x1]
        %v4314 = vld [vmem:[#allocation2 + $0x117] sm:$0x1]
        %v4315 = vld [vmem:[#allocation2 + $0x12f] sm:$0x1]
        %v4316 = vld [vmem:[#allocation2 + $0x147] sm:$0x1]
        %v4317 = vld [vmem:[#allocation2 + $0x15f] sm:$0x1]
        %v4318 = vld [vmem:[#allocation2 + $0x177] sm:$0x1]
        %v4319 = vld [vmem:[#allocation2 + $0x18f] sm:$0x1]
        %v4320 = vld [vmem:[#allocation2 + $0x1a7] sm:$0x1]
        %4321 = vst.msk [vmem:[#allocation2 + $0x11] sm:$0x1] %vm386, %v4303
        %4322 = vst.msk [vmem:[#allocation2 + $0x29] sm:$0x1] %vm386, %v4304
        %4323 = vst.msk [vmem:[#allocation2 + $0x41] sm:$0x1] %vm386, %v4305
        %4324 = vst.msk [vmem:[#allocation2 + $0x59] sm:$0x1] %vm386, %v4306
        %4325 = vst.msk [vmem:[#allocation2 + $0x71] sm:$0x1] %vm386, %v4307
        %4326 = vst.msk [vmem:[#allocation2 + $0x89] sm:$0x1] %vm386, %v4308
        %4327 = vst.msk [vmem:[#allocation2 + $0xa1] sm:$0x1] %vm386, %v4309
        %4328 = vst.msk [vmem:[#allocation2 + $0xb9] sm:$0x1] %vm386, %v4310
        %4329 = vst.msk [vmem:[#allocation2 + $0xd1] sm:$0x1] %vm386, %v4311
        %4330 = vst.msk [vmem:[#allocation2 + $0xe9] sm:$0x1] %vm386, %v4312
        %4331 = vst.msk [vmem:[#allocation2 + $0x101] sm:$0x1] %vm386, %v4313
        %4332 = vst.msk [vmem:[#allocation2 + $0x119] sm:$0x1] %vm386, %v4314
        %4333 = vst.msk [vmem:[#allocation2 + $0x131] sm:$0x1] %vm386, %v4315
        %4334 = vst.msk [vmem:[#allocation2 + $0x149] sm:$0x1] %vm386, %v4316
        %4335 = vst.msk [vmem:[#allocation2 + $0x161] sm:$0x1] %vm386, %v4317
        %4336 = vst.msk [vmem:[#allocation2 + $0x179] sm:$0x1] %vm386, %v4318
        %4337 = vst.msk [vmem:[#allocation2 + $0x191] sm:$0x1] %vm386, %v4319
        %4338 = vst.msk [vmem:[#allocation2 + $0x1a9] sm:$0x1] %vm386, %v4320
        %v4339 = vld [vmem:[#allocation11] sm:$0x1]
        %v4341 = vlaneseq
        %v4342 = vshrl.u32 %v4341, 7
        %v4343 = vsub.s32 0, %v4342
        %v4344 = vrot.slane %v4339, %v4343
        %v4346 = vadd.f32 %v4344, 0.0
        %v4347 = vld [vmem:[#allocation2] sm:$0xff]
        %v4348 = vld [vmem:[#allocation2 + $0x8] sm:$0xff]
        %v4349 = vld [vmem:[#allocation2 + $0x18] sm:$0xff]
        %v4350 = vld [vmem:[#allocation2 + $0x20] sm:$0xff]
        %v4351 = vld [vmem:[#allocation2 + $0x30] sm:$0xff]
        %v4352 = vld [vmem:[#allocation2 + $0x38] sm:$0xff]
        %v4353 = vld [vmem:[#allocation2 + $0x48] sm:$0xff]
        %v4354 = vld [vmem:[#allocation2 + $0x50] sm:$0xff]
        %v4355 = vld [vmem:[#allocation2 + $0x60] sm:$0xff]
        %v4356 = vld [vmem:[#allocation2 + $0x68] sm:$0xff]
        %v4357 = vld [vmem:[#allocation2 + $0x78] sm:$0xff]
        %v4358 = vld [vmem:[#allocation2 + $0x80] sm:$0xff]
        %v4359 = vld [vmem:[#allocation2 + $0x90] sm:$0xff]
        %v4360 = vld [vmem:[#allocation2 + $0x98] sm:$0xff]
        %v4361 = vld [vmem:[#allocation2 + $0xa8] sm:$0xff]
        %v4362 = vld [vmem:[#allocation2 + $0xb0] sm:$0xff]
        %v4363 = vld [vmem:[#allocation2 + $0xc0] sm:$0xff]
        %v4364 = vld [vmem:[#allocation2 + $0xc8] sm:$0xff]
        %v4365 = vld [vmem:[#allocation2 + $0xd8] sm:$0xff]
        %v4366 = vld [vmem:[#allocation2 + $0xe0] sm:$0xff]
        %v4367 = vld [vmem:[#allocation2 + $0xf0] sm:$0xff]
        %v4368 = vld [vmem:[#allocation2 + $0xf8] sm:$0xff]
        %v4369 = vld [vmem:[#allocation2 + $0x108] sm:$0xff]
        %v4370 = vld [vmem:[#allocation2 + $0x110] sm:$0xff]
        %v4371 = vld [vmem:[#allocation2 + $0x120] sm:$0xff]
        %v4372 = vld [vmem:[#allocation2 + $0x128] sm:$0xff]
        %v4373 = vld [vmem:[#allocation2 + $0x138] sm:$0xff]
        %v4374 = vld [vmem:[#allocation2 + $0x140] sm:$0xff]
        %v4375 = vld [vmem:[#allocation2 + $0x150] sm:$0xff]
        %v4376 = vld [vmem:[#allocation2 + $0x158] sm:$0xff]
        %v4377 = vld [vmem:[#allocation2 + $0x168] sm:$0xff]
        %v4378 = vld [vmem:[#allocation2 + $0x170] sm:$0xff]
        %v4379 = vld [vmem:[#allocation9] sm:$0xf]
        %v4381 = vsel %vm330, %v4347, 0
        %v4384 = vsel %vm330, %v4348, 0
        %v4387 = vsel %vm330, %v4349, 0
        %v4390 = vsel %vm330, %v4350, 0
        %v4393 = vsel %vm330, %v4351, 0
        %v4396 = vsel %vm330, %v4352, 0
        %v4399 = vsel %vm330, %v4353, 0
        %v4402 = vsel %vm330, %v4354, 0
        %v4405 = vsel %vm330, %v4355, 0
        %v4408 = vsel %vm330, %v4356, 0
        %v4411 = vsel %vm330, %v4357, 0
        %v4414 = vsel %vm330, %v4358, 0
        %v4417 = vsel %vm330, %v4359, 0
        %v4420 = vsel %vm330, %v4360, 0
        %v4423 = vsel %vm330, %v4361, 0
        %v4426 = vsel %vm330, %v4362, 0
        %v4429 = vsel %vm330, %v4363, 0
        %v4432 = vsel %vm330, %v4364, 0
        %v4435 = vsel %vm330, %v4365, 0
        %v4438 = vsel %vm330, %v4366, 0
        %v4441 = vsel %vm330, %v4367, 0
        %v4444 = vsel %vm330, %v4368, 0
        %v4447 = vsel %vm330, %v4369, 0
        %v4450 = vsel %vm330, %v4370, 0
        %v4453 = vsel %vm330, %v4371, 0
        %v4456 = vsel %vm330, %v4372, 0
        %v4459 = vsel %vm330, %v4373, 0
        %v4462 = vsel %vm330, %v4374, 0
        %v4465 = vsel %vm330, %v4375, 0
        %v4468 = vsel %vm330, %v4376, 0
        %v4471 = vsel %vm330, %v4377, 0
        %v4474 = vsel %vm330, %v4378, 0
        %v4477 = vsel %vm578, %v4379, 0
        %4479 = vmatprep.subr.mxu0 0.0
        %4480 = vmatpush1.msra.mxu0 %v4477
        %4481 = vmatprep.subr.mxu0 0.0
        %4482 = vmatpush1.msra.mxu0 0.0
        %4483 = vmatprep.subr.mxu0 0.0
        %4484 = vmatpush1.msra.mxu0 0.0
        %4485 = vmatprep.subr.mxu0 0.0
        %4486 = vmatpush1.msra.mxu0 0.0
        %4487 = vmatprep.subr.mxu0 0.0
        %4488 = vmatpush1.msra.mxu0 0.0
        %4489 = vmatprep.subr.mxu0 0.0
        %4490 = vmatpush1.msra.mxu0 0.0
        %4491 = vmatprep.subr.mxu0 0.0
        %4492 = vmatpush1.msra.mxu0 0.0
        %4493 = vmatprep.subr.mxu0 0.0
        %4494 = vmatpush1.msra.mxu0 0.0
        %4495 = vmatprep.subr.mxu0 0.0
        %4496 = vmatpush1.msra.mxu0 0.0
        %4497 = vmatprep.subr.mxu0 0.0
        %4498 = vmatpush1.msra.mxu0 0.0
        %4499 = vmatprep.subr.mxu0 0.0
        %4500 = vmatpush1.msra.mxu0 0.0
        %4501 = vmatprep.subr.mxu0 0.0
        %4502 = vmatpush1.msra.mxu0 0.0
        %4503 = vmatprep.subr.mxu0 0.0
        %4504 = vmatpush1.msra.mxu0 0.0
        %4505 = vmatprep.subr.mxu0 0.0
        %4506 = vmatpush1.msra.mxu0 0.0
        %4507 = vmatprep.subr.mxu0 0.0
        %4508 = vmatpush1.msra.mxu0 0.0
        %4509 = vmatprep.subr.mxu0 0.0
        %4510 = vmatpush1.msra.mxu0 0.0
        %4511 = vmatprep.subr.mxu0 0.0
        %4512 = vmatpush1.msra.mxu0 0.0
        %4513 = vmatprep.subr.mxu0 0.0
        %4514 = vmatpush1.msra.mxu0 0.0
        %4515 = vmatprep.subr.mxu0 0.0
        %4516 = vmatpush1.msra.mxu0 0.0
        %4517 = vmatprep.subr.mxu0 0.0
        %4518 = vmatpush1.msra.mxu0 0.0
        %4519 = vmatprep.subr.mxu0 0.0
        %4520 = vmatpush1.msra.mxu0 0.0
        %4521 = vmatprep.subr.mxu0 0.0
        %4522 = vmatpush1.msra.mxu0 0.0
        %4523 = vmatprep.subr.mxu0 0.0
        %4524 = vmatpush1.msra.mxu0 0.0
        %4525 = vmatprep.subr.mxu0 0.0
        %4526 = vmatpush1.msra.mxu0 0.0
        %4527 = vmatprep.subr.mxu0 0.0
        %4528 = vmatpush1.msra.mxu0 0.0
        %4529 = vmatprep.subr.mxu0 0.0
        %4530 = vmatpush1.msra.mxu0 0.0
        %4531 = vmatprep.subr.mxu0 0.0
        %4532 = vmatpush1.msra.mxu0 0.0
        %4533 = vmatprep.subr.mxu0 0.0
        %4534 = vmatpush1.msra.mxu0 0.0
        %4535 = vmatprep.subr.mxu0 0.0
        %4536 = vmatpush1.msra.mxu0 0.0
        %4537 = vmatprep.subr.mxu0 0.0
        %4538 = vmatpush1.msra.mxu0 0.0
        %4539 = vmatprep.subr.mxu0 0.0
        %4540 = vmatpush1.msra.mxu0 0.0
        %4541 = vmatprep.subr.mxu0 0.0
        %4542 = vmatpush1.msra.mxu0 0.0
        %4543 = vmatprep.mubr.f32.mxu0 0.0
        %4544 = vmatmul.mubr.f32.gmra.mrb[0].mxu0 %v4381
        %v4545 = vpop.f32.mrb[0].mxu0
        %v4546 = vadd.f32 0.0, %v4545
        %v4547 = vpop.f32.mrb[0].mxu0
        %4548 = vmatprep.mubr.f32.mxu0 0.0
        %4549 = vmatmul.mubr.f32.gmra.mrb[0].mxu0 %v4384
        %v4550 = vpop.f32.mrb[0].mxu0
        %v4551 = vadd.f32 0.0, %v4550
        %v4552 = vpop.f32.mrb[0].mxu0
        %4553 = vmatprep.mubr.f32.mxu0 0.0
        %4554 = vmatmul.mubr.f32.gmra.mrb[0].mxu0 %v4387
        %v4555 = vpop.f32.mrb[0].mxu0
        %v4556 = vadd.f32 0.0, %v4555
        %v4557 = vpop.f32.mrb[0].mxu0
        %4558 = vmatprep.mubr.f32.mxu0 0.0
        %4559 = vmatmul.mubr.f32.gmra.mrb[0].mxu0 %v4390
        %v4560 = vpop.f32.mrb[0].mxu0
        %v4561 = vadd.f32 0.0, %v4560
        %v4562 = vpop.f32.mrb[0].mxu0
        %4563 = vmatprep.mubr.f32.mxu0 0.0
        %4564 = vmatmul.mubr.f32.gmra.mrb[0].mxu0 %v4393
        %v4565 = vpop.f32.mrb[0].mxu0
        %v4566 = vadd.f32 0.0, %v4565
        %v4567 = vpop.f32.mrb[0].mxu0
        %4568 = vmatprep.mubr.f32.mxu0 0.0
        %4569 = vmatmul.mubr.f32.gmra.mrb[0].mxu0 %v4396
        %v4570 = vpop.f32.mrb[0].mxu0
        %v4571 = vadd.f32 0.0, %v4570
        %v4572 = vpop.f32.mrb[0].mxu0
        %4573 = vmatprep.mubr.f32.mxu0 0.0
        %4574 = vmatmul.mubr.f32.gmra.mrb[0].mxu0 %v4399
        %v4575 = vpop.f32.mrb[0].mxu0
        %v4576 = vadd.f32 0.0, %v4575
        %v4577 = vpop.f32.mrb[0].mxu0
        %4578 = vmatprep.mubr.f32.mxu0 0.0
        %4579 = vmatmul.mubr.f32.gmra.mrb[0].mxu0 %v4402
        %v4580 = vpop.f32.mrb[0].mxu0
        %v4581 = vadd.f32 0.0, %v4580
        %v4582 = vpop.f32.mrb[0].mxu0
        %4583 = vmatprep.mubr.f32.mxu0 0.0
        %4584 = vmatmul.mubr.f32.gmra.mrb[0].mxu0 %v4405
        %v4585 = vpop.f32.mrb[0].mxu0
        %v4586 = vadd.f32 0.0, %v4585
        %v4587 = vpop.f32.mrb[0].mxu0
        %4588 = vmatprep.mubr.f32.mxu0 0.0
        %4589 = vmatmul.mubr.f32.gmra.mrb[0].mxu0 %v4408
        %v4590 = vpop.f32.mrb[0].mxu0
        %v4591 = vadd.f32 0.0, %v4590
        %v4592 = vpop.f32.mrb[0].mxu0
        %4593 = vmatprep.mubr.f32.mxu0 0.0
        %4594 = vmatmul.mubr.f32.gmra.mrb[0].mxu0 %v4411
        %v4595 = vpop.f32.mrb[0].mxu0
        %v4596 = vadd.f32 0.0, %v4595
        %v4597 = vpop.f32.mrb[0].mxu0
        %4598 = vmatprep.mubr.f32.mxu0 0.0
        %4599 = vmatmul.mubr.f32.gmra.mrb[0].mxu0 %v4414
        %v4600 = vpop.f32.mrb[0].mxu0
        %v4601 = vadd.f32 0.0, %v4600
        %v4602 = vpop.f32.mrb[0].mxu0
        %4603 = vmatprep.mubr.f32.mxu0 0.0
        %4604 = vmatmul.mubr.f32.gmra.mrb[0].mxu0 %v4417
        %v4605 = vpop.f32.mrb[0].mxu0
        %v4606 = vadd.f32 0.0, %v4605
        %v4607 = vpop.f32.mrb[0].mxu0
        %4608 = vmatprep.mubr.f32.mxu0 0.0
        %4609 = vmatmul.mubr.f32.gmra.mrb[0].mxu0 %v4420
        %v4610 = vpop.f32.mrb[0].mxu0
        %v4611 = vadd.f32 0.0, %v4610
        %v4612 = vpop.f32.mrb[0].mxu0
        %4613 = vmatprep.mubr.f32.mxu0 0.0
        %4614 = vmatmul.mubr.f32.gmra.mrb[0].mxu0 %v4423
        %v4615 = vpop.f32.mrb[0].mxu0
        %v4616 = vadd.f32 0.0, %v4615
        %v4617 = vpop.f32.mrb[0].mxu0
        %4618 = vmatprep.mubr.f32.mxu0 0.0
        %4619 = vmatmul.mubr.f32.gmra.mrb[0].mxu0 %v4426
        %v4620 = vpop.f32.mrb[0].mxu0
        %v4621 = vadd.f32 0.0, %v4620
        %v4622 = vpop.f32.mrb[0].mxu0
        %4623 = vmatprep.mubr.f32.mxu0 0.0
        %4624 = vmatmul.mubr.f32.gmra.mrb[0].mxu0 %v4429
        %v4625 = vpop.f32.mrb[0].mxu0
        %v4626 = vadd.f32 0.0, %v4625
        %v4627 = vpop.f32.mrb[0].mxu0
        %4628 = vmatprep.mubr.f32.mxu0 0.0
        %4629 = vmatmul.mubr.f32.gmra.mrb[0].mxu0 %v4432
        %v4630 = vpop.f32.mrb[0].mxu0
        %v4631 = vadd.f32 0.0, %v4630
        %v4632 = vpop.f32.mrb[0].mxu0
        %4633 = vmatprep.mubr.f32.mxu0 0.0
        %4634 = vmatmul.mubr.f32.gmra.mrb[0].mxu0 %v4435
        %v4635 = vpop.f32.mrb[0].mxu0
        %v4636 = vadd.f32 0.0, %v4635
        %v4637 = vpop.f32.mrb[0].mxu0
        %4638 = vmatprep.mubr.f32.mxu0 0.0
        %4639 = vmatmul.mubr.f32.gmra.mrb[0].mxu0 %v4438
        %v4640 = vpop.f32.mrb[0].mxu0
        %v4641 = vadd.f32 0.0, %v4640
        %v4642 = vpop.f32.mrb[0].mxu0
        %4643 = vmatprep.mubr.f32.mxu0 0.0
        %4644 = vmatmul.mubr.f32.gmra.mrb[0].mxu0 %v4441
        %v4645 = vpop.f32.mrb[0].mxu0
        %v4646 = vadd.f32 0.0, %v4645
        %v4647 = vpop.f32.mrb[0].mxu0
        %4648 = vmatprep.mubr.f32.mxu0 0.0
        %4649 = vmatmul.mubr.f32.gmra.mrb[0].mxu0 %v4444
        %v4650 = vpop.f32.mrb[0].mxu0
        %v4651 = vadd.f32 0.0, %v4650
        %v4652 = vpop.f32.mrb[0].mxu0
        %4653 = vmatprep.mubr.f32.mxu0 0.0
        %4654 = vmatmul.mubr.f32.gmra.mrb[0].mxu0 %v4447
        %v4655 = vpop.f32.mrb[0].mxu0
        %v4656 = vadd.f32 0.0, %v4655
        %v4657 = vpop.f32.mrb[0].mxu0
        %4658 = vmatprep.mubr.f32.mxu0 0.0
        %4659 = vmatmul.mubr.f32.gmra.mrb[0].mxu0 %v4450
        %v4660 = vpop.f32.mrb[0].mxu0
        %v4661 = vadd.f32 0.0, %v4660
        %v4662 = vpop.f32.mrb[0].mxu0
        %4663 = vmatprep.mubr.f32.mxu0 0.0
        %4664 = vmatmul.mubr.f32.gmra.mrb[0].mxu0 %v4453
        %v4665 = vpop.f32.mrb[0].mxu0
        %v4666 = vadd.f32 0.0, %v4665
        %v4667 = vpop.f32.mrb[0].mxu0
        %4668 = vmatprep.mubr.f32.mxu0 0.0
        %4669 = vmatmul.mubr.f32.gmra.mrb[0].mxu0 %v4456
        %v4670 = vpop.f32.mrb[0].mxu0
        %v4671 = vadd.f32 0.0, %v4670
        %v4672 = vpop.f32.mrb[0].mxu0
        %4673 = vmatprep.mubr.f32.mxu0 0.0
        %4674 = vmatmul.mubr.f32.gmra.mrb[0].mxu0 %v4459
        %v4675 = vpop.f32.mrb[0].mxu0
        %v4676 = vadd.f32 0.0, %v4675
        %v4677 = vpop.f32.mrb[0].mxu0
        %4678 = vmatprep.mubr.f32.mxu0 0.0
        %4679 = vmatmul.mubr.f32.gmra.mrb[0].mxu0 %v4462
        %v4680 = vpop.f32.mrb[0].mxu0
        %v4681 = vadd.f32 0.0, %v4680
        %v4682 = vpop.f32.mrb[0].mxu0
        %4683 = vmatprep.mubr.f32.mxu0 0.0
        %4684 = vmatmul.mubr.f32.gmra.mrb[0].mxu0 %v4465
        %v4685 = vpop.f32.mrb[0].mxu0
        %v4686 = vadd.f32 0.0, %v4685
        %v4687 = vpop.f32.mrb[0].mxu0
        %4688 = vmatprep.mubr.f32.mxu0 0.0
        %4689 = vmatmul.mubr.f32.gmra.mrb[0].mxu0 %v4468
        %v4690 = vpop.f32.mrb[0].mxu0
        %v4691 = vadd.f32 0.0, %v4690
        %v4692 = vpop.f32.mrb[0].mxu0
        %4693 = vmatprep.mubr.f32.mxu0 0.0
        %4694 = vmatmul.mubr.f32.gmra.mrb[0].mxu0 %v4471
        %v4695 = vpop.f32.mrb[0].mxu0
        %v4696 = vadd.f32 0.0, %v4695
        %v4697 = vpop.f32.mrb[0].mxu0
        %4698 = vmatprep.mubr.f32.mxu0 0.0
        %4699 = vmatmul.mubr.f32.gmra.mrb[0].mxu0 %v4474
        %v4700 = vpop.f32.mrb[0].mxu0
        %v4701 = vadd.f32 0.0, %v4700
        %v4702 = vpop.f32.mrb[0].mxu0
        %4703 = vdwg.mxu0
        %v4704 = vadd.f32 %v4346, %v4546
        %v4705 = vadd.f32 %v4346, %v4551
        %v4706 = vadd.f32 %v4346, %v4556
        %v4707 = vadd.f32 %v4346, %v4561
        %v4708 = vadd.f32 %v4346, %v4566
        %v4709 = vadd.f32 %v4346, %v4571
        %v4710 = vadd.f32 %v4346, %v4576
        %v4711 = vadd.f32 %v4346, %v4581
        %v4712 = vadd.f32 %v4346, %v4586
        %v4713 = vadd.f32 %v4346, %v4591
        %v4714 = vadd.f32 %v4346, %v4596
        %v4715 = vadd.f32 %v4346, %v4601
        %v4716 = vadd.f32 %v4346, %v4606
        %v4717 = vadd.f32 %v4346, %v4611
        %v4718 = vadd.f32 %v4346, %v4616
        %v4719 = vadd.f32 %v4346, %v4621
        %v4720 = vadd.f32 %v4346, %v4626
        %v4721 = vadd.f32 %v4346, %v4631
        %v4722 = vadd.f32 %v4346, %v4636
        %v4723 = vadd.f32 %v4346, %v4641
        %v4724 = vadd.f32 %v4346, %v4646
        %v4725 = vadd.f32 %v4346, %v4651
        %v4726 = vadd.f32 %v4346, %v4656
        %v4727 = vadd.f32 %v4346, %v4661
        %v4728 = vadd.f32 %v4346, %v4666
        %v4729 = vadd.f32 %v4346, %v4671
        %v4730 = vadd.f32 %v4346, %v4676
        %v4731 = vadd.f32 %v4346, %v4681
        %v4732 = vadd.f32 %v4346, %v4686
        %v4733 = vadd.f32 %v4346, %v4691
        %v4734 = vadd.f32 %v4346, %v4696
        %v4735 = vadd.f32 %v4346, %v4701
        %v4736 = vld [vmem:[#allocation2 + $0x1] sm:$0xff]
        %v4737 = vld [vmem:[#allocation2 + $0x9] sm:$0xff]
        %v4738 = vld [vmem:[#allocation2 + $0x19] sm:$0xff]
        %v4739 = vld [vmem:[#allocation2 + $0x21] sm:$0xff]
        %v4740 = vld [vmem:[#allocation2 + $0x31] sm:$0xff]
        %v4741 = vld [vmem:[#allocation2 + $0x39] sm:$0xff]
        %v4742 = vld [vmem:[#allocation2 + $0x49] sm:$0xff]
        %v4743 = vld [vmem:[#allocation2 + $0x51] sm:$0xff]
        %v4744 = vld [vmem:[#allocation2 + $0x61] sm:$0xff]
        %v4745 = vld [vmem:[#allocation2 + $0x69] sm:$0xff]
        %v4746 = vld [vmem:[#allocation2 + $0x79] sm:$0xff]
        %v4747 = vld [vmem:[#allocation2 + $0x81] sm:$0xff]
        %v4748 = vld [vmem:[#allocation2 + $0x91] sm:$0xff]
        %v4749 = vld [vmem:[#allocation2 + $0x99] sm:$0xff]
        %v4750 = vld [vmem:[#allocation2 + $0xa9] sm:$0xff]
        %v4751 = vld [vmem:[#allocation2 + $0xb1] sm:$0xff]
        %v4752 = vld [vmem:[#allocation2 + $0xc1] sm:$0xff]
        %v4753 = vld [vmem:[#allocation2 + $0xc9] sm:$0xff]
        %v4754 = vld [vmem:[#allocation2 + $0xd9] sm:$0xff]
        %v4755 = vld [vmem:[#allocation2 + $0xe1] sm:$0xff]
        %v4756 = vld [vmem:[#allocation2 + $0xf1] sm:$0xff]
        %v4757 = vld [vmem:[#allocation2 + $0xf9] sm:$0xff]
        %v4758 = vld [vmem:[#allocation2 + $0x109] sm:$0xff]
        %v4759 = vld [vmem:[#allocation2 + $0x111] sm:$0xff]
        %v4760 = vld [vmem:[#allocation2 + $0x121] sm:$0xff]
        %v4761 = vld [vmem:[#allocation2 + $0x129] sm:$0xff]
        %v4762 = vld [vmem:[#allocation2 + $0x139] sm:$0xff]
        %v4763 = vld [vmem:[#allocation2 + $0x141] sm:$0xff]
        %v4764 = vld [vmem:[#allocation2 + $0x151] sm:$0xff]
        %v4765 = vld [vmem:[#allocation2 + $0x159] sm:$0xff]
        %v4766 = vld [vmem:[#allocation2 + $0x169] sm:$0xff]
        %v4767 = vld [vmem:[#allocation2 + $0x171] sm:$0xff]
        %s4768 = scalar_lea.vmem [#allocation9], 4
        %v4769 = vld [vmem:[%s4768] sm:$0xf]
        %v4771 = vsel %vm330, %v4736, 0
        %v4774 = vsel %vm330, %v4737, 0
        %v4777 = vsel %vm330, %v4738, 0
        %v4780 = vsel %vm330, %v4739, 0
        %v4783 = vsel %vm330, %v4740, 0
        %v4786 = vsel %vm330, %v4741, 0
        %v4789 = vsel %vm330, %v4742, 0
        %v4792 = vsel %vm330, %v4743, 0
        %v4795 = vsel %vm330, %v4744, 0
        %v4798 = vsel %vm330, %v4745, 0
        %v4801 = vsel %vm330, %v4746, 0
        %v4804 = vsel %vm330, %v4747, 0
        %v4807 = vsel %vm330, %v4748, 0
        %v4810 = vsel %vm330, %v4749, 0
        %v4813 = vsel %vm330, %v4750, 0
        %v4816 = vsel %vm330, %v4751, 0
        %v4819 = vsel %vm330, %v4752, 0
        %v4822 = vsel %vm330, %v4753, 0
        %v4825 = vsel %vm330, %v4754, 0
        %v4828 = vsel %vm330, %v4755, 0
        %v4831 = vsel %vm330, %v4756, 0
        %v4834 = vsel %vm330, %v4757, 0
        %v4837 = vsel %vm330, %v4758, 0
        %v4840 = vsel %vm330, %v4759, 0
        %v4843 = vsel %vm330, %v4760, 0
        %v4846 = vsel %vm330, %v4761, 0
        %v4849 = vsel %vm330, %v4762, 0
        %v4852 = vsel %vm330, %v4763, 0
        %v4855 = vsel %vm330, %v4764, 0
        %v4858 = vsel %vm330, %v4765, 0
        %v4861 = vsel %vm330, %v4766, 0
        %v4864 = vsel %vm330, %v4767, 0
        %v4867 = vsel %vm578, %v4769, 0
        %4869 = vmatprep.subr.mxu0 0.0
        %4870 = vmatpush1.msra.mxu0 %v4867
        %4871 = vmatprep.subr.mxu0 0.0
        %4872 = vmatpush1.msra.mxu0 0.0
        %4873 = vmatprep.subr.mxu0 0.0
        %4874 = vmatpush1.msra.mxu0 0.0
        %4875 = vmatprep.subr.mxu0 0.0
        %4876 = vmatpush1.msra.mxu0 0.0
        %4877 = vmatprep.subr.mxu0 0.0
        %4878 = vmatpush1.msra.mxu0 0.0
        %4879 = vmatprep.subr.mxu0 0.0
        %4880 = vmatpush1.msra.mxu0 0.0
        %4881 = vmatprep.subr.mxu0 0.0
        %4882 = vmatpush1.msra.mxu0 0.0
        %4883 = vmatprep.subr.mxu0 0.0
        %4884 = vmatpush1.msra.mxu0 0.0
        %4885 = vmatprep.subr.mxu0 0.0
        %4886 = vmatpush1.msra.mxu0 0.0
        %4887 = vmatprep.subr.mxu0 0.0
        %4888 = vmatpush1.msra.mxu0 0.0
        %4889 = vmatprep.subr.mxu0 0.0
        %4890 = vmatpush1.msra.mxu0 0.0
        %4891 = vmatprep.subr.mxu0 0.0
        %4892 = vmatpush1.msra.mxu0 0.0
        %4893 = vmatprep.subr.mxu0 0.0
        %4894 = vmatpush1.msra.mxu0 0.0
        %4895 = vmatprep.subr.mxu0 0.0
        %4896 = vmatpush1.msra.mxu0 0.0
        %4897 = vmatprep.subr.mxu0 0.0
        %4898 = vmatpush1.msra.mxu0 0.0
        %4899 = vmatprep.subr.mxu0 0.0
        %4900 = vmatpush1.msra.mxu0 0.0
        %4901 = vmatprep.subr.mxu0 0.0
        %4902 = vmatpush1.msra.mxu0 0.0
        %4903 = vmatprep.subr.mxu0 0.0
        %4904 = vmatpush1.msra.mxu0 0.0
        %4905 = vmatprep.subr.mxu0 0.0
        %4906 = vmatpush1.msra.mxu0 0.0
        %4907 = vmatprep.subr.mxu0 0.0
        %4908 = vmatpush1.msra.mxu0 0.0
        %4909 = vmatprep.subr.mxu0 0.0
        %4910 = vmatpush1.msra.mxu0 0.0
        %4911 = vmatprep.subr.mxu0 0.0
        %4912 = vmatpush1.msra.mxu0 0.0
        %4913 = vmatprep.subr.mxu0 0.0
        %4914 = vmatpush1.msra.mxu0 0.0
        %4915 = vmatprep.subr.mxu0 0.0
        %4916 = vmatpush1.msra.mxu0 0.0
        %4917 = vmatprep.subr.mxu0 0.0
        %4918 = vmatpush1.msra.mxu0 0.0
        %4919 = vmatprep.subr.mxu0 0.0
        %4920 = vmatpush1.msra.mxu0 0.0
        %4921 = vmatprep.subr.mxu0 0.0
        %4922 = vmatpush1.msra.mxu0 0.0
        %4923 = vmatprep.subr.mxu0 0.0
        %4924 = vmatpush1.msra.mxu0 0.0
        %4925 = vmatprep.subr.mxu0 0.0
        %4926 = vmatpush1.msra.mxu0 0.0
        %4927 = vmatprep.subr.mxu0 0.0
        %4928 = vmatpush1.msra.mxu0 0.0
        %4929 = vmatprep.subr.mxu0 0.0
        %4930 = vmatpush1.msra.mxu0 0.0
        %4931 = vmatprep.subr.mxu0 0.0
        %4932 = vmatpush1.msra.mxu0 0.0
        %4933 = vmatprep.mubr.f32.mxu0 0.0
        %4934 = vmatmul.mubr.f32.gmra.mrb[0].mxu0 %v4771
        %v4935 = vpop.f32.mrb[0].mxu0
        %v4936 = vadd.f32 0.0, %v4935
        %v4937 = vpop.f32.mrb[0].mxu0
        %4938 = vmatprep.mubr.f32.mxu0 0.0
        %4939 = vmatmul.mubr.f32.gmra.mrb[0].mxu0 %v4774
        %v4940 = vpop.f32.mrb[0].mxu0
        %v4941 = vadd.f32 0.0, %v4940
        %v4942 = vpop.f32.mrb[0].mxu0
        %4943 = vmatprep.mubr.f32.mxu0 0.0
        %4944 = vmatmul.mubr.f32.gmra.mrb[0].mxu0 %v4777
        %v4945 = vpop.f32.mrb[0].mxu0
        %v4946 = vadd.f32 0.0, %v4945
        %v4947 = vpop.f32.mrb[0].mxu0
        %4948 = vmatprep.mubr.f32.mxu0 0.0
        %4949 = vmatmul.mubr.f32.gmra.mrb[0].mxu0 %v4780
        %v4950 = vpop.f32.mrb[0].mxu0
        %v4951 = vadd.f32 0.0, %v4950
        %v4952 = vpop.f32.mrb[0].mxu0
        %4953 = vmatprep.mubr.f32.mxu0 0.0
        %4954 = vmatmul.mubr.f32.gmra.mrb[0].mxu0 %v4783
        %v4955 = vpop.f32.mrb[0].mxu0
        %v4956 = vadd.f32 0.0, %v4955
        %v4957 = vpop.f32.mrb[0].mxu0
        %4958 = vmatprep.mubr.f32.mxu0 0.0
        %4959 = vmatmul.mubr.f32.gmra.mrb[0].mxu0 %v4786
        %v4960 = vpop.f32.mrb[0].mxu0
        %v4961 = vadd.f32 0.0, %v4960
        %v4962 = vpop.f32.mrb[0].mxu0
        %4963 = vmatprep.mubr.f32.mxu0 0.0
        %4964 = vmatmul.mubr.f32.gmra.mrb[0].mxu0 %v4789
        %v4965 = vpop.f32.mrb[0].mxu0
        %v4966 = vadd.f32 0.0, %v4965
        %v4967 = vpop.f32.mrb[0].mxu0
        %4968 = vmatprep.mubr.f32.mxu0 0.0
        %4969 = vmatmul.mubr.f32.gmra.mrb[0].mxu0 %v4792
        %v4970 = vpop.f32.mrb[0].mxu0
        %v4971 = vadd.f32 0.0, %v4970
        %v4972 = vpop.f32.mrb[0].mxu0
        %4973 = vmatprep.mubr.f32.mxu0 0.0
        %4974 = vmatmul.mubr.f32.gmra.mrb[0].mxu0 %v4795
        %v4975 = vpop.f32.mrb[0].mxu0
        %v4976 = vadd.f32 0.0, %v4975
        %v4977 = vpop.f32.mrb[0].mxu0
        %4978 = vmatprep.mubr.f32.mxu0 0.0
        %4979 = vmatmul.mubr.f32.gmra.mrb[0].mxu0 %v4798
        %v4980 = vpop.f32.mrb[0].mxu0
        %v4981 = vadd.f32 0.0, %v4980
        %v4982 = vpop.f32.mrb[0].mxu0
        %4983 = vmatprep.mubr.f32.mxu0 0.0
        %4984 = vmatmul.mubr.f32.gmra.mrb[0].mxu0 %v4801
        %v4985 = vpop.f32.mrb[0].mxu0
        %v4986 = vadd.f32 0.0, %v4985
        %v4987 = vpop.f32.mrb[0].mxu0
        %4988 = vmatprep.mubr.f32.mxu0 0.0
        %4989 = vmatmul.mubr.f32.gmra.mrb[0].mxu0 %v4804
        %v4990 = vpop.f32.mrb[0].mxu0
        %v4991 = vadd.f32 0.0, %v4990
        %v4992 = vpop.f32.mrb[0].mxu0
        %4993 = vmatprep.mubr.f32.mxu0 0.0
        %4994 = vmatmul.mubr.f32.gmra.mrb[0].mxu0 %v4807
        %v4995 = vpop.f32.mrb[0].mxu0
        %v4996 = vadd.f32 0.0, %v4995
        %v4997 = vpop.f32.mrb[0].mxu0
        %4998 = vmatprep.mubr.f32.mxu0 0.0
        %4999 = vmatmul.mubr.f32.gmra.mrb[0].mxu0 %v4810
        %v5000 = vpop.f32.mrb[0].mxu0
        %v5001 = vadd.f32 0.0, %v5000
        %v5002 = vpop.f32.mrb[0].mxu0
        %5003 = vmatprep.mubr.f32.mxu0 0.0
        %5004 = vmatmul.mubr.f32.gmra.mrb[0].mxu0 %v4813
        %v5005 = vpop.f32.mrb[0].mxu0
        %v5006 = vadd.f32 0.0, %v5005
        %v5007 = vpop.f32.mrb[0].mxu0
        %5008 = vmatprep.mubr.f32.mxu0 0.0
        %5009 = vmatmul.mubr.f32.gmra.mrb[0].mxu0 %v4816
        %v5010 = vpop.f32.mrb[0].mxu0
        %v5011 = vadd.f32 0.0, %v5010
        %v5012 = vpop.f32.mrb[0].mxu0
        %5013 = vmatprep.mubr.f32.mxu0 0.0
        %5014 = vmatmul.mubr.f32.gmra.mrb[0].mxu0 %v4819
        %v5015 = vpop.f32.mrb[0].mxu0
        %v5016 = vadd.f32 0.0, %v5015
        %v5017 = vpop.f32.mrb[0].mxu0
        %5018 = vmatprep.mubr.f32.mxu0 0.0
        %5019 = vmatmul.mubr.f32.gmra.mrb[0].mxu0 %v4822
        %v5020 = vpop.f32.mrb[0].mxu0
        %v5021 = vadd.f32 0.0, %v5020
        %v5022 = vpop.f32.mrb[0].mxu0
        %5023 = vmatprep.mubr.f32.mxu0 0.0
        %5024 = vmatmul.mubr.f32.gmra.mrb[0].mxu0 %v4825
        %v5025 = vpop.f32.mrb[0].mxu0
        %v5026 = vadd.f32 0.0, %v5025
        %v5027 = vpop.f32.mrb[0].mxu0
        %5028 = vmatprep.mubr.f32.mxu0 0.0
        %5029 = vmatmul.mubr.f32.gmra.mrb[0].mxu0 %v4828
        %v5030 = vpop.f32.mrb[0].mxu0
        %v5031 = vadd.f32 0.0, %v5030
        %v5032 = vpop.f32.mrb[0].mxu0
        %5033 = vmatprep.mubr.f32.mxu0 0.0
        %5034 = vmatmul.mubr.f32.gmra.mrb[0].mxu0 %v4831
        %v5035 = vpop.f32.mrb[0].mxu0
        %v5036 = vadd.f32 0.0, %v5035
        %v5037 = vpop.f32.mrb[0].mxu0
        %5038 = vmatprep.mubr.f32.mxu0 0.0
        %5039 = vmatmul.mubr.f32.gmra.mrb[0].mxu0 %v4834
        %v5040 = vpop.f32.mrb[0].mxu0
        %v5041 = vadd.f32 0.0, %v5040
        %v5042 = vpop.f32.mrb[0].mxu0
        %5043 = vmatprep.mubr.f32.mxu0 0.0
        %5044 = vmatmul.mubr.f32.gmra.mrb[0].mxu0 %v4837
        %v5045 = vpop.f32.mrb[0].mxu0
        %v5046 = vadd.f32 0.0, %v5045
        %v5047 = vpop.f32.mrb[0].mxu0
        %5048 = vmatprep.mubr.f32.mxu0 0.0
        %5049 = vmatmul.mubr.f32.gmra.mrb[0].mxu0 %v4840
        %v5050 = vpop.f32.mrb[0].mxu0
        %v5051 = vadd.f32 0.0, %v5050
        %v5052 = vpop.f32.mrb[0].mxu0
        %5053 = vmatprep.mubr.f32.mxu0 0.0
        %5054 = vmatmul.mubr.f32.gmra.mrb[0].mxu0 %v4843
        %v5055 = vpop.f32.mrb[0].mxu0
        %v5056 = vadd.f32 0.0, %v5055
        %v5057 = vpop.f32.mrb[0].mxu0
        %5058 = vmatprep.mubr.f32.mxu0 0.0
        %5059 = vmatmul.mubr.f32.gmra.mrb[0].mxu0 %v4846
        %v5060 = vpop.f32.mrb[0].mxu0
        %v5061 = vadd.f32 0.0, %v5060
        %v5062 = vpop.f32.mrb[0].mxu0
        %5063 = vmatprep.mubr.f32.mxu0 0.0
        %5064 = vmatmul.mubr.f32.gmra.mrb[0].mxu0 %v4849
        %v5065 = vpop.f32.mrb[0].mxu0
        %v5066 = vadd.f32 0.0, %v5065
        %v5067 = vpop.f32.mrb[0].mxu0
        %5068 = vmatprep.mubr.f32.mxu0 0.0
        %5069 = vmatmul.mubr.f32.gmra.mrb[0].mxu0 %v4852
        %v5070 = vpop.f32.mrb[0].mxu0
        %v5071 = vadd.f32 0.0, %v5070
        %v5072 = vpop.f32.mrb[0].mxu0
        %5073 = vmatprep.mubr.f32.mxu0 0.0
        %5074 = vmatmul.mubr.f32.gmra.mrb[0].mxu0 %v4855
        %v5075 = vpop.f32.mrb[0].mxu0
        %v5076 = vadd.f32 0.0, %v5075
        %v5077 = vpop.f32.mrb[0].mxu0
        %5078 = vmatprep.mubr.f32.mxu0 0.0
        %5079 = vmatmul.mubr.f32.gmra.mrb[0].mxu0 %v4858
        %v5080 = vpop.f32.mrb[0].mxu0
        %v5081 = vadd.f32 0.0, %v5080
        %v5082 = vpop.f32.mrb[0].mxu0
        %5083 = vmatprep.mubr.f32.mxu0 0.0
        %5084 = vmatmul.mubr.f32.gmra.mrb[0].mxu0 %v4861
        %v5085 = vpop.f32.mrb[0].mxu0
        %v5086 = vadd.f32 0.0, %v5085
        %v5087 = vpop.f32.mrb[0].mxu0
        %5088 = vmatprep.mubr.f32.mxu0 0.0
        %5089 = vmatmul.mubr.f32.gmra.mrb[0].mxu0 %v4864
        %v5090 = vpop.f32.mrb[0].mxu0
        %v5091 = vadd.f32 0.0, %v5090
        %v5092 = vpop.f32.mrb[0].mxu0
        %5093 = vdwg.mxu0
        %v5094 = vadd.f32 %v4704, %v4936
        %v5095 = vadd.f32 %v4705, %v4941
        %v5096 = vadd.f32 %v4706, %v4946
        %v5097 = vadd.f32 %v4707, %v4951
        %v5098 = vadd.f32 %v4708, %v4956
        %v5099 = vadd.f32 %v4709, %v4961
        %v5100 = vadd.f32 %v4710, %v4966
        %v5101 = vadd.f32 %v4711, %v4971
        %v5102 = vadd.f32 %v4712, %v4976
        %v5103 = vadd.f32 %v4713, %v4981
        %v5104 = vadd.f32 %v4714, %v4986
        %v5105 = vadd.f32 %v4715, %v4991
        %v5106 = vadd.f32 %v4716, %v4996
        %v5107 = vadd.f32 %v4717, %v5001
        %v5108 = vadd.f32 %v4718, %v5006
        %v5109 = vadd.f32 %v4719, %v5011
        %v5110 = vadd.f32 %v4720, %v5016
        %v5111 = vadd.f32 %v4721, %v5021
        %v5112 = vadd.f32 %v4722, %v5026
        %v5113 = vadd.f32 %v4723, %v5031
        %v5114 = vadd.f32 %v4724, %v5036
        %v5115 = vadd.f32 %v4725, %v5041
        %v5116 = vadd.f32 %v4726, %v5046
        %v5117 = vadd.f32 %v4727, %v5051
        %v5118 = vadd.f32 %v4728, %v5056
        %v5119 = vadd.f32 %v4729, %v5061
        %v5120 = vadd.f32 %v4730, %v5066
        %v5121 = vadd.f32 %v4731, %v5071
        %v5122 = vadd.f32 %v4732, %v5076
        %v5123 = vadd.f32 %v4733, %v5081
        %v5124 = vadd.f32 %v4734, %v5086
        %v5125 = vadd.f32 %v4735, %v5091
        %v5126 = vld [vmem:[#allocation2 + $0x2] sm:$0xff]
        %v5127 = vld [vmem:[#allocation2 + $0xa] sm:$0xff]
        %v5128 = vld [vmem:[#allocation2 + $0x1a] sm:$0xff]
        %v5129 = vld [vmem:[#allocation2 + $0x22] sm:$0xff]
        %v5130 = vld [vmem:[#allocation2 + $0x32] sm:$0xff]
        %v5131 = vld [vmem:[#allocation2 + $0x3a] sm:$0xff]
        %v5132 = vld [vmem:[#allocation2 + $0x4a] sm:$0xff]
        %v5133 = vld [vmem:[#allocation2 + $0x52] sm:$0xff]
        %v5134 = vld [vmem:[#allocation2 + $0x62] sm:$0xff]
        %v5135 = vld [vmem:[#allocation2 + $0x6a] sm:$0xff]
        %v5136 = vld [vmem:[#allocation2 + $0x7a] sm:$0xff]
        %v5137 = vld [vmem:[#allocation2 + $0x82] sm:$0xff]
        %v5138 = vld [vmem:[#allocation2 + $0x92] sm:$0xff]
        %v5139 = vld [vmem:[#allocation2 + $0x9a] sm:$0xff]
        %v5140 = vld [vmem:[#allocation2 + $0xaa] sm:$0xff]
        %v5141 = vld [vmem:[#allocation2 + $0xb2] sm:$0xff]
        %v5142 = vld [vmem:[#allocation2 + $0xc2] sm:$0xff]
        %v5143 = vld [vmem:[#allocation2 + $0xca] sm:$0xff]
        %v5144 = vld [vmem:[#allocation2 + $0xda] sm:$0xff]
        %v5145 = vld [vmem:[#allocation2 + $0xe2] sm:$0xff]
        %v5146 = vld [vmem:[#allocation2 + $0xf2] sm:$0xff]
        %v5147 = vld [vmem:[#allocation2 + $0xfa] sm:$0xff]
        %v5148 = vld [vmem:[#allocation2 + $0x10a] sm:$0xff]
        %v5149 = vld [vmem:[#allocation2 + $0x112] sm:$0xff]
        %v5150 = vld [vmem:[#allocation2 + $0x122] sm:$0xff]
        %v5151 = vld [vmem:[#allocation2 + $0x12a] sm:$0xff]
        %v5152 = vld [vmem:[#allocation2 + $0x13a] sm:$0xff]
        %v5153 = vld [vmem:[#allocation2 + $0x142] sm:$0xff]
        %v5154 = vld [vmem:[#allocation2 + $0x152] sm:$0xff]
        %v5155 = vld [vmem:[#allocation2 + $0x15a] sm:$0xff]
        %v5156 = vld [vmem:[#allocation2 + $0x16a] sm:$0xff]
        %v5157 = vld [vmem:[#allocation2 + $0x172] sm:$0xff]
        %s5158 = scalar_lea.vmem [#allocation9], 8
        %v5159 = vld [vmem:[%s5158] sm:$0xf]
        %v5161 = vsel %vm330, %v5126, 0
        %v5164 = vsel %vm330, %v5127, 0
        %v5167 = vsel %vm330, %v5128, 0
        %v5170 = vsel %vm330, %v5129, 0
        %v5173 = vsel %vm330, %v5130, 0
        %v5176 = vsel %vm330, %v5131, 0
        %v5179 = vsel %vm330, %v5132, 0
        %v5182 = vsel %vm330, %v5133, 0
        %v5185 = vsel %vm330, %v5134, 0
        %v5188 = vsel %vm330, %v5135, 0
        %v5191 = vsel %vm330, %v5136, 0
        %v5194 = vsel %vm330, %v5137, 0
        %v5197 = vsel %vm330, %v5138, 0
        %v5200 = vsel %vm330, %v5139, 0
        %v5203 = vsel %vm330, %v5140, 0
        %v5206 = vsel %vm330, %v5141, 0
        %v5209 = vsel %vm330, %v5142, 0
        %v5212 = vsel %vm330, %v5143, 0
        %v5215 = vsel %vm330, %v5144, 0
        %v5218 = vsel %vm330, %v5145, 0
        %v5221 = vsel %vm330, %v5146, 0
        %v5224 = vsel %vm330, %v5147, 0
        %v5227 = vsel %vm330, %v5148, 0
        %v5230 = vsel %vm330, %v5149, 0
        %v5233 = vsel %vm330, %v5150, 0
        %v5236 = vsel %vm330, %v5151, 0
        %v5239 = vsel %vm330, %v5152, 0
        %v5242 = vsel %vm330, %v5153, 0
        %v5245 = vsel %vm330, %v5154, 0
        %v5248 = vsel %vm330, %v5155, 0
        %v5251 = vsel %vm330, %v5156, 0
        %v5254 = vsel %vm330, %v5157, 0
        %v5257 = vsel %vm578, %v5159, 0
        %5259 = vmatprep.subr.mxu0 0.0
        %5260 = vmatpush1.msra.mxu0 %v5257
        %5261 = vmatprep.subr.mxu0 0.0
        %5262 = vmatpush1.msra.mxu0 0.0
        %5263 = vmatprep.subr.mxu0 0.0
        %5264 = vmatpush1.msra.mxu0 0.0
        %5265 = vmatprep.subr.mxu0 0.0
        %5266 = vmatpush1.msra.mxu0 0.0
        %5267 = vmatprep.subr.mxu0 0.0
        %5268 = vmatpush1.msra.mxu0 0.0
        %5269 = vmatprep.subr.mxu0 0.0
        %5270 = vmatpush1.msra.mxu0 0.0
        %5271 = vmatprep.subr.mxu0 0.0
        %5272 = vmatpush1.msra.mxu0 0.0
        %5273 = vmatprep.subr.mxu0 0.0
        %5274 = vmatpush1.msra.mxu0 0.0
        %5275 = vmatprep.subr.mxu0 0.0
        %5276 = vmatpush1.msra.mxu0 0.0
        %5277 = vmatprep.subr.mxu0 0.0
        %5278 = vmatpush1.msra.mxu0 0.0
        %5279 = vmatprep.subr.mxu0 0.0
        %5280 = vmatpush1.msra.mxu0 0.0
        %5281 = vmatprep.subr.mxu0 0.0
        %5282 = vmatpush1.msra.mxu0 0.0
        %5283 = vmatprep.subr.mxu0 0.0
        %5284 = vmatpush1.msra.mxu0 0.0
        %5285 = vmatprep.subr.mxu0 0.0
        %5286 = vmatpush1.msra.mxu0 0.0
        %5287 = vmatprep.subr.mxu0 0.0
        %5288 = vmatpush1.msra.mxu0 0.0
        %5289 = vmatprep.subr.mxu0 0.0
        %5290 = vmatpush1.msra.mxu0 0.0
        %5291 = vmatprep.subr.mxu0 0.0
        %5292 = vmatpush1.msra.mxu0 0.0
        %5293 = vmatprep.subr.mxu0 0.0
        %5294 = vmatpush1.msra.mxu0 0.0
        %5295 = vmatprep.subr.mxu0 0.0
        %5296 = vmatpush1.msra.mxu0 0.0
        %5297 = vmatprep.subr.mxu0 0.0
        %5298 = vmatpush1.msra.mxu0 0.0
        %5299 = vmatprep.subr.mxu0 0.0
        %5300 = vmatpush1.msra.mxu0 0.0
        %5301 = vmatprep.subr.mxu0 0.0
        %5302 = vmatpush1.msra.mxu0 0.0
        %5303 = vmatprep.subr.mxu0 0.0
        %5304 = vmatpush1.msra.mxu0 0.0
        %5305 = vmatprep.subr.mxu0 0.0
        %5306 = vmatpush1.msra.mxu0 0.0
        %5307 = vmatprep.subr.mxu0 0.0
        %5308 = vmatpush1.msra.mxu0 0.0
        %5309 = vmatprep.subr.mxu0 0.0
        %5310 = vmatpush1.msra.mxu0 0.0
        %5311 = vmatprep.subr.mxu0 0.0
        %5312 = vmatpush1.msra.mxu0 0.0
        %5313 = vmatprep.subr.mxu0 0.0
        %5314 = vmatpush1.msra.mxu0 0.0
        %5315 = vmatprep.subr.mxu0 0.0
        %5316 = vmatpush1.msra.mxu0 0.0
        %5317 = vmatprep.subr.mxu0 0.0
        %5318 = vmatpush1.msra.mxu0 0.0
        %5319 = vmatprep.subr.mxu0 0.0
        %5320 = vmatpush1.msra.mxu0 0.0
        %5321 = vmatprep.subr.mxu0 0.0
        %5322 = vmatpush1.msra.mxu0 0.0
        %5323 = vmatprep.mubr.f32.mxu0 0.0
        %5324 = vmatmul.mubr.f32.gmra.mrb[0].mxu0 %v5161
        %v5325 = vpop.f32.mrb[0].mxu0
        %v5326 = vadd.f32 0.0, %v5325
        %v5327 = vpop.f32.mrb[0].mxu0
        %5328 = vmatprep.mubr.f32.mxu0 0.0
        %5329 = vmatmul.mubr.f32.gmra.mrb[0].mxu0 %v5164
        %v5330 = vpop.f32.mrb[0].mxu0
        %v5331 = vadd.f32 0.0, %v5330
        %v5332 = vpop.f32.mrb[0].mxu0
        %5333 = vmatprep.mubr.f32.mxu0 0.0
        %5334 = vmatmul.mubr.f32.gmra.mrb[0].mxu0 %v5167
        %v5335 = vpop.f32.mrb[0].mxu0
        %v5336 = vadd.f32 0.0, %v5335
        %v5337 = vpop.f32.mrb[0].mxu0
        %5338 = vmatprep.mubr.f32.mxu0 0.0
        %5339 = vmatmul.mubr.f32.gmra.mrb[0].mxu0 %v5170
        %v5340 = vpop.f32.mrb[0].mxu0
        %v5341 = vadd.f32 0.0, %v5340
        %v5342 = vpop.f32.mrb[0].mxu0
        %5343 = vmatprep.mubr.f32.mxu0 0.0
        %5344 = vmatmul.mubr.f32.gmra.mrb[0].mxu0 %v5173
        %v5345 = vpop.f32.mrb[0].mxu0
        %v5346 = vadd.f32 0.0, %v5345
        %v5347 = vpop.f32.mrb[0].mxu0
        %5348 = vmatprep.mubr.f32.mxu0 0.0
        %5349 = vmatmul.mubr.f32.gmra.mrb[0].mxu0 %v5176
        %v5350 = vpop.f32.mrb[0].mxu0
        %v5351 = vadd.f32 0.0, %v5350
        %v5352 = vpop.f32.mrb[0].mxu0
        %5353 = vmatprep.mubr.f32.mxu0 0.0
        %5354 = vmatmul.mubr.f32.gmra.mrb[0].mxu0 %v5179
        %v5355 = vpop.f32.mrb[0].mxu0
        %v5356 = vadd.f32 0.0, %v5355
        %v5357 = vpop.f32.mrb[0].mxu0
        %5358 = vmatprep.mubr.f32.mxu0 0.0
        %5359 = vmatmul.mubr.f32.gmra.mrb[0].mxu0 %v5182
        %v5360 = vpop.f32.mrb[0].mxu0
        %v5361 = vadd.f32 0.0, %v5360
        %v5362 = vpop.f32.mrb[0].mxu0
        %5363 = vmatprep.mubr.f32.mxu0 0.0
        %5364 = vmatmul.mubr.f32.gmra.mrb[0].mxu0 %v5185
        %v5365 = vpop.f32.mrb[0].mxu0
        %v5366 = vadd.f32 0.0, %v5365
        %v5367 = vpop.f32.mrb[0].mxu0
        %5368 = vmatprep.mubr.f32.mxu0 0.0
        %5369 = vmatmul.mubr.f32.gmra.mrb[0].mxu0 %v5188
        %v5370 = vpop.f32.mrb[0].mxu0
        %v5371 = vadd.f32 0.0, %v5370
        %v5372 = vpop.f32.mrb[0].mxu0
        %5373 = vmatprep.mubr.f32.mxu0 0.0
        %5374 = vmatmul.mubr.f32.gmra.mrb[0].mxu0 %v5191
        %v5375 = vpop.f32.mrb[0].mxu0
        %v5376 = vadd.f32 0.0, %v5375
        %v5377 = vpop.f32.mrb[0].mxu0
        %5378 = vmatprep.mubr.f32.mxu0 0.0
        %5379 = vmatmul.mubr.f32.gmra.mrb[0].mxu0 %v5194
        %v5380 = vpop.f32.mrb[0].mxu0
        %v5381 = vadd.f32 0.0, %v5380
        %v5382 = vpop.f32.mrb[0].mxu0
        %5383 = vmatprep.mubr.f32.mxu0 0.0
        %5384 = vmatmul.mubr.f32.gmra.mrb[0].mxu0 %v5197
        %v5385 = vpop.f32.mrb[0].mxu0
        %v5386 = vadd.f32 0.0, %v5385
        %v5387 = vpop.f32.mrb[0].mxu0
        %5388 = vmatprep.mubr.f32.mxu0 0.0
        %5389 = vmatmul.mubr.f32.gmra.mrb[0].mxu0 %v5200
        %v5390 = vpop.f32.mrb[0].mxu0
        %v5391 = vadd.f32 0.0, %v5390
        %v5392 = vpop.f32.mrb[0].mxu0
        %5393 = vmatprep.mubr.f32.mxu0 0.0
        %5394 = vmatmul.mubr.f32.gmra.mrb[0].mxu0 %v5203
        %v5395 = vpop.f32.mrb[0].mxu0
        %v5396 = vadd.f32 0.0, %v5395
        %v5397 = vpop.f32.mrb[0].mxu0
        %5398 = vmatprep.mubr.f32.mxu0 0.0
        %5399 = vmatmul.mubr.f32.gmra.mrb[0].mxu0 %v5206
        %v5400 = vpop.f32.mrb[0].mxu0
        %v5401 = vadd.f32 0.0, %v5400
        %v5402 = vpop.f32.mrb[0].mxu0
        %5403 = vmatprep.mubr.f32.mxu0 0.0
        %5404 = vmatmul.mubr.f32.gmra.mrb[0].mxu0 %v5209
        %v5405 = vpop.f32.mrb[0].mxu0
        %v5406 = vadd.f32 0.0, %v5405
        %v5407 = vpop.f32.mrb[0].mxu0
        %5408 = vmatprep.mubr.f32.mxu0 0.0
        %5409 = vmatmul.mubr.f32.gmra.mrb[0].mxu0 %v5212
        %v5410 = vpop.f32.mrb[0].mxu0
        %v5411 = vadd.f32 0.0, %v5410
        %v5412 = vpop.f32.mrb[0].mxu0
        %5413 = vmatprep.mubr.f32.mxu0 0.0
        %5414 = vmatmul.mubr.f32.gmra.mrb[0].mxu0 %v5215
        %v5415 = vpop.f32.mrb[0].mxu0
        %v5416 = vadd.f32 0.0, %v5415
        %v5417 = vpop.f32.mrb[0].mxu0
        %5418 = vmatprep.mubr.f32.mxu0 0.0
        %5419 = vmatmul.mubr.f32.gmra.mrb[0].mxu0 %v5218
        %v5420 = vpop.f32.mrb[0].mxu0
        %v5421 = vadd.f32 0.0, %v5420
        %v5422 = vpop.f32.mrb[0].mxu0
        %5423 = vmatprep.mubr.f32.mxu0 0.0
        %5424 = vmatmul.mubr.f32.gmra.mrb[0].mxu0 %v5221
        %v5425 = vpop.f32.mrb[0].mxu0
        %v5426 = vadd.f32 0.0, %v5425
        %v5427 = vpop.f32.mrb[0].mxu0
        %5428 = vmatprep.mubr.f32.mxu0 0.0
        %5429 = vmatmul.mubr.f32.gmra.mrb[0].mxu0 %v5224
        %v5430 = vpop.f32.mrb[0].mxu0
        %v5431 = vadd.f32 0.0, %v5430
        %v5432 = vpop.f32.mrb[0].mxu0
        %5433 = vmatprep.mubr.f32.mxu0 0.0
        %5434 = vmatmul.mubr.f32.gmra.mrb[0].mxu0 %v5227
        %v5435 = vpop.f32.mrb[0].mxu0
        %v5436 = vadd.f32 0.0, %v5435
        %v5437 = vpop.f32.mrb[0].mxu0
        %5438 = vmatprep.mubr.f32.mxu0 0.0
        %5439 = vmatmul.mubr.f32.gmra.mrb[0].mxu0 %v5230
        %v5440 = vpop.f32.mrb[0].mxu0
        %v5441 = vadd.f32 0.0, %v5440
        %v5442 = vpop.f32.mrb[0].mxu0
        %5443 = vmatprep.mubr.f32.mxu0 0.0
        %5444 = vmatmul.mubr.f32.gmra.mrb[0].mxu0 %v5233
        %v5445 = vpop.f32.mrb[0].mxu0
        %v5446 = vadd.f32 0.0, %v5445
        %v5447 = vpop.f32.mrb[0].mxu0
        %5448 = vmatprep.mubr.f32.mxu0 0.0
        %5449 = vmatmul.mubr.f32.gmra.mrb[0].mxu0 %v5236
        %v5450 = vpop.f32.mrb[0].mxu0
        %v5451 = vadd.f32 0.0, %v5450
        %v5452 = vpop.f32.mrb[0].mxu0
        %5453 = vmatprep.mubr.f32.mxu0 0.0
        %5454 = vmatmul.mubr.f32.gmra.mrb[0].mxu0 %v5239
        %v5455 = vpop.f32.mrb[0].mxu0
        %v5456 = vadd.f32 0.0, %v5455
        %v5457 = vpop.f32.mrb[0].mxu0
        %5458 = vmatprep.mubr.f32.mxu0 0.0
        %5459 = vmatmul.mubr.f32.gmra.mrb[0].mxu0 %v5242
        %v5460 = vpop.f32.mrb[0].mxu0
        %v5461 = vadd.f32 0.0, %v5460
        %v5462 = vpop.f32.mrb[0].mxu0
        %5463 = vmatprep.mubr.f32.mxu0 0.0
        %5464 = vmatmul.mubr.f32.gmra.mrb[0].mxu0 %v5245
        %v5465 = vpop.f32.mrb[0].mxu0
        %v5466 = vadd.f32 0.0, %v5465
        %v5467 = vpop.f32.mrb[0].mxu0
        %5468 = vmatprep.mubr.f32.mxu0 0.0
        %5469 = vmatmul.mubr.f32.gmra.mrb[0].mxu0 %v5248
        %v5470 = vpop.f32.mrb[0].mxu0
        %v5471 = vadd.f32 0.0, %v5470
        %v5472 = vpop.f32.mrb[0].mxu0
        %5473 = vmatprep.mubr.f32.mxu0 0.0
        %5474 = vmatmul.mubr.f32.gmra.mrb[0].mxu0 %v5251
        %v5475 = vpop.f32.mrb[0].mxu0
        %v5476 = vadd.f32 0.0, %v5475
        %v5477 = vpop.f32.mrb[0].mxu0
        %5478 = vmatprep.mubr.f32.mxu0 0.0
        %5479 = vmatmul.mubr.f32.gmra.mrb[0].mxu0 %v5254
        %v5480 = vpop.f32.mrb[0].mxu0
        %v5481 = vadd.f32 0.0, %v5480
        %v5482 = vpop.f32.mrb[0].mxu0
        %5483 = vdwg.mxu0
        %v5484 = vadd.f32 %v5094, %v5326
        %v5485 = vadd.f32 %v5095, %v5331
        %v5486 = vadd.f32 %v5096, %v5336
        %v5487 = vadd.f32 %v5097, %v5341
        %v5488 = vadd.f32 %v5098, %v5346
        %v5489 = vadd.f32 %v5099, %v5351
        %v5490 = vadd.f32 %v5100, %v5356
        %v5491 = vadd.f32 %v5101, %v5361
        %v5492 = vadd.f32 %v5102, %v5366
        %v5493 = vadd.f32 %v5103, %v5371
        %v5494 = vadd.f32 %v5104, %v5376
        %v5495 = vadd.f32 %v5105, %v5381
        %v5496 = vadd.f32 %v5106, %v5386
        %v5497 = vadd.f32 %v5107, %v5391
        %v5498 = vadd.f32 %v5108, %v5396
        %v5499 = vadd.f32 %v5109, %v5401
        %v5500 = vadd.f32 %v5110, %v5406
        %v5501 = vadd.f32 %v5111, %v5411
        %v5502 = vadd.f32 %v5112, %v5416
        %v5503 = vadd.f32 %v5113, %v5421
        %v5504 = vadd.f32 %v5114, %v5426
        %v5505 = vadd.f32 %v5115, %v5431
        %v5506 = vadd.f32 %v5116, %v5436
        %v5507 = vadd.f32 %v5117, %v5441
        %v5508 = vadd.f32 %v5118, %v5446
        %v5509 = vadd.f32 %v5119, %v5451
        %v5510 = vadd.f32 %v5120, %v5456
        %v5511 = vadd.f32 %v5121, %v5461
        %v5512 = vadd.f32 %v5122, %v5466
        %v5513 = vadd.f32 %v5123, %v5471
        %v5514 = vadd.f32 %v5124, %v5476
        %v5515 = vadd.f32 %v5125, %v5481
        %v5516 = vld [vmem:[%s329] sm:$0xff]
        %v5517 = vld [vmem:[%s329 + $0x8] sm:$0xff]
        %v5518 = vld [vmem:[%s329 + $0x18] sm:$0xff]
        %v5519 = vld [vmem:[%s329 + $0x20] sm:$0xff]
        %v5520 = vld [vmem:[%s329 + $0x30] sm:$0xff]
        %v5521 = vld [vmem:[%s329 + $0x38] sm:$0xff]
        %v5522 = vld [vmem:[%s329 + $0x48] sm:$0xff]
        %v5523 = vld [vmem:[%s329 + $0x50] sm:$0xff]
        %v5524 = vld [vmem:[%s329 + $0x60] sm:$0xff]
        %v5525 = vld [vmem:[%s329 + $0x68] sm:$0xff]
        %v5526 = vld [vmem:[%s329 + $0x78] sm:$0xff]
        %v5527 = vld [vmem:[%s329 + $0x80] sm:$0xff]
        %v5528 = vld [vmem:[%s329 + $0x90] sm:$0xff]
        %v5529 = vld [vmem:[%s329 + $0x98] sm:$0xff]
        %v5530 = vld [vmem:[%s329 + $0xa8] sm:$0xff]
        %v5531 = vld [vmem:[%s329 + $0xb0] sm:$0xff]
        %v5532 = vld [vmem:[%s329 + $0xc0] sm:$0xff]
        %v5533 = vld [vmem:[%s329 + $0xc8] sm:$0xff]
        %v5534 = vld [vmem:[%s329 + $0xd8] sm:$0xff]
        %v5535 = vld [vmem:[%s329 + $0xe0] sm:$0xff]
        %v5536 = vld [vmem:[%s329 + $0xf0] sm:$0xff]
        %v5537 = vld [vmem:[%s329 + $0xf8] sm:$0xff]
        %v5538 = vld [vmem:[%s329 + $0x108] sm:$0xff]
        %v5539 = vld [vmem:[%s329 + $0x110] sm:$0xff]
        %v5540 = vld [vmem:[%s329 + $0x120] sm:$0xff]
        %v5541 = vld [vmem:[%s329 + $0x128] sm:$0xff]
        %v5542 = vld [vmem:[%s329 + $0x138] sm:$0xff]
        %v5543 = vld [vmem:[%s329 + $0x140] sm:$0xff]
        %v5544 = vld [vmem:[%s329 + $0x150] sm:$0xff]
        %v5545 = vld [vmem:[%s329 + $0x158] sm:$0xff]
        %v5546 = vld [vmem:[%s329 + $0x168] sm:$0xff]
        %v5547 = vld [vmem:[%s329 + $0x170] sm:$0xff]
        %s5548 = scalar_lea.vmem [#allocation9], 12
        %v5549 = vld [vmem:[%s5548] sm:$0xf]
        %v5551 = vsel %vm330, %v5516, 0
        %v5554 = vsel %vm330, %v5517, 0
        %v5557 = vsel %vm330, %v5518, 0
        %v5560 = vsel %vm330, %v5519, 0
        %v5563 = vsel %vm330, %v5520, 0
        %v5566 = vsel %vm330, %v5521, 0
        %v5569 = vsel %vm330, %v5522, 0
        %v5572 = vsel %vm330, %v5523, 0
        %v5575 = vsel %vm330, %v5524, 0
        %v5578 = vsel %vm330, %v5525, 0
        %v5581 = vsel %vm330, %v5526, 0
        %v5584 = vsel %vm330, %v5527, 0
        %v5587 = vsel %vm330, %v5528, 0
        %v5590 = vsel %vm330, %v5529, 0
        %v5593 = vsel %vm330, %v5530, 0
        %v5596 = vsel %vm330, %v5531, 0
        %v5599 = vsel %vm330, %v5532, 0
        %v5602 = vsel %vm330, %v5533, 0
        %v5605 = vsel %vm330, %v5534, 0
        %v5608 = vsel %vm330, %v5535, 0
        %v5611 = vsel %vm330, %v5536, 0
        %v5614 = vsel %vm330, %v5537, 0
        %v5617 = vsel %vm330, %v5538, 0
        %v5620 = vsel %vm330, %v5539, 0
        %v5623 = vsel %vm330, %v5540, 0
        %v5626 = vsel %vm330, %v5541, 0
        %v5629 = vsel %vm330, %v5542, 0
        %v5632 = vsel %vm330, %v5543, 0
        %v5635 = vsel %vm330, %v5544, 0
        %v5638 = vsel %vm330, %v5545, 0
        %v5641 = vsel %vm330, %v5546, 0
        %v5644 = vsel %vm330, %v5547, 0
        %v5647 = vsel %vm578, %v5549, 0
        %5649 = vmatprep.subr.mxu0 0.0
        %5650 = vmatpush1.msra.mxu0 %v5647
        %5651 = vmatprep.subr.mxu0 0.0
        %5652 = vmatpush1.msra.mxu0 0.0
        %5653 = vmatprep.subr.mxu0 0.0
        %5654 = vmatpush1.msra.mxu0 0.0
        %5655 = vmatprep.subr.mxu0 0.0
        %5656 = vmatpush1.msra.mxu0 0.0
        %5657 = vmatprep.subr.mxu0 0.0
        %5658 = vmatpush1.msra.mxu0 0.0
        %5659 = vmatprep.subr.mxu0 0.0
        %5660 = vmatpush1.msra.mxu0 0.0
        %5661 = vmatprep.subr.mxu0 0.0
        %5662 = vmatpush1.msra.mxu0 0.0
        %5663 = vmatprep.subr.mxu0 0.0
        %5664 = vmatpush1.msra.mxu0 0.0
        %5665 = vmatprep.subr.mxu0 0.0
        %5666 = vmatpush1.msra.mxu0 0.0
        %5667 = vmatprep.subr.mxu0 0.0
        %5668 = vmatpush1.msra.mxu0 0.0
        %5669 = vmatprep.subr.mxu0 0.0
        %5670 = vmatpush1.msra.mxu0 0.0
        %5671 = vmatprep.subr.mxu0 0.0
        %5672 = vmatpush1.msra.mxu0 0.0
        %5673 = vmatprep.subr.mxu0 0.0
        %5674 = vmatpush1.msra.mxu0 0.0
        %5675 = vmatprep.subr.mxu0 0.0
        %5676 = vmatpush1.msra.mxu0 0.0
        %5677 = vmatprep.subr.mxu0 0.0
        %5678 = vmatpush1.msra.mxu0 0.0
        %5679 = vmatprep.subr.mxu0 0.0
        %5680 = vmatpush1.msra.mxu0 0.0
        %5681 = vmatprep.subr.mxu0 0.0
        %5682 = vmatpush1.msra.mxu0 0.0
        %5683 = vmatprep.subr.mxu0 0.0
        %5684 = vmatpush1.msra.mxu0 0.0
        %5685 = vmatprep.subr.mxu0 0.0
        %5686 = vmatpush1.msra.mxu0 0.0
        %5687 = vmatprep.subr.mxu0 0.0
        %5688 = vmatpush1.msra.mxu0 0.0
        %5689 = vmatprep.subr.mxu0 0.0
        %5690 = vmatpush1.msra.mxu0 0.0
        %5691 = vmatprep.subr.mxu0 0.0
        %5692 = vmatpush1.msra.mxu0 0.0
        %5693 = vmatprep.subr.mxu0 0.0
        %5694 = vmatpush1.msra.mxu0 0.0
        %5695 = vmatprep.subr.mxu0 0.0
        %5696 = vmatpush1.msra.mxu0 0.0
        %5697 = vmatprep.subr.mxu0 0.0
        %5698 = vmatpush1.msra.mxu0 0.0
        %5699 = vmatprep.subr.mxu0 0.0
        %5700 = vmatpush1.msra.mxu0 0.0
        %5701 = vmatprep.subr.mxu0 0.0
        %5702 = vmatpush1.msra.mxu0 0.0
        %5703 = vmatprep.subr.mxu0 0.0
        %5704 = vmatpush1.msra.mxu0 0.0
        %5705 = vmatprep.subr.mxu0 0.0
        %5706 = vmatpush1.msra.mxu0 0.0
        %5707 = vmatprep.subr.mxu0 0.0
        %5708 = vmatpush1.msra.mxu0 0.0
        %5709 = vmatprep.subr.mxu0 0.0
        %5710 = vmatpush1.msra.mxu0 0.0
        %5711 = vmatprep.subr.mxu0 0.0
        %5712 = vmatpush1.msra.mxu0 0.0
        %5713 = vmatprep.mubr.f32.mxu0 0.0
        %5714 = vmatmul.mubr.f32.gmra.mrb[0].mxu0 %v5551
        %v5715 = vpop.f32.mrb[0].mxu0
        %v5716 = vadd.f32 0.0, %v5715
        %v5717 = vpop.f32.mrb[0].mxu0
        %5718 = vmatprep.mubr.f32.mxu0 0.0
        %5719 = vmatmul.mubr.f32.gmra.mrb[0].mxu0 %v5554
        %v5720 = vpop.f32.mrb[0].mxu0
        %v5721 = vadd.f32 0.0, %v5720
        %v5722 = vpop.f32.mrb[0].mxu0
        %5723 = vmatprep.mubr.f32.mxu0 0.0
        %5724 = vmatmul.mubr.f32.gmra.mrb[0].mxu0 %v5557
        %v5725 = vpop.f32.mrb[0].mxu0
        %v5726 = vadd.f32 0.0, %v5725
        %v5727 = vpop.f32.mrb[0].mxu0
        %5728 = vmatprep.mubr.f32.mxu0 0.0
        %5729 = vmatmul.mubr.f32.gmra.mrb[0].mxu0 %v5560
        %v5730 = vpop.f32.mrb[0].mxu0
        %v5731 = vadd.f32 0.0, %v5730
        %v5732 = vpop.f32.mrb[0].mxu0
        %5733 = vmatprep.mubr.f32.mxu0 0.0
        %5734 = vmatmul.mubr.f32.gmra.mrb[0].mxu0 %v5563
        %v5735 = vpop.f32.mrb[0].mxu0
        %v5736 = vadd.f32 0.0, %v5735
        %v5737 = vpop.f32.mrb[0].mxu0
        %5738 = vmatprep.mubr.f32.mxu0 0.0
        %5739 = vmatmul.mubr.f32.gmra.mrb[0].mxu0 %v5566
        %v5740 = vpop.f32.mrb[0].mxu0
        %v5741 = vadd.f32 0.0, %v5740
        %v5742 = vpop.f32.mrb[0].mxu0
        %5743 = vmatprep.mubr.f32.mxu0 0.0
        %5744 = vmatmul.mubr.f32.gmra.mrb[0].mxu0 %v5569
        %v5745 = vpop.f32.mrb[0].mxu0
        %v5746 = vadd.f32 0.0, %v5745
        %v5747 = vpop.f32.mrb[0].mxu0
        %5748 = vmatprep.mubr.f32.mxu0 0.0
        %5749 = vmatmul.mubr.f32.gmra.mrb[0].mxu0 %v5572
        %v5750 = vpop.f32.mrb[0].mxu0
        %v5751 = vadd.f32 0.0, %v5750
        %v5752 = vpop.f32.mrb[0].mxu0
        %5753 = vmatprep.mubr.f32.mxu0 0.0
        %5754 = vmatmul.mubr.f32.gmra.mrb[0].mxu0 %v5575
        %v5755 = vpop.f32.mrb[0].mxu0
        %v5756 = vadd.f32 0.0, %v5755
        %v5757 = vpop.f32.mrb[0].mxu0
        %5758 = vmatprep.mubr.f32.mxu0 0.0
        %5759 = vmatmul.mubr.f32.gmra.mrb[0].mxu0 %v5578
        %v5760 = vpop.f32.mrb[0].mxu0
        %v5761 = vadd.f32 0.0, %v5760
        %v5762 = vpop.f32.mrb[0].mxu0
        %5763 = vmatprep.mubr.f32.mxu0 0.0
        %5764 = vmatmul.mubr.f32.gmra.mrb[0].mxu0 %v5581
        %v5765 = vpop.f32.mrb[0].mxu0
        %v5766 = vadd.f32 0.0, %v5765
        %v5767 = vpop.f32.mrb[0].mxu0
        %5768 = vmatprep.mubr.f32.mxu0 0.0
        %5769 = vmatmul.mubr.f32.gmra.mrb[0].mxu0 %v5584
        %v5770 = vpop.f32.mrb[0].mxu0
        %v5771 = vadd.f32 0.0, %v5770
        %v5772 = vpop.f32.mrb[0].mxu0
        %5773 = vmatprep.mubr.f32.mxu0 0.0
        %5774 = vmatmul.mubr.f32.gmra.mrb[0].mxu0 %v5587
        %v5775 = vpop.f32.mrb[0].mxu0
        %v5776 = vadd.f32 0.0, %v5775
        %v5777 = vpop.f32.mrb[0].mxu0
        %5778 = vmatprep.mubr.f32.mxu0 0.0
        %5779 = vmatmul.mubr.f32.gmra.mrb[0].mxu0 %v5590
        %v5780 = vpop.f32.mrb[0].mxu0
        %v5781 = vadd.f32 0.0, %v5780
        %v5782 = vpop.f32.mrb[0].mxu0
        %5783 = vmatprep.mubr.f32.mxu0 0.0
        %5784 = vmatmul.mubr.f32.gmra.mrb[0].mxu0 %v5593
        %v5785 = vpop.f32.mrb[0].mxu0
        %v5786 = vadd.f32 0.0, %v5785
        %v5787 = vpop.f32.mrb[0].mxu0
        %5788 = vmatprep.mubr.f32.mxu0 0.0
        %5789 = vmatmul.mubr.f32.gmra.mrb[0].mxu0 %v5596
        %v5790 = vpop.f32.mrb[0].mxu0
        %v5791 = vadd.f32 0.0, %v5790
        %v5792 = vpop.f32.mrb[0].mxu0
        %5793 = vmatprep.mubr.f32.mxu0 0.0
        %5794 = vmatmul.mubr.f32.gmra.mrb[0].mxu0 %v5599
        %v5795 = vpop.f32.mrb[0].mxu0
        %v5796 = vadd.f32 0.0, %v5795
        %v5797 = vpop.f32.mrb[0].mxu0
        %5798 = vmatprep.mubr.f32.mxu0 0.0
        %5799 = vmatmul.mubr.f32.gmra.mrb[0].mxu0 %v5602
        %v5800 = vpop.f32.mrb[0].mxu0
        %v5801 = vadd.f32 0.0, %v5800
        %v5802 = vpop.f32.mrb[0].mxu0
        %5803 = vmatprep.mubr.f32.mxu0 0.0
        %5804 = vmatmul.mubr.f32.gmra.mrb[0].mxu0 %v5605
        %v5805 = vpop.f32.mrb[0].mxu0
        %v5806 = vadd.f32 0.0, %v5805
        %v5807 = vpop.f32.mrb[0].mxu0
        %5808 = vmatprep.mubr.f32.mxu0 0.0
        %5809 = vmatmul.mubr.f32.gmra.mrb[0].mxu0 %v5608
        %v5810 = vpop.f32.mrb[0].mxu0
        %v5811 = vadd.f32 0.0, %v5810
        %v5812 = vpop.f32.mrb[0].mxu0
        %5813 = vmatprep.mubr.f32.mxu0 0.0
        %5814 = vmatmul.mubr.f32.gmra.mrb[0].mxu0 %v5611
        %v5815 = vpop.f32.mrb[0].mxu0
        %v5816 = vadd.f32 0.0, %v5815
        %v5817 = vpop.f32.mrb[0].mxu0
        %5818 = vmatprep.mubr.f32.mxu0 0.0
        %5819 = vmatmul.mubr.f32.gmra.mrb[0].mxu0 %v5614
        %v5820 = vpop.f32.mrb[0].mxu0
        %v5821 = vadd.f32 0.0, %v5820
        %v5822 = vpop.f32.mrb[0].mxu0
        %5823 = vmatprep.mubr.f32.mxu0 0.0
        %5824 = vmatmul.mubr.f32.gmra.mrb[0].mxu0 %v5617
        %v5825 = vpop.f32.mrb[0].mxu0
        %v5826 = vadd.f32 0.0, %v5825
        %v5827 = vpop.f32.mrb[0].mxu0
        %5828 = vmatprep.mubr.f32.mxu0 0.0
        %5829 = vmatmul.mubr.f32.gmra.mrb[0].mxu0 %v5620
        %v5830 = vpop.f32.mrb[0].mxu0
        %v5831 = vadd.f32 0.0, %v5830
        %v5832 = vpop.f32.mrb[0].mxu0
        %5833 = vmatprep.mubr.f32.mxu0 0.0
        %5834 = vmatmul.mubr.f32.gmra.mrb[0].mxu0 %v5623
        %v5835 = vpop.f32.mrb[0].mxu0
        %v5836 = vadd.f32 0.0, %v5835
        %v5837 = vpop.f32.mrb[0].mxu0
        %5838 = vmatprep.mubr.f32.mxu0 0.0
        %5839 = vmatmul.mubr.f32.gmra.mrb[0].mxu0 %v5626
        %v5840 = vpop.f32.mrb[0].mxu0
        %v5841 = vadd.f32 0.0, %v5840
        %v5842 = vpop.f32.mrb[0].mxu0
        %5843 = vmatprep.mubr.f32.mxu0 0.0
        %5844 = vmatmul.mubr.f32.gmra.mrb[0].mxu0 %v5629
        %v5845 = vpop.f32.mrb[0].mxu0
        %v5846 = vadd.f32 0.0, %v5845
        %v5847 = vpop.f32.mrb[0].mxu0
        %5848 = vmatprep.mubr.f32.mxu0 0.0
        %5849 = vmatmul.mubr.f32.gmra.mrb[0].mxu0 %v5632
        %v5850 = vpop.f32.mrb[0].mxu0
        %v5851 = vadd.f32 0.0, %v5850
        %v5852 = vpop.f32.mrb[0].mxu0
        %5853 = vmatprep.mubr.f32.mxu0 0.0
        %5854 = vmatmul.mubr.f32.gmra.mrb[0].mxu0 %v5635
        %v5855 = vpop.f32.mrb[0].mxu0
        %v5856 = vadd.f32 0.0, %v5855
        %v5857 = vpop.f32.mrb[0].mxu0
        %5858 = vmatprep.mubr.f32.mxu0 0.0
        %5859 = vmatmul.mubr.f32.gmra.mrb[0].mxu0 %v5638
        %v5860 = vpop.f32.mrb[0].mxu0
        %v5861 = vadd.f32 0.0, %v5860
        %v5862 = vpop.f32.mrb[0].mxu0
        %5863 = vmatprep.mubr.f32.mxu0 0.0
        %5864 = vmatmul.mubr.f32.gmra.mrb[0].mxu0 %v5641
        %v5865 = vpop.f32.mrb[0].mxu0
        %v5866 = vadd.f32 0.0, %v5865
        %v5867 = vpop.f32.mrb[0].mxu0
        %5868 = vmatprep.mubr.f32.mxu0 0.0
        %5869 = vmatmul.mubr.f32.gmra.mrb[0].mxu0 %v5644
        %v5870 = vpop.f32.mrb[0].mxu0
        %v5871 = vadd.f32 0.0, %v5870
        %v5872 = vpop.f32.mrb[0].mxu0
        %5873 = vdwg.mxu0
        %v5874 = vadd.f32 %v5484, %v5716
        %v5875 = vadd.f32 %v5485, %v5721
        %v5876 = vadd.f32 %v5486, %v5726
        %v5877 = vadd.f32 %v5487, %v5731
        %v5878 = vadd.f32 %v5488, %v5736
        %v5879 = vadd.f32 %v5489, %v5741
        %v5880 = vadd.f32 %v5490, %v5746
        %v5881 = vadd.f32 %v5491, %v5751
        %v5882 = vadd.f32 %v5492, %v5756
        %v5883 = vadd.f32 %v5493, %v5761
        %v5884 = vadd.f32 %v5494, %v5766
        %v5885 = vadd.f32 %v5495, %v5771
        %v5886 = vadd.f32 %v5496, %v5776
        %v5887 = vadd.f32 %v5497, %v5781
        %v5888 = vadd.f32 %v5498, %v5786
        %v5889 = vadd.f32 %v5499, %v5791
        %v5890 = vadd.f32 %v5500, %v5796
        %v5891 = vadd.f32 %v5501, %v5801
        %v5892 = vadd.f32 %v5502, %v5806
        %v5893 = vadd.f32 %v5503, %v5811
        %v5894 = vadd.f32 %v5504, %v5816
        %v5895 = vadd.f32 %v5505, %v5821
        %v5896 = vadd.f32 %v5506, %v5826
        %v5897 = vadd.f32 %v5507, %v5831
        %v5898 = vadd.f32 %v5508, %v5836
        %v5899 = vadd.f32 %v5509, %v5841
        %v5900 = vadd.f32 %v5510, %v5846
        %v5901 = vadd.f32 %v5511, %v5851
        %v5902 = vadd.f32 %v5512, %v5856
        %v5903 = vadd.f32 %v5513, %v5861
        %v5904 = vadd.f32 %v5514, %v5866
        %v5905 = vadd.f32 %v5515, %v5871
        %v5906 = vld [vmem:[%s329 + $0x1] sm:$0xff]
        %v5907 = vld [vmem:[%s329 + $0x9] sm:$0xff]
        %v5908 = vld [vmem:[%s329 + $0x19] sm:$0xff]
        %v5909 = vld [vmem:[%s329 + $0x21] sm:$0xff]
        %v5910 = vld [vmem:[%s329 + $0x31] sm:$0xff]
        %v5911 = vld [vmem:[%s329 + $0x39] sm:$0xff]
        %v5912 = vld [vmem:[%s329 + $0x49] sm:$0xff]
        %v5913 = vld [vmem:[%s329 + $0x51] sm:$0xff]
        %v5914 = vld [vmem:[%s329 + $0x61] sm:$0xff]
        %v5915 = vld [vmem:[%s329 + $0x69] sm:$0xff]
        %v5916 = vld [vmem:[%s329 + $0x79] sm:$0xff]
        %v5917 = vld [vmem:[%s329 + $0x81] sm:$0xff]
        %v5918 = vld [vmem:[%s329 + $0x91] sm:$0xff]
        %v5919 = vld [vmem:[%s329 + $0x99] sm:$0xff]
        %v5920 = vld [vmem:[%s329 + $0xa9] sm:$0xff]
        %v5921 = vld [vmem:[%s329 + $0xb1] sm:$0xff]
        %v5922 = vld [vmem:[%s329 + $0xc1] sm:$0xff]
        %v5923 = vld [vmem:[%s329 + $0xc9] sm:$0xff]
        %v5924 = vld [vmem:[%s329 + $0xd9] sm:$0xff]
        %v5925 = vld [vmem:[%s329 + $0xe1] sm:$0xff]
        %v5926 = vld [vmem:[%s329 + $0xf1] sm:$0xff]
        %v5927 = vld [vmem:[%s329 + $0xf9] sm:$0xff]
        %v5928 = vld [vmem:[%s329 + $0x109] sm:$0xff]
        %v5929 = vld [vmem:[%s329 + $0x111] sm:$0xff]
        %v5930 = vld [vmem:[%s329 + $0x121] sm:$0xff]
        %v5931 = vld [vmem:[%s329 + $0x129] sm:$0xff]
        %v5932 = vld [vmem:[%s329 + $0x139] sm:$0xff]
        %v5933 = vld [vmem:[%s329 + $0x141] sm:$0xff]
        %v5934 = vld [vmem:[%s329 + $0x151] sm:$0xff]
        %v5935 = vld [vmem:[%s329 + $0x159] sm:$0xff]
        %v5936 = vld [vmem:[%s329 + $0x169] sm:$0xff]
        %v5937 = vld [vmem:[%s329 + $0x171] sm:$0xff]
        %s5938 = scalar_lea.vmem [#allocation9], 16
        %v5939 = vld [vmem:[%s5938] sm:$0xf]
        %v5941 = vsel %vm330, %v5906, 0
        %v5944 = vsel %vm330, %v5907, 0
        %v5947 = vsel %vm330, %v5908, 0
        %v5950 = vsel %vm330, %v5909, 0
        %v5953 = vsel %vm330, %v5910, 0
        %v5956 = vsel %vm330, %v5911, 0
        %v5959 = vsel %vm330, %v5912, 0
        %v5962 = vsel %vm330, %v5913, 0
        %v5965 = vsel %vm330, %v5914, 0
        %v5968 = vsel %vm330, %v5915, 0
        %v5971 = vsel %vm330, %v5916, 0
        %v5974 = vsel %vm330, %v5917, 0
        %v5977 = vsel %vm330, %v5918, 0
        %v5980 = vsel %vm330, %v5919, 0
        %v5983 = vsel %vm330, %v5920, 0
        %v5986 = vsel %vm330, %v5921, 0
        %v5989 = vsel %vm330, %v5922, 0
        %v5992 = vsel %vm330, %v5923, 0
        %v5995 = vsel %vm330, %v5924, 0
        %v5998 = vsel %vm330, %v5925, 0
        %v6001 = vsel %vm330, %v5926, 0
        %v6004 = vsel %vm330, %v5927, 0
        %v6007 = vsel %vm330, %v5928, 0
        %v6010 = vsel %vm330, %v5929, 0
        %v6013 = vsel %vm330, %v5930, 0
        %v6016 = vsel %vm330, %v5931, 0
        %v6019 = vsel %vm330, %v5932, 0
        %v6022 = vsel %vm330, %v5933, 0
        %v6025 = vsel %vm330, %v5934, 0
        %v6028 = vsel %vm330, %v5935, 0
        %v6031 = vsel %vm330, %v5936, 0
        %v6034 = vsel %vm330, %v5937, 0
        %v6037 = vsel %vm578, %v5939, 0
        %6039 = vmatprep.subr.mxu0 0.0
        %6040 = vmatpush1.msra.mxu0 %v6037
        %6041 = vmatprep.subr.mxu0 0.0
        %6042 = vmatpush1.msra.mxu0 0.0
        %6043 = vmatprep.subr.mxu0 0.0
        %6044 = vmatpush1.msra.mxu0 0.0
        %6045 = vmatprep.subr.mxu0 0.0
        %6046 = vmatpush1.msra.mxu0 0.0
        %6047 = vmatprep.subr.mxu0 0.0
        %6048 = vmatpush1.msra.mxu0 0.0
        %6049 = vmatprep.subr.mxu0 0.0
        %6050 = vmatpush1.msra.mxu0 0.0
        %6051 = vmatprep.subr.mxu0 0.0
        %6052 = vmatpush1.msra.mxu0 0.0
        %6053 = vmatprep.subr.mxu0 0.0
        %6054 = vmatpush1.msra.mxu0 0.0
        %6055 = vmatprep.subr.mxu0 0.0
        %6056 = vmatpush1.msra.mxu0 0.0
        %6057 = vmatprep.subr.mxu0 0.0
        %6058 = vmatpush1.msra.mxu0 0.0
        %6059 = vmatprep.subr.mxu0 0.0
        %6060 = vmatpush1.msra.mxu0 0.0
        %6061 = vmatprep.subr.mxu0 0.0
        %6062 = vmatpush1.msra.mxu0 0.0
        %6063 = vmatprep.subr.mxu0 0.0
        %6064 = vmatpush1.msra.mxu0 0.0
        %6065 = vmatprep.subr.mxu0 0.0
        %6066 = vmatpush1.msra.mxu0 0.0
        %6067 = vmatprep.subr.mxu0 0.0
        %6068 = vmatpush1.msra.mxu0 0.0
        %6069 = vmatprep.subr.mxu0 0.0
        %6070 = vmatpush1.msra.mxu0 0.0
        %6071 = vmatprep.subr.mxu0 0.0
        %6072 = vmatpush1.msra.mxu0 0.0
        %6073 = vmatprep.subr.mxu0 0.0
        %6074 = vmatpush1.msra.mxu0 0.0
        %6075 = vmatprep.subr.mxu0 0.0
        %6076 = vmatpush1.msra.mxu0 0.0
        %6077 = vmatprep.subr.mxu0 0.0
        %6078 = vmatpush1.msra.mxu0 0.0
        %6079 = vmatprep.subr.mxu0 0.0
        %6080 = vmatpush1.msra.mxu0 0.0
        %6081 = vmatprep.subr.mxu0 0.0
        %6082 = vmatpush1.msra.mxu0 0.0
        %6083 = vmatprep.subr.mxu0 0.0
        %6084 = vmatpush1.msra.mxu0 0.0
        %6085 = vmatprep.subr.mxu0 0.0
        %6086 = vmatpush1.msra.mxu0 0.0
        %6087 = vmatprep.subr.mxu0 0.0
        %6088 = vmatpush1.msra.mxu0 0.0
        %6089 = vmatprep.subr.mxu0 0.0
        %6090 = vmatpush1.msra.mxu0 0.0
        %6091 = vmatprep.subr.mxu0 0.0
        %6092 = vmatpush1.msra.mxu0 0.0
        %6093 = vmatprep.subr.mxu0 0.0
        %6094 = vmatpush1.msra.mxu0 0.0
        %6095 = vmatprep.subr.mxu0 0.0
        %6096 = vmatpush1.msra.mxu0 0.0
        %6097 = vmatprep.subr.mxu0 0.0
        %6098 = vmatpush1.msra.mxu0 0.0
        %6099 = vmatprep.subr.mxu0 0.0
        %6100 = vmatpush1.msra.mxu0 0.0
        %6101 = vmatprep.subr.mxu0 0.0
        %6102 = vmatpush1.msra.mxu0 0.0
        %6103 = vmatprep.mubr.f32.mxu0 0.0
        %6104 = vmatmul.mubr.f32.gmra.mrb[0].mxu0 %v5941
        %v6105 = vpop.f32.mrb[0].mxu0
        %v6106 = vadd.f32 0.0, %v6105
        %v6107 = vpop.f32.mrb[0].mxu0
        %6108 = vmatprep.mubr.f32.mxu0 0.0
        %6109 = vmatmul.mubr.f32.gmra.mrb[0].mxu0 %v5944
        %v6110 = vpop.f32.mrb[0].mxu0
        %v6111 = vadd.f32 0.0, %v6110
        %v6112 = vpop.f32.mrb[0].mxu0
        %6113 = vmatprep.mubr.f32.mxu0 0.0
        %6114 = vmatmul.mubr.f32.gmra.mrb[0].mxu0 %v5947
        %v6115 = vpop.f32.mrb[0].mxu0
        %v6116 = vadd.f32 0.0, %v6115
        %v6117 = vpop.f32.mrb[0].mxu0
        %6118 = vmatprep.mubr.f32.mxu0 0.0
        %6119 = vmatmul.mubr.f32.gmra.mrb[0].mxu0 %v5950
        %v6120 = vpop.f32.mrb[0].mxu0
        %v6121 = vadd.f32 0.0, %v6120
        %v6122 = vpop.f32.mrb[0].mxu0
        %6123 = vmatprep.mubr.f32.mxu0 0.0
        %6124 = vmatmul.mubr.f32.gmra.mrb[0].mxu0 %v5953
        %v6125 = vpop.f32.mrb[0].mxu0
        %v6126 = vadd.f32 0.0, %v6125
        %v6127 = vpop.f32.mrb[0].mxu0
        %6128 = vmatprep.mubr.f32.mxu0 0.0
        %6129 = vmatmul.mubr.f32.gmra.mrb[0].mxu0 %v5956
        %v6130 = vpop.f32.mrb[0].mxu0
        %v6131 = vadd.f32 0.0, %v6130
        %v6132 = vpop.f32.mrb[0].mxu0
        %6133 = vmatprep.mubr.f32.mxu0 0.0
        %6134 = vmatmul.mubr.f32.gmra.mrb[0].mxu0 %v5959
        %v6135 = vpop.f32.mrb[0].mxu0
        %v6136 = vadd.f32 0.0, %v6135
        %v6137 = vpop.f32.mrb[0].mxu0
        %6138 = vmatprep.mubr.f32.mxu0 0.0
        %6139 = vmatmul.mubr.f32.gmra.mrb[0].mxu0 %v5962
        %v6140 = vpop.f32.mrb[0].mxu0
        %v6141 = vadd.f32 0.0, %v6140
        %v6142 = vpop.f32.mrb[0].mxu0
        %6143 = vmatprep.mubr.f32.mxu0 0.0
        %6144 = vmatmul.mubr.f32.gmra.mrb[0].mxu0 %v5965
        %v6145 = vpop.f32.mrb[0].mxu0
        %v6146 = vadd.f32 0.0, %v6145
        %v6147 = vpop.f32.mrb[0].mxu0
        %6148 = vmatprep.mubr.f32.mxu0 0.0
        %6149 = vmatmul.mubr.f32.gmra.mrb[0].mxu0 %v5968
        %v6150 = vpop.f32.mrb[0].mxu0
        %v6151 = vadd.f32 0.0, %v6150
        %v6152 = vpop.f32.mrb[0].mxu0
        %6153 = vmatprep.mubr.f32.mxu0 0.0
        %6154 = vmatmul.mubr.f32.gmra.mrb[0].mxu0 %v5971
        %v6155 = vpop.f32.mrb[0].mxu0
        %v6156 = vadd.f32 0.0, %v6155
        %v6157 = vpop.f32.mrb[0].mxu0
        %6158 = vmatprep.mubr.f32.mxu0 0.0
        %6159 = vmatmul.mubr.f32.gmra.mrb[0].mxu0 %v5974
        %v6160 = vpop.f32.mrb[0].mxu0
        %v6161 = vadd.f32 0.0, %v6160
        %v6162 = vpop.f32.mrb[0].mxu0
        %6163 = vmatprep.mubr.f32.mxu0 0.0
        %6164 = vmatmul.mubr.f32.gmra.mrb[0].mxu0 %v5977
        %v6165 = vpop.f32.mrb[0].mxu0
        %v6166 = vadd.f32 0.0, %v6165
        %v6167 = vpop.f32.mrb[0].mxu0
        %6168 = vmatprep.mubr.f32.mxu0 0.0
        %6169 = vmatmul.mubr.f32.gmra.mrb[0].mxu0 %v5980
        %v6170 = vpop.f32.mrb[0].mxu0
        %v6171 = vadd.f32 0.0, %v6170
        %v6172 = vpop.f32.mrb[0].mxu0
        %6173 = vmatprep.mubr.f32.mxu0 0.0
        %6174 = vmatmul.mubr.f32.gmra.mrb[0].mxu0 %v5983
        %v6175 = vpop.f32.mrb[0].mxu0
        %v6176 = vadd.f32 0.0, %v6175
        %v6177 = vpop.f32.mrb[0].mxu0
        %6178 = vmatprep.mubr.f32.mxu0 0.0
        %6179 = vmatmul.mubr.f32.gmra.mrb[0].mxu0 %v5986
        %v6180 = vpop.f32.mrb[0].mxu0
        %v6181 = vadd.f32 0.0, %v6180
        %v6182 = vpop.f32.mrb[0].mxu0
        %6183 = vmatprep.mubr.f32.mxu0 0.0
        %6184 = vmatmul.mubr.f32.gmra.mrb[0].mxu0 %v5989
        %v6185 = vpop.f32.mrb[0].mxu0
        %v6186 = vadd.f32 0.0, %v6185
        %v6187 = vpop.f32.mrb[0].mxu0
        %6188 = vmatprep.mubr.f32.mxu0 0.0
        %6189 = vmatmul.mubr.f32.gmra.mrb[0].mxu0 %v5992
        %v6190 = vpop.f32.mrb[0].mxu0
        %v6191 = vadd.f32 0.0, %v6190
        %v6192 = vpop.f32.mrb[0].mxu0
        %6193 = vmatprep.mubr.f32.mxu0 0.0
        %6194 = vmatmul.mubr.f32.gmra.mrb[0].mxu0 %v5995
        %v6195 = vpop.f32.mrb[0].mxu0
        %v6196 = vadd.f32 0.0, %v6195
        %v6197 = vpop.f32.mrb[0].mxu0
        %6198 = vmatprep.mubr.f32.mxu0 0.0
        %6199 = vmatmul.mubr.f32.gmra.mrb[0].mxu0 %v5998
        %v6200 = vpop.f32.mrb[0].mxu0
        %v6201 = vadd.f32 0.0, %v6200
        %v6202 = vpop.f32.mrb[0].mxu0
        %6203 = vmatprep.mubr.f32.mxu0 0.0
        %6204 = vmatmul.mubr.f32.gmra.mrb[0].mxu0 %v6001
        %v6205 = vpop.f32.mrb[0].mxu0
        %v6206 = vadd.f32 0.0, %v6205
        %v6207 = vpop.f32.mrb[0].mxu0
        %6208 = vmatprep.mubr.f32.mxu0 0.0
        %6209 = vmatmul.mubr.f32.gmra.mrb[0].mxu0 %v6004
        %v6210 = vpop.f32.mrb[0].mxu0
        %v6211 = vadd.f32 0.0, %v6210
        %v6212 = vpop.f32.mrb[0].mxu0
        %6213 = vmatprep.mubr.f32.mxu0 0.0
        %6214 = vmatmul.mubr.f32.gmra.mrb[0].mxu0 %v6007
        %v6215 = vpop.f32.mrb[0].mxu0
        %v6216 = vadd.f32 0.0, %v6215
        %v6217 = vpop.f32.mrb[0].mxu0
        %6218 = vmatprep.mubr.f32.mxu0 0.0
        %6219 = vmatmul.mubr.f32.gmra.mrb[0].mxu0 %v6010
        %v6220 = vpop.f32.mrb[0].mxu0
        %v6221 = vadd.f32 0.0, %v6220
        %v6222 = vpop.f32.mrb[0].mxu0
        %6223 = vmatprep.mubr.f32.mxu0 0.0
        %6224 = vmatmul.mubr.f32.gmra.mrb[0].mxu0 %v6013
        %v6225 = vpop.f32.mrb[0].mxu0
        %v6226 = vadd.f32 0.0, %v6225
        %v6227 = vpop.f32.mrb[0].mxu0
        %6228 = vmatprep.mubr.f32.mxu0 0.0
        %6229 = vmatmul.mubr.f32.gmra.mrb[0].mxu0 %v6016
        %v6230 = vpop.f32.mrb[0].mxu0
        %v6231 = vadd.f32 0.0, %v6230
        %v6232 = vpop.f32.mrb[0].mxu0
        %6233 = vmatprep.mubr.f32.mxu0 0.0
        %6234 = vmatmul.mubr.f32.gmra.mrb[0].mxu0 %v6019
        %v6235 = vpop.f32.mrb[0].mxu0
        %v6236 = vadd.f32 0.0, %v6235
        %v6237 = vpop.f32.mrb[0].mxu0
        %6238 = vmatprep.mubr.f32.mxu0 0.0
        %6239 = vmatmul.mubr.f32.gmra.mrb[0].mxu0 %v6022
        %v6240 = vpop.f32.mrb[0].mxu0
        %v6241 = vadd.f32 0.0, %v6240
        %v6242 = vpop.f32.mrb[0].mxu0
        %6243 = vmatprep.mubr.f32.mxu0 0.0
        %6244 = vmatmul.mubr.f32.gmra.mrb[0].mxu0 %v6025
        %v6245 = vpop.f32.mrb[0].mxu0
        %v6246 = vadd.f32 0.0, %v6245
        %v6247 = vpop.f32.mrb[0].mxu0
        %6248 = vmatprep.mubr.f32.mxu0 0.0
        %6249 = vmatmul.mubr.f32.gmra.mrb[0].mxu0 %v6028
        %v6250 = vpop.f32.mrb[0].mxu0
        %v6251 = vadd.f32 0.0, %v6250
        %v6252 = vpop.f32.mrb[0].mxu0
        %6253 = vmatprep.mubr.f32.mxu0 0.0
        %6254 = vmatmul.mubr.f32.gmra.mrb[0].mxu0 %v6031
        %v6255 = vpop.f32.mrb[0].mxu0
        %v6256 = vadd.f32 0.0, %v6255
        %v6257 = vpop.f32.mrb[0].mxu0
        %6258 = vmatprep.mubr.f32.mxu0 0.0
        %6259 = vmatmul.mubr.f32.gmra.mrb[0].mxu0 %v6034
        %v6260 = vpop.f32.mrb[0].mxu0
        %v6261 = vadd.f32 0.0, %v6260
        %v6262 = vpop.f32.mrb[0].mxu0
        %6263 = vdwg.mxu0
        %v6264 = vadd.f32 %v5874, %v6106
        %v6265 = vadd.f32 %v5875, %v6111
        %v6266 = vadd.f32 %v5876, %v6116
        %v6267 = vadd.f32 %v5877, %v6121
        %v6268 = vadd.f32 %v5878, %v6126
        %v6269 = vadd.f32 %v5879, %v6131
        %v6270 = vadd.f32 %v5880, %v6136
        %v6271 = vadd.f32 %v5881, %v6141
        %v6272 = vadd.f32 %v5882, %v6146
        %v6273 = vadd.f32 %v5883, %v6151
        %v6274 = vadd.f32 %v5884, %v6156
        %v6275 = vadd.f32 %v5885, %v6161
        %v6276 = vadd.f32 %v5886, %v6166
        %v6277 = vadd.f32 %v5887, %v6171
        %v6278 = vadd.f32 %v5888, %v6176
        %v6279 = vadd.f32 %v5889, %v6181
        %v6280 = vadd.f32 %v5890, %v6186
        %v6281 = vadd.f32 %v5891, %v6191
        %v6282 = vadd.f32 %v5892, %v6196
        %v6283 = vadd.f32 %v5893, %v6201
        %v6284 = vadd.f32 %v5894, %v6206
        %v6285 = vadd.f32 %v5895, %v6211
        %v6286 = vadd.f32 %v5896, %v6216
        %v6287 = vadd.f32 %v5897, %v6221
        %v6288 = vadd.f32 %v5898, %v6226
        %v6289 = vadd.f32 %v5899, %v6231
        %v6290 = vadd.f32 %v5900, %v6236
        %v6291 = vadd.f32 %v5901, %v6241
        %v6292 = vadd.f32 %v5902, %v6246
        %v6293 = vadd.f32 %v5903, %v6251
        %v6294 = vadd.f32 %v5904, %v6256
        %v6295 = vadd.f32 %v5905, %v6261
        %v6296 = vld [vmem:[%s329 + $0x2] sm:$0xff]
        %v6297 = vld [vmem:[%s329 + $0xa] sm:$0xff]
        %v6298 = vld [vmem:[%s329 + $0x1a] sm:$0xff]
        %v6299 = vld [vmem:[%s329 + $0x22] sm:$0xff]
        %v6300 = vld [vmem:[%s329 + $0x32] sm:$0xff]
        %v6301 = vld [vmem:[%s329 + $0x3a] sm:$0xff]
        %v6302 = vld [vmem:[%s329 + $0x4a] sm:$0xff]
        %v6303 = vld [vmem:[%s329 + $0x52] sm:$0xff]
        %v6304 = vld [vmem:[%s329 + $0x62] sm:$0xff]
        %v6305 = vld [vmem:[%s329 + $0x6a] sm:$0xff]
        %v6306 = vld [vmem:[%s329 + $0x7a] sm:$0xff]
        %v6307 = vld [vmem:[%s329 + $0x82] sm:$0xff]
        %v6308 = vld [vmem:[%s329 + $0x92] sm:$0xff]
        %v6309 = vld [vmem:[%s329 + $0x9a] sm:$0xff]
        %v6310 = vld [vmem:[%s329 + $0xaa] sm:$0xff]
        %v6311 = vld [vmem:[%s329 + $0xb2] sm:$0xff]
        %v6312 = vld [vmem:[%s329 + $0xc2] sm:$0xff]
        %v6313 = vld [vmem:[%s329 + $0xca] sm:$0xff]
        %v6314 = vld [vmem:[%s329 + $0xda] sm:$0xff]
        %v6315 = vld [vmem:[%s329 + $0xe2] sm:$0xff]
        %v6316 = vld [vmem:[%s329 + $0xf2] sm:$0xff]
        %v6317 = vld [vmem:[%s329 + $0xfa] sm:$0xff]
        %v6318 = vld [vmem:[%s329 + $0x10a] sm:$0xff]
        %v6319 = vld [vmem:[%s329 + $0x112] sm:$0xff]
        %v6320 = vld [vmem:[%s329 + $0x122] sm:$0xff]
        %v6321 = vld [vmem:[%s329 + $0x12a] sm:$0xff]
        %v6322 = vld [vmem:[%s329 + $0x13a] sm:$0xff]
        %v6323 = vld [vmem:[%s329 + $0x142] sm:$0xff]
        %v6324 = vld [vmem:[%s329 + $0x152] sm:$0xff]
        %v6325 = vld [vmem:[%s329 + $0x15a] sm:$0xff]
        %v6326 = vld [vmem:[%s329 + $0x16a] sm:$0xff]
        %v6327 = vld [vmem:[%s329 + $0x172] sm:$0xff]
        %s6328 = scalar_lea.vmem [#allocation9], 20
        %v6329 = vld [vmem:[%s6328] sm:$0xf]
        %v6331 = vsel %vm330, %v6296, 0
        %v6334 = vsel %vm330, %v6297, 0
        %v6337 = vsel %vm330, %v6298, 0
        %v6340 = vsel %vm330, %v6299, 0
        %v6343 = vsel %vm330, %v6300, 0
        %v6346 = vsel %vm330, %v6301, 0
        %v6349 = vsel %vm330, %v6302, 0
        %v6352 = vsel %vm330, %v6303, 0
        %v6355 = vsel %vm330, %v6304, 0
        %v6358 = vsel %vm330, %v6305, 0
        %v6361 = vsel %vm330, %v6306, 0
        %v6364 = vsel %vm330, %v6307, 0
        %v6367 = vsel %vm330, %v6308, 0
        %v6370 = vsel %vm330, %v6309, 0
        %v6373 = vsel %vm330, %v6310, 0
        %v6376 = vsel %vm330, %v6311, 0
        %v6379 = vsel %vm330, %v6312, 0
        %v6382 = vsel %vm330, %v6313, 0
        %v6385 = vsel %vm330, %v6314, 0
        %v6388 = vsel %vm330, %v6315, 0
        %v6391 = vsel %vm330, %v6316, 0
        %v6394 = vsel %vm330, %v6317, 0
        %v6397 = vsel %vm330, %v6318, 0
        %v6400 = vsel %vm330, %v6319, 0
        %v6403 = vsel %vm330, %v6320, 0
        %v6406 = vsel %vm330, %v6321, 0
        %v6409 = vsel %vm330, %v6322, 0
        %v6412 = vsel %vm330, %v6323, 0
        %v6415 = vsel %vm330, %v6324, 0
        %v6418 = vsel %vm330, %v6325, 0
        %v6421 = vsel %vm330, %v6326, 0
        %v6424 = vsel %vm330, %v6327, 0
        %v6427 = vsel %vm578, %v6329, 0
        %6429 = vmatprep.subr.mxu0 0.0
        %6430 = vmatpush1.msra.mxu0 %v6427
        %6431 = vmatprep.subr.mxu0 0.0
        %6432 = vmatpush1.msra.mxu0 0.0
        %6433 = vmatprep.subr.mxu0 0.0
        %6434 = vmatpush1.msra.mxu0 0.0
        %6435 = vmatprep.subr.mxu0 0.0
        %6436 = vmatpush1.msra.mxu0 0.0
        %6437 = vmatprep.subr.mxu0 0.0
        %6438 = vmatpush1.msra.mxu0 0.0
        %6439 = vmatprep.subr.mxu0 0.0
        %6440 = vmatpush1.msra.mxu0 0.0
        %6441 = vmatprep.subr.mxu0 0.0
        %6442 = vmatpush1.msra.mxu0 0.0
        %6443 = vmatprep.subr.mxu0 0.0
        %6444 = vmatpush1.msra.mxu0 0.0
        %6445 = vmatprep.subr.mxu0 0.0
        %6446 = vmatpush1.msra.mxu0 0.0
        %6447 = vmatprep.subr.mxu0 0.0
        %6448 = vmatpush1.msra.mxu0 0.0
        %6449 = vmatprep.subr.mxu0 0.0
        %6450 = vmatpush1.msra.mxu0 0.0
        %6451 = vmatprep.subr.mxu0 0.0
        %6452 = vmatpush1.msra.mxu0 0.0
        %6453 = vmatprep.subr.mxu0 0.0
        %6454 = vmatpush1.msra.mxu0 0.0
        %6455 = vmatprep.subr.mxu0 0.0
        %6456 = vmatpush1.msra.mxu0 0.0
        %6457 = vmatprep.subr.mxu0 0.0
        %6458 = vmatpush1.msra.mxu0 0.0
        %6459 = vmatprep.subr.mxu0 0.0
        %6460 = vmatpush1.msra.mxu0 0.0
        %6461 = vmatprep.subr.mxu0 0.0
        %6462 = vmatpush1.msra.mxu0 0.0
        %6463 = vmatprep.subr.mxu0 0.0
        %6464 = vmatpush1.msra.mxu0 0.0
        %6465 = vmatprep.subr.mxu0 0.0
        %6466 = vmatpush1.msra.mxu0 0.0
        %6467 = vmatprep.subr.mxu0 0.0
        %6468 = vmatpush1.msra.mxu0 0.0
        %6469 = vmatprep.subr.mxu0 0.0
        %6470 = vmatpush1.msra.mxu0 0.0
        %6471 = vmatprep.subr.mxu0 0.0
        %6472 = vmatpush1.msra.mxu0 0.0
        %6473 = vmatprep.subr.mxu0 0.0
        %6474 = vmatpush1.msra.mxu0 0.0
        %6475 = vmatprep.subr.mxu0 0.0
        %6476 = vmatpush1.msra.mxu0 0.0
        %6477 = vmatprep.subr.mxu0 0.0
        %6478 = vmatpush1.msra.mxu0 0.0
        %6479 = vmatprep.subr.mxu0 0.0
        %6480 = vmatpush1.msra.mxu0 0.0
        %6481 = vmatprep.subr.mxu0 0.0
        %6482 = vmatpush1.msra.mxu0 0.0
        %6483 = vmatprep.subr.mxu0 0.0
        %6484 = vmatpush1.msra.mxu0 0.0
        %6485 = vmatprep.subr.mxu0 0.0
        %6486 = vmatpush1.msra.mxu0 0.0
        %6487 = vmatprep.subr.mxu0 0.0
        %6488 = vmatpush1.msra.mxu0 0.0
        %6489 = vmatprep.subr.mxu0 0.0
        %6490 = vmatpush1.msra.mxu0 0.0
        %6491 = vmatprep.subr.mxu0 0.0
        %6492 = vmatpush1.msra.mxu0 0.0
        %6493 = vmatprep.mubr.f32.mxu0 0.0
        %6494 = vmatmul.mubr.f32.gmra.mrb[0].mxu0 %v6331
        %v6495 = vpop.f32.mrb[0].mxu0
        %v6496 = vadd.f32 0.0, %v6495
        %v6497 = vpop.f32.mrb[0].mxu0
        %6498 = vmatprep.mubr.f32.mxu0 0.0
        %6499 = vmatmul.mubr.f32.gmra.mrb[0].mxu0 %v6334
        %v6500 = vpop.f32.mrb[0].mxu0
        %v6501 = vadd.f32 0.0, %v6500
        %v6502 = vpop.f32.mrb[0].mxu0
        %6503 = vmatprep.mubr.f32.mxu0 0.0
        %6504 = vmatmul.mubr.f32.gmra.mrb[0].mxu0 %v6337
        %v6505 = vpop.f32.mrb[0].mxu0
        %v6506 = vadd.f32 0.0, %v6505
        %v6507 = vpop.f32.mrb[0].mxu0
        %6508 = vmatprep.mubr.f32.mxu0 0.0
        %6509 = vmatmul.mubr.f32.gmra.mrb[0].mxu0 %v6340
        %v6510 = vpop.f32.mrb[0].mxu0
        %v6511 = vadd.f32 0.0, %v6510
        %v6512 = vpop.f32.mrb[0].mxu0
        %6513 = vmatprep.mubr.f32.mxu0 0.0
        %6514 = vmatmul.mubr.f32.gmra.mrb[0].mxu0 %v6343
        %v6515 = vpop.f32.mrb[0].mxu0
        %v6516 = vadd.f32 0.0, %v6515
        %v6517 = vpop.f32.mrb[0].mxu0
        %6518 = vmatprep.mubr.f32.mxu0 0.0
        %6519 = vmatmul.mubr.f32.gmra.mrb[0].mxu0 %v6346
        %v6520 = vpop.f32.mrb[0].mxu0
        %v6521 = vadd.f32 0.0, %v6520
        %v6522 = vpop.f32.mrb[0].mxu0
        %6523 = vmatprep.mubr.f32.mxu0 0.0
        %6524 = vmatmul.mubr.f32.gmra.mrb[0].mxu0 %v6349
        %v6525 = vpop.f32.mrb[0].mxu0
        %v6526 = vadd.f32 0.0, %v6525
        %v6527 = vpop.f32.mrb[0].mxu0
        %6528 = vmatprep.mubr.f32.mxu0 0.0
        %6529 = vmatmul.mubr.f32.gmra.mrb[0].mxu0 %v6352
        %v6530 = vpop.f32.mrb[0].mxu0
        %v6531 = vadd.f32 0.0, %v6530
        %v6532 = vpop.f32.mrb[0].mxu0
        %6533 = vmatprep.mubr.f32.mxu0 0.0
        %6534 = vmatmul.mubr.f32.gmra.mrb[0].mxu0 %v6355
        %v6535 = vpop.f32.mrb[0].mxu0
        %v6536 = vadd.f32 0.0, %v6535
        %v6537 = vpop.f32.mrb[0].mxu0
        %6538 = vmatprep.mubr.f32.mxu0 0.0
        %6539 = vmatmul.mubr.f32.gmra.mrb[0].mxu0 %v6358
        %v6540 = vpop.f32.mrb[0].mxu0
        %v6541 = vadd.f32 0.0, %v6540
        %v6542 = vpop.f32.mrb[0].mxu0
        %6543 = vmatprep.mubr.f32.mxu0 0.0
        %6544 = vmatmul.mubr.f32.gmra.mrb[0].mxu0 %v6361
        %v6545 = vpop.f32.mrb[0].mxu0
        %v6546 = vadd.f32 0.0, %v6545
        %v6547 = vpop.f32.mrb[0].mxu0
        %6548 = vmatprep.mubr.f32.mxu0 0.0
        %6549 = vmatmul.mubr.f32.gmra.mrb[0].mxu0 %v6364
        %v6550 = vpop.f32.mrb[0].mxu0
        %v6551 = vadd.f32 0.0, %v6550
        %v6552 = vpop.f32.mrb[0].mxu0
        %6553 = vmatprep.mubr.f32.mxu0 0.0
        %6554 = vmatmul.mubr.f32.gmra.mrb[0].mxu0 %v6367
        %v6555 = vpop.f32.mrb[0].mxu0
        %v6556 = vadd.f32 0.0, %v6555
        %v6557 = vpop.f32.mrb[0].mxu0
        %6558 = vmatprep.mubr.f32.mxu0 0.0
        %6559 = vmatmul.mubr.f32.gmra.mrb[0].mxu0 %v6370
        %v6560 = vpop.f32.mrb[0].mxu0
        %v6561 = vadd.f32 0.0, %v6560
        %v6562 = vpop.f32.mrb[0].mxu0
        %6563 = vmatprep.mubr.f32.mxu0 0.0
        %6564 = vmatmul.mubr.f32.gmra.mrb[0].mxu0 %v6373
        %v6565 = vpop.f32.mrb[0].mxu0
        %v6566 = vadd.f32 0.0, %v6565
        %v6567 = vpop.f32.mrb[0].mxu0
        %6568 = vmatprep.mubr.f32.mxu0 0.0
        %6569 = vmatmul.mubr.f32.gmra.mrb[0].mxu0 %v6376
        %v6570 = vpop.f32.mrb[0].mxu0
        %v6571 = vadd.f32 0.0, %v6570
        %v6572 = vpop.f32.mrb[0].mxu0
        %6573 = vmatprep.mubr.f32.mxu0 0.0
        %6574 = vmatmul.mubr.f32.gmra.mrb[0].mxu0 %v6379
        %v6575 = vpop.f32.mrb[0].mxu0
        %v6576 = vadd.f32 0.0, %v6575
        %v6577 = vpop.f32.mrb[0].mxu0
        %6578 = vmatprep.mubr.f32.mxu0 0.0
        %6579 = vmatmul.mubr.f32.gmra.mrb[0].mxu0 %v6382
        %v6580 = vpop.f32.mrb[0].mxu0
        %v6581 = vadd.f32 0.0, %v6580
        %v6582 = vpop.f32.mrb[0].mxu0
        %6583 = vmatprep.mubr.f32.mxu0 0.0
        %6584 = vmatmul.mubr.f32.gmra.mrb[0].mxu0 %v6385
        %v6585 = vpop.f32.mrb[0].mxu0
        %v6586 = vadd.f32 0.0, %v6585
        %v6587 = vpop.f32.mrb[0].mxu0
        %6588 = vmatprep.mubr.f32.mxu0 0.0
        %6589 = vmatmul.mubr.f32.gmra.mrb[0].mxu0 %v6388
        %v6590 = vpop.f32.mrb[0].mxu0
        %v6591 = vadd.f32 0.0, %v6590
        %v6592 = vpop.f32.mrb[0].mxu0
        %6593 = vmatprep.mubr.f32.mxu0 0.0
        %6594 = vmatmul.mubr.f32.gmra.mrb[0].mxu0 %v6391
        %v6595 = vpop.f32.mrb[0].mxu0
        %v6596 = vadd.f32 0.0, %v6595
        %v6597 = vpop.f32.mrb[0].mxu0
        %6598 = vmatprep.mubr.f32.mxu0 0.0
        %6599 = vmatmul.mubr.f32.gmra.mrb[0].mxu0 %v6394
        %v6600 = vpop.f32.mrb[0].mxu0
        %v6601 = vadd.f32 0.0, %v6600
        %v6602 = vpop.f32.mrb[0].mxu0
        %6603 = vmatprep.mubr.f32.mxu0 0.0
        %6604 = vmatmul.mubr.f32.gmra.mrb[0].mxu0 %v6397
        %v6605 = vpop.f32.mrb[0].mxu0
        %v6606 = vadd.f32 0.0, %v6605
        %v6607 = vpop.f32.mrb[0].mxu0
        %6608 = vmatprep.mubr.f32.mxu0 0.0
        %6609 = vmatmul.mubr.f32.gmra.mrb[0].mxu0 %v6400
        %v6610 = vpop.f32.mrb[0].mxu0
        %v6611 = vadd.f32 0.0, %v6610
        %v6612 = vpop.f32.mrb[0].mxu0
        %6613 = vmatprep.mubr.f32.mxu0 0.0
        %6614 = vmatmul.mubr.f32.gmra.mrb[0].mxu0 %v6403
        %v6615 = vpop.f32.mrb[0].mxu0
        %v6616 = vadd.f32 0.0, %v6615
        %v6617 = vpop.f32.mrb[0].mxu0
        %6618 = vmatprep.mubr.f32.mxu0 0.0
        %6619 = vmatmul.mubr.f32.gmra.mrb[0].mxu0 %v6406
        %v6620 = vpop.f32.mrb[0].mxu0
        %v6621 = vadd.f32 0.0, %v6620
        %v6622 = vpop.f32.mrb[0].mxu0
        %6623 = vmatprep.mubr.f32.mxu0 0.0
        %6624 = vmatmul.mubr.f32.gmra.mrb[0].mxu0 %v6409
        %v6625 = vpop.f32.mrb[0].mxu0
        %v6626 = vadd.f32 0.0, %v6625
        %v6627 = vpop.f32.mrb[0].mxu0
        %6628 = vmatprep.mubr.f32.mxu0 0.0
        %6629 = vmatmul.mubr.f32.gmra.mrb[0].mxu0 %v6412
        %v6630 = vpop.f32.mrb[0].mxu0
        %v6631 = vadd.f32 0.0, %v6630
        %v6632 = vpop.f32.mrb[0].mxu0
        %6633 = vmatprep.mubr.f32.mxu0 0.0
        %6634 = vmatmul.mubr.f32.gmra.mrb[0].mxu0 %v6415
        %v6635 = vpop.f32.mrb[0].mxu0
        %v6636 = vadd.f32 0.0, %v6635
        %v6637 = vpop.f32.mrb[0].mxu0
        %6638 = vmatprep.mubr.f32.mxu0 0.0
        %6639 = vmatmul.mubr.f32.gmra.mrb[0].mxu0 %v6418
        %v6640 = vpop.f32.mrb[0].mxu0
        %v6641 = vadd.f32 0.0, %v6640
        %v6642 = vpop.f32.mrb[0].mxu0
        %6643 = vmatprep.mubr.f32.mxu0 0.0
        %6644 = vmatmul.mubr.f32.gmra.mrb[0].mxu0 %v6421
        %v6645 = vpop.f32.mrb[0].mxu0
        %v6646 = vadd.f32 0.0, %v6645
        %v6647 = vpop.f32.mrb[0].mxu0
        %6648 = vmatprep.mubr.f32.mxu0 0.0
        %6649 = vmatmul.mubr.f32.gmra.mrb[0].mxu0 %v6424
        %v6650 = vpop.f32.mrb[0].mxu0
        %v6651 = vadd.f32 0.0, %v6650
        %v6652 = vpop.f32.mrb[0].mxu0
        %6653 = vdwg.mxu0
        %v6654 = vadd.f32 %v6264, %v6496
        %v6655 = vadd.f32 %v6265, %v6501
        %v6656 = vadd.f32 %v6266, %v6506
        %v6657 = vadd.f32 %v6267, %v6511
        %v6658 = vadd.f32 %v6268, %v6516
        %v6659 = vadd.f32 %v6269, %v6521
        %v6660 = vadd.f32 %v6270, %v6526
        %v6661 = vadd.f32 %v6271, %v6531
        %v6662 = vadd.f32 %v6272, %v6536
        %v6663 = vadd.f32 %v6273, %v6541
        %v6664 = vadd.f32 %v6274, %v6546
        %v6665 = vadd.f32 %v6275, %v6551
        %v6666 = vadd.f32 %v6276, %v6556
        %v6667 = vadd.f32 %v6277, %v6561
        %v6668 = vadd.f32 %v6278, %v6566
        %v6669 = vadd.f32 %v6279, %v6571
        %v6670 = vadd.f32 %v6280, %v6576
        %v6671 = vadd.f32 %v6281, %v6581
        %v6672 = vadd.f32 %v6282, %v6586
        %v6673 = vadd.f32 %v6283, %v6591
        %v6674 = vadd.f32 %v6284, %v6596
        %v6675 = vadd.f32 %v6285, %v6601
        %v6676 = vadd.f32 %v6286, %v6606
        %v6677 = vadd.f32 %v6287, %v6611
        %v6678 = vadd.f32 %v6288, %v6616
        %v6679 = vadd.f32 %v6289, %v6621
        %v6680 = vadd.f32 %v6290, %v6626
        %v6681 = vadd.f32 %v6291, %v6631
        %v6682 = vadd.f32 %v6292, %v6636
        %v6683 = vadd.f32 %v6293, %v6641
        %v6684 = vadd.f32 %v6294, %v6646
        %v6685 = vadd.f32 %v6295, %v6651
        %v6686 = vld [vmem:[%s2789] sm:$0xff]
        %v6687 = vld [vmem:[%s2789 + $0x8] sm:$0xff]
        %v6688 = vld [vmem:[%s2789 + $0x18] sm:$0xff]
        %v6689 = vld [vmem:[%s2789 + $0x20] sm:$0xff]
        %v6690 = vld [vmem:[%s2789 + $0x30] sm:$0xff]
        %v6691 = vld [vmem:[%s2789 + $0x38] sm:$0xff]
        %v6692 = vld [vmem:[%s2789 + $0x48] sm:$0xff]
        %v6693 = vld [vmem:[%s2789 + $0x50] sm:$0xff]
        %v6694 = vld [vmem:[%s2789 + $0x60] sm:$0xff]
        %v6695 = vld [vmem:[%s2789 + $0x68] sm:$0xff]
        %v6696 = vld [vmem:[%s2789 + $0x78] sm:$0xff]
        %v6697 = vld [vmem:[%s2789 + $0x80] sm:$0xff]
        %v6698 = vld [vmem:[%s2789 + $0x90] sm:$0xff]
        %v6699 = vld [vmem:[%s2789 + $0x98] sm:$0xff]
        %v6700 = vld [vmem:[%s2789 + $0xa8] sm:$0xff]
        %v6701 = vld [vmem:[%s2789 + $0xb0] sm:$0xff]
        %v6702 = vld [vmem:[%s2789 + $0xc0] sm:$0xff]
        %v6703 = vld [vmem:[%s2789 + $0xc8] sm:$0xff]
        %v6704 = vld [vmem:[%s2789 + $0xd8] sm:$0xff]
        %v6705 = vld [vmem:[%s2789 + $0xe0] sm:$0xff]
        %v6706 = vld [vmem:[%s2789 + $0xf0] sm:$0xff]
        %v6707 = vld [vmem:[%s2789 + $0xf8] sm:$0xff]
        %v6708 = vld [vmem:[%s2789 + $0x108] sm:$0xff]
        %v6709 = vld [vmem:[%s2789 + $0x110] sm:$0xff]
        %v6710 = vld [vmem:[%s2789 + $0x120] sm:$0xff]
        %v6711 = vld [vmem:[%s2789 + $0x128] sm:$0xff]
        %v6712 = vld [vmem:[%s2789 + $0x138] sm:$0xff]
        %v6713 = vld [vmem:[%s2789 + $0x140] sm:$0xff]
        %v6714 = vld [vmem:[%s2789 + $0x150] sm:$0xff]
        %v6715 = vld [vmem:[%s2789 + $0x158] sm:$0xff]
        %v6716 = vld [vmem:[%s2789 + $0x168] sm:$0xff]
        %v6717 = vld [vmem:[%s2789 + $0x170] sm:$0xff]
        %s6718 = scalar_lea.vmem [#allocation9], 24
        %v6719 = vld [vmem:[%s6718] sm:$0xf]
        %v6721 = vsel %vm330, %v6686, 0
        %v6724 = vsel %vm330, %v6687, 0
        %v6727 = vsel %vm330, %v6688, 0
        %v6730 = vsel %vm330, %v6689, 0
        %v6733 = vsel %vm330, %v6690, 0
        %v6736 = vsel %vm330, %v6691, 0
        %v6739 = vsel %vm330, %v6692, 0
        %v6742 = vsel %vm330, %v6693, 0
        %v6745 = vsel %vm330, %v6694, 0
        %v6748 = vsel %vm330, %v6695, 0
        %v6751 = vsel %vm330, %v6696, 0
        %v6754 = vsel %vm330, %v6697, 0
        %v6757 = vsel %vm330, %v6698, 0
        %v6760 = vsel %vm330, %v6699, 0
        %v6763 = vsel %vm330, %v6700, 0
        %v6766 = vsel %vm330, %v6701, 0
        %v6769 = vsel %vm330, %v6702, 0
        %v6772 = vsel %vm330, %v6703, 0
        %v6775 = vsel %vm330, %v6704, 0
        %v6778 = vsel %vm330, %v6705, 0
        %v6781 = vsel %vm330, %v6706, 0
        %v6784 = vsel %vm330, %v6707, 0
        %v6787 = vsel %vm330, %v6708, 0
        %v6790 = vsel %vm330, %v6709, 0
        %v6793 = vsel %vm330, %v6710, 0
        %v6796 = vsel %vm330, %v6711, 0
        %v6799 = vsel %vm330, %v6712, 0
        %v6802 = vsel %vm330, %v6713, 0
        %v6805 = vsel %vm330, %v6714, 0
        %v6808 = vsel %vm330, %v6715, 0
        %v6811 = vsel %vm330, %v6716, 0
        %v6814 = vsel %vm330, %v6717, 0
        %v6817 = vsel %vm578, %v6719, 0
        %6819 = vmatprep.subr.mxu0 0.0
        %6820 = vmatpush1.msra.mxu0 %v6817
        %6821 = vmatprep.subr.mxu0 0.0
        %6822 = vmatpush1.msra.mxu0 0.0
        %6823 = vmatprep.subr.mxu0 0.0
        %6824 = vmatpush1.msra.mxu0 0.0
        %6825 = vmatprep.subr.mxu0 0.0
        %6826 = vmatpush1.msra.mxu0 0.0
        %6827 = vmatprep.subr.mxu0 0.0
        %6828 = vmatpush1.msra.mxu0 0.0
        %6829 = vmatprep.subr.mxu0 0.0
        %6830 = vmatpush1.msra.mxu0 0.0
        %6831 = vmatprep.subr.mxu0 0.0
        %6832 = vmatpush1.msra.mxu0 0.0
        %6833 = vmatprep.subr.mxu0 0.0
        %6834 = vmatpush1.msra.mxu0 0.0
        %6835 = vmatprep.subr.mxu0 0.0
        %6836 = vmatpush1.msra.mxu0 0.0
        %6837 = vmatprep.subr.mxu0 0.0
        %6838 = vmatpush1.msra.mxu0 0.0
        %6839 = vmatprep.subr.mxu0 0.0
        %6840 = vmatpush1.msra.mxu0 0.0
        %6841 = vmatprep.subr.mxu0 0.0
        %6842 = vmatpush1.msra.mxu0 0.0
        %6843 = vmatprep.subr.mxu0 0.0
        %6844 = vmatpush1.msra.mxu0 0.0
        %6845 = vmatprep.subr.mxu0 0.0
        %6846 = vmatpush1.msra.mxu0 0.0
        %6847 = vmatprep.subr.mxu0 0.0
        %6848 = vmatpush1.msra.mxu0 0.0
        %6849 = vmatprep.subr.mxu0 0.0
        %6850 = vmatpush1.msra.mxu0 0.0
        %6851 = vmatprep.subr.mxu0 0.0
        %6852 = vmatpush1.msra.mxu0 0.0
        %6853 = vmatprep.subr.mxu0 0.0
        %6854 = vmatpush1.msra.mxu0 0.0
        %6855 = vmatprep.subr.mxu0 0.0
        %6856 = vmatpush1.msra.mxu0 0.0
        %6857 = vmatprep.subr.mxu0 0.0
        %6858 = vmatpush1.msra.mxu0 0.0
        %6859 = vmatprep.subr.mxu0 0.0
        %6860 = vmatpush1.msra.mxu0 0.0
        %6861 = vmatprep.subr.mxu0 0.0
        %6862 = vmatpush1.msra.mxu0 0.0
        %6863 = vmatprep.subr.mxu0 0.0
        %6864 = vmatpush1.msra.mxu0 0.0
        %6865 = vmatprep.subr.mxu0 0.0
        %6866 = vmatpush1.msra.mxu0 0.0
        %6867 = vmatprep.subr.mxu0 0.0
        %6868 = vmatpush1.msra.mxu0 0.0
        %6869 = vmatprep.subr.mxu0 0.0
        %6870 = vmatpush1.msra.mxu0 0.0
        %6871 = vmatprep.subr.mxu0 0.0
        %6872 = vmatpush1.msra.mxu0 0.0
        %6873 = vmatprep.subr.mxu0 0.0
        %6874 = vmatpush1.msra.mxu0 0.0
        %6875 = vmatprep.subr.mxu0 0.0
        %6876 = vmatpush1.msra.mxu0 0.0
        %6877 = vmatprep.subr.mxu0 0.0
        %6878 = vmatpush1.msra.mxu0 0.0
        %6879 = vmatprep.subr.mxu0 0.0
        %6880 = vmatpush1.msra.mxu0 0.0
        %6881 = vmatprep.subr.mxu0 0.0
        %6882 = vmatpush1.msra.mxu0 0.0
        %6883 = vmatprep.mubr.f32.mxu0 0.0
        %6884 = vmatmul.mubr.f32.gmra.mrb[0].mxu0 %v6721
        %v6885 = vpop.f32.mrb[0].mxu0
        %v6886 = vadd.f32 0.0, %v6885
        %v6887 = vpop.f32.mrb[0].mxu0
        %6888 = vmatprep.mubr.f32.mxu0 0.0
        %6889 = vmatmul.mubr.f32.gmra.mrb[0].mxu0 %v6724
        %v6890 = vpop.f32.mrb[0].mxu0
        %v6891 = vadd.f32 0.0, %v6890
        %v6892 = vpop.f32.mrb[0].mxu0
        %6893 = vmatprep.mubr.f32.mxu0 0.0
        %6894 = vmatmul.mubr.f32.gmra.mrb[0].mxu0 %v6727
        %v6895 = vpop.f32.mrb[0].mxu0
        %v6896 = vadd.f32 0.0, %v6895
        %v6897 = vpop.f32.mrb[0].mxu0
        %6898 = vmatprep.mubr.f32.mxu0 0.0
        %6899 = vmatmul.mubr.f32.gmra.mrb[0].mxu0 %v6730
        %v6900 = vpop.f32.mrb[0].mxu0
        %v6901 = vadd.f32 0.0, %v6900
        %v6902 = vpop.f32.mrb[0].mxu0
        %6903 = vmatprep.mubr.f32.mxu0 0.0
        %6904 = vmatmul.mubr.f32.gmra.mrb[0].mxu0 %v6733
        %v6905 = vpop.f32.mrb[0].mxu0
        %v6906 = vadd.f32 0.0, %v6905
        %v6907 = vpop.f32.mrb[0].mxu0
        %6908 = vmatprep.mubr.f32.mxu0 0.0
        %6909 = vmatmul.mubr.f32.gmra.mrb[0].mxu0 %v6736
        %v6910 = vpop.f32.mrb[0].mxu0
        %v6911 = vadd.f32 0.0, %v6910
        %v6912 = vpop.f32.mrb[0].mxu0
        %6913 = vmatprep.mubr.f32.mxu0 0.0
        %6914 = vmatmul.mubr.f32.gmra.mrb[0].mxu0 %v6739
        %v6915 = vpop.f32.mrb[0].mxu0
        %v6916 = vadd.f32 0.0, %v6915
        %v6917 = vpop.f32.mrb[0].mxu0
        %6918 = vmatprep.mubr.f32.mxu0 0.0
        %6919 = vmatmul.mubr.f32.gmra.mrb[0].mxu0 %v6742
        %v6920 = vpop.f32.mrb[0].mxu0
        %v6921 = vadd.f32 0.0, %v6920
        %v6922 = vpop.f32.mrb[0].mxu0
        %6923 = vmatprep.mubr.f32.mxu0 0.0
        %6924 = vmatmul.mubr.f32.gmra.mrb[0].mxu0 %v6745
        %v6925 = vpop.f32.mrb[0].mxu0
        %v6926 = vadd.f32 0.0, %v6925
        %v6927 = vpop.f32.mrb[0].mxu0
        %6928 = vmatprep.mubr.f32.mxu0 0.0
        %6929 = vmatmul.mubr.f32.gmra.mrb[0].mxu0 %v6748
        %v6930 = vpop.f32.mrb[0].mxu0
        %v6931 = vadd.f32 0.0, %v6930
        %v6932 = vpop.f32.mrb[0].mxu0
        %6933 = vmatprep.mubr.f32.mxu0 0.0
        %6934 = vmatmul.mubr.f32.gmra.mrb[0].mxu0 %v6751
        %v6935 = vpop.f32.mrb[0].mxu0
        %v6936 = vadd.f32 0.0, %v6935
        %v6937 = vpop.f32.mrb[0].mxu0
        %6938 = vmatprep.mubr.f32.mxu0 0.0
        %6939 = vmatmul.mubr.f32.gmra.mrb[0].mxu0 %v6754
        %v6940 = vpop.f32.mrb[0].mxu0
        %v6941 = vadd.f32 0.0, %v6940
        %v6942 = vpop.f32.mrb[0].mxu0
        %6943 = vmatprep.mubr.f32.mxu0 0.0
        %6944 = vmatmul.mubr.f32.gmra.mrb[0].mxu0 %v6757
        %v6945 = vpop.f32.mrb[0].mxu0
        %v6946 = vadd.f32 0.0, %v6945
        %v6947 = vpop.f32.mrb[0].mxu0
        %6948 = vmatprep.mubr.f32.mxu0 0.0
        %6949 = vmatmul.mubr.f32.gmra.mrb[0].mxu0 %v6760
        %v6950 = vpop.f32.mrb[0].mxu0
        %v6951 = vadd.f32 0.0, %v6950
        %v6952 = vpop.f32.mrb[0].mxu0
        %6953 = vmatprep.mubr.f32.mxu0 0.0
        %6954 = vmatmul.mubr.f32.gmra.mrb[0].mxu0 %v6763
        %v6955 = vpop.f32.mrb[0].mxu0
        %v6956 = vadd.f32 0.0, %v6955
        %v6957 = vpop.f32.mrb[0].mxu0
        %6958 = vmatprep.mubr.f32.mxu0 0.0
        %6959 = vmatmul.mubr.f32.gmra.mrb[0].mxu0 %v6766
        %v6960 = vpop.f32.mrb[0].mxu0
        %v6961 = vadd.f32 0.0, %v6960
        %v6962 = vpop.f32.mrb[0].mxu0
        %6963 = vmatprep.mubr.f32.mxu0 0.0
        %6964 = vmatmul.mubr.f32.gmra.mrb[0].mxu0 %v6769
        %v6965 = vpop.f32.mrb[0].mxu0
        %v6966 = vadd.f32 0.0, %v6965
        %v6967 = vpop.f32.mrb[0].mxu0
        %6968 = vmatprep.mubr.f32.mxu0 0.0
        %6969 = vmatmul.mubr.f32.gmra.mrb[0].mxu0 %v6772
        %v6970 = vpop.f32.mrb[0].mxu0
        %v6971 = vadd.f32 0.0, %v6970
        %v6972 = vpop.f32.mrb[0].mxu0
        %6973 = vmatprep.mubr.f32.mxu0 0.0
        %6974 = vmatmul.mubr.f32.gmra.mrb[0].mxu0 %v6775
        %v6975 = vpop.f32.mrb[0].mxu0
        %v6976 = vadd.f32 0.0, %v6975
        %v6977 = vpop.f32.mrb[0].mxu0
        %6978 = vmatprep.mubr.f32.mxu0 0.0
        %6979 = vmatmul.mubr.f32.gmra.mrb[0].mxu0 %v6778
        %v6980 = vpop.f32.mrb[0].mxu0
        %v6981 = vadd.f32 0.0, %v6980
        %v6982 = vpop.f32.mrb[0].mxu0
        %6983 = vmatprep.mubr.f32.mxu0 0.0
        %6984 = vmatmul.mubr.f32.gmra.mrb[0].mxu0 %v6781
        %v6985 = vpop.f32.mrb[0].mxu0
        %v6986 = vadd.f32 0.0, %v6985
        %v6987 = vpop.f32.mrb[0].mxu0
        %6988 = vmatprep.mubr.f32.mxu0 0.0
        %6989 = vmatmul.mubr.f32.gmra.mrb[0].mxu0 %v6784
        %v6990 = vpop.f32.mrb[0].mxu0
        %v6991 = vadd.f32 0.0, %v6990
        %v6992 = vpop.f32.mrb[0].mxu0
        %6993 = vmatprep.mubr.f32.mxu0 0.0
        %6994 = vmatmul.mubr.f32.gmra.mrb[0].mxu0 %v6787
        %v6995 = vpop.f32.mrb[0].mxu0
        %v6996 = vadd.f32 0.0, %v6995
        %v6997 = vpop.f32.mrb[0].mxu0
        %6998 = vmatprep.mubr.f32.mxu0 0.0
        %6999 = vmatmul.mubr.f32.gmra.mrb[0].mxu0 %v6790
        %v7000 = vpop.f32.mrb[0].mxu0
        %v7001 = vadd.f32 0.0, %v7000
        %v7002 = vpop.f32.mrb[0].mxu0
        %7003 = vmatprep.mubr.f32.mxu0 0.0
        %7004 = vmatmul.mubr.f32.gmra.mrb[0].mxu0 %v6793
        %v7005 = vpop.f32.mrb[0].mxu0
        %v7006 = vadd.f32 0.0, %v7005
        %v7007 = vpop.f32.mrb[0].mxu0
        %7008 = vmatprep.mubr.f32.mxu0 0.0
        %7009 = vmatmul.mubr.f32.gmra.mrb[0].mxu0 %v6796
        %v7010 = vpop.f32.mrb[0].mxu0
        %v7011 = vadd.f32 0.0, %v7010
        %v7012 = vpop.f32.mrb[0].mxu0
        %7013 = vmatprep.mubr.f32.mxu0 0.0
        %7014 = vmatmul.mubr.f32.gmra.mrb[0].mxu0 %v6799
        %v7015 = vpop.f32.mrb[0].mxu0
        %v7016 = vadd.f32 0.0, %v7015
        %v7017 = vpop.f32.mrb[0].mxu0
        %7018 = vmatprep.mubr.f32.mxu0 0.0
        %7019 = vmatmul.mubr.f32.gmra.mrb[0].mxu0 %v6802
        %v7020 = vpop.f32.mrb[0].mxu0
        %v7021 = vadd.f32 0.0, %v7020
        %v7022 = vpop.f32.mrb[0].mxu0
        %7023 = vmatprep.mubr.f32.mxu0 0.0
        %7024 = vmatmul.mubr.f32.gmra.mrb[0].mxu0 %v6805
        %v7025 = vpop.f32.mrb[0].mxu0
        %v7026 = vadd.f32 0.0, %v7025
        %v7027 = vpop.f32.mrb[0].mxu0
        %7028 = vmatprep.mubr.f32.mxu0 0.0
        %7029 = vmatmul.mubr.f32.gmra.mrb[0].mxu0 %v6808
        %v7030 = vpop.f32.mrb[0].mxu0
        %v7031 = vadd.f32 0.0, %v7030
        %v7032 = vpop.f32.mrb[0].mxu0
        %7033 = vmatprep.mubr.f32.mxu0 0.0
        %7034 = vmatmul.mubr.f32.gmra.mrb[0].mxu0 %v6811
        %v7035 = vpop.f32.mrb[0].mxu0
        %v7036 = vadd.f32 0.0, %v7035
        %v7037 = vpop.f32.mrb[0].mxu0
        %7038 = vmatprep.mubr.f32.mxu0 0.0
        %7039 = vmatmul.mubr.f32.gmra.mrb[0].mxu0 %v6814
        %v7040 = vpop.f32.mrb[0].mxu0
        %v7041 = vadd.f32 0.0, %v7040
        %v7042 = vpop.f32.mrb[0].mxu0
        %7043 = vdwg.mxu0
        %v7044 = vadd.f32 %v6654, %v6886
        %v7045 = vadd.f32 %v6655, %v6891
        %v7046 = vadd.f32 %v6656, %v6896
        %v7047 = vadd.f32 %v6657, %v6901
        %v7048 = vadd.f32 %v6658, %v6906
        %v7049 = vadd.f32 %v6659, %v6911
        %v7050 = vadd.f32 %v6660, %v6916
        %v7051 = vadd.f32 %v6661, %v6921
        %v7052 = vadd.f32 %v6662, %v6926
        %v7053 = vadd.f32 %v6663, %v6931
        %v7054 = vadd.f32 %v6664, %v6936
        %v7055 = vadd.f32 %v6665, %v6941
        %v7056 = vadd.f32 %v6666, %v6946
        %v7057 = vadd.f32 %v6667, %v6951
        %v7058 = vadd.f32 %v6668, %v6956
        %v7059 = vadd.f32 %v6669, %v6961
        %v7060 = vadd.f32 %v6670, %v6966
        %v7061 = vadd.f32 %v6671, %v6971
        %v7062 = vadd.f32 %v6672, %v6976
        %v7063 = vadd.f32 %v6673, %v6981
        %v7064 = vadd.f32 %v6674, %v6986
        %v7065 = vadd.f32 %v6675, %v6991
        %v7066 = vadd.f32 %v6676, %v6996
        %v7067 = vadd.f32 %v6677, %v7001
        %v7068 = vadd.f32 %v6678, %v7006
        %v7069 = vadd.f32 %v6679, %v7011
        %v7070 = vadd.f32 %v6680, %v7016
        %v7071 = vadd.f32 %v6681, %v7021
        %v7072 = vadd.f32 %v6682, %v7026
        %v7073 = vadd.f32 %v6683, %v7031
        %v7074 = vadd.f32 %v6684, %v7036
        %v7075 = vadd.f32 %v6685, %v7041
        %v7076 = vld [vmem:[%s2789 + $0x1] sm:$0xff]
        %v7077 = vld [vmem:[%s2789 + $0x9] sm:$0xff]
        %v7078 = vld [vmem:[%s2789 + $0x19] sm:$0xff]
        %v7079 = vld [vmem:[%s2789 + $0x21] sm:$0xff]
        %v7080 = vld [vmem:[%s2789 + $0x31] sm:$0xff]
        %v7081 = vld [vmem:[%s2789 + $0x39] sm:$0xff]
        %v7082 = vld [vmem:[%s2789 + $0x49] sm:$0xff]
        %v7083 = vld [vmem:[%s2789 + $0x51] sm:$0xff]
        %v7084 = vld [vmem:[%s2789 + $0x61] sm:$0xff]
        %v7085 = vld [vmem:[%s2789 + $0x69] sm:$0xff]
        %v7086 = vld [vmem:[%s2789 + $0x79] sm:$0xff]
        %v7087 = vld [vmem:[%s2789 + $0x81] sm:$0xff]
        %v7088 = vld [vmem:[%s2789 + $0x91] sm:$0xff]
        %v7089 = vld [vmem:[%s2789 + $0x99] sm:$0xff]
        %v7090 = vld [vmem:[%s2789 + $0xa9] sm:$0xff]
        %v7091 = vld [vmem:[%s2789 + $0xb1] sm:$0xff]
        %v7092 = vld [vmem:[%s2789 + $0xc1] sm:$0xff]
        %v7093 = vld [vmem:[%s2789 + $0xc9] sm:$0xff]
        %v7094 = vld [vmem:[%s2789 + $0xd9] sm:$0xff]
        %v7095 = vld [vmem:[%s2789 + $0xe1] sm:$0xff]
        %v7096 = vld [vmem:[%s2789 + $0xf1] sm:$0xff]
        %v7097 = vld [vmem:[%s2789 + $0xf9] sm:$0xff]
        %v7098 = vld [vmem:[%s2789 + $0x109] sm:$0xff]
        %v7099 = vld [vmem:[%s2789 + $0x111] sm:$0xff]
        %v7100 = vld [vmem:[%s2789 + $0x121] sm:$0xff]
        %v7101 = vld [vmem:[%s2789 + $0x129] sm:$0xff]
        %v7102 = vld [vmem:[%s2789 + $0x139] sm:$0xff]
        %v7103 = vld [vmem:[%s2789 + $0x141] sm:$0xff]
        %v7104 = vld [vmem:[%s2789 + $0x151] sm:$0xff]
        %v7105 = vld [vmem:[%s2789 + $0x159] sm:$0xff]
        %v7106 = vld [vmem:[%s2789 + $0x169] sm:$0xff]
        %v7107 = vld [vmem:[%s2789 + $0x171] sm:$0xff]
        %s7108 = scalar_lea.vmem [#allocation9], 28
        %v7109 = vld [vmem:[%s7108] sm:$0xf]
        %v7111 = vsel %vm330, %v7076, 0
        %v7114 = vsel %vm330, %v7077, 0
        %v7117 = vsel %vm330, %v7078, 0
        %v7120 = vsel %vm330, %v7079, 0
        %v7123 = vsel %vm330, %v7080, 0
        %v7126 = vsel %vm330, %v7081, 0
        %v7129 = vsel %vm330, %v7082, 0
        %v7132 = vsel %vm330, %v7083, 0
        %v7135 = vsel %vm330, %v7084, 0
        %v7138 = vsel %vm330, %v7085, 0
        %v7141 = vsel %vm330, %v7086, 0
        %v7144 = vsel %vm330, %v7087, 0
        %v7147 = vsel %vm330, %v7088, 0
        %v7150 = vsel %vm330, %v7089, 0
        %v7153 = vsel %vm330, %v7090, 0
        %v7156 = vsel %vm330, %v7091, 0
        %v7159 = vsel %vm330, %v7092, 0
        %v7162 = vsel %vm330, %v7093, 0
        %v7165 = vsel %vm330, %v7094, 0
        %v7168 = vsel %vm330, %v7095, 0
        %v7171 = vsel %vm330, %v7096, 0
        %v7174 = vsel %vm330, %v7097, 0
        %v7177 = vsel %vm330, %v7098, 0
        %v7180 = vsel %vm330, %v7099, 0
        %v7183 = vsel %vm330, %v7100, 0
        %v7186 = vsel %vm330, %v7101, 0
        %v7189 = vsel %vm330, %v7102, 0
        %v7192 = vsel %vm330, %v7103, 0
        %v7195 = vsel %vm330, %v7104, 0
        %v7198 = vsel %vm330, %v7105, 0
        %v7201 = vsel %vm330, %v7106, 0
        %v7204 = vsel %vm330, %v7107, 0
        %v7207 = vsel %vm578, %v7109, 0
        %7209 = vmatprep.subr.mxu0 0.0
        %7210 = vmatpush1.msra.mxu0 %v7207
        %7211 = vmatprep.subr.mxu0 0.0
        %7212 = vmatpush1.msra.mxu0 0.0
        %7213 = vmatprep.subr.mxu0 0.0
        %7214 = vmatpush1.msra.mxu0 0.0
        %7215 = vmatprep.subr.mxu0 0.0
        %7216 = vmatpush1.msra.mxu0 0.0
        %7217 = vmatprep.subr.mxu0 0.0
        %7218 = vmatpush1.msra.mxu0 0.0
        %7219 = vmatprep.subr.mxu0 0.0
        %7220 = vmatpush1.msra.mxu0 0.0
        %7221 = vmatprep.subr.mxu0 0.0
        %7222 = vmatpush1.msra.mxu0 0.0
        %7223 = vmatprep.subr.mxu0 0.0
        %7224 = vmatpush1.msra.mxu0 0.0
        %7225 = vmatprep.subr.mxu0 0.0
        %7226 = vmatpush1.msra.mxu0 0.0
        %7227 = vmatprep.subr.mxu0 0.0
        %7228 = vmatpush1.msra.mxu0 0.0
        %7229 = vmatprep.subr.mxu0 0.0
        %7230 = vmatpush1.msra.mxu0 0.0
        %7231 = vmatprep.subr.mxu0 0.0
        %7232 = vmatpush1.msra.mxu0 0.0
        %7233 = vmatprep.subr.mxu0 0.0
        %7234 = vmatpush1.msra.mxu0 0.0
        %7235 = vmatprep.subr.mxu0 0.0
        %7236 = vmatpush1.msra.mxu0 0.0
        %7237 = vmatprep.subr.mxu0 0.0
        %7238 = vmatpush1.msra.mxu0 0.0
        %7239 = vmatprep.subr.mxu0 0.0
        %7240 = vmatpush1.msra.mxu0 0.0
        %7241 = vmatprep.subr.mxu0 0.0
        %7242 = vmatpush1.msra.mxu0 0.0
        %7243 = vmatprep.subr.mxu0 0.0
        %7244 = vmatpush1.msra.mxu0 0.0
        %7245 = vmatprep.subr.mxu0 0.0
        %7246 = vmatpush1.msra.mxu0 0.0
        %7247 = vmatprep.subr.mxu0 0.0
        %7248 = vmatpush1.msra.mxu0 0.0
        %7249 = vmatprep.subr.mxu0 0.0
        %7250 = vmatpush1.msra.mxu0 0.0
        %7251 = vmatprep.subr.mxu0 0.0
        %7252 = vmatpush1.msra.mxu0 0.0
        %7253 = vmatprep.subr.mxu0 0.0
        %7254 = vmatpush1.msra.mxu0 0.0
        %7255 = vmatprep.subr.mxu0 0.0
        %7256 = vmatpush1.msra.mxu0 0.0
        %7257 = vmatprep.subr.mxu0 0.0
        %7258 = vmatpush1.msra.mxu0 0.0
        %7259 = vmatprep.subr.mxu0 0.0
        %7260 = vmatpush1.msra.mxu0 0.0
        %7261 = vmatprep.subr.mxu0 0.0
        %7262 = vmatpush1.msra.mxu0 0.0
        %7263 = vmatprep.subr.mxu0 0.0
        %7264 = vmatpush1.msra.mxu0 0.0
        %7265 = vmatprep.subr.mxu0 0.0
        %7266 = vmatpush1.msra.mxu0 0.0
        %7267 = vmatprep.subr.mxu0 0.0
        %7268 = vmatpush1.msra.mxu0 0.0
        %7269 = vmatprep.subr.mxu0 0.0
        %7270 = vmatpush1.msra.mxu0 0.0
        %7271 = vmatprep.subr.mxu0 0.0
        %7272 = vmatpush1.msra.mxu0 0.0
        %7273 = vmatprep.mubr.f32.mxu0 0.0
        %7274 = vmatmul.mubr.f32.gmra.mrb[0].mxu0 %v7111
        %v7275 = vpop.f32.mrb[0].mxu0
        %v7276 = vadd.f32 0.0, %v7275
        %v7277 = vpop.f32.mrb[0].mxu0
        %7278 = vmatprep.mubr.f32.mxu0 0.0
        %7279 = vmatmul.mubr.f32.gmra.mrb[0].mxu0 %v7114
        %v7280 = vpop.f32.mrb[0].mxu0
        %v7281 = vadd.f32 0.0, %v7280
        %v7282 = vpop.f32.mrb[0].mxu0
        %7283 = vmatprep.mubr.f32.mxu0 0.0
        %7284 = vmatmul.mubr.f32.gmra.mrb[0].mxu0 %v7117
        %v7285 = vpop.f32.mrb[0].mxu0
        %v7286 = vadd.f32 0.0, %v7285
        %v7287 = vpop.f32.mrb[0].mxu0
        %7288 = vmatprep.mubr.f32.mxu0 0.0
        %7289 = vmatmul.mubr.f32.gmra.mrb[0].mxu0 %v7120
        %v7290 = vpop.f32.mrb[0].mxu0
        %v7291 = vadd.f32 0.0, %v7290
        %v7292 = vpop.f32.mrb[0].mxu0
        %7293 = vmatprep.mubr.f32.mxu0 0.0
        %7294 = vmatmul.mubr.f32.gmra.mrb[0].mxu0 %v7123
        %v7295 = vpop.f32.mrb[0].mxu0
        %v7296 = vadd.f32 0.0, %v7295
        %v7297 = vpop.f32.mrb[0].mxu0
        %7298 = vmatprep.mubr.f32.mxu0 0.0
        %7299 = vmatmul.mubr.f32.gmra.mrb[0].mxu0 %v7126
        %v7300 = vpop.f32.mrb[0].mxu0
        %v7301 = vadd.f32 0.0, %v7300
        %v7302 = vpop.f32.mrb[0].mxu0
        %7303 = vmatprep.mubr.f32.mxu0 0.0
        %7304 = vmatmul.mubr.f32.gmra.mrb[0].mxu0 %v7129
        %v7305 = vpop.f32.mrb[0].mxu0
        %v7306 = vadd.f32 0.0, %v7305
        %v7307 = vpop.f32.mrb[0].mxu0
        %7308 = vmatprep.mubr.f32.mxu0 0.0
        %7309 = vmatmul.mubr.f32.gmra.mrb[0].mxu0 %v7132
        %v7310 = vpop.f32.mrb[0].mxu0
        %v7311 = vadd.f32 0.0, %v7310
        %v7312 = vpop.f32.mrb[0].mxu0
        %7313 = vmatprep.mubr.f32.mxu0 0.0
        %7314 = vmatmul.mubr.f32.gmra.mrb[0].mxu0 %v7135
        %v7315 = vpop.f32.mrb[0].mxu0
        %v7316 = vadd.f32 0.0, %v7315
        %v7317 = vpop.f32.mrb[0].mxu0
        %7318 = vmatprep.mubr.f32.mxu0 0.0
        %7319 = vmatmul.mubr.f32.gmra.mrb[0].mxu0 %v7138
        %v7320 = vpop.f32.mrb[0].mxu0
        %v7321 = vadd.f32 0.0, %v7320
        %v7322 = vpop.f32.mrb[0].mxu0
        %7323 = vmatprep.mubr.f32.mxu0 0.0
        %7324 = vmatmul.mubr.f32.gmra.mrb[0].mxu0 %v7141
        %v7325 = vpop.f32.mrb[0].mxu0
        %v7326 = vadd.f32 0.0, %v7325
        %v7327 = vpop.f32.mrb[0].mxu0
        %7328 = vmatprep.mubr.f32.mxu0 0.0
        %7329 = vmatmul.mubr.f32.gmra.mrb[0].mxu0 %v7144
        %v7330 = vpop.f32.mrb[0].mxu0
        %v7331 = vadd.f32 0.0, %v7330
        %v7332 = vpop.f32.mrb[0].mxu0
        %7333 = vmatprep.mubr.f32.mxu0 0.0
        %7334 = vmatmul.mubr.f32.gmra.mrb[0].mxu0 %v7147
        %v7335 = vpop.f32.mrb[0].mxu0
        %v7336 = vadd.f32 0.0, %v7335
        %v7337 = vpop.f32.mrb[0].mxu0
        %7338 = vmatprep.mubr.f32.mxu0 0.0
        %7339 = vmatmul.mubr.f32.gmra.mrb[0].mxu0 %v7150
        %v7340 = vpop.f32.mrb[0].mxu0
        %v7341 = vadd.f32 0.0, %v7340
        %v7342 = vpop.f32.mrb[0].mxu0
        %7343 = vmatprep.mubr.f32.mxu0 0.0
        %7344 = vmatmul.mubr.f32.gmra.mrb[0].mxu0 %v7153
        %v7345 = vpop.f32.mrb[0].mxu0
        %v7346 = vadd.f32 0.0, %v7345
        %v7347 = vpop.f32.mrb[0].mxu0
        %7348 = vmatprep.mubr.f32.mxu0 0.0
        %7349 = vmatmul.mubr.f32.gmra.mrb[0].mxu0 %v7156
        %v7350 = vpop.f32.mrb[0].mxu0
        %v7351 = vadd.f32 0.0, %v7350
        %v7352 = vpop.f32.mrb[0].mxu0
        %7353 = vmatprep.mubr.f32.mxu0 0.0
        %7354 = vmatmul.mubr.f32.gmra.mrb[0].mxu0 %v7159
        %v7355 = vpop.f32.mrb[0].mxu0
        %v7356 = vadd.f32 0.0, %v7355
        %v7357 = vpop.f32.mrb[0].mxu0
        %7358 = vmatprep.mubr.f32.mxu0 0.0
        %7359 = vmatmul.mubr.f32.gmra.mrb[0].mxu0 %v7162
        %v7360 = vpop.f32.mrb[0].mxu0
        %v7361 = vadd.f32 0.0, %v7360
        %v7362 = vpop.f32.mrb[0].mxu0
        %7363 = vmatprep.mubr.f32.mxu0 0.0
        %7364 = vmatmul.mubr.f32.gmra.mrb[0].mxu0 %v7165
        %v7365 = vpop.f32.mrb[0].mxu0
        %v7366 = vadd.f32 0.0, %v7365
        %v7367 = vpop.f32.mrb[0].mxu0
        %7368 = vmatprep.mubr.f32.mxu0 0.0
        %7369 = vmatmul.mubr.f32.gmra.mrb[0].mxu0 %v7168
        %v7370 = vpop.f32.mrb[0].mxu0
        %v7371 = vadd.f32 0.0, %v7370
        %v7372 = vpop.f32.mrb[0].mxu0
        %7373 = vmatprep.mubr.f32.mxu0 0.0
        %7374 = vmatmul.mubr.f32.gmra.mrb[0].mxu0 %v7171
        %v7375 = vpop.f32.mrb[0].mxu0
        %v7376 = vadd.f32 0.0, %v7375
        %v7377 = vpop.f32.mrb[0].mxu0
        %7378 = vmatprep.mubr.f32.mxu0 0.0
        %7379 = vmatmul.mubr.f32.gmra.mrb[0].mxu0 %v7174
        %v7380 = vpop.f32.mrb[0].mxu0
        %v7381 = vadd.f32 0.0, %v7380
        %v7382 = vpop.f32.mrb[0].mxu0
        %7383 = vmatprep.mubr.f32.mxu0 0.0
        %7384 = vmatmul.mubr.f32.gmra.mrb[0].mxu0 %v7177
        %v7385 = vpop.f32.mrb[0].mxu0
        %v7386 = vadd.f32 0.0, %v7385
        %v7387 = vpop.f32.mrb[0].mxu0
        %7388 = vmatprep.mubr.f32.mxu0 0.0
        %7389 = vmatmul.mubr.f32.gmra.mrb[0].mxu0 %v7180
        %v7390 = vpop.f32.mrb[0].mxu0
        %v7391 = vadd.f32 0.0, %v7390
        %v7392 = vpop.f32.mrb[0].mxu0
        %7393 = vmatprep.mubr.f32.mxu0 0.0
        %7394 = vmatmul.mubr.f32.gmra.mrb[0].mxu0 %v7183
        %v7395 = vpop.f32.mrb[0].mxu0
        %v7396 = vadd.f32 0.0, %v7395
        %v7397 = vpop.f32.mrb[0].mxu0
        %7398 = vmatprep.mubr.f32.mxu0 0.0
        %7399 = vmatmul.mubr.f32.gmra.mrb[0].mxu0 %v7186
        %v7400 = vpop.f32.mrb[0].mxu0
        %v7401 = vadd.f32 0.0, %v7400
        %v7402 = vpop.f32.mrb[0].mxu0
        %7403 = vmatprep.mubr.f32.mxu0 0.0
        %7404 = vmatmul.mubr.f32.gmra.mrb[0].mxu0 %v7189
        %v7405 = vpop.f32.mrb[0].mxu0
        %v7406 = vadd.f32 0.0, %v7405
        %v7407 = vpop.f32.mrb[0].mxu0
        %7408 = vmatprep.mubr.f32.mxu0 0.0
        %7409 = vmatmul.mubr.f32.gmra.mrb[0].mxu0 %v7192
        %v7410 = vpop.f32.mrb[0].mxu0
        %v7411 = vadd.f32 0.0, %v7410
        %v7412 = vpop.f32.mrb[0].mxu0
        %7413 = vmatprep.mubr.f32.mxu0 0.0
        %7414 = vmatmul.mubr.f32.gmra.mrb[0].mxu0 %v7195
        %v7415 = vpop.f32.mrb[0].mxu0
        %v7416 = vadd.f32 0.0, %v7415
        %v7417 = vpop.f32.mrb[0].mxu0
        %7418 = vmatprep.mubr.f32.mxu0 0.0
        %7419 = vmatmul.mubr.f32.gmra.mrb[0].mxu0 %v7198
        %v7420 = vpop.f32.mrb[0].mxu0
        %v7421 = vadd.f32 0.0, %v7420
        %v7422 = vpop.f32.mrb[0].mxu0
        %7423 = vmatprep.mubr.f32.mxu0 0.0
        %7424 = vmatmul.mubr.f32.gmra.mrb[0].mxu0 %v7201
        %v7425 = vpop.f32.mrb[0].mxu0
        %v7426 = vadd.f32 0.0, %v7425
        %v7427 = vpop.f32.mrb[0].mxu0
        %7428 = vmatprep.mubr.f32.mxu0 0.0
        %7429 = vmatmul.mubr.f32.gmra.mrb[0].mxu0 %v7204
        %v7430 = vpop.f32.mrb[0].mxu0
        %v7431 = vadd.f32 0.0, %v7430
        %v7432 = vpop.f32.mrb[0].mxu0
        %7433 = vdwg.mxu0
        %v7434 = vadd.f32 %v7044, %v7276
        %v7435 = vadd.f32 %v7045, %v7281
        %v7436 = vadd.f32 %v7046, %v7286
        %v7437 = vadd.f32 %v7047, %v7291
        %v7438 = vadd.f32 %v7048, %v7296
        %v7439 = vadd.f32 %v7049, %v7301
        %v7440 = vadd.f32 %v7050, %v7306
        %v7441 = vadd.f32 %v7051, %v7311
        %v7442 = vadd.f32 %v7052, %v7316
        %v7443 = vadd.f32 %v7053, %v7321
        %v7444 = vadd.f32 %v7054, %v7326
        %v7445 = vadd.f32 %v7055, %v7331
        %v7446 = vadd.f32 %v7056, %v7336
        %v7447 = vadd.f32 %v7057, %v7341
        %v7448 = vadd.f32 %v7058, %v7346
        %v7449 = vadd.f32 %v7059, %v7351
        %v7450 = vadd.f32 %v7060, %v7356
        %v7451 = vadd.f32 %v7061, %v7361
        %v7452 = vadd.f32 %v7062, %v7366
        %v7453 = vadd.f32 %v7063, %v7371
        %v7454 = vadd.f32 %v7064, %v7376
        %v7455 = vadd.f32 %v7065, %v7381
        %v7456 = vadd.f32 %v7066, %v7386
        %v7457 = vadd.f32 %v7067, %v7391
        %v7458 = vadd.f32 %v7068, %v7396
        %v7459 = vadd.f32 %v7069, %v7401
        %v7460 = vadd.f32 %v7070, %v7406
        %v7461 = vadd.f32 %v7071, %v7411
        %v7462 = vadd.f32 %v7072, %v7416
        %v7463 = vadd.f32 %v7073, %v7421
        %v7464 = vadd.f32 %v7074, %v7426
        %v7465 = vadd.f32 %v7075, %v7431
        %v7466 = vld [vmem:[%s2789 + $0x2] sm:$0xff]
        %v7467 = vld [vmem:[%s2789 + $0xa] sm:$0xff]
        %v7468 = vld [vmem:[%s2789 + $0x1a] sm:$0xff]
        %v7469 = vld [vmem:[%s2789 + $0x22] sm:$0xff]
        %v7470 = vld [vmem:[%s2789 + $0x32] sm:$0xff]
        %v7471 = vld [vmem:[%s2789 + $0x3a] sm:$0xff]
        %v7472 = vld [vmem:[%s2789 + $0x4a] sm:$0xff]
        %v7473 = vld [vmem:[%s2789 + $0x52] sm:$0xff]
        %v7474 = vld [vmem:[%s2789 + $0x62] sm:$0xff]
        %v7475 = vld [vmem:[%s2789 + $0x6a] sm:$0xff]
        %v7476 = vld [vmem:[%s2789 + $0x7a] sm:$0xff]
        %v7477 = vld [vmem:[%s2789 + $0x82] sm:$0xff]
        %v7478 = vld [vmem:[%s2789 + $0x92] sm:$0xff]
        %v7479 = vld [vmem:[%s2789 + $0x9a] sm:$0xff]
        %v7480 = vld [vmem:[%s2789 + $0xaa] sm:$0xff]
        %v7481 = vld [vmem:[%s2789 + $0xb2] sm:$0xff]
        %v7482 = vld [vmem:[%s2789 + $0xc2] sm:$0xff]
        %v7483 = vld [vmem:[%s2789 + $0xca] sm:$0xff]
        %v7484 = vld [vmem:[%s2789 + $0xda] sm:$0xff]
        %v7485 = vld [vmem:[%s2789 + $0xe2] sm:$0xff]
        %v7486 = vld [vmem:[%s2789 + $0xf2] sm:$0xff]
        %v7487 = vld [vmem:[%s2789 + $0xfa] sm:$0xff]
        %v7488 = vld [vmem:[%s2789 + $0x10a] sm:$0xff]
        %v7489 = vld [vmem:[%s2789 + $0x112] sm:$0xff]
        %v7490 = vld [vmem:[%s2789 + $0x122] sm:$0xff]
        %v7491 = vld [vmem:[%s2789 + $0x12a] sm:$0xff]
        %v7492 = vld [vmem:[%s2789 + $0x13a] sm:$0xff]
        %v7493 = vld [vmem:[%s2789 + $0x142] sm:$0xff]
        %v7494 = vld [vmem:[%s2789 + $0x152] sm:$0xff]
        %v7495 = vld [vmem:[%s2789 + $0x15a] sm:$0xff]
        %v7496 = vld [vmem:[%s2789 + $0x16a] sm:$0xff]
        %v7497 = vld [vmem:[%s2789 + $0x172] sm:$0xff]
        %s7498 = scalar_lea.vmem [#allocation9], 32
        %v7499 = vld [vmem:[%s7498] sm:$0xf]
        %v7501 = vsel %vm330, %v7466, 0
        %v7504 = vsel %vm330, %v7467, 0
        %v7507 = vsel %vm330, %v7468, 0
        %v7510 = vsel %vm330, %v7469, 0
        %v7513 = vsel %vm330, %v7470, 0
        %v7516 = vsel %vm330, %v7471, 0
        %v7519 = vsel %vm330, %v7472, 0
        %v7522 = vsel %vm330, %v7473, 0
        %v7525 = vsel %vm330, %v7474, 0
        %v7528 = vsel %vm330, %v7475, 0
        %v7531 = vsel %vm330, %v7476, 0
        %v7534 = vsel %vm330, %v7477, 0
        %v7537 = vsel %vm330, %v7478, 0
        %v7540 = vsel %vm330, %v7479, 0
        %v7543 = vsel %vm330, %v7480, 0
        %v7546 = vsel %vm330, %v7481, 0
        %v7549 = vsel %vm330, %v7482, 0
        %v7552 = vsel %vm330, %v7483, 0
        %v7555 = vsel %vm330, %v7484, 0
        %v7558 = vsel %vm330, %v7485, 0
        %v7561 = vsel %vm330, %v7486, 0
        %v7564 = vsel %vm330, %v7487, 0
        %v7567 = vsel %vm330, %v7488, 0
        %v7570 = vsel %vm330, %v7489, 0
        %v7573 = vsel %vm330, %v7490, 0
        %v7576 = vsel %vm330, %v7491, 0
        %v7579 = vsel %vm330, %v7492, 0
        %v7582 = vsel %vm330, %v7493, 0
        %v7585 = vsel %vm330, %v7494, 0
        %v7588 = vsel %vm330, %v7495, 0
        %v7591 = vsel %vm330, %v7496, 0
        %v7594 = vsel %vm330, %v7497, 0
        %v7597 = vsel %vm578, %v7499, 0
        %7599 = vmatprep.subr.mxu0 0.0
        %7600 = vmatpush1.msra.mxu0 %v7597
        %7601 = vmatprep.subr.mxu0 0.0
        %7602 = vmatpush1.msra.mxu0 0.0
        %7603 = vmatprep.subr.mxu0 0.0
        %7604 = vmatpush1.msra.mxu0 0.0
        %7605 = vmatprep.subr.mxu0 0.0
        %7606 = vmatpush1.msra.mxu0 0.0
        %7607 = vmatprep.subr.mxu0 0.0
        %7608 = vmatpush1.msra.mxu0 0.0
        %7609 = vmatprep.subr.mxu0 0.0
        %7610 = vmatpush1.msra.mxu0 0.0
        %7611 = vmatprep.subr.mxu0 0.0
        %7612 = vmatpush1.msra.mxu0 0.0
        %7613 = vmatprep.subr.mxu0 0.0
        %7614 = vmatpush1.msra.mxu0 0.0
        %7615 = vmatprep.subr.mxu0 0.0
        %7616 = vmatpush1.msra.mxu0 0.0
        %7617 = vmatprep.subr.mxu0 0.0
        %7618 = vmatpush1.msra.mxu0 0.0
        %7619 = vmatprep.subr.mxu0 0.0
        %7620 = vmatpush1.msra.mxu0 0.0
        %7621 = vmatprep.subr.mxu0 0.0
        %7622 = vmatpush1.msra.mxu0 0.0
        %7623 = vmatprep.subr.mxu0 0.0
        %7624 = vmatpush1.msra.mxu0 0.0
        %7625 = vmatprep.subr.mxu0 0.0
        %7626 = vmatpush1.msra.mxu0 0.0
        %7627 = vmatprep.subr.mxu0 0.0
        %7628 = vmatpush1.msra.mxu0 0.0
        %7629 = vmatprep.subr.mxu0 0.0
        %7630 = vmatpush1.msra.mxu0 0.0
        %7631 = vmatprep.subr.mxu0 0.0
        %7632 = vmatpush1.msra.mxu0 0.0
        %7633 = vmatprep.subr.mxu0 0.0
        %7634 = vmatpush1.msra.mxu0 0.0
        %7635 = vmatprep.subr.mxu0 0.0
        %7636 = vmatpush1.msra.mxu0 0.0
        %7637 = vmatprep.subr.mxu0 0.0
        %7638 = vmatpush1.msra.mxu0 0.0
        %7639 = vmatprep.subr.mxu0 0.0
        %7640 = vmatpush1.msra.mxu0 0.0
        %7641 = vmatprep.subr.mxu0 0.0
        %7642 = vmatpush1.msra.mxu0 0.0
        %7643 = vmatprep.subr.mxu0 0.0
        %7644 = vmatpush1.msra.mxu0 0.0
        %7645 = vmatprep.subr.mxu0 0.0
        %7646 = vmatpush1.msra.mxu0 0.0
        %7647 = vmatprep.subr.mxu0 0.0
        %7648 = vmatpush1.msra.mxu0 0.0
        %7649 = vmatprep.subr.mxu0 0.0
        %7650 = vmatpush1.msra.mxu0 0.0
        %7651 = vmatprep.subr.mxu0 0.0
        %7652 = vmatpush1.msra.mxu0 0.0
        %7653 = vmatprep.subr.mxu0 0.0
        %7654 = vmatpush1.msra.mxu0 0.0
        %7655 = vmatprep.subr.mxu0 0.0
        %7656 = vmatpush1.msra.mxu0 0.0
        %7657 = vmatprep.subr.mxu0 0.0
        %7658 = vmatpush1.msra.mxu0 0.0
        %7659 = vmatprep.subr.mxu0 0.0
        %7660 = vmatpush1.msra.mxu0 0.0
        %7661 = vmatprep.subr.mxu0 0.0
        %7662 = vmatpush1.msra.mxu0 0.0
        %7663 = vmatprep.mubr.f32.mxu0 0.0
        %7664 = vmatmul.mubr.f32.gmra.mrb[0].mxu0 %v7501
        %v7665 = vpop.f32.mrb[0].mxu0
        %v7666 = vadd.f32 0.0, %v7665
        %v7667 = vpop.f32.mrb[0].mxu0
        %7668 = vmatprep.mubr.f32.mxu0 0.0
        %7669 = vmatmul.mubr.f32.gmra.mrb[0].mxu0 %v7504
        %v7670 = vpop.f32.mrb[0].mxu0
        %v7671 = vadd.f32 0.0, %v7670
        %v7672 = vpop.f32.mrb[0].mxu0
        %7673 = vmatprep.mubr.f32.mxu0 0.0
        %7674 = vmatmul.mubr.f32.gmra.mrb[0].mxu0 %v7507
        %v7675 = vpop.f32.mrb[0].mxu0
        %v7676 = vadd.f32 0.0, %v7675
        %v7677 = vpop.f32.mrb[0].mxu0
        %7678 = vmatprep.mubr.f32.mxu0 0.0
        %7679 = vmatmul.mubr.f32.gmra.mrb[0].mxu0 %v7510
        %v7680 = vpop.f32.mrb[0].mxu0
        %v7681 = vadd.f32 0.0, %v7680
        %v7682 = vpop.f32.mrb[0].mxu0
        %7683 = vmatprep.mubr.f32.mxu0 0.0
        %7684 = vmatmul.mubr.f32.gmra.mrb[0].mxu0 %v7513
        %v7685 = vpop.f32.mrb[0].mxu0
        %v7686 = vadd.f32 0.0, %v7685
        %v7687 = vpop.f32.mrb[0].mxu0
        %7688 = vmatprep.mubr.f32.mxu0 0.0
        %7689 = vmatmul.mubr.f32.gmra.mrb[0].mxu0 %v7516
        %v7690 = vpop.f32.mrb[0].mxu0
        %v7691 = vadd.f32 0.0, %v7690
        %v7692 = vpop.f32.mrb[0].mxu0
        %7693 = vmatprep.mubr.f32.mxu0 0.0
        %7694 = vmatmul.mubr.f32.gmra.mrb[0].mxu0 %v7519
        %v7695 = vpop.f32.mrb[0].mxu0
        %v7696 = vadd.f32 0.0, %v7695
        %v7697 = vpop.f32.mrb[0].mxu0
        %7698 = vmatprep.mubr.f32.mxu0 0.0
        %7699 = vmatmul.mubr.f32.gmra.mrb[0].mxu0 %v7522
        %v7700 = vpop.f32.mrb[0].mxu0
        %v7701 = vadd.f32 0.0, %v7700
        %v7702 = vpop.f32.mrb[0].mxu0
        %7703 = vmatprep.mubr.f32.mxu0 0.0
        %7704 = vmatmul.mubr.f32.gmra.mrb[0].mxu0 %v7525
        %v7705 = vpop.f32.mrb[0].mxu0
        %v7706 = vadd.f32 0.0, %v7705
        %v7707 = vpop.f32.mrb[0].mxu0
        %7708 = vmatprep.mubr.f32.mxu0 0.0
        %7709 = vmatmul.mubr.f32.gmra.mrb[0].mxu0 %v7528
        %v7710 = vpop.f32.mrb[0].mxu0
        %v7711 = vadd.f32 0.0, %v7710
        %v7712 = vpop.f32.mrb[0].mxu0
        %7713 = vmatprep.mubr.f32.mxu0 0.0
        %7714 = vmatmul.mubr.f32.gmra.mrb[0].mxu0 %v7531
        %v7715 = vpop.f32.mrb[0].mxu0
        %v7716 = vadd.f32 0.0, %v7715
        %v7717 = vpop.f32.mrb[0].mxu0
        %7718 = vmatprep.mubr.f32.mxu0 0.0
        %7719 = vmatmul.mubr.f32.gmra.mrb[0].mxu0 %v7534
        %v7720 = vpop.f32.mrb[0].mxu0
        %v7721 = vadd.f32 0.0, %v7720
        %v7722 = vpop.f32.mrb[0].mxu0
        %7723 = vmatprep.mubr.f32.mxu0 0.0
        %7724 = vmatmul.mubr.f32.gmra.mrb[0].mxu0 %v7537
        %v7725 = vpop.f32.mrb[0].mxu0
        %v7726 = vadd.f32 0.0, %v7725
        %v7727 = vpop.f32.mrb[0].mxu0
        %7728 = vmatprep.mubr.f32.mxu0 0.0
        %7729 = vmatmul.mubr.f32.gmra.mrb[0].mxu0 %v7540
        %v7730 = vpop.f32.mrb[0].mxu0
        %v7731 = vadd.f32 0.0, %v7730
        %v7732 = vpop.f32.mrb[0].mxu0
        %7733 = vmatprep.mubr.f32.mxu0 0.0
        %7734 = vmatmul.mubr.f32.gmra.mrb[0].mxu0 %v7543
        %v7735 = vpop.f32.mrb[0].mxu0
        %v7736 = vadd.f32 0.0, %v7735
        %v7737 = vpop.f32.mrb[0].mxu0
        %7738 = vmatprep.mubr.f32.mxu0 0.0
        %7739 = vmatmul.mubr.f32.gmra.mrb[0].mxu0 %v7546
        %v7740 = vpop.f32.mrb[0].mxu0
        %v7741 = vadd.f32 0.0, %v7740
        %v7742 = vpop.f32.mrb[0].mxu0
        %7743 = vmatprep.mubr.f32.mxu0 0.0
        %7744 = vmatmul.mubr.f32.gmra.mrb[0].mxu0 %v7549
        %v7745 = vpop.f32.mrb[0].mxu0
        %v7746 = vadd.f32 0.0, %v7745
        %v7747 = vpop.f32.mrb[0].mxu0
        %7748 = vmatprep.mubr.f32.mxu0 0.0
        %7749 = vmatmul.mubr.f32.gmra.mrb[0].mxu0 %v7552
        %v7750 = vpop.f32.mrb[0].mxu0
        %v7751 = vadd.f32 0.0, %v7750
        %v7752 = vpop.f32.mrb[0].mxu0
        %7753 = vmatprep.mubr.f32.mxu0 0.0
        %7754 = vmatmul.mubr.f32.gmra.mrb[0].mxu0 %v7555
        %v7755 = vpop.f32.mrb[0].mxu0
        %v7756 = vadd.f32 0.0, %v7755
        %v7757 = vpop.f32.mrb[0].mxu0
        %7758 = vmatprep.mubr.f32.mxu0 0.0
        %7759 = vmatmul.mubr.f32.gmra.mrb[0].mxu0 %v7558
        %v7760 = vpop.f32.mrb[0].mxu0
        %v7761 = vadd.f32 0.0, %v7760
        %v7762 = vpop.f32.mrb[0].mxu0
        %7763 = vmatprep.mubr.f32.mxu0 0.0
        %7764 = vmatmul.mubr.f32.gmra.mrb[0].mxu0 %v7561
        %v7765 = vpop.f32.mrb[0].mxu0
        %v7766 = vadd.f32 0.0, %v7765
        %v7767 = vpop.f32.mrb[0].mxu0
        %7768 = vmatprep.mubr.f32.mxu0 0.0
        %7769 = vmatmul.mubr.f32.gmra.mrb[0].mxu0 %v7564
        %v7770 = vpop.f32.mrb[0].mxu0
        %v7771 = vadd.f32 0.0, %v7770
        %v7772 = vpop.f32.mrb[0].mxu0
        %7773 = vmatprep.mubr.f32.mxu0 0.0
        %7774 = vmatmul.mubr.f32.gmra.mrb[0].mxu0 %v7567
        %v7775 = vpop.f32.mrb[0].mxu0
        %v7776 = vadd.f32 0.0, %v7775
        %v7777 = vpop.f32.mrb[0].mxu0
        %7778 = vmatprep.mubr.f32.mxu0 0.0
        %7779 = vmatmul.mubr.f32.gmra.mrb[0].mxu0 %v7570
        %v7780 = vpop.f32.mrb[0].mxu0
        %v7781 = vadd.f32 0.0, %v7780
        %v7782 = vpop.f32.mrb[0].mxu0
        %7783 = vmatprep.mubr.f32.mxu0 0.0
        %7784 = vmatmul.mubr.f32.gmra.mrb[0].mxu0 %v7573
        %v7785 = vpop.f32.mrb[0].mxu0
        %v7786 = vadd.f32 0.0, %v7785
        %v7787 = vpop.f32.mrb[0].mxu0
        %7788 = vmatprep.mubr.f32.mxu0 0.0
        %7789 = vmatmul.mubr.f32.gmra.mrb[0].mxu0 %v7576
        %v7790 = vpop.f32.mrb[0].mxu0
        %v7791 = vadd.f32 0.0, %v7790
        %v7792 = vpop.f32.mrb[0].mxu0
        %7793 = vmatprep.mubr.f32.mxu0 0.0
        %7794 = vmatmul.mubr.f32.gmra.mrb[0].mxu0 %v7579
        %v7795 = vpop.f32.mrb[0].mxu0
        %v7796 = vadd.f32 0.0, %v7795
        %v7797 = vpop.f32.mrb[0].mxu0
        %7798 = vmatprep.mubr.f32.mxu0 0.0
        %7799 = vmatmul.mubr.f32.gmra.mrb[0].mxu0 %v7582
        %v7800 = vpop.f32.mrb[0].mxu0
        %v7801 = vadd.f32 0.0, %v7800
        %v7802 = vpop.f32.mrb[0].mxu0
        %7803 = vmatprep.mubr.f32.mxu0 0.0
        %7804 = vmatmul.mubr.f32.gmra.mrb[0].mxu0 %v7585
        %v7805 = vpop.f32.mrb[0].mxu0
        %v7806 = vadd.f32 0.0, %v7805
        %v7807 = vpop.f32.mrb[0].mxu0
        %7808 = vmatprep.mubr.f32.mxu0 0.0
        %7809 = vmatmul.mubr.f32.gmra.mrb[0].mxu0 %v7588
        %v7810 = vpop.f32.mrb[0].mxu0
        %v7811 = vadd.f32 0.0, %v7810
        %v7812 = vpop.f32.mrb[0].mxu0
        %7813 = vmatprep.mubr.f32.mxu0 0.0
        %7814 = vmatmul.mubr.f32.gmra.mrb[0].mxu0 %v7591
        %v7815 = vpop.f32.mrb[0].mxu0
        %v7816 = vadd.f32 0.0, %v7815
        %v7817 = vpop.f32.mrb[0].mxu0
        %7818 = vmatprep.mubr.f32.mxu0 0.0
        %7819 = vmatmul.mubr.f32.gmra.mrb[0].mxu0 %v7594
        %v7820 = vpop.f32.mrb[0].mxu0
        %v7821 = vadd.f32 0.0, %v7820
        %v7822 = vpop.f32.mrb[0].mxu0
        %7823 = vdwg.mxu0
        %v7824 = vadd.f32 %v7434, %v7666
        %v7825 = vadd.f32 %v7435, %v7671
        %v7826 = vadd.f32 %v7436, %v7676
        %v7827 = vadd.f32 %v7437, %v7681
        %v7828 = vadd.f32 %v7438, %v7686
        %v7829 = vadd.f32 %v7439, %v7691
        %v7830 = vadd.f32 %v7440, %v7696
        %v7831 = vadd.f32 %v7441, %v7701
        %v7832 = vadd.f32 %v7442, %v7706
        %v7833 = vadd.f32 %v7443, %v7711
        %v7834 = vadd.f32 %v7444, %v7716
        %v7835 = vadd.f32 %v7445, %v7721
        %v7836 = vadd.f32 %v7446, %v7726
        %v7837 = vadd.f32 %v7447, %v7731
        %v7838 = vadd.f32 %v7448, %v7736
        %v7839 = vadd.f32 %v7449, %v7741
        %v7840 = vadd.f32 %v7450, %v7746
        %v7841 = vadd.f32 %v7451, %v7751
        %v7842 = vadd.f32 %v7452, %v7756
        %v7843 = vadd.f32 %v7453, %v7761
        %v7844 = vadd.f32 %v7454, %v7766
        %v7845 = vadd.f32 %v7455, %v7771
        %v7846 = vadd.f32 %v7456, %v7776
        %v7847 = vadd.f32 %v7457, %v7781
        %v7848 = vadd.f32 %v7458, %v7786
        %v7849 = vadd.f32 %v7459, %v7791
        %v7850 = vadd.f32 %v7460, %v7796
        %v7851 = vadd.f32 %v7461, %v7801
        %v7852 = vadd.f32 %v7462, %v7806
        %v7853 = vadd.f32 %v7463, %v7811
        %v7854 = vadd.f32 %v7464, %v7816
        %v7855 = vadd.f32 %v7465, %v7821
        %v7856 = vsel %vm330, %v7824, 0.0
        %v7857 = vsel %vm330, %v7825, 0.0
        %v7858 = vadd.f32 %v7856, %v7857
        %v7859 = vsel %vm330, %v7826, 0.0
        %v7860 = vadd.f32 %v7858, %v7859
        %v7861 = vsel %vm330, %v7827, 0.0
        %v7862 = vadd.f32 %v7860, %v7861
        %v7863 = vsel %vm330, %v7828, 0.0
        %v7864 = vadd.f32 %v7862, %v7863
        %v7865 = vsel %vm330, %v7829, 0.0
        %v7866 = vadd.f32 %v7864, %v7865
        %v7867 = vsel %vm330, %v7830, 0.0
        %v7868 = vadd.f32 %v7866, %v7867
        %v7869 = vsel %vm330, %v7831, 0.0
        %v7870 = vadd.f32 %v7868, %v7869
        %v7871 = vsel %vm330, %v7832, 0.0
        %v7872 = vadd.f32 %v7870, %v7871
        %v7873 = vsel %vm330, %v7833, 0.0
        %v7874 = vadd.f32 %v7872, %v7873
        %v7875 = vsel %vm330, %v7834, 0.0
        %v7876 = vadd.f32 %v7874, %v7875
        %v7877 = vsel %vm330, %v7835, 0.0
        %v7878 = vadd.f32 %v7876, %v7877
        %v7879 = vsel %vm330, %v7836, 0.0
        %v7880 = vadd.f32 %v7878, %v7879
        %v7881 = vsel %vm330, %v7837, 0.0
        %v7882 = vadd.f32 %v7880, %v7881
        %v7883 = vsel %vm330, %v7838, 0.0
        %v7884 = vadd.f32 %v7882, %v7883
        %v7885 = vsel %vm330, %v7839, 0.0
        %v7886 = vadd.f32 %v7884, %v7885
        %v7887 = vsel %vm330, %v7840, 0.0
        %v7888 = vadd.f32 %v7886, %v7887
        %v7889 = vsel %vm330, %v7841, 0.0
        %v7890 = vadd.f32 %v7888, %v7889
        %v7891 = vsel %vm330, %v7842, 0.0
        %v7892 = vadd.f32 %v7890, %v7891
        %v7893 = vsel %vm330, %v7843, 0.0
        %v7894 = vadd.f32 %v7892, %v7893
        %v7895 = vsel %vm330, %v7844, 0.0
        %v7896 = vadd.f32 %v7894, %v7895
        %v7897 = vsel %vm330, %v7845, 0.0
        %v7898 = vadd.f32 %v7896, %v7897
        %v7899 = vsel %vm330, %v7846, 0.0
        %v7900 = vadd.f32 %v7898, %v7899
        %v7901 = vsel %vm330, %v7847, 0.0
        %v7902 = vadd.f32 %v7900, %v7901
        %v7903 = vsel %vm330, %v7848, 0.0
        %v7904 = vadd.f32 %v7902, %v7903
        %v7905 = vsel %vm330, %v7849, 0.0
        %v7906 = vadd.f32 %v7904, %v7905
        %v7907 = vsel %vm330, %v7850, 0.0
        %v7908 = vadd.f32 %v7906, %v7907
        %v7909 = vsel %vm330, %v7851, 0.0
        %v7910 = vadd.f32 %v7908, %v7909
        %v7911 = vsel %vm330, %v7852, 0.0
        %v7912 = vadd.f32 %v7910, %v7911
        %v7913 = vsel %vm330, %v7853, 0.0
        %v7914 = vadd.f32 %v7912, %v7913
        %v7915 = vsel %vm330, %v7854, 0.0
        %v7916 = vadd.f32 %v7914, %v7915
        %v7917 = vsel %vm330, %v7855, 0.0
        %v7918 = vadd.f32 %v7916, %v7917
        %v7919 = vrot.slane %v7918, 4
        %v7920 = vadd.f32 %v7918, %v7919
        %v7921 = vrot.slane %v7920, 2
        %v7922 = vadd.f32 %v7920, %v7921
        %v7923 = vrot.slane %v7922, 1
        %v7924 = vadd.f32 %v7922, %v7923
        %v7925 = vmul.f32 %v7924, %v4029
        %v7926 = vsub.f32 %v7824, %v7925
        %v7927 = vsub.f32 %v7825, %v7925
        %v7928 = vsub.f32 %v7826, %v7925
        %v7929 = vsub.f32 %v7827, %v7925
        %v7930 = vsub.f32 %v7828, %v7925
        %v7931 = vsub.f32 %v7829, %v7925
        %v7932 = vsub.f32 %v7830, %v7925
        %v7933 = vsub.f32 %v7831, %v7925
        %v7934 = vsub.f32 %v7832, %v7925
        %v7935 = vsub.f32 %v7833, %v7925
        %v7936 = vsub.f32 %v7834, %v7925
        %v7937 = vsub.f32 %v7835, %v7925
        %v7938 = vsub.f32 %v7836, %v7925
        %v7939 = vsub.f32 %v7837, %v7925
        %v7940 = vsub.f32 %v7838, %v7925
        %v7941 = vsub.f32 %v7839, %v7925
        %v7942 = vsub.f32 %v7840, %v7925
        %v7943 = vsub.f32 %v7841, %v7925
        %v7944 = vsub.f32 %v7842, %v7925
        %v7945 = vsub.f32 %v7843, %v7925
        %v7946 = vsub.f32 %v7844, %v7925
        %v7947 = vsub.f32 %v7845, %v7925
        %v7948 = vsub.f32 %v7846, %v7925
        %v7949 = vsub.f32 %v7847, %v7925
        %v7950 = vsub.f32 %v7848, %v7925
        %v7951 = vsub.f32 %v7849, %v7925
        %v7952 = vsub.f32 %v7850, %v7925
        %v7953 = vsub.f32 %v7851, %v7925
        %v7954 = vsub.f32 %v7852, %v7925
        %v7955 = vsub.f32 %v7853, %v7925
        %v7956 = vsub.f32 %v7854, %v7925
        %v7957 = vsub.f32 %v7855, %v7925
        %v7958 = vmul.f32 %v7926, %v7926
        %v7959 = vmul.f32 %v7927, %v7927
        %v7960 = vmul.f32 %v7928, %v7928
        %v7961 = vmul.f32 %v7929, %v7929
        %v7962 = vmul.f32 %v7930, %v7930
        %v7963 = vmul.f32 %v7931, %v7931
        %v7964 = vmul.f32 %v7932, %v7932
        %v7965 = vmul.f32 %v7933, %v7933
        %v7966 = vmul.f32 %v7934, %v7934
        %v7967 = vmul.f32 %v7935, %v7935
        %v7968 = vmul.f32 %v7936, %v7936
        %v7969 = vmul.f32 %v7937, %v7937
        %v7970 = vmul.f32 %v7938, %v7938
        %v7971 = vmul.f32 %v7939, %v7939
        %v7972 = vmul.f32 %v7940, %v7940
        %v7973 = vmul.f32 %v7941, %v7941
        %v7974 = vmul.f32 %v7942, %v7942
        %v7975 = vmul.f32 %v7943, %v7943
        %v7976 = vmul.f32 %v7944, %v7944
        %v7977 = vmul.f32 %v7945, %v7945
        %v7978 = vmul.f32 %v7946, %v7946
        %v7979 = vmul.f32 %v7947, %v7947
        %v7980 = vmul.f32 %v7948, %v7948
        %v7981 = vmul.f32 %v7949, %v7949
        %v7982 = vmul.f32 %v7950, %v7950
        %v7983 = vmul.f32 %v7951, %v7951
        %v7984 = vmul.f32 %v7952, %v7952
        %v7985 = vmul.f32 %v7953, %v7953
        %v7986 = vmul.f32 %v7954, %v7954
        %v7987 = vmul.f32 %v7955, %v7955
        %v7988 = vmul.f32 %v7956, %v7956
        %v7989 = vmul.f32 %v7957, %v7957
        %v7990 = vsel %vm330, %v7958, 0.0
        %v7991 = vsel %vm330, %v7959, 0.0
        %v7992 = vadd.f32 %v7990, %v7991
        %v7993 = vsel %vm330, %v7960, 0.0
        %v7994 = vadd.f32 %v7992, %v7993
        %v7995 = vsel %vm330, %v7961, 0.0
        %v7996 = vadd.f32 %v7994, %v7995
        %v7997 = vsel %vm330, %v7962, 0.0
        %v7998 = vadd.f32 %v7996, %v7997
        %v7999 = vsel %vm330, %v7963, 0.0
        %v8000 = vadd.f32 %v7998, %v7999
        %v8001 = vsel %vm330, %v7964, 0.0
        %v8002 = vadd.f32 %v8000, %v8001
        %v8003 = vsel %vm330, %v7965, 0.0
        %v8004 = vadd.f32 %v8002, %v8003
        %v8005 = vsel %vm330, %v7966, 0.0
        %v8006 = vadd.f32 %v8004, %v8005
        %v8007 = vsel %vm330, %v7967, 0.0
        %v8008 = vadd.f32 %v8006, %v8007
        %v8009 = vsel %vm330, %v7968, 0.0
        %v8010 = vadd.f32 %v8008, %v8009
        %v8011 = vsel %vm330, %v7969, 0.0
        %v8012 = vadd.f32 %v8010, %v8011
        %v8013 = vsel %vm330, %v7970, 0.0
        %v8014 = vadd.f32 %v8012, %v8013
        %v8015 = vsel %vm330, %v7971, 0.0
        %v8016 = vadd.f32 %v8014, %v8015
        %v8017 = vsel %vm330, %v7972, 0.0
        %v8018 = vadd.f32 %v8016, %v8017
        %v8019 = vsel %vm330, %v7973, 0.0
        %v8020 = vadd.f32 %v8018, %v8019
        %v8021 = vsel %vm330, %v7974, 0.0
        %v8022 = vadd.f32 %v8020, %v8021
        %v8023 = vsel %vm330, %v7975, 0.0
        %v8024 = vadd.f32 %v8022, %v8023
        %v8025 = vsel %vm330, %v7976, 0.0
        %v8026 = vadd.f32 %v8024, %v8025
        %v8027 = vsel %vm330, %v7977, 0.0
        %v8028 = vadd.f32 %v8026, %v8027
        %v8029 = vsel %vm330, %v7978, 0.0
        %v8030 = vadd.f32 %v8028, %v8029
        %v8031 = vsel %vm330, %v7979, 0.0
        %v8032 = vadd.f32 %v8030, %v8031
        %v8033 = vsel %vm330, %v7980, 0.0
        %v8034 = vadd.f32 %v8032, %v8033
        %v8035 = vsel %vm330, %v7981, 0.0
        %v8036 = vadd.f32 %v8034, %v8035
        %v8037 = vsel %vm330, %v7982, 0.0
        %v8038 = vadd.f32 %v8036, %v8037
        %v8039 = vsel %vm330, %v7983, 0.0
        %v8040 = vadd.f32 %v8038, %v8039
        %v8041 = vsel %vm330, %v7984, 0.0
        %v8042 = vadd.f32 %v8040, %v8041
        %v8043 = vsel %vm330, %v7985, 0.0
        %v8044 = vadd.f32 %v8042, %v8043
        %v8045 = vsel %vm330, %v7986, 0.0
        %v8046 = vadd.f32 %v8044, %v8045
        %v8047 = vsel %vm330, %v7987, 0.0
        %v8048 = vadd.f32 %v8046, %v8047
        %v8049 = vsel %vm330, %v7988, 0.0
        %v8050 = vadd.f32 %v8048, %v8049
        %v8051 = vsel %vm330, %v7989, 0.0
        %v8052 = vadd.f32 %v8050, %v8051
        %v8053 = vrot.slane %v8052, 4
        %v8054 = vadd.f32 %v8052, %v8053
        %v8055 = vrot.slane %v8054, 2
        %v8056 = vadd.f32 %v8054, %v8055
        %v8057 = vrot.slane %v8056, 1
        %v8058 = vadd.f32 %v8056, %v8057
        %v8059 = vmul.f32 %v8058, %v4029
        %v8060 = vadd.f32 %v8059, 1e-05
        %v8061 = vrsqrt.pop %v8060
        %v8062 = vmul.f32 %v7926, %v8061
        %v8063 = vmul.f32 %v7927, %v8061
        %v8064 = vmul.f32 %v7928, %v8061
        %v8065 = vmul.f32 %v7929, %v8061
        %v8066 = vmul.f32 %v7930, %v8061
        %v8067 = vmul.f32 %v7931, %v8061
        %v8068 = vmul.f32 %v7932, %v8061
        %v8069 = vmul.f32 %v7933, %v8061
        %v8070 = vmul.f32 %v7934, %v8061
        %v8071 = vmul.f32 %v7935, %v8061
        %v8072 = vmul.f32 %v7936, %v8061
        %v8073 = vmul.f32 %v7937, %v8061
        %v8074 = vmul.f32 %v7938, %v8061
        %v8075 = vmul.f32 %v7939, %v8061
        %v8076 = vmul.f32 %v7940, %v8061
        %v8077 = vmul.f32 %v7941, %v8061
        %v8078 = vmul.f32 %v7942, %v8061
        %v8079 = vmul.f32 %v7943, %v8061
        %v8080 = vmul.f32 %v7944, %v8061
        %v8081 = vmul.f32 %v7945, %v8061
        %v8082 = vmul.f32 %v7946, %v8061
        %v8083 = vmul.f32 %v7947, %v8061
        %v8084 = vmul.f32 %v7948, %v8061
        %v8085 = vmul.f32 %v7949, %v8061
        %v8086 = vmul.f32 %v7950, %v8061
        %v8087 = vmul.f32 %v7951, %v8061
        %v8088 = vmul.f32 %v7952, %v8061
        %v8089 = vmul.f32 %v7953, %v8061
        %v8090 = vmul.f32 %v7954, %v8061
        %v8091 = vmul.f32 %v7955, %v8061
        %v8092 = vmul.f32 %v7956, %v8061
        %v8093 = vmul.f32 %v7957, %v8061
        %v8094 = vadd.f32 %v297, %v8062
        %v8095 = vadd.f32 %v298, %v8063
        %v8096 = vadd.f32 %v299, %v8064
        %v8097 = vadd.f32 %v300, %v8065
        %v8098 = vadd.f32 %v301, %v8066
        %v8099 = vadd.f32 %v302, %v8067
        %v8100 = vadd.f32 %v303, %v8068
        %v8101 = vadd.f32 %v304, %v8069
        %v8102 = vadd.f32 %v305, %v8070
        %v8103 = vadd.f32 %v306, %v8071
        %v8104 = vadd.f32 %v307, %v8072
        %v8105 = vadd.f32 %v308, %v8073
        %v8106 = vadd.f32 %v309, %v8074
        %v8107 = vadd.f32 %v310, %v8075
        %v8108 = vadd.f32 %v311, %v8076
        %v8109 = vadd.f32 %v312, %v8077
        %v8110 = vadd.f32 %v313, %v8078
        %v8111 = vadd.f32 %v314, %v8079
        %v8112 = vadd.f32 %v315, %v8080
        %v8113 = vadd.f32 %v316, %v8081
        %v8114 = vadd.f32 %v317, %v8082
        %v8115 = vadd.f32 %v318, %v8083
        %v8116 = vadd.f32 %v319, %v8084
        %v8117 = vadd.f32 %v320, %v8085
        %v8118 = vadd.f32 %v321, %v8086
        %v8119 = vadd.f32 %v322, %v8087
        %v8120 = vadd.f32 %v323, %v8088
        %v8121 = vadd.f32 %v324, %v8089
        %v8122 = vadd.f32 %v325, %v8090
        %v8123 = vadd.f32 %v326, %v8091
        %v8124 = vadd.f32 %v327, %v8092
        %v8125 = vadd.f32 %v328, %v8093
        %8126 = vst.msk [vmem:[%s296] sm:$0xff] %vm330, %v8094
        %8127 = vst.msk [vmem:[%s296 + $0x8] sm:$0xff] %vm330, %v8095
        %8128 = vst.msk [vmem:[%s296 + $0x10] sm:$0xff] %vm330, %v8096
        %8129 = vst.msk [vmem:[%s296 + $0x18] sm:$0xff] %vm330, %v8097
        %8130 = vst.msk [vmem:[%s296 + $0x20] sm:$0xff] %vm330, %v8098
        %8131 = vst.msk [vmem:[%s296 + $0x28] sm:$0xff] %vm330, %v8099
        %8132 = vst.msk [vmem:[%s296 + $0x30] sm:$0xff] %vm330, %v8100
        %8133 = vst.msk [vmem:[%s296 + $0x38] sm:$0xff] %vm330, %v8101
        %8134 = vst.msk [vmem:[%s296 + $0x40] sm:$0xff] %vm330, %v8102
        %8135 = vst.msk [vmem:[%s296 + $0x48] sm:$0xff] %vm330, %v8103
        %8136 = vst.msk [vmem:[%s296 + $0x50] sm:$0xff] %vm330, %v8104
        %8137 = vst.msk [vmem:[%s296 + $0x58] sm:$0xff] %vm330, %v8105
        %8138 = vst.msk [vmem:[%s296 + $0x60] sm:$0xff] %vm330, %v8106
        %8139 = vst.msk [vmem:[%s296 + $0x68] sm:$0xff] %vm330, %v8107
        %8140 = vst.msk [vmem:[%s296 + $0x70] sm:$0xff] %vm330, %v8108
        %8141 = vst.msk [vmem:[%s296 + $0x78] sm:$0xff] %vm330, %v8109
        %8142 = vst.msk [vmem:[%s296 + $0x80] sm:$0xff] %vm330, %v8110
        %8143 = vst.msk [vmem:[%s296 + $0x88] sm:$0xff] %vm330, %v8111
        %8144 = vst.msk [vmem:[%s296 + $0x90] sm:$0xff] %vm330, %v8112
        %8145 = vst.msk [vmem:[%s296 + $0x98] sm:$0xff] %vm330, %v8113
        %8146 = vst.msk [vmem:[%s296 + $0xa0] sm:$0xff] %vm330, %v8114
        %8147 = vst.msk [vmem:[%s296 + $0xa8] sm:$0xff] %vm330, %v8115
        %8148 = vst.msk [vmem:[%s296 + $0xb0] sm:$0xff] %vm330, %v8116
        %8149 = vst.msk [vmem:[%s296 + $0xb8] sm:$0xff] %vm330, %v8117
        %8150 = vst.msk [vmem:[%s296 + $0xc0] sm:$0xff] %vm330, %v8118
        %8151 = vst.msk [vmem:[%s296 + $0xc8] sm:$0xff] %vm330, %v8119
        %8152 = vst.msk [vmem:[%s296 + $0xd0] sm:$0xff] %vm330, %v8120
        %8153 = vst.msk [vmem:[%s296 + $0xd8] sm:$0xff] %vm330, %v8121
        %8154 = vst.msk [vmem:[%s296 + $0xe0] sm:$0xff] %vm330, %v8122
        %8155 = vst.msk [vmem:[%s296 + $0xe8] sm:$0xff] %vm330, %v8123
        %8156 = vst.msk [vmem:[%s296 + $0xf0] sm:$0xff] %vm330, %v8124
        %8157 = vst.msk [vmem:[%s296 + $0xf8] sm:$0xff] %vm330, %v8125
        %s8158 = sand.u32 %s142, 1
        %s8159 = scalar_lea.sflag [#allocation5], %s8158
        %s8160 = sand.u32 %s142, 1
        %s8161 = smul.addr %s8160, 256
        %s8162 = scalar_lea.vmem [#allocation12], %s8161
        // Predicated region
        $region61: #{tpu_custom_call.1} parent=39 // pred_check
          %p8163 = pneg %p152
        $region62: #{tpu_custom_call.1} parent=39 // pred_check_branch
          %8165 = sbr.rel (%p8163) target = $region64
        $region63: #{tpu_custom_call.1} parent=39 // pred_region
          %s8167 = ssub.s32 4096, 4096
          %8168 = vsyncadd %s8159, %s8167
          %s8169 = smul.addr %s24, 32
          %s8170 = smul.addr %s8169, 128
          %s8171 = scalar_lea.hbm %s5, %s8170
          %s8172 = sshll.u32 %s8162, 4
          %s8173 = int_to_ptr.vmem [resolvable:$true] %s8172
          %8178 = dma.vmem_to_hbm [thread:$0]  %s8173, 4096, %s8171, %s8159, 128, 128, 8
        $region64: #{tpu_custom_call.1} parent=39 // pred_fallthru
          _
      $region40: #{tpu_custom_call.1} parent=5 // pred_fallthru
        _
      %p8179 = scmp.le.s32.totalorder 2, %s19
      // Predicated region
      $region65: #{tpu_custom_call.1} parent=5 // pred_check
        %p8180 = pneg %p8179
      $region66: #{tpu_custom_call.1} parent=5 // pred_check_branch
        %8182 = sbr.rel (%p8180) target = $region68
      $region67: #{tpu_custom_call.1} parent=5 // pred_region
        %s8183 = ssub.s32 %s19, 2
        // Predicated region
        $region69: #{tpu_custom_call.1} parent=67 // pred_check
          %p8184 = pneg %p158
        $region70: #{tpu_custom_call.1} parent=67 // pred_check_branch
          %8186 = sbr.rel (%p8184) target = $region72
        $region71: #{tpu_custom_call.1} parent=67 // pred_region
          %s8187 = sand.u32 %s143, 1
          %s8188 = scalar_lea.sflag [#allocation5], %s8187
          %s8189 = sand.u32 %s143, 1
          %s8190 = smul.addr %s8189, 256
          %s8191 = scalar_lea.vmem [#allocation12], %s8190
          %8192 = dma.done %s8188, 4096
        $region72: #{tpu_custom_call.1} parent=67 // pred_fallthru
          _
      $region68: #{tpu_custom_call.1} parent=5 // pred_fallthru
        _
    $region6: #{tpu_custom_call.1} parent=1 // loop_footer
      %s23 = sadd.s32 1, %s19
    $region7: #{tpu_custom_call.1} parent=1 // loop_footer_branch
      %18 = sbr.rel target = $region3
    $region8: #{tpu_custom_call.1} parent=1 // loop_exit
      _
    %8193 = vsyncpa [#allocation4], 1
    %s8194 = scalar_lea.sflag [#allocation4], 1
    %8195 = vsyncpa %s8194, 1
    %8196 = vsyncpa [#allocation7], 1
    %8197 = vsyncpa [#allocation10], 1
    %8198 = vsyncpa [#allocation5], 1
    %s8199 = scalar_lea.sflag [#allocation5], 1
    %8200 = vsyncpa %s8199, 1

</llo_original>
